<compile_context>
chip_gen: v7x
topology: tpu7x:2x2x1
jax: 0.10.0
libtpu: 0.0.40
codegen_flags: <defaults>
</compile_context>

<pallas_src>
import functools
import math

import jax
import jax.numpy as jnp
from jax.experimental import pallas as pl
from jax.experimental.pallas import tpu as pltpu

# ----------------- config -----------------
B = 2
C = 3
IMG = 16
PATCH = 4
D = 32            # hidden dim (ViT-B/16 uses 768; shrunk)
NH = 4            # attention heads
DH = D // NH
LAYERS = 2        # encoder blocks (ViT-B/16 uses 12; shrunk)
MLP_DIM = 4 * D   # same 4x ratio as ViT
VIT_OUT = 1000    # vit_b_16 classification head -> feeds SmallFormer MLP
NUM_CLASSES = 1
LN_EPS = 1e-6
BN_EPS = 1e-5

NPATCH = (IMG // PATCH) ** 2
SEQ = NPATCH + 1
PATCH_FEAT = C * PATCH * PATCH


# ----------------- parameter naming / packing -----------------
_PER_LAYER = ("w_in", "b_in", "w_out", "b_out", "w_fc1", "b_fc1", "w_fc2", "b_fc2")
_ANY_NAMES = ("head_w", "W1", "W2")   # big head weights: manual DMA, overlapped with encoder


def _param_names(n_layers):
    names = ["conv_w", "conv_b", "cls_row", "pos_patch"]
    for i in range(n_layers):
        names += [f"l{i}_{s}" for s in _PER_LAYER]
    names += ["head_b", "B1", "bn1_s", "bn1_t", "B2", "bn2_s", "bn2_t", "W3", "B3"]
    return tuple(names)


def pack_params(p):
    """One-time host-side packing.

    - matmul weights stored bf16 (f32 accumulation in-kernel)
    - LayerNorm gamma/beta folded into the following matmul weights/biases
    - attention scale 1/sqrt(DH) folded into the Q columns of w_in / b_in
    - eval-mode BatchNorm folded into per-feature scale/shift
    """
    bf = lambda a: a.astype(jnp.bfloat16)
    row = lambda a: a.reshape(1, -1).astype(jnp.float32)
    attn_scale = 1.0 / math.sqrt(DH)

    f = {}
    f["conv_w"] = bf(p["conv_w"])
    f["conv_b"] = row(p["conv_b"])
    # fold the class-token row together with its positional embedding
    f["cls_row"] = (p["cls"].reshape(1, D) + p["pos"][0, 0:1, :]).astype(jnp.float32)
    f["pos_patch"] = p["pos"][0, 1:, :].astype(jnp.float32)            # (NPATCH, D)

    for i, lyr in enumerate(p["layers"]):
        # LN1 gamma/beta -> w_in / b_in ; 1/sqrt(DH) -> Q columns
        w_in = lyr["ln1_g"][:, None] * lyr["w_in"]                      # (D, 3D)
        b_in = lyr["ln1_b"] @ lyr["w_in"] + lyr["b_in"]                 # (3D,)
        col_scale = jnp.concatenate(
            [jnp.full((D,), attn_scale), jnp.ones((2 * D,))]).astype(jnp.float32)
        w_in = w_in * col_scale[None, :]
        b_in = b_in * col_scale
        f[f"l{i}_w_in"] = bf(w_in)
        f[f"l{i}_b_in"] = row(b_in)
        f[f"l{i}_w_out"] = lyr["w_out"].astype(jnp.float32)             # (D,D) tiny; kept f32
        f[f"l{i}_b_out"] = row(lyr["b_out"])
        # LN2 gamma/beta -> w_fc1 / b_fc1
        w_fc1 = lyr["ln2_g"][:, None] * lyr["w_fc1"]
        b_fc1 = lyr["ln2_b"] @ lyr["w_fc1"] + lyr["b_fc1"]
        f[f"l{i}_w_fc1"] = bf(w_fc1)
        f[f"l{i}_b_fc1"] = row(b_fc1)
        f[f"l{i}_w_fc2"] = bf(lyr["w_fc2"])
        f[f"l{i}_b_fc2"] = row(lyr["b_fc2"])

    # final LN gamma/beta -> ViT head
    head_w = p["ln_g"][:, None] * p["head_w"]
    head_b = p["ln_b"] @ p["head_w"] + p["head_b"]
    f["head_w"] = bf(head_w)
    f["head_b"] = row(head_b)

    # TODO(synk): BatchNorm1d training-mode batch statistics not implemented;
    #             eval-mode running stats are folded into per-feature scale/shift.
    f["W1"] = bf(p["W1"]); f["B1"] = row(p["B1"])
    bn1_s = p["bn1_w"] / jnp.sqrt(p["bn1_v"] + BN_EPS)
    f["bn1_s"] = row(bn1_s)
    f["bn1_t"] = row(p["bn1_b"] - p["bn1_m"] * bn1_s)
    f["W2"] = bf(p["W2"]); f["B2"] = row(p["B2"])
    bn2_s = p["bn2_w"] / jnp.sqrt(p["bn2_v"] + BN_EPS)
    f["bn2_s"] = row(bn2_s)
    f["bn2_t"] = row(p["bn2_b"] - p["bn2_m"] * bn2_s)
    f["W3"] = row(p["W3"][:, 0])                                        # (1, 84) row: VPU reduce
    f["B3"] = row(p["B3"])
    return f


# ----------------- the fused Pallas kernel (one batch element per grid step) -----------------
def _fused_kernel(*refs, names):
    n = len(names)
    xp_ref = refs[0]                                   # (1, NPATCH, PATCH_FEAT)
    P = dict(zip(names, refs[1:1 + n]))
    (head_w_hbm, w1_hbm, w2_hbm,                       # pl.ANY (HBM) refs
     o_ref,                                            # (1, 1, NUM_CLASSES) output
     head_w_sc, w1_sc, w2_sc, dma_sem) = refs[1 + n:]  # VMEM scratch + DMA sems

    # Kick off the ~1.2 MB head-weight DMAs immediately; overlap with encoder compute.
    cp_head = pltpu.make_async_copy(head_w_hbm, head_w_sc, dma_sem.at[0])
    cp_w1 = pltpu.make_async_copy(w1_hbm, w1_sc, dma_sem.at[1])
    cp_w2 = pltpu.make_async_copy(w2_hbm, w2_sc, dma_sem.at[2])
    cp_head.start(); cp_w1.start(); cp_w2.start()

    inv_sqrt2 = 1.0 / math.sqrt(2.0)

    def norm(x):
        # LayerNorm without affine (gamma/beta pre-folded into the following matmul)
        mu = jnp.mean(x, axis=-1, keepdims=True)
        xc = x - mu
        var = jnp.mean(xc * xc, axis=-1, keepdims=True)
        return xc * jax.lax.rsqrt(var + LN_EPS)

    def mm(x, w):
        # MXU matmul; activation cast to weight dtype (bf16 for big weights), f32 accumulate.
        return jnp.dot(x.astype(w.dtype), w, preferred_element_type=jnp.float32)

    # ---- patch embedding (== Conv2d kernel=stride=PATCH) + pos embed + cls token ----
    tok = (mm(xp_ref[0], P["conv_w"][...]) + P["conv_b"][...]
           + P["pos_patch"][...])                                       # (NPATCH, D)
    x = jnp.concatenate([P["cls_row"][...], tok], axis=0)               # (SEQ, D)

    # ---- pre-LN encoder blocks ----
    for i in range(LAYERS):
        L = lambda s: P[f"l{i}_{s}"][...]

        # MHA: LN(folded) -> QKV -> per-head softmax(QK^T)V -> single out-proj matmul
        qkv = mm(norm(x), L("w_in")) + L("b_in")                        # (SEQ, 3D)
        heads = []
        for h in range(NH):
            c = h * DH
            q = qkv[:, c:c + DH]                                        # (SEQ, DH) (pre-scaled)
            k = qkv[:, D + c:D + c + DH]
            v = qkv[:, 2 * D + c:2 * D + c + DH]
            s = jnp.dot(q, k.T, preferred_element_type=jnp.float32)     # (SEQ, SEQ)
            s = s - jnp.max(s, axis=-1, keepdims=True)
            pw = jnp.exp(s)
            pw = pw * pl.reciprocal(jnp.sum(pw, axis=-1, keepdims=True), approx=True)
            heads.append(jnp.dot(pw, v, preferred_element_type=jnp.float32))
        attn = jnp.concatenate(heads, axis=-1)                          # (SEQ, D)
        x = x + mm(attn, L("w_out")) + L("b_out")                       # residual 1

        # MLP: LN(folded) -> FC1 -> GELU(erf) -> FC2
        m = mm(norm(x), L("w_fc1")) + L("b_fc1")                        # (SEQ, MLP_DIM)
        m = 0.5 * m * (1.0 + jax.lax.erf(m * inv_sqrt2))                # exact torch GELU
        x = x + mm(m, L("w_fc2")) + L("b_fc2")                          # residual 2

    # ---- final LN on class token only, ViT 1000-way head ----
    cls = norm(x[0:1, :])                                               # (1, D)
    cp_head.wait(); cp_w1.wait(); cp_w2.wait()                          # head weights now in VMEM
    feats = mm(cls, head_w_sc[...]) + P["head_b"][...]                  # (1, 1000)

    # ---- SmallFormer MLP head (eval-mode BN folded) + sigmoid ----
    h1 = mm(feats, w1_sc[...]) + P["B1"][...]
    h1 = h1 * jax.nn.sigmoid(h1)                                        # SiLU
    h1 = h1 * P["bn1_s"][...] + P["bn1_t"][...]                         # BatchNorm1d (eval)
    h2 = mm(h1, w2_sc[...]) + P["B2"][...]
    h2 = h2 * jax.nn.sigmoid(h2)
    h2 = h2 * P["bn2_s"][...] + P["bn2_t"][...]
    # (1,84)@(84,1) done on the VPU: multiply + lane reduction (avoids 1-lane MXU pass)
    logit = jnp.sum(h2 * P["W3"][...], axis=-1, keepdims=True) + P["B3"][...]
    o_ref[0] = jax.nn.sigmoid(logit)                                    # (1, 1)


# ----------------- forward (single pallas_call, grid over batch) -----------------
@jax.jit
def smallformer_forward(x_nchw, packed):
    Bb = x_nchw.shape[0]
    nh = IMG // PATCH
    # patchify: Conv2d(kernel=stride=PATCH) == reshape/transpose + in-kernel matmul
    xp = x_nchw.reshape(Bb, C, nh, PATCH, nh, PATCH)
    xp = xp.transpose(0, 2, 4, 1, 3, 5).reshape(Bb, NPATCH, PATCH_FEAT)

    names = _param_names(LAYERS)
    vmem_args = [packed[k] for k in names]
    any_args = [packed[k] for k in _ANY_NAMES]

    def rep_spec(a):
        # weight replicated across grid steps (constant block index -> DMA'd once)
        return pl.BlockSpec(a.shape, lambda b: (0,) * a.ndim)

    in_specs = (
        [pl.BlockSpec((1, NPATCH, PATCH_FEAT), lambda b: (b, 0, 0))]
        + [rep_spec(a) for a in vmem_args]
        + [pl.BlockSpec(memory_space=pl.ANY)] * len(_ANY_NAMES)
    )
    out_specs = pl.BlockSpec((1, 1, NUM_CLASSES), lambda b: (b, 0, 0))

    kernel = functools.partial(_fused_kernel, names=names)
    out = pl.pallas_call(
        kernel,
        out_shape=jax.ShapeDtypeStruct((Bb, 1, NUM_CLASSES), jnp.float32),
        grid=(Bb,),
        in_specs=in_specs,
        out_specs=out_specs,
        scratch_shapes=[
            pltpu.VMEM((D, VIT_OUT), jnp.bfloat16),     # head_w landing buffer
            pltpu.VMEM((VIT_OUT, 512), jnp.bfloat16),   # W1 landing buffer
            pltpu.VMEM((512, 84), jnp.bfloat16),        # W2 landing buffer
            pltpu.SemaphoreType.DMA((3,)),
        ],
        compiler_params=pltpu.CompilerParams(
            dimension_semantics=("parallel",),          # v7x: one image per TensorCore
            vmem_limit_bytes=8 * 1024 * 1024,           # actual footprint ~1.5 MB
        ),
    )(xp, *vmem_args, *any_args)
    return out.reshape(Bb, NUM_CLASSES)


# ----------------- parameters (deterministic synthetic init) -----------------
def init_params(key):
    def nrm(k, shape, std=0.02):
        return (std * jax.random.normal(k, shape)).astype(jnp.float32)

    keys = iter(jax.random.split(key, 64))
    p = {}
    p["conv_w"] = nrm(next(keys), (PATCH_FEAT, D))
    p["conv_b"] = jnp.zeros((D,), jnp.float32)
    p["cls"] = nrm(next(keys), (1, 1, D))
    p["pos"] = nrm(next(keys), (1, SEQ, D))
    layers = []
    for _ in range(LAYERS):
        layers.append(dict(
            ln1_g=jnp.ones((D,), jnp.float32), ln1_b=jnp.zeros((D,), jnp.float32),
            w_in=nrm(next(keys), (D, 3 * D)), b_in=jnp.zeros((3 * D,), jnp.float32),
            w_out=nrm(next(keys), (D, D)), b_out=jnp.zeros((D,), jnp.float32),
            ln2_g=jnp.ones((D,), jnp.float32), ln2_b=jnp.zeros((D,), jnp.float32),
            w_fc1=nrm(next(keys), (D, MLP_DIM)), b_fc1=jnp.zeros((MLP_DIM,), jnp.float32),
            w_fc2=nrm(next(keys), (MLP_DIM, D)), b_fc2=jnp.zeros((D,), jnp.float32),
        ))
    p["layers"] = layers
    p["ln_g"] = jnp.ones((D,), jnp.float32)
    p["ln_b"] = jnp.zeros((D,), jnp.float32)
    p["head_w"] = nrm(next(keys), (D, VIT_OUT))
    p["head_b"] = jnp.zeros((VIT_OUT,), jnp.float32)
    # SmallFormer MLP: Linear(1000,512) SiLU BN(512) Linear(512,84) SiLU BN(84) Linear(84,1)
    p["W1"] = nrm(next(keys), (VIT_OUT, 512)); p["B1"] = jnp.zeros((512,), jnp.float32)
    p["W2"] = nrm(next(keys), (512, 84));      p["B2"] = jnp.zeros((84,), jnp.float32)
    p["W3"] = nrm(next(keys), (84, NUM_CLASSES)); p["B3"] = jnp.zeros((NUM_CLASSES,), jnp.float32)
    # eval-mode BatchNorm1d stats/affine (deterministic synthetic values)
    p["bn1_w"] = 1.0 + nrm(next(keys), (512,), 0.1)
    p["bn1_b"] = nrm(next(keys), (512,), 0.1)
    p["bn1_m"] = nrm(next(keys), (512,), 0.1)
    p["bn1_v"] = jax.random.uniform(next(keys), (512,), minval=0.5, maxval=1.5).astype(jnp.float32)
    p["bn2_w"] = 1.0 + nrm(next(keys), (84,), 0.1)
    p["bn2_b"] = nrm(next(keys), (84,), 0.1)
    p["bn2_m"] = nrm(next(keys), (84,), 0.1)
    p["bn2_v"] = jax.random.uniform(next(keys), (84,), minval=0.5, maxval=1.5).astype(jnp.float32)
    return p


if __name__ == "__main__":
    key = jax.random.PRNGKey(0)
    k_x, k_p = jax.random.split(key)
    x = jax.random.normal(k_x, (B, C, IMG, IMG), dtype=jnp.float32)   # NCHW, like PyTorch
    params = init_params(k_p)
    packed = pack_params(params)                                       # one-time weight packing

    out = smallformer_forward(x, packed)
    out = jax.block_until_ready(out)

    assert out.shape == (B, NUM_CLASSES)
    assert bool(jnp.all(jnp.isfinite(out)))
    assert bool(jnp.all((out >= 0.0) & (out <= 1.0)))   # sigmoid range
    print("KERNEL_OK")
</pallas_src>

<mosaic_0001>
module attributes {stable_mosaic.version = 11 : i64} {
  func.func @_fused_kernel(%arg0: i32, %arg1: memref<1x16x48xf32, #tpu.memory_space<vmem>>, %arg2: memref<48x32xbf16, #tpu.memory_space<vmem>>, %arg3: memref<1x32xf32, #tpu.memory_space<vmem>>, %arg4: memref<1x32xf32, #tpu.memory_space<vmem>>, %arg5: memref<16x32xf32, #tpu.memory_space<vmem>>, %arg6: memref<32x96xbf16, #tpu.memory_space<vmem>>, %arg7: memref<1x96xf32, #tpu.memory_space<vmem>>, %arg8: memref<32x32xf32, #tpu.memory_space<vmem>>, %arg9: memref<1x32xf32, #tpu.memory_space<vmem>>, %arg10: memref<32x128xbf16, #tpu.memory_space<vmem>>, %arg11: memref<1x128xf32, #tpu.memory_space<vmem>>, %arg12: memref<128x32xbf16, #tpu.memory_space<vmem>>, %arg13: memref<1x32xf32, #tpu.memory_space<vmem>>, %arg14: memref<32x96xbf16, #tpu.memory_space<vmem>>, %arg15: memref<1x96xf32, #tpu.memory_space<vmem>>, %arg16: memref<32x32xf32, #tpu.memory_space<vmem>>, %arg17: memref<1x32xf32, #tpu.memory_space<vmem>>, %arg18: memref<32x128xbf16, #tpu.memory_space<vmem>>, %arg19: memref<1x128xf32, #tpu.memory_space<vmem>>, %arg20: memref<128x32xbf16, #tpu.memory_space<vmem>>, %arg21: memref<1x32xf32, #tpu.memory_space<vmem>>, %arg22: memref<1x1000xf32, #tpu.memory_space<vmem>>, %arg23: memref<1x512xf32, #tpu.memory_space<vmem>>, %arg24: memref<1x512xf32, #tpu.memory_space<vmem>>, %arg25: memref<1x512xf32, #tpu.memory_space<vmem>>, %arg26: memref<1x84xf32, #tpu.memory_space<vmem>>, %arg27: memref<1x84xf32, #tpu.memory_space<vmem>>, %arg28: memref<1x84xf32, #tpu.memory_space<vmem>>, %arg29: memref<1x84xf32, #tpu.memory_space<vmem>>, %arg30: memref<1x1xf32, #tpu.memory_space<vmem>>, %arg31: memref<32x1000xbf16, #tpu.memory_space<any>>, %arg32: memref<1000x512xbf16, #tpu.memory_space<any>>, %arg33: memref<512x84xbf16, #tpu.memory_space<any>>, %arg34: memref<1x1x1xf32, #tpu.memory_space<vmem>>, %arg35: memref<32x1000xbf16, #tpu.memory_space<vmem>>, %arg36: memref<1000x512xbf16, #tpu.memory_space<vmem>>, %arg37: memref<512x84xbf16, #tpu.memory_space<vmem>>, %arg38: memref<3x!tpu.dma_semaphore, #tpu.memory_space<semaphore_mem>>) attributes {dimension_semantics = [#tpu.dimension_semantics<parallel>], iteration_bounds = array<i64: 2>, scalar_prefetch = 0 : i64, scratch_operands = 4 : i64, tpu.core_type = #tpu.core_type<tc>, window_params = [{transform_indices = @transform_0, window_bounds = array<i64: 1, 16, 48>}, {pipeline_mode = #tpu.pipeline_mode<synchronous>, transform_indices = @transform_1, window_bounds = array<i64: 48, 32>}, {pipeline_mode = #tpu.pipeline_mode<synchronous>, transform_indices = @transform_2, window_bounds = array<i64: 1, 32>}, {pipeline_mode = #tpu.pipeline_mode<synchronous>, transform_indices = @transform_3, window_bounds = array<i64: 1, 32>}, {pipeline_mode = #tpu.pipeline_mode<synchronous>, transform_indices = @transform_4, window_bounds = array<i64: 16, 32>}, {pipeline_mode = #tpu.pipeline_mode<synchronous>, transform_indices = @transform_5, window_bounds = array<i64: 32, 96>}, {pipeline_mode = #tpu.pipeline_mode<synchronous>, transform_indices = @transform_6, window_bounds = array<i64: 1, 96>}, {pipeline_mode = #tpu.pipeline_mode<synchronous>, transform_indices = @transform_7, window_bounds = array<i64: 32, 32>}, {pipeline_mode = #tpu.pipeline_mode<synchronous>, transform_indices = @transform_8, window_bounds = array<i64: 1, 32>}, {pipeline_mode = #tpu.pipeline_mode<synchronous>, transform_indices = @transform_9, window_bounds = array<i64: 32, 128>}, {pipeline_mode = #tpu.pipeline_mode<synchronous>, transform_indices = @transform_10, window_bounds = array<i64: 1, 128>}, {pipeline_mode = #tpu.pipeline_mode<synchronous>, transform_indices = @transform_11, window_bounds = array<i64: 128, 32>}, {pipeline_mode = #tpu.pipeline_mode<synchronous>, transform_indices = @transform_12, window_bounds = array<i64: 1, 32>}, {pipeline_mode = #tpu.pipeline_mode<synchronous>, transform_indices = @transform_13, window_bounds = array<i64: 32, 96>}, {pipeline_mode = #tpu.pipeline_mode<synchronous>, transform_indices = @transform_14, window_bounds = array<i64: 1, 96>}, {pipeline_mode = #tpu.pipeline_mode<synchronous>, transform_indices = @transform_15, window_bounds = array<i64: 32, 32>}, {pipeline_mode = #tpu.pipeline_mode<synchronous>, transform_indices = @transform_16, window_bounds = array<i64: 1, 32>}, {pipeline_mode = #tpu.pipeline_mode<synchronous>, transform_indices = @transform_17, window_bounds = array<i64: 32, 128>}, {pipeline_mode = #tpu.pipeline_mode<synchronous>, transform_indices = @transform_18, window_bounds = array<i64: 1, 128>}, {pipeline_mode = #tpu.pipeline_mode<synchronous>, transform_indices = @transform_19, window_bounds = array<i64: 128, 32>}, {pipeline_mode = #tpu.pipeline_mode<synchronous>, transform_indices = @transform_20, window_bounds = array<i64: 1, 32>}, {pipeline_mode = #tpu.pipeline_mode<synchronous>, transform_indices = @transform_21, window_bounds = array<i64: 1, 1000>}, {pipeline_mode = #tpu.pipeline_mode<synchronous>, transform_indices = @transform_22, window_bounds = array<i64: 1, 512>}, {pipeline_mode = #tpu.pipeline_mode<synchronous>, transform_indices = @transform_23, window_bounds = array<i64: 1, 512>}, {pipeline_mode = #tpu.pipeline_mode<synchronous>, transform_indices = @transform_24, window_bounds = array<i64: 1, 512>}, {pipeline_mode = #tpu.pipeline_mode<synchronous>, transform_indices = @transform_25, window_bounds = array<i64: 1, 84>}, {pipeline_mode = #tpu.pipeline_mode<synchronous>, transform_indices = @transform_26, window_bounds = array<i64: 1, 84>}, {pipeline_mode = #tpu.pipeline_mode<synchronous>, transform_indices = @transform_27, window_bounds = array<i64: 1, 84>}, {pipeline_mode = #tpu.pipeline_mode<synchronous>, transform_indices = @transform_28, window_bounds = array<i64: 1, 84>}, {pipeline_mode = #tpu.pipeline_mode<synchronous>, transform_indices = @transform_29, window_bounds = array<i64: 1, 1>}, {}, {}, {}, {transform_indices = @transform_33, window_bounds = array<i64: 1, 1, 1>}]} {
    %c0_i32 = arith.constant 0 : i32
    %0 = tpu.memref_slice %arg38[%c0_i32] : memref<3x!tpu.dma_semaphore, #tpu.memory_space<semaphore_mem>> -> memref<1x!tpu.dma_semaphore, #tpu.memory_space<semaphore_mem>>
    %1 = tpu.memref_squeeze %0 : memref<1x!tpu.dma_semaphore, #tpu.memory_space<semaphore_mem>> -> memref<!tpu.dma_semaphore, #tpu.memory_space<semaphore_mem>>
    tpu.enqueue_dma source(%arg31 : memref<32x1000xbf16, #tpu.memory_space<any>>) target(%arg35 : memref<32x1000xbf16, #tpu.memory_space<vmem>>) target_semaphore(%1 : memref<!tpu.dma_semaphore, #tpu.memory_space<semaphore_mem>>)
    %c1_i32 = arith.constant 1 : i32
    %2 = tpu.memref_slice %arg38[%c1_i32] : memref<3x!tpu.dma_semaphore, #tpu.memory_space<semaphore_mem>> -> memref<1x!tpu.dma_semaphore, #tpu.memory_space<semaphore_mem>>
    %3 = tpu.memref_squeeze %2 : memref<1x!tpu.dma_semaphore, #tpu.memory_space<semaphore_mem>> -> memref<!tpu.dma_semaphore, #tpu.memory_space<semaphore_mem>>
    tpu.enqueue_dma source(%arg32 : memref<1000x512xbf16, #tpu.memory_space<any>>) target(%arg36 : memref<1000x512xbf16, #tpu.memory_space<vmem>>) target_semaphore(%3 : memref<!tpu.dma_semaphore, #tpu.memory_space<semaphore_mem>>)
    %c2_i32 = arith.constant 2 : i32
    %4 = tpu.memref_slice %arg38[%c2_i32] : memref<3x!tpu.dma_semaphore, #tpu.memory_space<semaphore_mem>> -> memref<1x!tpu.dma_semaphore, #tpu.memory_space<semaphore_mem>>
    %5 = tpu.memref_squeeze %4 : memref<1x!tpu.dma_semaphore, #tpu.memory_space<semaphore_mem>> -> memref<!tpu.dma_semaphore, #tpu.memory_space<semaphore_mem>>
    tpu.enqueue_dma source(%arg33 : memref<512x84xbf16, #tpu.memory_space<any>>) target(%arg37 : memref<512x84xbf16, #tpu.memory_space<vmem>>) target_semaphore(%5 : memref<!tpu.dma_semaphore, #tpu.memory_space<semaphore_mem>>)
    %c0 = arith.constant 0 : index
    %c0_0 = arith.constant 0 : index
    %c0_1 = arith.constant 0 : index
    %6 = vector.load %arg1[%c0, %c0_0, %c0_1] : memref<1x16x48xf32, #tpu.memory_space<vmem>>, vector<1x16x48xf32>
    %7 = vector.shape_cast %6 : vector<1x16x48xf32> to vector<16x48xf32>
    %c0_2 = arith.constant 0 : index
    %c0_3 = arith.constant 0 : index
    %8 = vector.load %arg2[%c0_2, %c0_3] : memref<48x32xbf16, #tpu.memory_space<vmem>>, vector<48x32xbf16>
    %9 = arith.truncf %7 : vector<16x48xf32> to vector<16x48xbf16>
    %cst = arith.constant dense<0.000000e+00> : vector<16x32xf32>
    %10 = tpu.matmul %9, %8, %cst {dimension_numbers = #tpu.dot_dimension_numbers<[1], [0], [0], [1], [0, 0, 1, 1], [], []>} : vector<16x48xbf16>, vector<48x32xbf16>, vector<16x32xf32> -> vector<16x32xf32>
    %c0_4 = arith.constant 0 : index
    %c0_5 = arith.constant 0 : index
    %11 = vector.load %arg3[%c0_4, %c0_5] : memref<1x32xf32, #tpu.memory_space<vmem>>, vector<1x32xf32>
    %12 = vector.broadcast %11 : vector<1x32xf32> to vector<16x32xf32>
    %13 = arith.addf %10, %12 : vector<16x32xf32>
    %c0_6 = arith.constant 0 : index
    %c0_7 = arith.constant 0 : index
    %14 = vector.load %arg5[%c0_6, %c0_7] : memref<16x32xf32, #tpu.memory_space<vmem>>, vector<16x32xf32>
    %15 = arith.addf %13, %14 : vector<16x32xf32>
    %c0_8 = arith.constant 0 : index
    %c0_9 = arith.constant 0 : index
    %16 = vector.load %arg4[%c0_8, %c0_9] : memref<1x32xf32, #tpu.memory_space<vmem>>, vector<1x32xf32>
    %17 = tpu.concatenate %16, %15 in 0 : vector<1x32xf32>, vector<16x32xf32> -> vector<17x32xf32>
    %cst_10 = arith.constant dense<0.000000e+00> : vector<17xf32>
    %18 = vector.multi_reduction <add>, %17, %cst_10 [1] : vector<17x32xf32> to vector<17xf32>
    %19 = vector.shape_cast %18 : vector<17xf32> to vector<17x1xf32>
    %cst_11 = arith.constant 3.200000e+01 : f32
    %20 = vector.broadcast %cst_11 : f32 to vector<17x1xf32>
    %21 = arith.divf %19, %20 : vector<17x1xf32>
    %22 = vector.broadcast %21 : vector<17x1xf32> to vector<17x32xf32>
    %23 = arith.subf %17, %22 : vector<17x32xf32>
    %24 = arith.mulf %23, %23 : vector<17x32xf32>
    %cst_12 = arith.constant dense<0.000000e+00> : vector<17xf32>
    %25 = vector.multi_reduction <add>, %24, %cst_12 [1] : vector<17x32xf32> to vector<17xf32>
    %26 = vector.shape_cast %25 : vector<17xf32> to vector<17x1xf32>
    %cst_13 = arith.constant 3.200000e+01 : f32
    %27 = vector.broadcast %cst_13 : f32 to vector<17x1xf32>
    %28 = arith.divf %26, %27 : vector<17x1xf32>
    %cst_14 = arith.constant 9.99999997E-7 : f32
    %29 = vector.broadcast %cst_14 : f32 to vector<17x1xf32>
    %30 = arith.addf %28, %29 : vector<17x1xf32>
    %31 = math.rsqrt %30 : vector<17x1xf32>
    %32 = vector.broadcast %31 : vector<17x1xf32> to vector<17x32xf32>
    %33 = arith.mulf %23, %32 : vector<17x32xf32>
    %c0_15 = arith.constant 0 : index
    %c0_16 = arith.constant 0 : index
    %34 = vector.load %arg6[%c0_15, %c0_16] : memref<32x96xbf16, #tpu.memory_space<vmem>>, vector<32x96xbf16>
    %35 = arith.truncf %33 : vector<17x32xf32> to vector<17x32xbf16>
    %cst_17 = arith.constant dense<0.000000e+00> : vector<17x96xf32>
    %36 = tpu.matmul %35, %34, %cst_17 {dimension_numbers = #tpu.dot_dimension_numbers<[1], [0], [0], [1], [0, 0, 1, 1], [], []>} : vector<17x32xbf16>, vector<32x96xbf16>, vector<17x96xf32> -> vector<17x96xf32>
    %c0_18 = arith.constant 0 : index
    %c0_19 = arith.constant 0 : index
    %37 = vector.load %arg7[%c0_18, %c0_19] : memref<1x96xf32, #tpu.memory_space<vmem>>, vector<1x96xf32>
    %38 = vector.broadcast %37 : vector<1x96xf32> to vector<17x96xf32>
    %39 = arith.addf %36, %38 : vector<17x96xf32>
    %40 = vector.extract_strided_slice %39 {offsets = [0, 0], sizes = [17, 8], strides = [1, 1]} : vector<17x96xf32> to vector<17x8xf32>
    %41 = vector.extract_strided_slice %39 {offsets = [0, 32], sizes = [17, 8], strides = [1, 1]} : vector<17x96xf32> to vector<17x8xf32>
    %42 = vector.extract_strided_slice %39 {offsets = [0, 64], sizes = [17, 8], strides = [1, 1]} : vector<17x96xf32> to vector<17x8xf32>
    %43 = tpu.transpose %41, [1, 0] : vector<17x8xf32> -> vector<8x17xf32>
    %cst_20 = arith.constant dense<0.000000e+00> : vector<17x17xf32>
    %44 = tpu.matmul %40, %43, %cst_20 {dimension_numbers = #tpu.dot_dimension_numbers<[1], [0], [0], [1], [0, 0, 1, 1], [], []>} : vector<17x8xf32>, vector<8x17xf32>, vector<17x17xf32> -> vector<17x17xf32>
    %cst_21 = arith.constant dense<0xFF800000> : vector<17xf32>
    %45 = vector.multi_reduction <maximumf>, %44, %cst_21 [1] : vector<17x17xf32> to vector<17xf32>
    %46 = vector.shape_cast %45 : vector<17xf32> to vector<17x1xf32>
    %47 = vector.broadcast %46 : vector<17x1xf32> to vector<17x17xf32>
    %48 = arith.subf %44, %47 : vector<17x17xf32>
    %49 = math.exp %48 : vector<17x17xf32>
    %cst_22 = arith.constant dense<0.000000e+00> : vector<17xf32>
    %50 = vector.multi_reduction <add>, %49, %cst_22 [1] : vector<17x17xf32> to vector<17xf32>
    %51 = vector.shape_cast %50 : vector<17xf32> to vector<17x1xf32>
    %52 = tpu.reciprocal %51 {approx = true} : vector<17x1xf32> -> vector<17x1xf32>
    %53 = vector.broadcast %52 : vector<17x1xf32> to vector<17x17xf32>
    %54 = arith.mulf %49, %53 : vector<17x17xf32>
    %cst_23 = arith.constant dense<0.000000e+00> : vector<17x8xf32>
    %55 = tpu.matmul %54, %42, %cst_23 {dimension_numbers = #tpu.dot_dimension_numbers<[1], [0], [0], [1], [0, 0, 1, 1], [], []>} : vector<17x17xf32>, vector<17x8xf32>, vector<17x8xf32> -> vector<17x8xf32>
    %56 = vector.extract_strided_slice %39 {offsets = [0, 8], sizes = [17, 8], strides = [1, 1]} : vector<17x96xf32> to vector<17x8xf32>
    %57 = vector.extract_strided_slice %39 {offsets = [0, 40], sizes = [17, 8], strides = [1, 1]} : vector<17x96xf32> to vector<17x8xf32>
    %58 = vector.extract_strided_slice %39 {offsets = [0, 72], sizes = [17, 8], strides = [1, 1]} : vector<17x96xf32> to vector<17x8xf32>
    %59 = tpu.transpose %57, [1, 0] : vector<17x8xf32> -> vector<8x17xf32>
    %cst_24 = arith.constant dense<0.000000e+00> : vector<17x17xf32>
    %60 = tpu.matmul %56, %59, %cst_24 {dimension_numbers = #tpu.dot_dimension_numbers<[1], [0], [0], [1], [0, 0, 1, 1], [], []>} : vector<17x8xf32>, vector<8x17xf32>, vector<17x17xf32> -> vector<17x17xf32>
    %cst_25 = arith.constant dense<0xFF800000> : vector<17xf32>
    %61 = vector.multi_reduction <maximumf>, %60, %cst_25 [1] : vector<17x17xf32> to vector<17xf32>
    %62 = vector.shape_cast %61 : vector<17xf32> to vector<17x1xf32>
    %63 = vector.broadcast %62 : vector<17x1xf32> to vector<17x17xf32>
    %64 = arith.subf %60, %63 : vector<17x17xf32>
    %65 = math.exp %64 : vector<17x17xf32>
    %cst_26 = arith.constant dense<0.000000e+00> : vector<17xf32>
    %66 = vector.multi_reduction <add>, %65, %cst_26 [1] : vector<17x17xf32> to vector<17xf32>
    %67 = vector.shape_cast %66 : vector<17xf32> to vector<17x1xf32>
    %68 = tpu.reciprocal %67 {approx = true} : vector<17x1xf32> -> vector<17x1xf32>
    %69 = vector.broadcast %68 : vector<17x1xf32> to vector<17x17xf32>
    %70 = arith.mulf %65, %69 : vector<17x17xf32>
    %cst_27 = arith.constant dense<0.000000e+00> : vector<17x8xf32>
    %71 = tpu.matmul %70, %58, %cst_27 {dimension_numbers = #tpu.dot_dimension_numbers<[1], [0], [0], [1], [0, 0, 1, 1], [], []>} : vector<17x17xf32>, vector<17x8xf32>, vector<17x8xf32> -> vector<17x8xf32>
    %72 = vector.extract_strided_slice %39 {offsets = [0, 16], sizes = [17, 8], strides = [1, 1]} : vector<17x96xf32> to vector<17x8xf32>
    %73 = vector.extract_strided_slice %39 {offsets = [0, 48], sizes = [17, 8], strides = [1, 1]} : vector<17x96xf32> to vector<17x8xf32>
    %74 = vector.extract_strided_slice %39 {offsets = [0, 80], sizes = [17, 8], strides = [1, 1]} : vector<17x96xf32> to vector<17x8xf32>
    %75 = tpu.transpose %73, [1, 0] : vector<17x8xf32> -> vector<8x17xf32>
    %cst_28 = arith.constant dense<0.000000e+00> : vector<17x17xf32>
    %76 = tpu.matmul %72, %75, %cst_28 {dimension_numbers = #tpu.dot_dimension_numbers<[1], [0], [0], [1], [0, 0, 1, 1], [], []>} : vector<17x8xf32>, vector<8x17xf32>, vector<17x17xf32> -> vector<17x17xf32>
    %cst_29 = arith.constant dense<0xFF800000> : vector<17xf32>
    %77 = vector.multi_reduction <maximumf>, %76, %cst_29 [1] : vector<17x17xf32> to vector<17xf32>
    %78 = vector.shape_cast %77 : vector<17xf32> to vector<17x1xf32>
    %79 = vector.broadcast %78 : vector<17x1xf32> to vector<17x17xf32>
    %80 = arith.subf %76, %79 : vector<17x17xf32>
    %81 = math.exp %80 : vector<17x17xf32>
    %cst_30 = arith.constant dense<0.000000e+00> : vector<17xf32>
    %82 = vector.multi_reduction <add>, %81, %cst_30 [1] : vector<17x17xf32> to vector<17xf32>
    %83 = vector.shape_cast %82 : vector<17xf32> to vector<17x1xf32>
    %84 = tpu.reciprocal %83 {approx = true} : vector<17x1xf32> -> vector<17x1xf32>
    %85 = vector.broadcast %84 : vector<17x1xf32> to vector<17x17xf32>
    %86 = arith.mulf %81, %85 : vector<17x17xf32>
    %cst_31 = arith.constant dense<0.000000e+00> : vector<17x8xf32>
    %87 = tpu.matmul %86, %74, %cst_31 {dimension_numbers = #tpu.dot_dimension_numbers<[1], [0], [0], [1], [0, 0, 1, 1], [], []>} : vector<17x17xf32>, vector<17x8xf32>, vector<17x8xf32> -> vector<17x8xf32>
    %88 = vector.extract_strided_slice %39 {offsets = [0, 24], sizes = [17, 8], strides = [1, 1]} : vector<17x96xf32> to vector<17x8xf32>
    %89 = vector.extract_strided_slice %39 {offsets = [0, 56], sizes = [17, 8], strides = [1, 1]} : vector<17x96xf32> to vector<17x8xf32>
    %90 = vector.extract_strided_slice %39 {offsets = [0, 88], sizes = [17, 8], strides = [1, 1]} : vector<17x96xf32> to vector<17x8xf32>
    %91 = tpu.transpose %89, [1, 0] : vector<17x8xf32> -> vector<8x17xf32>
    %cst_32 = arith.constant dense<0.000000e+00> : vector<17x17xf32>
    %92 = tpu.matmul %88, %91, %cst_32 {dimension_numbers = #tpu.dot_dimension_numbers<[1], [0], [0], [1], [0, 0, 1, 1], [], []>} : vector<17x8xf32>, vector<8x17xf32>, vector<17x17xf32> -> vector<17x17xf32>
    %cst_33 = arith.constant dense<0xFF800000> : vector<17xf32>
    %93 = vector.multi_reduction <maximumf>, %92, %cst_33 [1] : vector<17x17xf32> to vector<17xf32>
    %94 = vector.shape_cast %93 : vector<17xf32> to vector<17x1xf32>
    %95 = vector.broadcast %94 : vector<17x1xf32> to vector<17x17xf32>
    %96 = arith.subf %92, %95 : vector<17x17xf32>
    %97 = math.exp %96 : vector<17x17xf32>
    %cst_34 = arith.constant dense<0.000000e+00> : vector<17xf32>
    %98 = vector.multi_reduction <add>, %97, %cst_34 [1] : vector<17x17xf32> to vector<17xf32>
    %99 = vector.shape_cast %98 : vector<17xf32> to vector<17x1xf32>
    %100 = tpu.reciprocal %99 {approx = true} : vector<17x1xf32> -> vector<17x1xf32>
    %101 = vector.broadcast %100 : vector<17x1xf32> to vector<17x17xf32>
    %102 = arith.mulf %97, %101 : vector<17x17xf32>
    %cst_35 = arith.constant dense<0.000000e+00> : vector<17x8xf32>
    %103 = tpu.matmul %102, %90, %cst_35 {dimension_numbers = #tpu.dot_dimension_numbers<[1], [0], [0], [1], [0, 0, 1, 1], [], []>} : vector<17x17xf32>, vector<17x8xf32>, vector<17x8xf32> -> vector<17x8xf32>
    %104 = tpu.concatenate %55, %71, %87, %103 in 1 : vector<17x8xf32>, vector<17x8xf32>, vector<17x8xf32>, vector<17x8xf32> -> vector<17x32xf32>
    %c0_36 = arith.constant 0 : index
    %c0_37 = arith.constant 0 : index
    %105 = vector.load %arg8[%c0_36, %c0_37] : memref<32x32xf32, #tpu.memory_space<vmem>>, vector<32x32xf32>
    %cst_38 = arith.constant dense<0.000000e+00> : vector<17x32xf32>
    %106 = tpu.matmul %104, %105, %cst_38 {dimension_numbers = #tpu.dot_dimension_numbers<[1], [0], [0], [1], [0, 0, 1, 1], [], []>} : vector<17x32xf32>, vector<32x32xf32>, vector<17x32xf32> -> vector<17x32xf32>
    %107 = arith.addf %17, %106 : vector<17x32xf32>
    %c0_39 = arith.constant 0 : index
    %c0_40 = arith.constant 0 : index
    %108 = vector.load %arg9[%c0_39, %c0_40] : memref<1x32xf32, #tpu.memory_space<vmem>>, vector<1x32xf32>
    %109 = vector.broadcast %108 : vector<1x32xf32> to vector<17x32xf32>
    %110 = arith.addf %107, %109 : vector<17x32xf32>
    %cst_41 = arith.constant dense<0.000000e+00> : vector<17xf32>
    %111 = vector.multi_reduction <add>, %110, %cst_41 [1] : vector<17x32xf32> to vector<17xf32>
    %112 = vector.shape_cast %111 : vector<17xf32> to vector<17x1xf32>
    %cst_42 = arith.constant 3.200000e+01 : f32
    %113 = vector.broadcast %cst_42 : f32 to vector<17x1xf32>
    %114 = arith.divf %112, %113 : vector<17x1xf32>
    %115 = vector.broadcast %114 : vector<17x1xf32> to vector<17x32xf32>
    %116 = arith.subf %110, %115 : vector<17x32xf32>
    %117 = arith.mulf %116, %116 : vector<17x32xf32>
    %cst_43 = arith.constant dense<0.000000e+00> : vector<17xf32>
    %118 = vector.multi_reduction <add>, %117, %cst_43 [1] : vector<17x32xf32> to vector<17xf32>
    %119 = vector.shape_cast %118 : vector<17xf32> to vector<17x1xf32>
    %cst_44 = arith.constant 3.200000e+01 : f32
    %120 = vector.broadcast %cst_44 : f32 to vector<17x1xf32>
    %121 = arith.divf %119, %120 : vector<17x1xf32>
    %cst_45 = arith.constant 9.99999997E-7 : f32
    %122 = vector.broadcast %cst_45 : f32 to vector<17x1xf32>
    %123 = arith.addf %121, %122 : vector<17x1xf32>
    %124 = math.rsqrt %123 : vector<17x1xf32>
    %125 = vector.broadcast %124 : vector<17x1xf32> to vector<17x32xf32>
    %126 = arith.mulf %116, %125 : vector<17x32xf32>
    %c0_46 = arith.constant 0 : index
    %c0_47 = arith.constant 0 : index
    %127 = vector.load %arg10[%c0_46, %c0_47] : memref<32x128xbf16, #tpu.memory_space<vmem>>, vector<32x128xbf16>
    %128 = arith.truncf %126 : vector<17x32xf32> to vector<17x32xbf16>
    %cst_48 = arith.constant dense<0.000000e+00> : vector<17x128xf32>
    %129 = tpu.matmul %128, %127, %cst_48 {dimension_numbers = #tpu.dot_dimension_numbers<[1], [0], [0], [1], [0, 0, 1, 1], [], []>} : vector<17x32xbf16>, vector<32x128xbf16>, vector<17x128xf32> -> vector<17x128xf32>
    %c0_49 = arith.constant 0 : index
    %c0_50 = arith.constant 0 : index
    %130 = vector.load %arg11[%c0_49, %c0_50] : memref<1x128xf32, #tpu.memory_space<vmem>>, vector<1x128xf32>
    %131 = vector.broadcast %130 : vector<1x128xf32> to vector<17x128xf32>
    %132 = arith.addf %129, %131 : vector<17x128xf32>
    %cst_51 = arith.constant 5.000000e-01 : f32
    %133 = vector.broadcast %cst_51 : f32 to vector<17x128xf32>
    %134 = arith.mulf %133, %132 : vector<17x128xf32>
    %cst_52 = arith.constant 0.707106769 : f32
    %135 = vector.broadcast %cst_52 : f32 to vector<17x128xf32>
    %136 = arith.mulf %132, %135 : vector<17x128xf32>
    %137 = math.erf %136 : vector<17x128xf32>
    %cst_53 = arith.constant 1.000000e+00 : f32
    %138 = vector.broadcast %cst_53 : f32 to vector<17x128xf32>
    %139 = arith.addf %138, %137 : vector<17x128xf32>
    %140 = arith.mulf %134, %139 : vector<17x128xf32>
    %c0_54 = arith.constant 0 : index
    %c0_55 = arith.constant 0 : index
    %141 = vector.load %arg12[%c0_54, %c0_55] : memref<128x32xbf16, #tpu.memory_space<vmem>>, vector<128x32xbf16>
    %142 = arith.truncf %140 : vector<17x128xf32> to vector<17x128xbf16>
    %cst_56 = arith.constant dense<0.000000e+00> : vector<17x32xf32>
    %143 = tpu.matmul %142, %141, %cst_56 {dimension_numbers = #tpu.dot_dimension_numbers<[1], [0], [0], [1], [0, 0, 1, 1], [], []>} : vector<17x128xbf16>, vector<128x32xbf16>, vector<17x32xf32> -> vector<17x32xf32>
    %144 = arith.addf %110, %143 : vector<17x32xf32>
    %c0_57 = arith.constant 0 : index
    %c0_58 = arith.constant 0 : index
    %145 = vector.load %arg13[%c0_57, %c0_58] : memref<1x32xf32, #tpu.memory_space<vmem>>, vector<1x32xf32>
    %146 = vector.broadcast %145 : vector<1x32xf32> to vector<17x32xf32>
    %147 = arith.addf %144, %146 : vector<17x32xf32>
    %cst_59 = arith.constant dense<0.000000e+00> : vector<17xf32>
    %148 = vector.multi_reduction <add>, %147, %cst_59 [1] : vector<17x32xf32> to vector<17xf32>
    %149 = vector.shape_cast %148 : vector<17xf32> to vector<17x1xf32>
    %cst_60 = arith.constant 3.200000e+01 : f32
    %150 = vector.broadcast %cst_60 : f32 to vector<17x1xf32>
    %151 = arith.divf %149, %150 : vector<17x1xf32>
    %152 = vector.broadcast %151 : vector<17x1xf32> to vector<17x32xf32>
    %153 = arith.subf %147, %152 : vector<17x32xf32>
    %154 = arith.mulf %153, %153 : vector<17x32xf32>
    %cst_61 = arith.constant dense<0.000000e+00> : vector<17xf32>
    %155 = vector.multi_reduction <add>, %154, %cst_61 [1] : vector<17x32xf32> to vector<17xf32>
    %156 = vector.shape_cast %155 : vector<17xf32> to vector<17x1xf32>
    %cst_62 = arith.constant 3.200000e+01 : f32
    %157 = vector.broadcast %cst_62 : f32 to vector<17x1xf32>
    %158 = arith.divf %156, %157 : vector<17x1xf32>
    %cst_63 = arith.constant 9.99999997E-7 : f32
    %159 = vector.broadcast %cst_63 : f32 to vector<17x1xf32>
    %160 = arith.addf %158, %159 : vector<17x1xf32>
    %161 = math.rsqrt %160 : vector<17x1xf32>
    %162 = vector.broadcast %161 : vector<17x1xf32> to vector<17x32xf32>
    %163 = arith.mulf %153, %162 : vector<17x32xf32>
    %c0_64 = arith.constant 0 : index
    %c0_65 = arith.constant 0 : index
    %164 = vector.load %arg14[%c0_64, %c0_65] : memref<32x96xbf16, #tpu.memory_space<vmem>>, vector<32x96xbf16>
    %165 = arith.truncf %163 : vector<17x32xf32> to vector<17x32xbf16>
    %cst_66 = arith.constant dense<0.000000e+00> : vector<17x96xf32>
    %166 = tpu.matmul %165, %164, %cst_66 {dimension_numbers = #tpu.dot_dimension_numbers<[1], [0], [0], [1], [0, 0, 1, 1], [], []>} : vector<17x32xbf16>, vector<32x96xbf16>, vector<17x96xf32> -> vector<17x96xf32>
    %c0_67 = arith.constant 0 : index
    %c0_68 = arith.constant 0 : index
    %167 = vector.load %arg15[%c0_67, %c0_68] : memref<1x96xf32, #tpu.memory_space<vmem>>, vector<1x96xf32>
    %168 = vector.broadcast %167 : vector<1x96xf32> to vector<17x96xf32>
    %169 = arith.addf %166, %168 : vector<17x96xf32>
    %170 = vector.extract_strided_slice %169 {offsets = [0, 0], sizes = [17, 8], strides = [1, 1]} : vector<17x96xf32> to vector<17x8xf32>
    %171 = vector.extract_strided_slice %169 {offsets = [0, 32], sizes = [17, 8], strides = [1, 1]} : vector<17x96xf32> to vector<17x8xf32>
    %172 = vector.extract_strided_slice %169 {offsets = [0, 64], sizes = [17, 8], strides = [1, 1]} : vector<17x96xf32> to vector<17x8xf32>
    %173 = tpu.transpose %171, [1, 0] : vector<17x8xf32> -> vector<8x17xf32>
    %cst_69 = arith.constant dense<0.000000e+00> : vector<17x17xf32>
    %174 = tpu.matmul %170, %173, %cst_69 {dimension_numbers = #tpu.dot_dimension_numbers<[1], [0], [0], [1], [0, 0, 1, 1], [], []>} : vector<17x8xf32>, vector<8x17xf32>, vector<17x17xf32> -> vector<17x17xf32>
    %cst_70 = arith.constant dense<0xFF800000> : vector<17xf32>
    %175 = vector.multi_reduction <maximumf>, %174, %cst_70 [1] : vector<17x17xf32> to vector<17xf32>
    %176 = vector.shape_cast %175 : vector<17xf32> to vector<17x1xf32>
    %177 = vector.broadcast %176 : vector<17x1xf32> to vector<17x17xf32>
    %178 = arith.subf %174, %177 : vector<17x17xf32>
    %179 = math.exp %178 : vector<17x17xf32>
    %cst_71 = arith.constant dense<0.000000e+00> : vector<17xf32>
    %180 = vector.multi_reduction <add>, %179, %cst_71 [1] : vector<17x17xf32> to vector<17xf32>
    %181 = vector.shape_cast %180 : vector<17xf32> to vector<17x1xf32>
    %182 = tpu.reciprocal %181 {approx = true} : vector<17x1xf32> -> vector<17x1xf32>
    %183 = vector.broadcast %182 : vector<17x1xf32> to vector<17x17xf32>
    %184 = arith.mulf %179, %183 : vector<17x17xf32>
    %cst_72 = arith.constant dense<0.000000e+00> : vector<17x8xf32>
    %185 = tpu.matmul %184, %172, %cst_72 {dimension_numbers = #tpu.dot_dimension_numbers<[1], [0], [0], [1], [0, 0, 1, 1], [], []>} : vector<17x17xf32>, vector<17x8xf32>, vector<17x8xf32> -> vector<17x8xf32>
    %186 = vector.extract_strided_slice %169 {offsets = [0, 8], sizes = [17, 8], strides = [1, 1]} : vector<17x96xf32> to vector<17x8xf32>
    %187 = vector.extract_strided_slice %169 {offsets = [0, 40], sizes = [17, 8], strides = [1, 1]} : vector<17x96xf32> to vector<17x8xf32>
    %188 = vector.extract_strided_slice %169 {offsets = [0, 72], sizes = [17, 8], strides = [1, 1]} : vector<17x96xf32> to vector<17x8xf32>
    %189 = tpu.transpose %187, [1, 0] : vector<17x8xf32> -> vector<8x17xf32>
    %cst_73 = arith.constant dense<0.000000e+00> : vector<17x17xf32>
    %190 = tpu.matmul %186, %189, %cst_73 {dimension_numbers = #tpu.dot_dimension_numbers<[1], [0], [0], [1], [0, 0, 1, 1], [], []>} : vector<17x8xf32>, vector<8x17xf32>, vector<17x17xf32> -> vector<17x17xf32>
    %cst_74 = arith.constant dense<0xFF800000> : vector<17xf32>
    %191 = vector.multi_reduction <maximumf>, %190, %cst_74 [1] : vector<17x17xf32> to vector<17xf32>
    %192 = vector.shape_cast %191 : vector<17xf32> to vector<17x1xf32>
    %193 = vector.broadcast %192 : vector<17x1xf32> to vector<17x17xf32>
    %194 = arith.subf %190, %193 : vector<17x17xf32>
    %195 = math.exp %194 : vector<17x17xf32>
    %cst_75 = arith.constant dense<0.000000e+00> : vector<17xf32>
    %196 = vector.multi_reduction <add>, %195, %cst_75 [1] : vector<17x17xf32> to vector<17xf32>
    %197 = vector.shape_cast %196 : vector<17xf32> to vector<17x1xf32>
    %198 = tpu.reciprocal %197 {approx = true} : vector<17x1xf32> -> vector<17x1xf32>
    %199 = vector.broadcast %198 : vector<17x1xf32> to vector<17x17xf32>
    %200 = arith.mulf %195, %199 : vector<17x17xf32>
    %cst_76 = arith.constant dense<0.000000e+00> : vector<17x8xf32>
    %201 = tpu.matmul %200, %188, %cst_76 {dimension_numbers = #tpu.dot_dimension_numbers<[1], [0], [0], [1], [0, 0, 1, 1], [], []>} : vector<17x17xf32>, vector<17x8xf32>, vector<17x8xf32> -> vector<17x8xf32>
    %202 = vector.extract_strided_slice %169 {offsets = [0, 16], sizes = [17, 8], strides = [1, 1]} : vector<17x96xf32> to vector<17x8xf32>
    %203 = vector.extract_strided_slice %169 {offsets = [0, 48], sizes = [17, 8], strides = [1, 1]} : vector<17x96xf32> to vector<17x8xf32>
    %204 = vector.extract_strided_slice %169 {offsets = [0, 80], sizes = [17, 8], strides = [1, 1]} : vector<17x96xf32> to vector<17x8xf32>
    %205 = tpu.transpose %203, [1, 0] : vector<17x8xf32> -> vector<8x17xf32>
    %cst_77 = arith.constant dense<0.000000e+00> : vector<17x17xf32>
    %206 = tpu.matmul %202, %205, %cst_77 {dimension_numbers = #tpu.dot_dimension_numbers<[1], [0], [0], [1], [0, 0, 1, 1], [], []>} : vector<17x8xf32>, vector<8x17xf32>, vector<17x17xf32> -> vector<17x17xf32>
    %cst_78 = arith.constant dense<0xFF800000> : vector<17xf32>
    %207 = vector.multi_reduction <maximumf>, %206, %cst_78 [1] : vector<17x17xf32> to vector<17xf32>
    %208 = vector.shape_cast %207 : vector<17xf32> to vector<17x1xf32>
    %209 = vector.broadcast %208 : vector<17x1xf32> to vector<17x17xf32>
    %210 = arith.subf %206, %209 : vector<17x17xf32>
    %211 = math.exp %210 : vector<17x17xf32>
    %cst_79 = arith.constant dense<0.000000e+00> : vector<17xf32>
    %212 = vector.multi_reduction <add>, %211, %cst_79 [1] : vector<17x17xf32> to vector<17xf32>
    %213 = vector.shape_cast %212 : vector<17xf32> to vector<17x1xf32>
    %214 = tpu.reciprocal %213 {approx = true} : vector<17x1xf32> -> vector<17x1xf32>
    %215 = vector.broadcast %214 : vector<17x1xf32> to vector<17x17xf32>
    %216 = arith.mulf %211, %215 : vector<17x17xf32>
    %cst_80 = arith.constant dense<0.000000e+00> : vector<17x8xf32>
    %217 = tpu.matmul %216, %204, %cst_80 {dimension_numbers = #tpu.dot_dimension_numbers<[1], [0], [0], [1], [0, 0, 1, 1], [], []>} : vector<17x17xf32>, vector<17x8xf32>, vector<17x8xf32> -> vector<17x8xf32>
    %218 = vector.extract_strided_slice %169 {offsets = [0, 24], sizes = [17, 8], strides = [1, 1]} : vector<17x96xf32> to vector<17x8xf32>
    %219 = vector.extract_strided_slice %169 {offsets = [0, 56], sizes = [17, 8], strides = [1, 1]} : vector<17x96xf32> to vector<17x8xf32>
    %220 = vector.extract_strided_slice %169 {offsets = [0, 88], sizes = [17, 8], strides = [1, 1]} : vector<17x96xf32> to vector<17x8xf32>
    %221 = tpu.transpose %219, [1, 0] : vector<17x8xf32> -> vector<8x17xf32>
    %cst_81 = arith.constant dense<0.000000e+00> : vector<17x17xf32>
    %222 = tpu.matmul %218, %221, %cst_81 {dimension_numbers = #tpu.dot_dimension_numbers<[1], [0], [0], [1], [0, 0, 1, 1], [], []>} : vector<17x8xf32>, vector<8x17xf32>, vector<17x17xf32> -> vector<17x17xf32>
    %cst_82 = arith.constant dense<0xFF800000> : vector<17xf32>
    %223 = vector.multi_reduction <maximumf>, %222, %cst_82 [1] : vector<17x17xf32> to vector<17xf32>
    %224 = vector.shape_cast %223 : vector<17xf32> to vector<17x1xf32>
    %225 = vector.broadcast %224 : vector<17x1xf32> to vector<17x17xf32>
    %226 = arith.subf %222, %225 : vector<17x17xf32>
    %227 = math.exp %226 : vector<17x17xf32>
    %cst_83 = arith.constant dense<0.000000e+00> : vector<17xf32>
    %228 = vector.multi_reduction <add>, %227, %cst_83 [1] : vector<17x17xf32> to vector<17xf32>
    %229 = vector.shape_cast %228 : vector<17xf32> to vector<17x1xf32>
    %230 = tpu.reciprocal %229 {approx = true} : vector<17x1xf32> -> vector<17x1xf32>
    %231 = vector.broadcast %230 : vector<17x1xf32> to vector<17x17xf32>
    %232 = arith.mulf %227, %231 : vector<17x17xf32>
    %cst_84 = arith.constant dense<0.000000e+00> : vector<17x8xf32>
    %233 = tpu.matmul %232, %220, %cst_84 {dimension_numbers = #tpu.dot_dimension_numbers<[1], [0], [0], [1], [0, 0, 1, 1], [], []>} : vector<17x17xf32>, vector<17x8xf32>, vector<17x8xf32> -> vector<17x8xf32>
    %234 = tpu.concatenate %185, %201, %217, %233 in 1 : vector<17x8xf32>, vector<17x8xf32>, vector<17x8xf32>, vector<17x8xf32> -> vector<17x32xf32>
    %c0_85 = arith.constant 0 : index
    %c0_86 = arith.constant 0 : index
    %235 = vector.load %arg16[%c0_85, %c0_86] : memref<32x32xf32, #tpu.memory_space<vmem>>, vector<32x32xf32>
    %cst_87 = arith.constant dense<0.000000e+00> : vector<17x32xf32>
    %236 = tpu.matmul %234, %235, %cst_87 {dimension_numbers = #tpu.dot_dimension_numbers<[1], [0], [0], [1], [0, 0, 1, 1], [], []>} : vector<17x32xf32>, vector<32x32xf32>, vector<17x32xf32> -> vector<17x32xf32>
    %237 = arith.addf %147, %236 : vector<17x32xf32>
    %c0_88 = arith.constant 0 : index
    %c0_89 = arith.constant 0 : index
    %238 = vector.load %arg17[%c0_88, %c0_89] : memref<1x32xf32, #tpu.memory_space<vmem>>, vector<1x32xf32>
    %239 = vector.broadcast %238 : vector<1x32xf32> to vector<17x32xf32>
    %240 = arith.addf %237, %239 : vector<17x32xf32>
    %cst_90 = arith.constant dense<0.000000e+00> : vector<17xf32>
    %241 = vector.multi_reduction <add>, %240, %cst_90 [1] : vector<17x32xf32> to vector<17xf32>
    %242 = vector.shape_cast %241 : vector<17xf32> to vector<17x1xf32>
    %cst_91 = arith.constant 3.200000e+01 : f32
    %243 = vector.broadcast %cst_91 : f32 to vector<17x1xf32>
    %244 = arith.divf %242, %243 : vector<17x1xf32>
    %245 = vector.broadcast %244 : vector<17x1xf32> to vector<17x32xf32>
    %246 = arith.subf %240, %245 : vector<17x32xf32>
    %247 = arith.mulf %246, %246 : vector<17x32xf32>
    %cst_92 = arith.constant dense<0.000000e+00> : vector<17xf32>
    %248 = vector.multi_reduction <add>, %247, %cst_92 [1] : vector<17x32xf32> to vector<17xf32>
    %249 = vector.shape_cast %248 : vector<17xf32> to vector<17x1xf32>
    %cst_93 = arith.constant 3.200000e+01 : f32
    %250 = vector.broadcast %cst_93 : f32 to vector<17x1xf32>
    %251 = arith.divf %249, %250 : vector<17x1xf32>
    %cst_94 = arith.constant 9.99999997E-7 : f32
    %252 = vector.broadcast %cst_94 : f32 to vector<17x1xf32>
    %253 = arith.addf %251, %252 : vector<17x1xf32>
    %254 = math.rsqrt %253 : vector<17x1xf32>
    %255 = vector.broadcast %254 : vector<17x1xf32> to vector<17x32xf32>
    %256 = arith.mulf %246, %255 : vector<17x32xf32>
    %c0_95 = arith.constant 0 : index
    %c0_96 = arith.constant 0 : index
    %257 = vector.load %arg18[%c0_95, %c0_96] : memref<32x128xbf16, #tpu.memory_space<vmem>>, vector<32x128xbf16>
    %258 = arith.truncf %256 : vector<17x32xf32> to vector<17x32xbf16>
    %cst_97 = arith.constant dense<0.000000e+00> : vector<17x128xf32>
    %259 = tpu.matmul %258, %257, %cst_97 {dimension_numbers = #tpu.dot_dimension_numbers<[1], [0], [0], [1], [0, 0, 1, 1], [], []>} : vector<17x32xbf16>, vector<32x128xbf16>, vector<17x128xf32> -> vector<17x128xf32>
    %c0_98 = arith.constant 0 : index
    %c0_99 = arith.constant 0 : index
    %260 = vector.load %arg19[%c0_98, %c0_99] : memref<1x128xf32, #tpu.memory_space<vmem>>, vector<1x128xf32>
    %261 = vector.broadcast %260 : vector<1x128xf32> to vector<17x128xf32>
    %262 = arith.addf %259, %261 : vector<17x128xf32>
    %cst_100 = arith.constant 5.000000e-01 : f32
    %263 = vector.broadcast %cst_100 : f32 to vector<17x128xf32>
    %264 = arith.mulf %263, %262 : vector<17x128xf32>
    %cst_101 = arith.constant 0.707106769 : f32
    %265 = vector.broadcast %cst_101 : f32 to vector<17x128xf32>
    %266 = arith.mulf %262, %265 : vector<17x128xf32>
    %267 = math.erf %266 : vector<17x128xf32>
    %cst_102 = arith.constant 1.000000e+00 : f32
    %268 = vector.broadcast %cst_102 : f32 to vector<17x128xf32>
    %269 = arith.addf %268, %267 : vector<17x128xf32>
    %270 = arith.mulf %264, %269 : vector<17x128xf32>
    %c0_103 = arith.constant 0 : index
    %c0_104 = arith.constant 0 : index
    %271 = vector.load %arg20[%c0_103, %c0_104] : memref<128x32xbf16, #tpu.memory_space<vmem>>, vector<128x32xbf16>
    %272 = arith.truncf %270 : vector<17x128xf32> to vector<17x128xbf16>
    %cst_105 = arith.constant dense<0.000000e+00> : vector<17x32xf32>
    %273 = tpu.matmul %272, %271, %cst_105 {dimension_numbers = #tpu.dot_dimension_numbers<[1], [0], [0], [1], [0, 0, 1, 1], [], []>} : vector<17x128xbf16>, vector<128x32xbf16>, vector<17x32xf32> -> vector<17x32xf32>
    %274 = arith.addf %240, %273 : vector<17x32xf32>
    %c0_106 = arith.constant 0 : index
    %c0_107 = arith.constant 0 : index
    %275 = vector.load %arg21[%c0_106, %c0_107] : memref<1x32xf32, #tpu.memory_space<vmem>>, vector<1x32xf32>
    %276 = vector.broadcast %275 : vector<1x32xf32> to vector<17x32xf32>
    %277 = arith.addf %274, %276 : vector<17x32xf32>
    %278 = vector.extract_strided_slice %277 {offsets = [0, 0], sizes = [1, 32], strides = [1, 1]} : vector<17x32xf32> to vector<1x32xf32>
    %cst_108 = arith.constant dense<0.000000e+00> : vector<1xf32>
    %279 = vector.multi_reduction <add>, %278, %cst_108 [1] : vector<1x32xf32> to vector<1xf32>
    %280 = vector.shape_cast %279 : vector<1xf32> to vector<1x1xf32>
    %cst_109 = arith.constant 3.200000e+01 : f32
    %281 = vector.broadcast %cst_109 : f32 to vector<1x1xf32>
    %282 = arith.divf %280, %281 : vector<1x1xf32>
    %283 = vector.broadcast %282 : vector<1x1xf32> to vector<1x32xf32>
    %284 = arith.subf %278, %283 : vector<1x32xf32>
    %285 = arith.mulf %284, %284 : vector<1x32xf32>
    %cst_110 = arith.constant dense<0.000000e+00> : vector<1xf32>
    %286 = vector.multi_reduction <add>, %285, %cst_110 [1] : vector<1x32xf32> to vector<1xf32>
    %287 = vector.shape_cast %286 : vector<1xf32> to vector<1x1xf32>
    %cst_111 = arith.constant 3.200000e+01 : f32
    %288 = vector.broadcast %cst_111 : f32 to vector<1x1xf32>
    %289 = arith.divf %287, %288 : vector<1x1xf32>
    %cst_112 = arith.constant 9.99999997E-7 : f32
    %290 = vector.broadcast %cst_112 : f32 to vector<1x1xf32>
    %291 = arith.addf %289, %290 : vector<1x1xf32>
    %292 = math.rsqrt %291 : vector<1x1xf32>
    %293 = vector.broadcast %292 : vector<1x1xf32> to vector<1x32xf32>
    %294 = arith.mulf %284, %293 : vector<1x32xf32>
    %c0_i32_113 = arith.constant 0 : i32
    %295 = tpu.memref_slice %arg38[%c0_i32_113] : memref<3x!tpu.dma_semaphore, #tpu.memory_space<semaphore_mem>> -> memref<1x!tpu.dma_semaphore, #tpu.memory_space<semaphore_mem>>
    %296 = tpu.memref_squeeze %295 : memref<1x!tpu.dma_semaphore, #tpu.memory_space<semaphore_mem>> -> memref<!tpu.dma_semaphore, #tpu.memory_space<semaphore_mem>>
    tpu.wait_dma2 semaphore(%296 : memref<!tpu.dma_semaphore, #tpu.memory_space<semaphore_mem>>) src(%arg31 : memref<32x1000xbf16, #tpu.memory_space<any>>) dst(%arg35 : memref<32x1000xbf16, #tpu.memory_space<vmem>>)
    %c1_i32_114 = arith.constant 1 : i32
    %297 = tpu.memref_slice %arg38[%c1_i32_114] : memref<3x!tpu.dma_semaphore, #tpu.memory_space<semaphore_mem>> -> memref<1x!tpu.dma_semaphore, #tpu.memory_space<semaphore_mem>>
    %298 = tpu.memref_squeeze %297 : memref<1x!tpu.dma_semaphore, #tpu.memory_space<semaphore_mem>> -> memref<!tpu.dma_semaphore, #tpu.memory_space<semaphore_mem>>
    tpu.wait_dma2 semaphore(%298 : memref<!tpu.dma_semaphore, #tpu.memory_space<semaphore_mem>>) src(%arg32 : memref<1000x512xbf16, #tpu.memory_space<any>>) dst(%arg36 : memref<1000x512xbf16, #tpu.memory_space<vmem>>)
    %c2_i32_115 = arith.constant 2 : i32
    %299 = tpu.memref_slice %arg38[%c2_i32_115] : memref<3x!tpu.dma_semaphore, #tpu.memory_space<semaphore_mem>> -> memref<1x!tpu.dma_semaphore, #tpu.memory_space<semaphore_mem>>
    %300 = tpu.memref_squeeze %299 : memref<1x!tpu.dma_semaphore, #tpu.memory_space<semaphore_mem>> -> memref<!tpu.dma_semaphore, #tpu.memory_space<semaphore_mem>>
    tpu.wait_dma2 semaphore(%300 : memref<!tpu.dma_semaphore, #tpu.memory_space<semaphore_mem>>) src(%arg33 : memref<512x84xbf16, #tpu.memory_space<any>>) dst(%arg37 : memref<512x84xbf16, #tpu.memory_space<vmem>>)
    %c0_116 = arith.constant 0 : index
    %c0_117 = arith.constant 0 : index
    %301 = vector.load %arg35[%c0_116, %c0_117] : memref<32x1000xbf16, #tpu.memory_space<vmem>>, vector<32x1000xbf16>
    %302 = arith.truncf %294 : vector<1x32xf32> to vector<1x32xbf16>
    %cst_118 = arith.constant dense<0.000000e+00> : vector<1x1000xf32>
    %303 = tpu.matmul %302, %301, %cst_118 {dimension_numbers = #tpu.dot_dimension_numbers<[1], [0], [0], [1], [0, 0, 1, 1], [], []>} : vector<1x32xbf16>, vector<32x1000xbf16>, vector<1x1000xf32> -> vector<1x1000xf32>
    %c0_119 = arith.constant 0 : index
    %c0_120 = arith.constant 0 : index
    %304 = vector.load %arg22[%c0_119, %c0_120] : memref<1x1000xf32, #tpu.memory_space<vmem>>, vector<1x1000xf32>
    %305 = arith.addf %303, %304 : vector<1x1000xf32>
    %c0_121 = arith.constant 0 : index
    %c0_122 = arith.constant 0 : index
    %306 = vector.load %arg36[%c0_121, %c0_122] : memref<1000x512xbf16, #tpu.memory_space<vmem>>, vector<1000x512xbf16>
    %307 = arith.truncf %305 : vector<1x1000xf32> to vector<1x1000xbf16>
    %cst_123 = arith.constant dense<0.000000e+00> : vector<1x512xf32>
    %308 = tpu.matmul %307, %306, %cst_123 {dimension_numbers = #tpu.dot_dimension_numbers<[1], [0], [0], [1], [0, 0, 1, 1], [], []>} : vector<1x1000xbf16>, vector<1000x512xbf16>, vector<1x512xf32> -> vector<1x512xf32>
    %c0_124 = arith.constant 0 : index
    %c0_125 = arith.constant 0 : index
    %309 = vector.load %arg23[%c0_124, %c0_125] : memref<1x512xf32, #tpu.memory_space<vmem>>, vector<1x512xf32>
    %310 = arith.addf %308, %309 : vector<1x512xf32>
    %311 = arith.negf %310 : vector<1x512xf32>
    %312 = math.exp %311 : vector<1x512xf32>
    %cst_126 = arith.constant 1.000000e+00 : f32
    %313 = vector.broadcast %cst_126 : f32 to vector<1x512xf32>
    %314 = arith.addf %313, %312 : vector<1x512xf32>
    %315 = arith.divf %313, %314 : vector<1x512xf32>
    %316 = arith.mulf %310, %315 : vector<1x512xf32>
    %c0_127 = arith.constant 0 : index
    %c0_128 = arith.constant 0 : index
    %317 = vector.load %arg24[%c0_127, %c0_128] : memref<1x512xf32, #tpu.memory_space<vmem>>, vector<1x512xf32>
    %318 = arith.mulf %316, %317 : vector<1x512xf32>
    %c0_129 = arith.constant 0 : index
    %c0_130 = arith.constant 0 : index
    %319 = vector.load %arg25[%c0_129, %c0_130] : memref<1x512xf32, #tpu.memory_space<vmem>>, vector<1x512xf32>
    %320 = arith.addf %318, %319 : vector<1x512xf32>
    %c0_131 = arith.constant 0 : index
    %c0_132 = arith.constant 0 : index
    %321 = vector.load %arg37[%c0_131, %c0_132] : memref<512x84xbf16, #tpu.memory_space<vmem>>, vector<512x84xbf16>
    %322 = arith.truncf %320 : vector<1x512xf32> to vector<1x512xbf16>
    %cst_133 = arith.constant dense<0.000000e+00> : vector<1x84xf32>
    %323 = tpu.matmul %322, %321, %cst_133 {dimension_numbers = #tpu.dot_dimension_numbers<[1], [0], [0], [1], [0, 0, 1, 1], [], []>} : vector<1x512xbf16>, vector<512x84xbf16>, vector<1x84xf32> -> vector<1x84xf32>
    %c0_134 = arith.constant 0 : index
    %c0_135 = arith.constant 0 : index
    %324 = vector.load %arg26[%c0_134, %c0_135] : memref<1x84xf32, #tpu.memory_space<vmem>>, vector<1x84xf32>
    %325 = arith.addf %323, %324 : vector<1x84xf32>
    %326 = arith.negf %325 : vector<1x84xf32>
    %327 = math.exp %326 : vector<1x84xf32>
    %cst_136 = arith.constant 1.000000e+00 : f32
    %328 = vector.broadcast %cst_136 : f32 to vector<1x84xf32>
    %329 = arith.addf %328, %327 : vector<1x84xf32>
    %330 = arith.divf %328, %329 : vector<1x84xf32>
    %331 = arith.mulf %325, %330 : vector<1x84xf32>
    %c0_137 = arith.constant 0 : index
    %c0_138 = arith.constant 0 : index
    %332 = vector.load %arg27[%c0_137, %c0_138] : memref<1x84xf32, #tpu.memory_space<vmem>>, vector<1x84xf32>
    %333 = arith.mulf %331, %332 : vector<1x84xf32>
    %c0_139 = arith.constant 0 : index
    %c0_140 = arith.constant 0 : index
    %334 = vector.load %arg28[%c0_139, %c0_140] : memref<1x84xf32, #tpu.memory_space<vmem>>, vector<1x84xf32>
    %335 = arith.addf %333, %334 : vector<1x84xf32>
    %c0_141 = arith.constant 0 : index
    %c0_142 = arith.constant 0 : index
    %336 = vector.load %arg29[%c0_141, %c0_142] : memref<1x84xf32, #tpu.memory_space<vmem>>, vector<1x84xf32>
    %337 = arith.mulf %335, %336 : vector<1x84xf32>
    %cst_143 = arith.constant dense<0.000000e+00> : vector<1xf32>
    %338 = vector.multi_reduction <add>, %337, %cst_143 [1] : vector<1x84xf32> to vector<1xf32>
    %339 = vector.shape_cast %338 : vector<1xf32> to vector<1x1xf32>
    %c0_144 = arith.constant 0 : index
    %c0_145 = arith.constant 0 : index
    %340 = vector.load %arg30[%c0_144, %c0_145] : memref<1x1xf32, #tpu.memory_space<vmem>>, vector<1x1xf32>
    %341 = arith.addf %339, %340 : vector<1x1xf32>
    %342 = arith.negf %341 : vector<1x1xf32>
    %343 = math.exp %342 : vector<1x1xf32>
    %cst_146 = arith.constant 1.000000e+00 : f32
    %344 = vector.broadcast %cst_146 : f32 to vector<1x1xf32>
    %345 = arith.addf %344, %343 : vector<1x1xf32>
    %346 = arith.divf %344, %345 : vector<1x1xf32>
    %c0_147 = arith.constant 0 : index
    %c0_148 = arith.constant 0 : index
    %c0_149 = arith.constant 0 : index
    %347 = vector.load %arg34[%c0_147, %c0_148, %c0_149] : memref<1x1x1xf32, #tpu.memory_space<vmem>>, vector<1x1x1xf32>
    %348 = vector.shape_cast %347 : vector<1x1x1xf32> to vector<1x1xf32>
    %349 = vector.shape_cast %346 : vector<1x1xf32> to vector<1x1x1xf32>
    tpu.vector_store %arg34[%c0_147, %c0_148, %c0_149], %349 {strides = array<i32>} : memref<1x1x1xf32, #tpu.memory_space<vmem>>, vector<1x1x1xf32>,
    return
  }
  func.func @transform_0(%arg0: i32) -> (i32, i32, i32) {
    %c0_i32 = arith.constant 0 : i32
    %c0_i32_0 = arith.constant 0 : i32
    %c0_i32_1 = arith.constant 0 : i32
    return %arg0, %c0_i32, %c0_i32_0 : i32, i32, i32
  }
  func.func @transform_1(%arg0: i32) -> (i32, i32) {
    %c0_i32 = arith.constant 0 : i32
    %c0_i32_0 = arith.constant 0 : i32
    %c0_i32_1 = arith.constant 0 : i32
    return %c0_i32, %c0_i32_0 : i32, i32
  }
  func.func @transform_2(%arg0: i32) -> (i32, i32) {
    %c0_i32 = arith.constant 0 : i32
    %c0_i32_0 = arith.constant 0 : i32
    %c0_i32_1 = arith.constant 0 : i32
    return %c0_i32, %c0_i32_0 : i32, i32
  }
  func.func @transform_3(%arg0: i32) -> (i32, i32) {
    %c0_i32 = arith.constant 0 : i32
    %c0_i32_0 = arith.constant 0 : i32
    %c0_i32_1 = arith.constant 0 : i32
    return %c0_i32, %c0_i32_0 : i32, i32
  }
  func.func @transform_4(%arg0: i32) -> (i32, i32) {
    %c0_i32 = arith.constant 0 : i32
    %c0_i32_0 = arith.constant 0 : i32
    %c0_i32_1 = arith.constant 0 : i32
    return %c0_i32, %c0_i32_0 : i32, i32
  }
  func.func @transform_5(%arg0: i32) -> (i32, i32) {
    %c0_i32 = arith.constant 0 : i32
    %c0_i32_0 = arith.constant 0 : i32
    %c0_i32_1 = arith.constant 0 : i32
    return %c0_i32, %c0_i32_0 : i32, i32
  }
  func.func @transform_6(%arg0: i32) -> (i32, i32) {
    %c0_i32 = arith.constant 0 : i32
    %c0_i32_0 = arith.constant 0 : i32
    %c0_i32_1 = arith.constant 0 : i32
    return %c0_i32, %c0_i32_0 : i32, i32
  }
  func.func @transform_7(%arg0: i32) -> (i32, i32) {
    %c0_i32 = arith.constant 0 : i32
    %c0_i32_0 = arith.constant 0 : i32
    %c0_i32_1 = arith.constant 0 : i32
    return %c0_i32, %c0_i32_0 : i32, i32
  }
  func.func @transform_8(%arg0: i32) -> (i32, i32) {
    %c0_i32 = arith.constant 0 : i32
    %c0_i32_0 = arith.constant 0 : i32
    %c0_i32_1 = arith.constant 0 : i32
    return %c0_i32, %c0_i32_0 : i32, i32
  }
  func.func @transform_9(%arg0: i32) -> (i32, i32) {
    %c0_i32 = arith.constant 0 : i32
    %c0_i32_0 = arith.constant 0 : i32
    %c0_i32_1 = arith.constant 0 : i32
    return %c0_i32, %c0_i32_0 : i32, i32
  }
  func.func @transform_10(%arg0: i32) -> (i32, i32) {
    %c0_i32 = arith.constant 0 : i32
    %c0_i32_0 = arith.constant 0 : i32
    %c0_i32_1 = arith.constant 0 : i32
    return %c0_i32, %c0_i32_0 : i32, i32
  }
  func.func @transform_11(%arg0: i32) -> (i32, i32) {
    %c0_i32 = arith.constant 0 : i32
    %c0_i32_0 = arith.constant 0 : i32
    %c0_i32_1 = arith.constant 0 : i32
    return %c0_i32, %c0_i32_0 : i32, i32
  }
  func.func @transform_12(%arg0: i32) -> (i32, i32) {
    %c0_i32 = arith.constant 0 : i32
    %c0_i32_0 = arith.constant 0 : i32
    %c0_i32_1 = arith.constant 0 : i32
    return %c0_i32, %c0_i32_0 : i32, i32
  }
  func.func @transform_13(%arg0: i32) -> (i32, i32) {
    %c0_i32 = arith.constant 0 : i32
    %c0_i32_0 = arith.constant 0 : i32
    %c0_i32_1 = arith.constant 0 : i32
    return %c0_i32, %c0_i32_0 : i32, i32
  }
  func.func @transform_14(%arg0: i32) -> (i32, i32) {
    %c0_i32 = arith.constant 0 : i32
    %c0_i32_0 = arith.constant 0 : i32
    %c0_i32_1 = arith.constant 0 : i32
    return %c0_i32, %c0_i32_0 : i32, i32
  }
  func.func @transform_15(%arg0: i32) -> (i32, i32) {
    %c0_i32 = arith.constant 0 : i32
    %c0_i32_0 = arith.constant 0 : i32
    %c0_i32_1 = arith.constant 0 : i32
    return %c0_i32, %c0_i32_0 : i32, i32
  }
  func.func @transform_16(%arg0: i32) -> (i32, i32) {
    %c0_i32 = arith.constant 0 : i32
    %c0_i32_0 = arith.constant 0 : i32
    %c0_i32_1 = arith.constant 0 : i32
    return %c0_i32, %c0_i32_0 : i32, i32
  }
  func.func @transform_17(%arg0: i32) -> (i32, i32) {
    %c0_i32 = arith.constant 0 : i32
    %c0_i32_0 = arith.constant 0 : i32
    %c0_i32_1 = arith.constant 0 : i32
    return %c0_i32, %c0_i32_0 : i32, i32
  }
  func.func @transform_18(%arg0: i32) -> (i32, i32) {
    %c0_i32 = arith.constant 0 : i32
    %c0_i32_0 = arith.constant 0 : i32
    %c0_i32_1 = arith.constant 0 : i32
    return %c0_i32, %c0_i32_0 : i32, i32
  }
  func.func @transform_19(%arg0: i32) -> (i32, i32) {
    %c0_i32 = arith.constant 0 : i32
    %c0_i32_0 = arith.constant 0 : i32
    %c0_i32_1 = arith.constant 0 : i32
    return %c0_i32, %c0_i32_0 : i32, i32
  }
  func.func @transform_20(%arg0: i32) -> (i32, i32) {
    %c0_i32 = arith.constant 0 : i32
    %c0_i32_0 = arith.constant 0 : i32
    %c0_i32_1 = arith.constant 0 : i32
    return %c0_i32, %c0_i32_0 : i32, i32
  }
  func.func @transform_21(%arg0: i32) -> (i32, i32) {
    %c0_i32 = arith.constant 0 : i32
    %c0_i32_0 = arith.constant 0 : i32
    %c0_i32_1 = arith.constant 0 : i32
    return %c0_i32, %c0_i32_0 : i32, i32
  }
  func.func @transform_22(%arg0: i32) -> (i32, i32) {
    %c0_i32 = arith.constant 0 : i32
    %c0_i32_0 = arith.constant 0 : i32
    %c0_i32_1 = arith.constant 0 : i32
    return %c0_i32, %c0_i32_0 : i32, i32
  }
  func.func @transform_23(%arg0: i32) -> (i32, i32) {
    %c0_i32 = arith.constant 0 : i32
    %c0_i32_0 = arith.constant 0 : i32
    %c0_i32_1 = arith.constant 0 : i32
    return %c0_i32, %c0_i32_0 : i32, i32
  }
  func.func @transform_24(%arg0: i32) -> (i32, i32) {
    %c0_i32 = arith.constant 0 : i32
    %c0_i32_0 = arith.constant 0 : i32
    %c0_i32_1 = arith.constant 0 : i32
    return %c0_i32, %c0_i32_0 : i32, i32
  }
  func.func @transform_25(%arg0: i32) -> (i32, i32) {
    %c0_i32 = arith.constant 0 : i32
    %c0_i32_0 = arith.constant 0 : i32
    %c0_i32_1 = arith.constant 0 : i32
    return %c0_i32, %c0_i32_0 : i32, i32
  }
  func.func @transform_26(%arg0: i32) -> (i32, i32) {
    %c0_i32 = arith.constant 0 : i32
    %c0_i32_0 = arith.constant 0 : i32
    %c0_i32_1 = arith.constant 0 : i32
    return %c0_i32, %c0_i32_0 : i32, i32
  }
  func.func @transform_27(%arg0: i32) -> (i32, i32) {
    %c0_i32 = arith.constant 0 : i32
    %c0_i32_0 = arith.constant 0 : i32
    %c0_i32_1 = arith.constant 0 : i32
    return %c0_i32, %c0_i32_0 : i32, i32
  }
  func.func @transform_28(%arg0: i32) -> (i32, i32) {
    %c0_i32 = arith.constant 0 : i32
    %c0_i32_0 = arith.constant 0 : i32
    %c0_i32_1 = arith.constant 0 : i32
    return %c0_i32, %c0_i32_0 : i32, i32
  }
  func.func @transform_29(%arg0: i32) -> (i32, i32) {
    %c0_i32 = arith.constant 0 : i32
    %c0_i32_0 = arith.constant 0 : i32
    %c0_i32_1 = arith.constant 0 : i32
    return %c0_i32, %c0_i32_0 : i32, i32
  }
  func.func @transform_33(%arg0: i32) -> (i32, i32, i32) {
    %c0_i32 = arith.constant 0 : i32
    %c0_i32_0 = arith.constant 0 : i32
    %c0_i32_1 = arith.constant 0 : i32
    return %arg0, %c0_i32, %c0_i32_0 : i32, i32, i32
  }
}

</mosaic_0001>

<llo_original>
// kernel: smallformer_forward.1
$region0: #{smallformer_forward.1}
  #allocation0 [shape = 'u32[]', space=smem, size = 0x4, offset = 0x4, fixed_abs, tag = 'smem constant byte address 0x4 - core index']
  #allocation1 [shape = 'u32[144,128]{1,0:T(1,128)}', space=vmem, size = 0x12000, scoped, tag = 'internal scratch']
  #allocation2 [shape = 'bf16[32,1000]{1,0:T(16,128)(2,1)}', space=vmem, size = 0x10000, scoped, tag = 'scratch operand']
  #allocation3 [shape = 'bf16[1000,512]{1,0:T(8,128)(2,1)}', space=vmem, size = 0xfa000, scoped, tag = 'scratch operand']
  #allocation4 [shape = 'bf16[512,84]{1,0:T(16,128)(2,1)}', space=vmem, size = 0x20000, scoped, tag = 'scratch operand']
  #allocation5 [shape = 's32[3]{0}', space=sflag, size = 0xc, scoped, tag = 'scratch operand']
  #allocation6 [shape = 'f32[1,1]{1,0:T(1,128)S(1)}', space=vmem, size = 0x200, scoped, tag = 'scoped memory for smallformer_forward.1']
  #allocation42 [shape = 's32[]', space=sflag, size = 0x4, offset = 0, fixed_abs, tag = 'sflag constant byte address 0x0 - dummy sync flag']
  #allocation43 [shape = 's32[]', space=sflag, size = 0x4, offset = 0, fixed_abs, tag = 'sflag constant byte address 0x0 - dummy sync flag']
  #allocation44 [shape = 's32[]', space=sflag, size = 0x4, offset = 0, fixed_abs, tag = 'sflag constant byte address 0x0 - dummy sync flag']
  %s0 = inlined_call_operand.smem [shape: u32[34], index: -1, kind: input, shape index: {}]
  %s1 = sld [smem:[%s0]]
  %s2 = scalar_lea.smem %s0, 1
  %s3 = sld [smem:[%s2]]
  %s4 = scalar_lea.smem %s0, 2
  %s5 = sld [smem:[%s4]]
  %s6 = scalar_lea.smem %s0, 3
  %s7 = sld [smem:[%s6]]
  %s8 = scalar_lea.smem %s0, 4
  %s9 = sld [smem:[%s8]]
  %s10 = scalar_lea.smem %s0, 5
  %s11 = sld [smem:[%s10]]
  %s12 = scalar_lea.smem %s0, 6
  %s13 = sld [smem:[%s12]]
  %s14 = scalar_lea.smem %s0, 7
  %s15 = sld [smem:[%s14]]
  %s16 = scalar_lea.smem %s0, 8
  %s17 = sld [smem:[%s16]]
  %s18 = scalar_lea.smem %s0, 9
  %s19 = sld [smem:[%s18]]
  %s20 = scalar_lea.smem %s0, 10
  %s21 = sld [smem:[%s20]]
  %s22 = scalar_lea.smem %s0, 11
  %s23 = sld [smem:[%s22]]
  %s24 = scalar_lea.smem %s0, 12
  %s25 = sld [smem:[%s24]]
  %s26 = scalar_lea.smem %s0, 13
  %s27 = sld [smem:[%s26]]
  %s28 = scalar_lea.smem %s0, 14
  %s29 = sld [smem:[%s28]]
  %s30 = scalar_lea.smem %s0, 15
  %s31 = sld [smem:[%s30]]
  %s32 = scalar_lea.smem %s0, 16
  %s33 = sld [smem:[%s32]]
  %s34 = scalar_lea.smem %s0, 17
  %s35 = sld [smem:[%s34]]
  %s36 = scalar_lea.smem %s0, 18
  %s37 = sld [smem:[%s36]]
  %s38 = scalar_lea.smem %s0, 19
  %s39 = sld [smem:[%s38]]
  %s40 = scalar_lea.smem %s0, 20
  %s41 = sld [smem:[%s40]]
  %s42 = scalar_lea.smem %s0, 21
  %s43 = sld [smem:[%s42]]
  %s44 = scalar_lea.smem %s0, 22
  %s45 = sld [smem:[%s44]]
  %s46 = scalar_lea.smem %s0, 23
  %s47 = sld [smem:[%s46]]
  %s48 = scalar_lea.smem %s0, 24
  %s49 = sld [smem:[%s48]]
  %s50 = scalar_lea.smem %s0, 25
  %s51 = sld [smem:[%s50]]
  %s52 = scalar_lea.smem %s0, 26
  %s53 = sld [smem:[%s52]]
  %s54 = scalar_lea.smem %s0, 27
  %s55 = sld [smem:[%s54]]
  %s56 = scalar_lea.smem %s0, 28
  %s57 = sld [smem:[%s56]]
  %s58 = scalar_lea.smem %s0, 29
  %s59 = sld [smem:[%s58]]
  %s60 = scalar_lea.smem %s0, 30
  %s61 = sld [smem:[%s60]]
  %s62 = scalar_lea.smem %s0, 31
  %s63 = sld [smem:[%s62]]
  %s64 = scalar_lea.smem %s0, 32
  %s65 = sld [smem:[%s64]]
  %s66 = scalar_lea.smem %s0, 33
  %s67 = sld [smem:[%s66]]
  %s68 = sld [smem:[#allocation0]]
  $region350: #{smallformer_forward.1} parent=0
    _
  %s70 = ssub.s32 1, %s68
  %s71 = scalar_select 0, %s70, %s68
  %v72 = vstv %s59
  %73 = vst [vmem:[#allocation6] sm:$0x1] %v72
  $region1: #{smallformer_forward.1} parent=0
    #allocation7 [shape = 'u8[512]{0}', space=vmem, size = 0x400, scoped, tag = 'input window, operand 2, single buffered']
    #allocation8 [shape = 's32[2]{0}', space=sflag, size = 0x8, scoped, tag = 'scoped memory for smallformer_forward.1']
    #allocation9 [shape = 'u8[512]{0}', space=vmem, size = 0x400, scoped, tag = 'input window, operand 3, single buffered']
    #allocation10 [shape = 's32[1]{0}', space=sflag, size = 0x4, scoped, tag = 'scoped memory for smallformer_forward.1']
    #allocation11 [shape = 'u8[8192]{0}', space=vmem, size = 0x2000, scoped, tag = 'input window, operand 5, single buffered']
    #allocation12 [shape = 'u8[512]{0}', space=vmem, size = 0x400, scoped, tag = 'input window, operand 6, single buffered']
    #allocation13 [shape = 's32[1]{0}', space=sflag, size = 0x4, scoped, tag = 'scoped memory for smallformer_forward.1']
    #allocation14 [shape = 'u8[16384]{0}', space=vmem, size = 0x4000, scoped, tag = 'input window, operand 7, single buffered']
    #allocation15 [shape = 'u8[512]{0}', space=vmem, size = 0x400, scoped, tag = 'input window, operand 8, single buffered']
    #allocation16 [shape = 's32[1]{0}', space=sflag, size = 0x4, scoped, tag = 'scoped memory for smallformer_forward.1']
    #allocation17 [shape = 'u8[8192]{0}', space=vmem, size = 0x2000, scoped, tag = 'input window, operand 9, single buffered']
    #allocation18 [shape = 'u8[512]{0}', space=vmem, size = 0x400, scoped, tag = 'input window, operand 10, single buffered']
    #allocation19 [shape = 's32[1]{0}', space=sflag, size = 0x4, scoped, tag = 'scoped memory for smallformer_forward.1']
    #allocation20 [shape = 'u8[512]{0}', space=vmem, size = 0x400, scoped, tag = 'input window, operand 12, single buffered']
    #allocation21 [shape = 'u8[8192]{0}', space=vmem, size = 0x2000, scoped, tag = 'input window, operand 13, single buffered']
    #allocation22 [shape = 's32[1]{0}', space=sflag, size = 0x4, scoped, tag = 'scoped memory for smallformer_forward.1']
    #allocation23 [shape = 'u8[512]{0}', space=vmem, size = 0x400, scoped, tag = 'input window, operand 14, single buffered']
    #allocation24 [shape = 'u8[16384]{0}', space=vmem, size = 0x4000, scoped, tag = 'input window, operand 15, single buffered']
    #allocation25 [shape = 's32[1]{0}', space=sflag, size = 0x4, scoped, tag = 'scoped memory for smallformer_forward.1']
    #allocation26 [shape = 'u8[512]{0}', space=vmem, size = 0x400, scoped, tag = 'input window, operand 16, single buffered']
    #allocation27 [shape = 'u8[8192]{0}', space=vmem, size = 0x2000, scoped, tag = 'input window, operand 17, single buffered']
    #allocation28 [shape = 's32[1]{0}', space=sflag, size = 0x4, scoped, tag = 'scoped memory for smallformer_forward.1']
    #allocation29 [shape = 'u8[512]{0}', space=vmem, size = 0x400, scoped, tag = 'input window, operand 18, single buffered']
    #allocation30 [shape = 'u8[512]{0}', space=vmem, size = 0x400, scoped, tag = 'input window, operand 20, single buffered']
    #allocation31 [shape = 's32[1]{0}', space=sflag, size = 0x4, scoped, tag = 'scoped memory for smallformer_forward.1']
    #allocation32 [shape = 'u8[4096]{0}', space=vmem, size = 0x1000, scoped, tag = 'input window, operand 21, single buffered']
    #allocation33 [shape = 'u8[2048]{0}', space=vmem, size = 0x800, scoped, tag = 'input window, operand 23, single buffered']
    #allocation34 [shape = 's32[1]{0}', space=sflag, size = 0x4, scoped, tag = 'scoped memory for smallformer_forward.1']
    #allocation35 [shape = 'u8[2048]{0}', space=vmem, size = 0x800, scoped, tag = 'input window, operand 24, single buffered']
    #allocation36 [shape = 'u8[512]{0}', space=vmem, size = 0x400, scoped, tag = 'input window, operand 25, single buffered']
    #allocation37 [shape = 's32[1]{0}', space=sflag, size = 0x4, scoped, tag = 'scoped memory for smallformer_forward.1']
    #allocation38 [shape = 'u8[512]{0}', space=vmem, size = 0x400, scoped, tag = 'input window, operand 26, single buffered']
    #allocation39 [shape = 'u8[512]{0}', space=vmem, size = 0x400, scoped, tag = 'input window, operand 27, single buffered']
    #allocation40 [shape = 's32[1]{0}', space=sflag, size = 0x4, scoped, tag = 'scoped memory for smallformer_forward.1']
    #allocation41 [shape = 'u8[512]{0}', space=vmem, size = 0x400, scoped, tag = 'input window, operand 28, single buffered']
    %74 = vsyncpa [#allocation8], 0
    %75 = vsyncpa [#allocation10], 0
    %76 = vsyncpa [#allocation13], 0
    %77 = vsyncpa [#allocation16], 0
    %78 = vsyncpa [#allocation19], 0
    %79 = vsyncpa [#allocation22], 0
    %80 = vsyncpa [#allocation25], 0
    %81 = vsyncpa [#allocation28], 0
    %82 = vsyncpa [#allocation31], 0
    %83 = vsyncpa [#allocation34], 0
    %84 = vsyncpa [#allocation37], 0
    %85 = vsyncpa [#allocation40], 0
    loop: start=0, step=1, limit=4
    $region2: #{smallformer_forward.1} parent=1 // loop_pre_header
      _
    $region3: #{smallformer_forward.1} parent=1 // loop_header
      %s87 = sphi 0, %s91
      %p88 = scmp.ge.s32.totalorder %s87, 4
      %s97 = sphi 0, %s99
      %s100 = sphi 0, %s97
      %s101 = sphi 0, %s100
      %s117 = sphi 0, %s101
      %s121 = sphi 0, %s121
      %s123 = sphi 0, %s121
      %s124 = sphi 0, %s123
      %s138 = sphi 0, %s124
      %s142 = sphi 0, %s142
      %s144 = sphi 0, %s142
      %s145 = sphi 0, %s144
      %s159 = sphi 0, %s145
      %s163 = sphi 0, %s163
      %s165 = sphi 0, %s163
      %s166 = sphi 0, %s165
      %s180 = sphi 0, %s166
      %s184 = sphi 0, %s184
      %s186 = sphi 0, %s184
      %s187 = sphi 0, %s186
      %s201 = sphi 0, %s187
      %s205 = sphi 0, %s205
      %s207 = sphi 0, %s205
      %s208 = sphi 0, %s207
      %s222 = sphi 0, %s208
      %s226 = sphi 0, %s226
      %s228 = sphi 0, %s226
      %s229 = sphi 0, %s228
      %s243 = sphi 0, %s229
      %s247 = sphi 0, %s247
      %s249 = sphi 0, %s247
      %s250 = sphi 0, %s249
      %s264 = sphi 0, %s250
      %s268 = sphi 0, %s268
      %s270 = sphi 0, %s268
      %s271 = sphi 0, %s270
      %s285 = sphi 0, %s271
      %s289 = sphi 0, %s289
      %s291 = sphi 0, %s289
      %s292 = sphi 0, %s291
      %s306 = sphi 0, %s292
      %s310 = sphi 0, %s310
      %s312 = sphi 0, %s310
      %s313 = sphi 0, %s312
      %s327 = sphi 0, %s313
      %s331 = sphi 0, %s331
      %s333 = sphi 0, %s331
      %s334 = sphi 0, %s333
      %s348 = sphi 0, %s334
      %s352 = sphi 0, %s352
      %s354 = sphi 0, %s352
      %s355 = sphi 0, %s354
      %s369 = sphi 0, %s355
      %s373 = sphi 0, %s373
      %s375 = sphi 0, %s373
      %s376 = sphi 0, %s375
      %s390 = sphi 0, %s376
      %s394 = sphi 0, %s394
      %s396 = sphi 0, %s394
      %s397 = sphi 0, %s396
      %s411 = sphi 0, %s397
      %s415 = sphi 0, %s415
      %s417 = sphi 0, %s415
      %s418 = sphi 0, %s417
      %s432 = sphi 0, %s418
      %s436 = sphi 0, %s436
      %s438 = sphi 0, %s436
      %s439 = sphi 0, %s438
      %s453 = sphi 0, %s439
      %s457 = sphi 0, %s457
      %s459 = sphi 0, %s457
      %s460 = sphi 0, %s459
      %s474 = sphi 0, %s460
      %s478 = sphi 0, %s478
      %s480 = sphi 0, %s478
      %s481 = sphi 0, %s480
      %s495 = sphi 0, %s481
      %s499 = sphi 0, %s499
      %s501 = sphi 0, %s499
      %s502 = sphi 0, %s501
      %s516 = sphi 0, %s502
      %s520 = sphi 0, %s520
      %s522 = sphi 0, %s520
      %s523 = sphi 0, %s522
      %s537 = sphi 0, %s523
      %s541 = sphi 0, %s541
      %s543 = sphi 0, %s541
      %s544 = sphi 0, %s543
      %s558 = sphi 0, %s544
      %s562 = sphi 0, %s562
      %s564 = sphi 0, %s562
      %s565 = sphi 0, %s564
      %s579 = sphi 0, %s565
      %s583 = sphi 0, %s583
      %s585 = sphi 0, %s583
      %s586 = sphi 0, %s585
      %s600 = sphi 0, %s586
      %s604 = sphi 0, %s604
      %s606 = sphi 0, %s604
      %s607 = sphi 0, %s606
      %s621 = sphi 0, %s607
      %s625 = sphi 0, %s625
      %s627 = sphi 0, %s625
      %s628 = sphi 0, %s627
      %s642 = sphi 0, %s628
      %s646 = sphi 0, %s646
      %s648 = sphi 0, %s646
      %s649 = sphi 0, %s648
      %s663 = sphi 0, %s649
      %s667 = sphi 0, %s667
      %s669 = sphi 0, %s667
      %s670 = sphi 0, %s669
      %s684 = sphi 0, %s670
      %s688 = sphi 0, %s688
      %s690 = sphi 0, %s688
      %s691 = sphi 0, %s690
      %s705 = sphi 0, %s691
      %s709 = sphi 0, %s709
      %s711 = sphi 0, %s709
      %s712 = sphi 0, %s711
      %s726 = sphi 0, %s712
      %s732 = sphi 0, %s734
      %s735 = sphi 0, %s732
      %s736 = sphi 0, %s735
      %s752 = sphi 0, %s736
    $region4: #{smallformer_forward.1} parent=1 // loop_header_branch
      %90 = sbr.rel (%p88) target = $region8
    $region5: #{smallformer_forward.1} parent=1 // loop_body
      %s92 = ssub.s32 %s87, 1
      %s93 = ssub.s32 %s87, 2
      %s94 = sadd.s32 %s87, 1
      %s95 = ssub.s32 %s87, %s94
      %p96 = scmp.eq.s32.totalorder %s95, 0
      %s98 = sadd.s32 %s97, 1
      %s99 = scalar_select %p96, %s97, %s98
      %p102 = pneg %p96
      %p103 = scmp.eq.s32.totalorder %s87, 1
      %p104 = por %p102, %p103
      %p105 = scmp.ne.s32.totalorder %s97, %s100
      %p106 = scmp.eq.s32.totalorder %s87, 0
      %p107 = por %p105, %p106
      %p108 = scmp.ne.s32.totalorder %s97, %s100
      %p109 = scmp.eq.s32.totalorder %s92, 1
      %p110 = por %p108, %p109
      %p111 = scmp.ne.s32.totalorder %s100, %s101
      %p112 = scmp.eq.s32.totalorder %s92, 0
      %p113 = por %p111, %p112
      %p114 = scmp.ne.s32.totalorder %s100, %s101
      %p115 = scmp.eq.s32.totalorder %s93, 1
      %p116 = por %p114, %p115
      %p118 = scmp.ne.s32.totalorder %s101, %s117
      %p119 = scmp.eq.s32.totalorder %s93, 0
      %p120 = por %p118, %p119
      %s122 = sadd.s32 %s121, 1
      %p125 = scmp.eq.s32.totalorder %s87, 1
      %p126 = scmp.ne.s32.totalorder %s121, %s123
      %p127 = scmp.eq.s32.totalorder %s87, 0
      %p128 = por %p126, %p127
      %p129 = scmp.ne.s32.totalorder %s121, %s123
      %p130 = scmp.eq.s32.totalorder %s92, 1
      %p131 = por %p129, %p130
      %p132 = scmp.ne.s32.totalorder %s123, %s124
      %p133 = scmp.eq.s32.totalorder %s92, 0
      %p134 = por %p132, %p133
      %p135 = scmp.ne.s32.totalorder %s123, %s124
      %p136 = scmp.eq.s32.totalorder %s93, 1
      %p137 = por %p135, %p136
      %p139 = scmp.ne.s32.totalorder %s124, %s138
      %p140 = scmp.eq.s32.totalorder %s93, 0
      %p141 = por %p139, %p140
      %s143 = sadd.s32 %s142, 1
      %p146 = scmp.eq.s32.totalorder %s87, 1
      %p147 = scmp.ne.s32.totalorder %s142, %s144
      %p148 = scmp.eq.s32.totalorder %s87, 0
      %p149 = por %p147, %p148
      %p150 = scmp.ne.s32.totalorder %s142, %s144
      %p151 = scmp.eq.s32.totalorder %s92, 1
      %p152 = por %p150, %p151
      %p153 = scmp.ne.s32.totalorder %s144, %s145
      %p154 = scmp.eq.s32.totalorder %s92, 0
      %p155 = por %p153, %p154
      %p156 = scmp.ne.s32.totalorder %s144, %s145
      %p157 = scmp.eq.s32.totalorder %s93, 1
      %p158 = por %p156, %p157
      %p160 = scmp.ne.s32.totalorder %s145, %s159
      %p161 = scmp.eq.s32.totalorder %s93, 0
      %p162 = por %p160, %p161
      %s164 = sadd.s32 %s163, 1
      %p167 = scmp.eq.s32.totalorder %s87, 1
      %p168 = scmp.ne.s32.totalorder %s163, %s165
      %p169 = scmp.eq.s32.totalorder %s87, 0
      %p170 = por %p168, %p169
      %p171 = scmp.ne.s32.totalorder %s163, %s165
      %p172 = scmp.eq.s32.totalorder %s92, 1
      %p173 = por %p171, %p172
      %p174 = scmp.ne.s32.totalorder %s165, %s166
      %p175 = scmp.eq.s32.totalorder %s92, 0
      %p176 = por %p174, %p175
      %p177 = scmp.ne.s32.totalorder %s165, %s166
      %p178 = scmp.eq.s32.totalorder %s93, 1
      %p179 = por %p177, %p178
      %p181 = scmp.ne.s32.totalorder %s166, %s180
      %p182 = scmp.eq.s32.totalorder %s93, 0
      %p183 = por %p181, %p182
      %s185 = sadd.s32 %s184, 1
      %p188 = scmp.eq.s32.totalorder %s87, 1
      %p189 = scmp.ne.s32.totalorder %s184, %s186
      %p190 = scmp.eq.s32.totalorder %s87, 0
      %p191 = por %p189, %p190
      %p192 = scmp.ne.s32.totalorder %s184, %s186
      %p193 = scmp.eq.s32.totalorder %s92, 1
      %p194 = por %p192, %p193
      %p195 = scmp.ne.s32.totalorder %s186, %s187
      %p196 = scmp.eq.s32.totalorder %s92, 0
      %p197 = por %p195, %p196
      %p198 = scmp.ne.s32.totalorder %s186, %s187
      %p199 = scmp.eq.s32.totalorder %s93, 1
      %p200 = por %p198, %p199
      %p202 = scmp.ne.s32.totalorder %s187, %s201
      %p203 = scmp.eq.s32.totalorder %s93, 0
      %p204 = por %p202, %p203
      %s206 = sadd.s32 %s205, 1
      %p209 = scmp.eq.s32.totalorder %s87, 1
      %p210 = scmp.ne.s32.totalorder %s205, %s207
      %p211 = scmp.eq.s32.totalorder %s87, 0
      %p212 = por %p210, %p211
      %p213 = scmp.ne.s32.totalorder %s205, %s207
      %p214 = scmp.eq.s32.totalorder %s92, 1
      %p215 = por %p213, %p214
      %p216 = scmp.ne.s32.totalorder %s207, %s208
      %p217 = scmp.eq.s32.totalorder %s92, 0
      %p218 = por %p216, %p217
      %p219 = scmp.ne.s32.totalorder %s207, %s208
      %p220 = scmp.eq.s32.totalorder %s93, 1
      %p221 = por %p219, %p220
      %p223 = scmp.ne.s32.totalorder %s208, %s222
      %p224 = scmp.eq.s32.totalorder %s93, 0
      %p225 = por %p223, %p224
      %s227 = sadd.s32 %s226, 1
      %p230 = scmp.eq.s32.totalorder %s87, 1
      %p231 = scmp.ne.s32.totalorder %s226, %s228
      %p232 = scmp.eq.s32.totalorder %s87, 0
      %p233 = por %p231, %p232
      %p234 = scmp.ne.s32.totalorder %s226, %s228
      %p235 = scmp.eq.s32.totalorder %s92, 1
      %p236 = por %p234, %p235
      %p237 = scmp.ne.s32.totalorder %s228, %s229
      %p238 = scmp.eq.s32.totalorder %s92, 0
      %p239 = por %p237, %p238
      %p240 = scmp.ne.s32.totalorder %s228, %s229
      %p241 = scmp.eq.s32.totalorder %s93, 1
      %p242 = por %p240, %p241
      %p244 = scmp.ne.s32.totalorder %s229, %s243
      %p245 = scmp.eq.s32.totalorder %s93, 0
      %p246 = por %p244, %p245
      %s248 = sadd.s32 %s247, 1
      %p251 = scmp.eq.s32.totalorder %s87, 1
      %p252 = scmp.ne.s32.totalorder %s247, %s249
      %p253 = scmp.eq.s32.totalorder %s87, 0
      %p254 = por %p252, %p253
      %p255 = scmp.ne.s32.totalorder %s247, %s249
      %p256 = scmp.eq.s32.totalorder %s92, 1
      %p257 = por %p255, %p256
      %p258 = scmp.ne.s32.totalorder %s249, %s250
      %p259 = scmp.eq.s32.totalorder %s92, 0
      %p260 = por %p258, %p259
      %p261 = scmp.ne.s32.totalorder %s249, %s250
      %p262 = scmp.eq.s32.totalorder %s93, 1
      %p263 = por %p261, %p262
      %p265 = scmp.ne.s32.totalorder %s250, %s264
      %p266 = scmp.eq.s32.totalorder %s93, 0
      %p267 = por %p265, %p266
      %s269 = sadd.s32 %s268, 1
      %p272 = scmp.eq.s32.totalorder %s87, 1
      %p273 = scmp.ne.s32.totalorder %s268, %s270
      %p274 = scmp.eq.s32.totalorder %s87, 0
      %p275 = por %p273, %p274
      %p276 = scmp.ne.s32.totalorder %s268, %s270
      %p277 = scmp.eq.s32.totalorder %s92, 1
      %p278 = por %p276, %p277
      %p279 = scmp.ne.s32.totalorder %s270, %s271
      %p280 = scmp.eq.s32.totalorder %s92, 0
      %p281 = por %p279, %p280
      %p282 = scmp.ne.s32.totalorder %s270, %s271
      %p283 = scmp.eq.s32.totalorder %s93, 1
      %p284 = por %p282, %p283
      %p286 = scmp.ne.s32.totalorder %s271, %s285
      %p287 = scmp.eq.s32.totalorder %s93, 0
      %p288 = por %p286, %p287
      %s290 = sadd.s32 %s289, 1
      %p293 = scmp.eq.s32.totalorder %s87, 1
      %p294 = scmp.ne.s32.totalorder %s289, %s291
      %p295 = scmp.eq.s32.totalorder %s87, 0
      %p296 = por %p294, %p295
      %p297 = scmp.ne.s32.totalorder %s289, %s291
      %p298 = scmp.eq.s32.totalorder %s92, 1
      %p299 = por %p297, %p298
      %p300 = scmp.ne.s32.totalorder %s291, %s292
      %p301 = scmp.eq.s32.totalorder %s92, 0
      %p302 = por %p300, %p301
      %p303 = scmp.ne.s32.totalorder %s291, %s292
      %p304 = scmp.eq.s32.totalorder %s93, 1
      %p305 = por %p303, %p304
      %p307 = scmp.ne.s32.totalorder %s292, %s306
      %p308 = scmp.eq.s32.totalorder %s93, 0
      %p309 = por %p307, %p308
      %s311 = sadd.s32 %s310, 1
      %p314 = scmp.eq.s32.totalorder %s87, 1
      %p315 = scmp.ne.s32.totalorder %s310, %s312
      %p316 = scmp.eq.s32.totalorder %s87, 0
      %p317 = por %p315, %p316
      %p318 = scmp.ne.s32.totalorder %s310, %s312
      %p319 = scmp.eq.s32.totalorder %s92, 1
      %p320 = por %p318, %p319
      %p321 = scmp.ne.s32.totalorder %s312, %s313
      %p322 = scmp.eq.s32.totalorder %s92, 0
      %p323 = por %p321, %p322
      %p324 = scmp.ne.s32.totalorder %s312, %s313
      %p325 = scmp.eq.s32.totalorder %s93, 1
      %p326 = por %p324, %p325
      %p328 = scmp.ne.s32.totalorder %s313, %s327
      %p329 = scmp.eq.s32.totalorder %s93, 0
      %p330 = por %p328, %p329
      %s332 = sadd.s32 %s331, 1
      %p335 = scmp.eq.s32.totalorder %s87, 1
      %p336 = scmp.ne.s32.totalorder %s331, %s333
      %p337 = scmp.eq.s32.totalorder %s87, 0
      %p338 = por %p336, %p337
      %p339 = scmp.ne.s32.totalorder %s331, %s333
      %p340 = scmp.eq.s32.totalorder %s92, 1
      %p341 = por %p339, %p340
      %p342 = scmp.ne.s32.totalorder %s333, %s334
      %p343 = scmp.eq.s32.totalorder %s92, 0
      %p344 = por %p342, %p343
      %p345 = scmp.ne.s32.totalorder %s333, %s334
      %p346 = scmp.eq.s32.totalorder %s93, 1
      %p347 = por %p345, %p346
      %p349 = scmp.ne.s32.totalorder %s334, %s348
      %p350 = scmp.eq.s32.totalorder %s93, 0
      %p351 = por %p349, %p350
      %s353 = sadd.s32 %s352, 1
      %p356 = scmp.eq.s32.totalorder %s87, 1
      %p357 = scmp.ne.s32.totalorder %s352, %s354
      %p358 = scmp.eq.s32.totalorder %s87, 0
      %p359 = por %p357, %p358
      %p360 = scmp.ne.s32.totalorder %s352, %s354
      %p361 = scmp.eq.s32.totalorder %s92, 1
      %p362 = por %p360, %p361
      %p363 = scmp.ne.s32.totalorder %s354, %s355
      %p364 = scmp.eq.s32.totalorder %s92, 0
      %p365 = por %p363, %p364
      %p366 = scmp.ne.s32.totalorder %s354, %s355
      %p367 = scmp.eq.s32.totalorder %s93, 1
      %p368 = por %p366, %p367
      %p370 = scmp.ne.s32.totalorder %s355, %s369
      %p371 = scmp.eq.s32.totalorder %s93, 0
      %p372 = por %p370, %p371
      %s374 = sadd.s32 %s373, 1
      %p377 = scmp.eq.s32.totalorder %s87, 1
      %p378 = scmp.ne.s32.totalorder %s373, %s375
      %p379 = scmp.eq.s32.totalorder %s87, 0
      %p380 = por %p378, %p379
      %p381 = scmp.ne.s32.totalorder %s373, %s375
      %p382 = scmp.eq.s32.totalorder %s92, 1
      %p383 = por %p381, %p382
      %p384 = scmp.ne.s32.totalorder %s375, %s376
      %p385 = scmp.eq.s32.totalorder %s92, 0
      %p386 = por %p384, %p385
      %p387 = scmp.ne.s32.totalorder %s375, %s376
      %p388 = scmp.eq.s32.totalorder %s93, 1
      %p389 = por %p387, %p388
      %p391 = scmp.ne.s32.totalorder %s376, %s390
      %p392 = scmp.eq.s32.totalorder %s93, 0
      %p393 = por %p391, %p392
      %s395 = sadd.s32 %s394, 1
      %p398 = scmp.eq.s32.totalorder %s87, 1
      %p399 = scmp.ne.s32.totalorder %s394, %s396
      %p400 = scmp.eq.s32.totalorder %s87, 0
      %p401 = por %p399, %p400
      %p402 = scmp.ne.s32.totalorder %s394, %s396
      %p403 = scmp.eq.s32.totalorder %s92, 1
      %p404 = por %p402, %p403
      %p405 = scmp.ne.s32.totalorder %s396, %s397
      %p406 = scmp.eq.s32.totalorder %s92, 0
      %p407 = por %p405, %p406
      %p408 = scmp.ne.s32.totalorder %s396, %s397
      %p409 = scmp.eq.s32.totalorder %s93, 1
      %p410 = por %p408, %p409
      %p412 = scmp.ne.s32.totalorder %s397, %s411
      %p413 = scmp.eq.s32.totalorder %s93, 0
      %p414 = por %p412, %p413
      %s416 = sadd.s32 %s415, 1
      %p419 = scmp.eq.s32.totalorder %s87, 1
      %p420 = scmp.ne.s32.totalorder %s415, %s417
      %p421 = scmp.eq.s32.totalorder %s87, 0
      %p422 = por %p420, %p421
      %p423 = scmp.ne.s32.totalorder %s415, %s417
      %p424 = scmp.eq.s32.totalorder %s92, 1
      %p425 = por %p423, %p424
      %p426 = scmp.ne.s32.totalorder %s417, %s418
      %p427 = scmp.eq.s32.totalorder %s92, 0
      %p428 = por %p426, %p427
      %p429 = scmp.ne.s32.totalorder %s417, %s418
      %p430 = scmp.eq.s32.totalorder %s93, 1
      %p431 = por %p429, %p430
      %p433 = scmp.ne.s32.totalorder %s418, %s432
      %p434 = scmp.eq.s32.totalorder %s93, 0
      %p435 = por %p433, %p434
      %s437 = sadd.s32 %s436, 1
      %p440 = scmp.eq.s32.totalorder %s87, 1
      %p441 = scmp.ne.s32.totalorder %s436, %s438
      %p442 = scmp.eq.s32.totalorder %s87, 0
      %p443 = por %p441, %p442
      %p444 = scmp.ne.s32.totalorder %s436, %s438
      %p445 = scmp.eq.s32.totalorder %s92, 1
      %p446 = por %p444, %p445
      %p447 = scmp.ne.s32.totalorder %s438, %s439
      %p448 = scmp.eq.s32.totalorder %s92, 0
      %p449 = por %p447, %p448
      %p450 = scmp.ne.s32.totalorder %s438, %s439
      %p451 = scmp.eq.s32.totalorder %s93, 1
      %p452 = por %p450, %p451
      %p454 = scmp.ne.s32.totalorder %s439, %s453
      %p455 = scmp.eq.s32.totalorder %s93, 0
      %p456 = por %p454, %p455
      %s458 = sadd.s32 %s457, 1
      %p461 = scmp.eq.s32.totalorder %s87, 1
      %p462 = scmp.ne.s32.totalorder %s457, %s459
      %p463 = scmp.eq.s32.totalorder %s87, 0
      %p464 = por %p462, %p463
      %p465 = scmp.ne.s32.totalorder %s457, %s459
      %p466 = scmp.eq.s32.totalorder %s92, 1
      %p467 = por %p465, %p466
      %p468 = scmp.ne.s32.totalorder %s459, %s460
      %p469 = scmp.eq.s32.totalorder %s92, 0
      %p470 = por %p468, %p469
      %p471 = scmp.ne.s32.totalorder %s459, %s460
      %p472 = scmp.eq.s32.totalorder %s93, 1
      %p473 = por %p471, %p472
      %p475 = scmp.ne.s32.totalorder %s460, %s474
      %p476 = scmp.eq.s32.totalorder %s93, 0
      %p477 = por %p475, %p476
      %s479 = sadd.s32 %s478, 1
      %p482 = scmp.eq.s32.totalorder %s87, 1
      %p483 = scmp.ne.s32.totalorder %s478, %s480
      %p484 = scmp.eq.s32.totalorder %s87, 0
      %p485 = por %p483, %p484
      %p486 = scmp.ne.s32.totalorder %s478, %s480
      %p487 = scmp.eq.s32.totalorder %s92, 1
      %p488 = por %p486, %p487
      %p489 = scmp.ne.s32.totalorder %s480, %s481
      %p490 = scmp.eq.s32.totalorder %s92, 0
      %p491 = por %p489, %p490
      %p492 = scmp.ne.s32.totalorder %s480, %s481
      %p493 = scmp.eq.s32.totalorder %s93, 1
      %p494 = por %p492, %p493
      %p496 = scmp.ne.s32.totalorder %s481, %s495
      %p497 = scmp.eq.s32.totalorder %s93, 0
      %p498 = por %p496, %p497
      %s500 = sadd.s32 %s499, 1
      %p503 = scmp.eq.s32.totalorder %s87, 1
      %p504 = scmp.ne.s32.totalorder %s499, %s501
      %p505 = scmp.eq.s32.totalorder %s87, 0
      %p506 = por %p504, %p505
      %p507 = scmp.ne.s32.totalorder %s499, %s501
      %p508 = scmp.eq.s32.totalorder %s92, 1
      %p509 = por %p507, %p508
      %p510 = scmp.ne.s32.totalorder %s501, %s502
      %p511 = scmp.eq.s32.totalorder %s92, 0
      %p512 = por %p510, %p511
      %p513 = scmp.ne.s32.totalorder %s501, %s502
      %p514 = scmp.eq.s32.totalorder %s93, 1
      %p515 = por %p513, %p514
      %p517 = scmp.ne.s32.totalorder %s502, %s516
      %p518 = scmp.eq.s32.totalorder %s93, 0
      %p519 = por %p517, %p518
      %s521 = sadd.s32 %s520, 1
      %p524 = scmp.eq.s32.totalorder %s87, 1
      %p525 = scmp.ne.s32.totalorder %s520, %s522
      %p526 = scmp.eq.s32.totalorder %s87, 0
      %p527 = por %p525, %p526
      %p528 = scmp.ne.s32.totalorder %s520, %s522
      %p529 = scmp.eq.s32.totalorder %s92, 1
      %p530 = por %p528, %p529
      %p531 = scmp.ne.s32.totalorder %s522, %s523
      %p532 = scmp.eq.s32.totalorder %s92, 0
      %p533 = por %p531, %p532
      %p534 = scmp.ne.s32.totalorder %s522, %s523
      %p535 = scmp.eq.s32.totalorder %s93, 1
      %p536 = por %p534, %p535
      %p538 = scmp.ne.s32.totalorder %s523, %s537
      %p539 = scmp.eq.s32.totalorder %s93, 0
      %p540 = por %p538, %p539
      %s542 = sadd.s32 %s541, 1
      %p545 = scmp.eq.s32.totalorder %s87, 1
      %p546 = scmp.ne.s32.totalorder %s541, %s543
      %p547 = scmp.eq.s32.totalorder %s87, 0
      %p548 = por %p546, %p547
      %p549 = scmp.ne.s32.totalorder %s541, %s543
      %p550 = scmp.eq.s32.totalorder %s92, 1
      %p551 = por %p549, %p550
      %p552 = scmp.ne.s32.totalorder %s543, %s544
      %p553 = scmp.eq.s32.totalorder %s92, 0
      %p554 = por %p552, %p553
      %p555 = scmp.ne.s32.totalorder %s543, %s544
      %p556 = scmp.eq.s32.totalorder %s93, 1
      %p557 = por %p555, %p556
      %p559 = scmp.ne.s32.totalorder %s544, %s558
      %p560 = scmp.eq.s32.totalorder %s93, 0
      %p561 = por %p559, %p560
      %s563 = sadd.s32 %s562, 1
      %p566 = scmp.eq.s32.totalorder %s87, 1
      %p567 = scmp.ne.s32.totalorder %s562, %s564
      %p568 = scmp.eq.s32.totalorder %s87, 0
      %p569 = por %p567, %p568
      %p570 = scmp.ne.s32.totalorder %s562, %s564
      %p571 = scmp.eq.s32.totalorder %s92, 1
      %p572 = por %p570, %p571
      %p573 = scmp.ne.s32.totalorder %s564, %s565
      %p574 = scmp.eq.s32.totalorder %s92, 0
      %p575 = por %p573, %p574
      %p576 = scmp.ne.s32.totalorder %s564, %s565
      %p577 = scmp.eq.s32.totalorder %s93, 1
      %p578 = por %p576, %p577
      %p580 = scmp.ne.s32.totalorder %s565, %s579
      %p581 = scmp.eq.s32.totalorder %s93, 0
      %p582 = por %p580, %p581
      %s584 = sadd.s32 %s583, 1
      %p587 = scmp.eq.s32.totalorder %s87, 1
      %p588 = scmp.ne.s32.totalorder %s583, %s585
      %p589 = scmp.eq.s32.totalorder %s87, 0
      %p590 = por %p588, %p589
      %p591 = scmp.ne.s32.totalorder %s583, %s585
      %p592 = scmp.eq.s32.totalorder %s92, 1
      %p593 = por %p591, %p592
      %p594 = scmp.ne.s32.totalorder %s585, %s586
      %p595 = scmp.eq.s32.totalorder %s92, 0
      %p596 = por %p594, %p595
      %p597 = scmp.ne.s32.totalorder %s585, %s586
      %p598 = scmp.eq.s32.totalorder %s93, 1
      %p599 = por %p597, %p598
      %p601 = scmp.ne.s32.totalorder %s586, %s600
      %p602 = scmp.eq.s32.totalorder %s93, 0
      %p603 = por %p601, %p602
      %s605 = sadd.s32 %s604, 1
      %p608 = scmp.eq.s32.totalorder %s87, 1
      %p609 = scmp.ne.s32.totalorder %s604, %s606
      %p610 = scmp.eq.s32.totalorder %s87, 0
      %p611 = por %p609, %p610
      %p612 = scmp.ne.s32.totalorder %s604, %s606
      %p613 = scmp.eq.s32.totalorder %s92, 1
      %p614 = por %p612, %p613
      %p615 = scmp.ne.s32.totalorder %s606, %s607
      %p616 = scmp.eq.s32.totalorder %s92, 0
      %p617 = por %p615, %p616
      %p618 = scmp.ne.s32.totalorder %s606, %s607
      %p619 = scmp.eq.s32.totalorder %s93, 1
      %p620 = por %p618, %p619
      %p622 = scmp.ne.s32.totalorder %s607, %s621
      %p623 = scmp.eq.s32.totalorder %s93, 0
      %p624 = por %p622, %p623
      %s626 = sadd.s32 %s625, 1
      %p629 = scmp.eq.s32.totalorder %s87, 1
      %p630 = scmp.ne.s32.totalorder %s625, %s627
      %p631 = scmp.eq.s32.totalorder %s87, 0
      %p632 = por %p630, %p631
      %p633 = scmp.ne.s32.totalorder %s625, %s627
      %p634 = scmp.eq.s32.totalorder %s92, 1
      %p635 = por %p633, %p634
      %p636 = scmp.ne.s32.totalorder %s627, %s628
      %p637 = scmp.eq.s32.totalorder %s92, 0
      %p638 = por %p636, %p637
      %p639 = scmp.ne.s32.totalorder %s627, %s628
      %p640 = scmp.eq.s32.totalorder %s93, 1
      %p641 = por %p639, %p640
      %p643 = scmp.ne.s32.totalorder %s628, %s642
      %p644 = scmp.eq.s32.totalorder %s93, 0
      %p645 = por %p643, %p644
      %s647 = sadd.s32 %s646, 1
      %p650 = scmp.eq.s32.totalorder %s87, 1
      %p651 = scmp.ne.s32.totalorder %s646, %s648
      %p652 = scmp.eq.s32.totalorder %s87, 0
      %p653 = por %p651, %p652
      %p654 = scmp.ne.s32.totalorder %s646, %s648
      %p655 = scmp.eq.s32.totalorder %s92, 1
      %p656 = por %p654, %p655
      %p657 = scmp.ne.s32.totalorder %s648, %s649
      %p658 = scmp.eq.s32.totalorder %s92, 0
      %p659 = por %p657, %p658
      %p660 = scmp.ne.s32.totalorder %s648, %s649
      %p661 = scmp.eq.s32.totalorder %s93, 1
      %p662 = por %p660, %p661
      %p664 = scmp.ne.s32.totalorder %s649, %s663
      %p665 = scmp.eq.s32.totalorder %s93, 0
      %p666 = por %p664, %p665
      %s668 = sadd.s32 %s667, 1
      %p671 = scmp.eq.s32.totalorder %s87, 1
      %p672 = scmp.ne.s32.totalorder %s667, %s669
      %p673 = scmp.eq.s32.totalorder %s87, 0
      %p674 = por %p672, %p673
      %p675 = scmp.ne.s32.totalorder %s667, %s669
      %p676 = scmp.eq.s32.totalorder %s92, 1
      %p677 = por %p675, %p676
      %p678 = scmp.ne.s32.totalorder %s669, %s670
      %p679 = scmp.eq.s32.totalorder %s92, 0
      %p680 = por %p678, %p679
      %p681 = scmp.ne.s32.totalorder %s669, %s670
      %p682 = scmp.eq.s32.totalorder %s93, 1
      %p683 = por %p681, %p682
      %p685 = scmp.ne.s32.totalorder %s670, %s684
      %p686 = scmp.eq.s32.totalorder %s93, 0
      %p687 = por %p685, %p686
      %s689 = sadd.s32 %s688, 1
      %p692 = scmp.eq.s32.totalorder %s87, 1
      %p693 = scmp.ne.s32.totalorder %s688, %s690
      %p694 = scmp.eq.s32.totalorder %s87, 0
      %p695 = por %p693, %p694
      %p696 = scmp.ne.s32.totalorder %s688, %s690
      %p697 = scmp.eq.s32.totalorder %s92, 1
      %p698 = por %p696, %p697
      %p699 = scmp.ne.s32.totalorder %s690, %s691
      %p700 = scmp.eq.s32.totalorder %s92, 0
      %p701 = por %p699, %p700
      %p702 = scmp.ne.s32.totalorder %s690, %s691
      %p703 = scmp.eq.s32.totalorder %s93, 1
      %p704 = por %p702, %p703
      %p706 = scmp.ne.s32.totalorder %s691, %s705
      %p707 = scmp.eq.s32.totalorder %s93, 0
      %p708 = por %p706, %p707
      %s710 = sadd.s32 %s709, 1
      %p713 = scmp.eq.s32.totalorder %s87, 1
      %p714 = scmp.ne.s32.totalorder %s709, %s711
      %p715 = scmp.eq.s32.totalorder %s87, 0
      %p716 = por %p714, %p715
      %p717 = scmp.ne.s32.totalorder %s709, %s711
      %p718 = scmp.eq.s32.totalorder %s92, 1
      %p719 = por %p717, %p718
      %p720 = scmp.ne.s32.totalorder %s711, %s712
      %p721 = scmp.eq.s32.totalorder %s92, 0
      %p722 = por %p720, %p721
      %p723 = scmp.ne.s32.totalorder %s711, %s712
      %p724 = scmp.eq.s32.totalorder %s93, 1
      %p725 = por %p723, %p724
      %p727 = scmp.ne.s32.totalorder %s712, %s726
      %p728 = scmp.eq.s32.totalorder %s93, 0
      %p729 = por %p727, %p728
      %s730 = ssub.s32 %s87, %s94
      %p731 = scmp.eq.s32.totalorder %s730, 0
      %s733 = sadd.s32 %s732, 1
      %s734 = scalar_select %p731, %s732, %s733
      %p737 = pneg %p731
      %p738 = scmp.eq.s32.totalorder %s87, 1
      %p739 = por %p737, %p738
      %p740 = scmp.ne.s32.totalorder %s732, %s735
      %p741 = scmp.eq.s32.totalorder %s87, 0
      %p742 = por %p740, %p741
      %p743 = scmp.ne.s32.totalorder %s732, %s735
      %p744 = scmp.eq.s32.totalorder %s92, 1
      %p745 = por %p743, %p744
      %p746 = scmp.ne.s32.totalorder %s735, %s736
      %p747 = scmp.eq.s32.totalorder %s92, 0
      %p748 = por %p746, %p747
      %p749 = scmp.ne.s32.totalorder %s735, %s736
      %p750 = scmp.eq.s32.totalorder %s93, 1
      %p751 = por %p749, %p750
      %p753 = scmp.ne.s32.totalorder %s736, %s752
      %p754 = scmp.eq.s32.totalorder %s93, 0
      %p755 = por %p753, %p754
      %p756 = scmp.le.s32.totalorder 1, %s87
      %p757 = scmp.lt.s32.totalorder %s87, 3
      %p758 = pnand %p756, %p757
      %p759 = pneg %p758
      // Predicated region
      $region9: #{smallformer_forward.1} parent=5 // pred_check
        _
      $region10: #{smallformer_forward.1} parent=5 // pred_check_branch
        %761 = sbr.rel (%p758) target = $region12
      $region11: #{smallformer_forward.1} parent=5 // pred_region
        %s762 = ssub.s32 %s87, 1
        // Predicated region
        $region13: #{smallformer_forward.1} parent=11 // pred_check
          %p763 = pneg %p134
        $region14: #{smallformer_forward.1} parent=11 // pred_check_branch
          %765 = sbr.rel (%p763) target = $region16
        $region15: #{smallformer_forward.1} parent=11 // pred_region
          _
        $region16: #{smallformer_forward.1} parent=11 // pred_fallthru
          _
        // Predicated region
        $region17: #{smallformer_forward.1} parent=11 // pred_check
          %p766 = pneg %p155
        $region18: #{smallformer_forward.1} parent=11 // pred_check_branch
          %768 = sbr.rel (%p766) target = $region20
        $region19: #{smallformer_forward.1} parent=11 // pred_region
          %s770 = ssub.s32 16, 16
          %771 = vsyncadd [#allocation8], %s770
          %s773 = sshll.u32 [#allocation7], 4
          %s774 = int_to_ptr.vmem [resolvable:$true] %s773
          %776 = dma.hbm_to_vmem [thread:$0]  %s5, 16, %s774, [#allocation8]
        $region20: #{smallformer_forward.1} parent=11 // pred_fallthru
          _
        // Predicated region
        $region21: #{smallformer_forward.1} parent=11 // pred_check
          %p777 = pneg %p176
        $region22: #{smallformer_forward.1} parent=11 // pred_check_branch
          %779 = sbr.rel (%p777) target = $region24
        $region23: #{smallformer_forward.1} parent=11 // pred_region
          %s781 = ssub.s32 16, 16
          %782 = vsyncadd [#allocation10], %s781
          %s784 = sshll.u32 [#allocation9], 4
          %s785 = int_to_ptr.vmem [resolvable:$true] %s784
          %787 = dma.hbm_to_vmem [thread:$0]  %s7, 16, %s785, [#allocation10]
        $region24: #{smallformer_forward.1} parent=11 // pred_fallthru
          _
        // Predicated region
        $region25: #{smallformer_forward.1} parent=11 // pred_check
          %p788 = pneg %p197
        $region26: #{smallformer_forward.1} parent=11 // pred_check_branch
          %790 = sbr.rel (%p788) target = $region28
        $region27: #{smallformer_forward.1} parent=11 // pred_region
          _
        $region28: #{smallformer_forward.1} parent=11 // pred_fallthru
          _
        // Predicated region
        $region29: #{smallformer_forward.1} parent=11 // pred_check
          %p791 = pneg %p218
        $region30: #{smallformer_forward.1} parent=11 // pred_check_branch
          %793 = sbr.rel (%p791) target = $region32
        $region31: #{smallformer_forward.1} parent=11 // pred_region
          %s795 = ssub.s32 256, 256
          %796 = vsyncadd [#allocation10], %s795
          %s797 = sshll.u32 [#allocation11], 4
          %s798 = int_to_ptr.vmem [resolvable:$true] %s797
          %803 = dma.hbm_to_vmem [thread:$0]  %s11, 256, %s798, [#allocation10], 64, 64, 4
        $region32: #{smallformer_forward.1} parent=11 // pred_fallthru
          _
        // Predicated region
        $region33: #{smallformer_forward.1} parent=11 // pred_check
          %p804 = pneg %p239
        $region34: #{smallformer_forward.1} parent=11 // pred_check_branch
          %806 = sbr.rel (%p804) target = $region36
        $region35: #{smallformer_forward.1} parent=11 // pred_region
          %s808 = ssub.s32 16, 16
          %809 = vsyncadd [#allocation13], %s808
          %s811 = sshll.u32 [#allocation12], 4
          %s812 = int_to_ptr.vmem [resolvable:$true] %s811
          %814 = dma.hbm_to_vmem [thread:$0]  %s13, 16, %s812, [#allocation13]
        $region36: #{smallformer_forward.1} parent=11 // pred_fallthru
          _
        // Predicated region
        $region37: #{smallformer_forward.1} parent=11 // pred_check
          %p815 = pneg %p260
        $region38: #{smallformer_forward.1} parent=11 // pred_check_branch
          %817 = sbr.rel (%p815) target = $region40
        $region39: #{smallformer_forward.1} parent=11 // pred_region
          %s819 = ssub.s32 512, 512
          %820 = vsyncadd [#allocation13], %s819
          %s821 = sshll.u32 [#allocation14], 4
          %s822 = int_to_ptr.vmem [resolvable:$true] %s821
          %827 = dma.hbm_to_vmem [thread:$0]  %s15, 512, %s822, [#allocation13], 128, 128, 8
        $region40: #{smallformer_forward.1} parent=11 // pred_fallthru
          _
        // Predicated region
        $region41: #{smallformer_forward.1} parent=11 // pred_check
          %p828 = pneg %p281
        $region42: #{smallformer_forward.1} parent=11 // pred_check_branch
          %830 = sbr.rel (%p828) target = $region44
        $region43: #{smallformer_forward.1} parent=11 // pred_region
          %s832 = ssub.s32 16, 16
          %833 = vsyncadd [#allocation16], %s832
          %s835 = sshll.u32 [#allocation15], 4
          %s836 = int_to_ptr.vmem [resolvable:$true] %s835
          %838 = dma.hbm_to_vmem [thread:$0]  %s17, 16, %s836, [#allocation16]
        $region44: #{smallformer_forward.1} parent=11 // pred_fallthru
          _
        // Predicated region
        $region45: #{smallformer_forward.1} parent=11 // pred_check
          %p839 = pneg %p302
        $region46: #{smallformer_forward.1} parent=11 // pred_check_branch
          %841 = sbr.rel (%p839) target = $region48
        $region47: #{smallformer_forward.1} parent=11 // pred_region
          %s843 = ssub.s32 256, 256
          %844 = vsyncadd [#allocation16], %s843
          %s845 = sshll.u32 [#allocation17], 4
          %s846 = int_to_ptr.vmem [resolvable:$true] %s845
          %851 = dma.hbm_to_vmem [thread:$0]  %s19, 256, %s846, [#allocation16], 64, 64, 4
        $region48: #{smallformer_forward.1} parent=11 // pred_fallthru
          _
        // Predicated region
        $region49: #{smallformer_forward.1} parent=11 // pred_check
          %p852 = pneg %p323
        $region50: #{smallformer_forward.1} parent=11 // pred_check_branch
          %854 = sbr.rel (%p852) target = $region52
        $region51: #{smallformer_forward.1} parent=11 // pred_region
          %s856 = ssub.s32 16, 16
          %857 = vsyncadd [#allocation19], %s856
          %s859 = sshll.u32 [#allocation18], 4
          %s860 = int_to_ptr.vmem [resolvable:$true] %s859
          %862 = dma.hbm_to_vmem [thread:$0]  %s21, 16, %s860, [#allocation19]
        $region52: #{smallformer_forward.1} parent=11 // pred_fallthru
          _
        // Predicated region
        $region53: #{smallformer_forward.1} parent=11 // pred_check
          %p863 = pneg %p344
        $region54: #{smallformer_forward.1} parent=11 // pred_check_branch
          %865 = sbr.rel (%p863) target = $region56
        $region55: #{smallformer_forward.1} parent=11 // pred_region
          _
        $region56: #{smallformer_forward.1} parent=11 // pred_fallthru
          _
        // Predicated region
        $region57: #{smallformer_forward.1} parent=11 // pred_check
          %p866 = pneg %p365
        $region58: #{smallformer_forward.1} parent=11 // pred_check_branch
          %868 = sbr.rel (%p866) target = $region60
        $region59: #{smallformer_forward.1} parent=11 // pred_region
          %s870 = ssub.s32 16, 16
          %871 = vsyncadd [#allocation19], %s870
          %s873 = sshll.u32 [#allocation20], 4
          %s874 = int_to_ptr.vmem [resolvable:$true] %s873
          %876 = dma.hbm_to_vmem [thread:$0]  %s25, 16, %s874, [#allocation19]
        $region60: #{smallformer_forward.1} parent=11 // pred_fallthru
          _
        // Predicated region
        $region61: #{smallformer_forward.1} parent=11 // pred_check
          %p877 = pneg %p386
        $region62: #{smallformer_forward.1} parent=11 // pred_check_branch
          %879 = sbr.rel (%p877) target = $region64
        $region63: #{smallformer_forward.1} parent=11 // pred_region
          %s881 = ssub.s32 256, 256
          %882 = vsyncadd [#allocation22], %s881
          %s883 = sshll.u32 [#allocation21], 4
          %s884 = int_to_ptr.vmem [resolvable:$true] %s883
          %889 = dma.hbm_to_vmem [thread:$0]  %s27, 256, %s884, [#allocation22], 64, 64, 4
        $region64: #{smallformer_forward.1} parent=11 // pred_fallthru
          _
        // Predicated region
        $region65: #{smallformer_forward.1} parent=11 // pred_check
          %p890 = pneg %p407
        $region66: #{smallformer_forward.1} parent=11 // pred_check_branch
          %892 = sbr.rel (%p890) target = $region68
        $region67: #{smallformer_forward.1} parent=11 // pred_region
          %s894 = ssub.s32 16, 16
          %895 = vsyncadd [#allocation22], %s894
          %s897 = sshll.u32 [#allocation23], 4
          %s898 = int_to_ptr.vmem [resolvable:$true] %s897
          %900 = dma.hbm_to_vmem [thread:$0]  %s29, 16, %s898, [#allocation22]
        $region68: #{smallformer_forward.1} parent=11 // pred_fallthru
          _
        // Predicated region
        $region69: #{smallformer_forward.1} parent=11 // pred_check
          %p901 = pneg %p428
        $region70: #{smallformer_forward.1} parent=11 // pred_check_branch
          %903 = sbr.rel (%p901) target = $region72
        $region71: #{smallformer_forward.1} parent=11 // pred_region
          %s905 = ssub.s32 512, 512
          %906 = vsyncadd [#allocation25], %s905
          %s907 = sshll.u32 [#allocation24], 4
          %s908 = int_to_ptr.vmem [resolvable:$true] %s907
          %913 = dma.hbm_to_vmem [thread:$0]  %s31, 512, %s908, [#allocation25], 128, 128, 8
        $region72: #{smallformer_forward.1} parent=11 // pred_fallthru
          _
        // Predicated region
        $region73: #{smallformer_forward.1} parent=11 // pred_check
          %p914 = pneg %p449
        $region74: #{smallformer_forward.1} parent=11 // pred_check_branch
          %916 = sbr.rel (%p914) target = $region76
        $region75: #{smallformer_forward.1} parent=11 // pred_region
          %s918 = ssub.s32 16, 16
          %919 = vsyncadd [#allocation25], %s918
          %s921 = sshll.u32 [#allocation26], 4
          %s922 = int_to_ptr.vmem [resolvable:$true] %s921
          %924 = dma.hbm_to_vmem [thread:$0]  %s33, 16, %s922, [#allocation25]
        $region76: #{smallformer_forward.1} parent=11 // pred_fallthru
          _
        // Predicated region
        $region77: #{smallformer_forward.1} parent=11 // pred_check
          %p925 = pneg %p470
        $region78: #{smallformer_forward.1} parent=11 // pred_check_branch
          %927 = sbr.rel (%p925) target = $region80
        $region79: #{smallformer_forward.1} parent=11 // pred_region
          %s929 = ssub.s32 256, 256
          %930 = vsyncadd [#allocation28], %s929
          %s931 = sshll.u32 [#allocation27], 4
          %s932 = int_to_ptr.vmem [resolvable:$true] %s931
          %937 = dma.hbm_to_vmem [thread:$0]  %s35, 256, %s932, [#allocation28], 64, 64, 4
        $region80: #{smallformer_forward.1} parent=11 // pred_fallthru
          _
        // Predicated region
        $region81: #{smallformer_forward.1} parent=11 // pred_check
          %p938 = pneg %p491
        $region82: #{smallformer_forward.1} parent=11 // pred_check_branch
          %940 = sbr.rel (%p938) target = $region84
        $region83: #{smallformer_forward.1} parent=11 // pred_region
          %s942 = ssub.s32 16, 16
          %943 = vsyncadd [#allocation28], %s942
          %s945 = sshll.u32 [#allocation29], 4
          %s946 = int_to_ptr.vmem [resolvable:$true] %s945
          %948 = dma.hbm_to_vmem [thread:$0]  %s37, 16, %s946, [#allocation28]
        $region84: #{smallformer_forward.1} parent=11 // pred_fallthru
          _
        // Predicated region
        $region85: #{smallformer_forward.1} parent=11 // pred_check
          %p949 = pneg %p512
        $region86: #{smallformer_forward.1} parent=11 // pred_check_branch
          %951 = sbr.rel (%p949) target = $region88
        $region87: #{smallformer_forward.1} parent=11 // pred_region
          _
        $region88: #{smallformer_forward.1} parent=11 // pred_fallthru
          _
        // Predicated region
        $region89: #{smallformer_forward.1} parent=11 // pred_check
          %p952 = pneg %p533
        $region90: #{smallformer_forward.1} parent=11 // pred_check_branch
          %954 = sbr.rel (%p952) target = $region92
        $region91: #{smallformer_forward.1} parent=11 // pred_region
          %s956 = ssub.s32 16, 16
          %957 = vsyncadd [#allocation31], %s956
          %s959 = sshll.u32 [#allocation30], 4
          %s960 = int_to_ptr.vmem [resolvable:$true] %s959
          %962 = dma.hbm_to_vmem [thread:$0]  %s41, 16, %s960, [#allocation31]
        $region92: #{smallformer_forward.1} parent=11 // pred_fallthru
          _
        // Predicated region
        $region93: #{smallformer_forward.1} parent=11 // pred_check
          %p963 = pneg %p554
        $region94: #{smallformer_forward.1} parent=11 // pred_check_branch
          %965 = sbr.rel (%p963) target = $region96
        $region95: #{smallformer_forward.1} parent=11 // pred_region
          %s967 = ssub.s32 128, 128
          %968 = vsyncadd [#allocation31], %s967
          %s970 = sshll.u32 [#allocation32], 4
          %s971 = int_to_ptr.vmem [resolvable:$true] %s970
          %973 = dma.hbm_to_vmem [thread:$0]  %s43, 128, %s971, [#allocation31]
        $region96: #{smallformer_forward.1} parent=11 // pred_fallthru
          _
        // Predicated region
        $region97: #{smallformer_forward.1} parent=11 // pred_check
          %p974 = pneg %p575
        $region98: #{smallformer_forward.1} parent=11 // pred_check_branch
          %976 = sbr.rel (%p974) target = $region100
        $region99: #{smallformer_forward.1} parent=11 // pred_region
          _
        $region100: #{smallformer_forward.1} parent=11 // pred_fallthru
          _
        // Predicated region
        $region101: #{smallformer_forward.1} parent=11 // pred_check
          %p977 = pneg %p596
        $region102: #{smallformer_forward.1} parent=11 // pred_check_branch
          %979 = sbr.rel (%p977) target = $region104
        $region103: #{smallformer_forward.1} parent=11 // pred_region
          %s981 = ssub.s32 64, 64
          %982 = vsyncadd [#allocation34], %s981
          %s984 = sshll.u32 [#allocation33], 4
          %s985 = int_to_ptr.vmem [resolvable:$true] %s984
          %987 = dma.hbm_to_vmem [thread:$0]  %s47, 64, %s985, [#allocation34]
        $region104: #{smallformer_forward.1} parent=11 // pred_fallthru
          _
        // Predicated region
        $region105: #{smallformer_forward.1} parent=11 // pred_check
          %p988 = pneg %p617
        $region106: #{smallformer_forward.1} parent=11 // pred_check_branch
          %990 = sbr.rel (%p988) target = $region108
        $region107: #{smallformer_forward.1} parent=11 // pred_region
          %s992 = ssub.s32 64, 64
          %993 = vsyncadd [#allocation34], %s992
          %s995 = sshll.u32 [#allocation35], 4
          %s996 = int_to_ptr.vmem [resolvable:$true] %s995
          %998 = dma.hbm_to_vmem [thread:$0]  %s49, 64, %s996, [#allocation34]
        $region108: #{smallformer_forward.1} parent=11 // pred_fallthru
          _
        // Predicated region
        $region109: #{smallformer_forward.1} parent=11 // pred_check
          %p999 = pneg %p638
        $region110: #{smallformer_forward.1} parent=11 // pred_check_branch
          %1001 = sbr.rel (%p999) target = $region112
        $region111: #{smallformer_forward.1} parent=11 // pred_region
          %s1003 = ssub.s32 16, 16
          %1004 = vsyncadd [#allocation37], %s1003
          %s1006 = sshll.u32 [#allocation36], 4
          %s1007 = int_to_ptr.vmem [resolvable:$true] %s1006
          %1009 = dma.hbm_to_vmem [thread:$0]  %s51, 16, %s1007, [#allocation37]
        $region112: #{smallformer_forward.1} parent=11 // pred_fallthru
          _
        // Predicated region
        $region113: #{smallformer_forward.1} parent=11 // pred_check
          %p1010 = pneg %p659
        $region114: #{smallformer_forward.1} parent=11 // pred_check_branch
          %1012 = sbr.rel (%p1010) target = $region116
        $region115: #{smallformer_forward.1} parent=11 // pred_region
          %s1014 = ssub.s32 16, 16
          %1015 = vsyncadd [#allocation37], %s1014
          %s1017 = sshll.u32 [#allocation38], 4
          %s1018 = int_to_ptr.vmem [resolvable:$true] %s1017
          %1020 = dma.hbm_to_vmem [thread:$0]  %s53, 16, %s1018, [#allocation37]
        $region116: #{smallformer_forward.1} parent=11 // pred_fallthru
          _
        // Predicated region
        $region117: #{smallformer_forward.1} parent=11 // pred_check
          %p1021 = pneg %p680
        $region118: #{smallformer_forward.1} parent=11 // pred_check_branch
          %1023 = sbr.rel (%p1021) target = $region120
        $region119: #{smallformer_forward.1} parent=11 // pred_region
          %s1025 = ssub.s32 16, 16
          %1026 = vsyncadd [#allocation40], %s1025
          %s1028 = sshll.u32 [#allocation39], 4
          %s1029 = int_to_ptr.vmem [resolvable:$true] %s1028
          %1031 = dma.hbm_to_vmem [thread:$0]  %s55, 16, %s1029, [#allocation40]
        $region120: #{smallformer_forward.1} parent=11 // pred_fallthru
          _
        // Predicated region
        $region121: #{smallformer_forward.1} parent=11 // pred_check
          %p1032 = pneg %p701
        $region122: #{smallformer_forward.1} parent=11 // pred_check_branch
          %1034 = sbr.rel (%p1032) target = $region124
        $region123: #{smallformer_forward.1} parent=11 // pred_region
          %s1036 = ssub.s32 16, 16
          %1037 = vsyncadd [#allocation40], %s1036
          %s1039 = sshll.u32 [#allocation41], 4
          %s1040 = int_to_ptr.vmem [resolvable:$true] %s1039
          %1042 = dma.hbm_to_vmem [thread:$0]  %s57, 16, %s1040, [#allocation40]
        $region124: #{smallformer_forward.1} parent=11 // pred_fallthru
          _
        // Predicated region
        $region125: #{smallformer_forward.1} parent=11 // pred_check
          %p1043 = pneg %p722
        $region126: #{smallformer_forward.1} parent=11 // pred_check_branch
          %1045 = sbr.rel (%p1043) target = $region128
        $region127: #{smallformer_forward.1} parent=11 // pred_region
          _
        $region128: #{smallformer_forward.1} parent=11 // pred_fallthru
          _
      $region12: #{smallformer_forward.1} parent=5 // pred_fallthru
        _
      %p1046 = scmp.lt.s32.totalorder %s87, 2
      // Predicated region
      $region129: #{smallformer_forward.1} parent=5 // pred_check
        %p1047 = pneg %p1046
      $region130: #{smallformer_forward.1} parent=5 // pred_check_branch
        %1049 = sbr.rel (%p1047) target = $region132
      $region131: #{smallformer_forward.1} parent=5 // pred_region
        // Predicated region
        $region133: #{smallformer_forward.1} parent=131 // pred_check
          %p1050 = pneg %p107
        $region134: #{smallformer_forward.1} parent=131 // pred_check_branch
          %1052 = sbr.rel (%p1050) target = $region136
        $region135: #{smallformer_forward.1} parent=131 // pred_region
          %p1053 = scmp.lt.s32.totalorder %s87, 1
          %s1054 = scalar_select %p1053, %s87, 1
          %s1055 = smul.addr %s1054, 2
          %s1056 = smul.addr %s1055, 8
          %s1057 = scalar_lea.vmem %s1, %s1056
        $region136: #{smallformer_forward.1} parent=131 // pred_fallthru
          _
      $region132: #{smallformer_forward.1} parent=5 // pred_fallthru
        _
      %p1058 = scmp.le.s32.totalorder 1, %s87
      %p1059 = scmp.lt.s32.totalorder %s87, 3
      %p1060 = pnand %p1058, %p1059
      %p1061 = pneg %p1060
      // Predicated region
      $region137: #{smallformer_forward.1} parent=5 // pred_check
        _
      $region138: #{smallformer_forward.1} parent=5 // pred_check_branch
        %1063 = sbr.rel (%p1060) target = $region140
      $region139: #{smallformer_forward.1} parent=5 // pred_region
        %s1064 = ssub.s32 %s87, 1
        // Predicated region
        $region141: #{smallformer_forward.1} parent=139 // pred_check
          %p1065 = pneg %p155
        $region142: #{smallformer_forward.1} parent=139 // pred_check_branch
          %1067 = sbr.rel (%p1065) target = $region144
        $region143: #{smallformer_forward.1} parent=139 // pred_region
          %1068 = dma.done [#allocation8], 16
        $region144: #{smallformer_forward.1} parent=139 // pred_fallthru
          _
        // Predicated region
        $region145: #{smallformer_forward.1} parent=139 // pred_check
          %p1069 = pneg %p176
        $region146: #{smallformer_forward.1} parent=139 // pred_check_branch
          %1071 = sbr.rel (%p1069) target = $region148
        $region147: #{smallformer_forward.1} parent=139 // pred_region
          %1072 = dma.done [#allocation10], 16
        $region148: #{smallformer_forward.1} parent=139 // pred_fallthru
          _
        // Predicated region
        $region149: #{smallformer_forward.1} parent=139 // pred_check
          %p1073 = pneg %p218
        $region150: #{smallformer_forward.1} parent=139 // pred_check_branch
          %1075 = sbr.rel (%p1073) target = $region152
        $region151: #{smallformer_forward.1} parent=139 // pred_region
          %1076 = dma.done [#allocation10], 256
        $region152: #{smallformer_forward.1} parent=139 // pred_fallthru
          _
        // Predicated region
        $region153: #{smallformer_forward.1} parent=139 // pred_check
          %p1077 = pneg %p239
        $region154: #{smallformer_forward.1} parent=139 // pred_check_branch
          %1079 = sbr.rel (%p1077) target = $region156
        $region155: #{smallformer_forward.1} parent=139 // pred_region
          %1080 = dma.done [#allocation13], 16
        $region156: #{smallformer_forward.1} parent=139 // pred_fallthru
          _
        // Predicated region
        $region157: #{smallformer_forward.1} parent=139 // pred_check
          %p1081 = pneg %p260
        $region158: #{smallformer_forward.1} parent=139 // pred_check_branch
          %1083 = sbr.rel (%p1081) target = $region160
        $region159: #{smallformer_forward.1} parent=139 // pred_region
          %1084 = dma.done [#allocation13], 512
        $region160: #{smallformer_forward.1} parent=139 // pred_fallthru
          _
        // Predicated region
        $region161: #{smallformer_forward.1} parent=139 // pred_check
          %p1085 = pneg %p281
        $region162: #{smallformer_forward.1} parent=139 // pred_check_branch
          %1087 = sbr.rel (%p1085) target = $region164
        $region163: #{smallformer_forward.1} parent=139 // pred_region
          %1088 = dma.done [#allocation16], 16
        $region164: #{smallformer_forward.1} parent=139 // pred_fallthru
          _
        // Predicated region
        $region165: #{smallformer_forward.1} parent=139 // pred_check
          %p1089 = pneg %p302
        $region166: #{smallformer_forward.1} parent=139 // pred_check_branch
          %1091 = sbr.rel (%p1089) target = $region168
        $region167: #{smallformer_forward.1} parent=139 // pred_region
          %1092 = dma.done [#allocation16], 256
        $region168: #{smallformer_forward.1} parent=139 // pred_fallthru
          _
        // Predicated region
        $region169: #{smallformer_forward.1} parent=139 // pred_check
          %p1093 = pneg %p323
        $region170: #{smallformer_forward.1} parent=139 // pred_check_branch
          %1095 = sbr.rel (%p1093) target = $region172
        $region171: #{smallformer_forward.1} parent=139 // pred_region
          %1096 = dma.done [#allocation19], 16
        $region172: #{smallformer_forward.1} parent=139 // pred_fallthru
          _
        // Predicated region
        $region173: #{smallformer_forward.1} parent=139 // pred_check
          %p1097 = pneg %p365
        $region174: #{smallformer_forward.1} parent=139 // pred_check_branch
          %1099 = sbr.rel (%p1097) target = $region176
        $region175: #{smallformer_forward.1} parent=139 // pred_region
          %1100 = dma.done [#allocation19], 16
        $region176: #{smallformer_forward.1} parent=139 // pred_fallthru
          _
        // Predicated region
        $region177: #{smallformer_forward.1} parent=139 // pred_check
          %p1101 = pneg %p386
        $region178: #{smallformer_forward.1} parent=139 // pred_check_branch
          %1103 = sbr.rel (%p1101) target = $region180
        $region179: #{smallformer_forward.1} parent=139 // pred_region
          %1104 = dma.done [#allocation22], 256
        $region180: #{smallformer_forward.1} parent=139 // pred_fallthru
          _
        // Predicated region
        $region181: #{smallformer_forward.1} parent=139 // pred_check
          %p1105 = pneg %p407
        $region182: #{smallformer_forward.1} parent=139 // pred_check_branch
          %1107 = sbr.rel (%p1105) target = $region184
        $region183: #{smallformer_forward.1} parent=139 // pred_region
          %1108 = dma.done [#allocation22], 16
        $region184: #{smallformer_forward.1} parent=139 // pred_fallthru
          _
        // Predicated region
        $region185: #{smallformer_forward.1} parent=139 // pred_check
          %p1109 = pneg %p428
        $region186: #{smallformer_forward.1} parent=139 // pred_check_branch
          %1111 = sbr.rel (%p1109) target = $region188
        $region187: #{smallformer_forward.1} parent=139 // pred_region
          %1112 = dma.done [#allocation25], 512
        $region188: #{smallformer_forward.1} parent=139 // pred_fallthru
          _
        // Predicated region
        $region189: #{smallformer_forward.1} parent=139 // pred_check
          %p1113 = pneg %p449
        $region190: #{smallformer_forward.1} parent=139 // pred_check_branch
          %1115 = sbr.rel (%p1113) target = $region192
        $region191: #{smallformer_forward.1} parent=139 // pred_region
          %1116 = dma.done [#allocation25], 16
        $region192: #{smallformer_forward.1} parent=139 // pred_fallthru
          _
        // Predicated region
        $region193: #{smallformer_forward.1} parent=139 // pred_check
          %p1117 = pneg %p470
        $region194: #{smallformer_forward.1} parent=139 // pred_check_branch
          %1119 = sbr.rel (%p1117) target = $region196
        $region195: #{smallformer_forward.1} parent=139 // pred_region
          %1120 = dma.done [#allocation28], 256
        $region196: #{smallformer_forward.1} parent=139 // pred_fallthru
          _
        // Predicated region
        $region197: #{smallformer_forward.1} parent=139 // pred_check
          %p1121 = pneg %p491
        $region198: #{smallformer_forward.1} parent=139 // pred_check_branch
          %1123 = sbr.rel (%p1121) target = $region200
        $region199: #{smallformer_forward.1} parent=139 // pred_region
          %1124 = dma.done [#allocation28], 16
        $region200: #{smallformer_forward.1} parent=139 // pred_fallthru
          _
        // Predicated region
        $region201: #{smallformer_forward.1} parent=139 // pred_check
          %p1125 = pneg %p533
        $region202: #{smallformer_forward.1} parent=139 // pred_check_branch
          %1127 = sbr.rel (%p1125) target = $region204
        $region203: #{smallformer_forward.1} parent=139 // pred_region
          %1128 = dma.done [#allocation31], 16
        $region204: #{smallformer_forward.1} parent=139 // pred_fallthru
          _
        // Predicated region
        $region205: #{smallformer_forward.1} parent=139 // pred_check
          %p1129 = pneg %p554
        $region206: #{smallformer_forward.1} parent=139 // pred_check_branch
          %1131 = sbr.rel (%p1129) target = $region208
        $region207: #{smallformer_forward.1} parent=139 // pred_region
          %1132 = dma.done [#allocation31], 128
        $region208: #{smallformer_forward.1} parent=139 // pred_fallthru
          _
        // Predicated region
        $region209: #{smallformer_forward.1} parent=139 // pred_check
          %p1133 = pneg %p596
        $region210: #{smallformer_forward.1} parent=139 // pred_check_branch
          %1135 = sbr.rel (%p1133) target = $region212
        $region211: #{smallformer_forward.1} parent=139 // pred_region
          %1136 = dma.done [#allocation34], 64
        $region212: #{smallformer_forward.1} parent=139 // pred_fallthru
          _
        // Predicated region
        $region213: #{smallformer_forward.1} parent=139 // pred_check
          %p1137 = pneg %p617
        $region214: #{smallformer_forward.1} parent=139 // pred_check_branch
          %1139 = sbr.rel (%p1137) target = $region216
        $region215: #{smallformer_forward.1} parent=139 // pred_region
          %1140 = dma.done [#allocation34], 64
        $region216: #{smallformer_forward.1} parent=139 // pred_fallthru
          _
        // Predicated region
        $region217: #{smallformer_forward.1} parent=139 // pred_check
          %p1141 = pneg %p638
        $region218: #{smallformer_forward.1} parent=139 // pred_check_branch
          %1143 = sbr.rel (%p1141) target = $region220
        $region219: #{smallformer_forward.1} parent=139 // pred_region
          %1144 = dma.done [#allocation37], 16
        $region220: #{smallformer_forward.1} parent=139 // pred_fallthru
          _
        // Predicated region
        $region221: #{smallformer_forward.1} parent=139 // pred_check
          %p1145 = pneg %p659
        $region222: #{smallformer_forward.1} parent=139 // pred_check_branch
          %1147 = sbr.rel (%p1145) target = $region224
        $region223: #{smallformer_forward.1} parent=139 // pred_region
          %1148 = dma.done [#allocation37], 16
        $region224: #{smallformer_forward.1} parent=139 // pred_fallthru
          _
        // Predicated region
        $region225: #{smallformer_forward.1} parent=139 // pred_check
          %p1149 = pneg %p680
        $region226: #{smallformer_forward.1} parent=139 // pred_check_branch
          %1151 = sbr.rel (%p1149) target = $region228
        $region227: #{smallformer_forward.1} parent=139 // pred_region
          %1152 = dma.done [#allocation40], 16
        $region228: #{smallformer_forward.1} parent=139 // pred_fallthru
          _
        // Predicated region
        $region229: #{smallformer_forward.1} parent=139 // pred_check
          %p1153 = pneg %p701
        $region230: #{smallformer_forward.1} parent=139 // pred_check_branch
          %1155 = sbr.rel (%p1153) target = $region232
        $region231: #{smallformer_forward.1} parent=139 // pred_region
          %1156 = dma.done [#allocation40], 16
        $region232: #{smallformer_forward.1} parent=139 // pred_fallthru
          _
        %p1157 = scmp.lt.s32.totalorder %s92, 1
        %s1158 = scalar_select %p1157, %s92, 1
        %s1159 = smul.addr %s1158, 2
        %s1160 = smul.addr %s1159, 8
        %s1161 = scalar_lea.vmem %s1, %s1160
        %p1162 = pneg %p113
        %p1163 = pneg %p110
        %p1164 = pneg %p134
        %p1165 = pneg %p131
        %p1166 = pneg %p155
        %p1167 = pneg %p152
        %p1168 = pneg %p176
        %p1169 = pneg %p173
        %p1170 = pneg %p197
        %p1171 = pneg %p194
        %p1172 = pneg %p218
        %p1173 = pneg %p215
        %p1174 = pneg %p239
        %p1175 = pneg %p236
        %p1176 = pneg %p260
        %p1177 = pneg %p257
        %p1178 = pneg %p281
        %p1179 = pneg %p278
        %p1180 = pneg %p302
        %p1181 = pneg %p299
        %p1182 = pneg %p323
        %p1183 = pneg %p320
        %p1184 = pneg %p344
        %p1185 = pneg %p341
        %p1186 = pneg %p365
        %p1187 = pneg %p362
        %p1188 = pneg %p386
        %p1189 = pneg %p383
        %p1190 = pneg %p407
        %p1191 = pneg %p404
        %p1192 = pneg %p428
        %p1193 = pneg %p425
        %p1194 = pneg %p449
        %p1195 = pneg %p446
        %p1196 = pneg %p470
        %p1197 = pneg %p467
        %p1198 = pneg %p491
        %p1199 = pneg %p488
        %p1200 = pneg %p512
        %p1201 = pneg %p509
        %p1202 = pneg %p533
        %p1203 = pneg %p530
        %p1204 = pneg %p554
        %p1205 = pneg %p551
        %p1206 = pneg %p575
        %p1207 = pneg %p572
        %p1208 = pneg %p596
        %p1209 = pneg %p593
        %p1210 = pneg %p617
        %p1211 = pneg %p614
        %p1212 = pneg %p638
        %p1213 = pneg %p635
        %p1214 = pneg %p659
        %p1215 = pneg %p656
        %p1216 = pneg %p680
        %p1217 = pneg %p677
        %p1218 = pneg %p701
        %p1219 = pneg %p698
        %p1220 = pneg %p722
        %p1221 = pneg %p719
        %p1222 = pneg %p748
        %p1223 = pneg %p745
        %p1224 = scmp.lt.s32.totalorder %s92, 1
        %s1225 = scalar_select %p1224, %s92, 1
        %s1226 = scalar_lea.vmem %s67, %s1225
        %p1227 = scmp.lt.s32.totalorder %s92, 1
        %s1228 = scalar_select %p1227, %s92, 1
        %s1229 = smul.addr %s1228, 2
        %s1230 = smul.addr %s1229, 8
        %s1231 = scalar_lea.vmem %s1, %s1230
        %p1232 = scmp.lt.s32.totalorder %s92, 1
        %s1233 = scalar_select %p1232, %s92, 1
        %s1234 = scalar_lea.vmem %s67, %s1233
        %p1237 = scmp.lt.u32.totalorder 4, 8
        %p1238 = pneg %p1237
        // Predicated region
        $region233: #{smallformer_forward.1} parent=139 // pred_check
          _
        $region234: #{smallformer_forward.1} parent=139 // pred_check_branch
          %1240 = sbr.rel (%p1237) target = $region236
        $region235: #{smallformer_forward.1} parent=139 // pred_region
          %s1317 = sand.u32 4, 7
          %p1318 = scmp.eq.s32.totalorder %s1317, 0
          %p1319 = pneg %p1318
          // Predicated region
          $region248: #{smallformer_forward.1} parent=235 // pred_check
            _
          $region249: #{smallformer_forward.1} parent=235 // pred_check_branch
            %1321 = sbr.rel (%p1318) target = $region251
          $region250: #{smallformer_forward.1} parent=235 // pred_region
            %s1322 = sand.u32 4, 7
            %s1323 = ssub.s32 4, %s1322
            %s1324 = scalar_lea.vmem %s61, %s1323
            %s1325 = ssub.s32 4, %s1322
            %s1326 = scalar_lea.vmem [#allocation2], %s1325
            loop: start=0, step=1, limit=1
            $region252: #{smallformer_forward.1} parent=250 // loop_pre_header
              _
            $region253: #{smallformer_forward.1} parent=250 // loop_header
              %s1328 = sphi 0, %s1332
              %p1329 = scmp.ge.s32.totalorder %s1328, 1
              %s1333 = sphi %s61, %s61
              %s1334 = sphi [#allocation2], [#allocation2]
            $region254: #{smallformer_forward.1} parent=250 // loop_header_branch
              %1331 = sbr.rel (%p1329) target = $region258
            $region255: #{smallformer_forward.1} parent=250 // loop_body
              _
            $region256: #{smallformer_forward.1} parent=250 // loop_footer
              %s1332 = sadd.s32 1, %s1328
            $region257: #{smallformer_forward.1} parent=250 // loop_footer_branch
              %1327 = sbr.rel target = $region253
            $region258: #{smallformer_forward.1} parent=250 // loop_exit
              _
            %s1335 = sshllo.u32 0, %s1322
            loop: start=0, step=1, limit=1
            $region259: #{smallformer_forward.1} parent=250 // loop_pre_header
              _
            $region260: #{smallformer_forward.1} parent=250 // loop_header
              %s1337 = sphi 0, %s1341
              %p1338 = scmp.ge.s32.totalorder %s1337, 1
              %s1342 = sphi %s1324, %s1324
              %s1343 = sphi %s1326, %s1326
            $region261: #{smallformer_forward.1} parent=250 // loop_header_branch
              %1340 = sbr.rel (%p1338) target = $region265
            $region262: #{smallformer_forward.1} parent=250 // loop_body
              %v1344 = vld [vmem:[%s1342] sm:%s1335]
              %1345 = vst [vmem:[%s1343] sm:%s1335] %v1344
              %v1346 = vld [vmem:[%s1342 + $0x20] sm:%s1335]
              %1347 = vst [vmem:[%s1343 + $0x4] sm:%s1335] %v1346
              %v1348 = vld [vmem:[%s1342 + $0x4] sm:%s1335]
              %1349 = vst [vmem:[%s1343 + $0x8] sm:%s1335] %v1348
              %v1350 = vld [vmem:[%s1342 + $0x24] sm:%s1335]
              %1351 = vst [vmem:[%s1343 + $0xc] sm:%s1335] %v1350
              %v1352 = vld [vmem:[%s1342 + $0x8] sm:%s1335]
              %1353 = vst [vmem:[%s1343 + $0x10] sm:%s1335] %v1352
              %v1354 = vld [vmem:[%s1342 + $0x28] sm:%s1335]
              %1355 = vst [vmem:[%s1343 + $0x14] sm:%s1335] %v1354
              %v1356 = vld [vmem:[%s1342 + $0xc] sm:%s1335]
              %1357 = vst [vmem:[%s1343 + $0x18] sm:%s1335] %v1356
              %v1358 = vld [vmem:[%s1342 + $0x2c] sm:%s1335]
              %1359 = vst [vmem:[%s1343 + $0x1c] sm:%s1335] %v1358
              %v1360 = vld [vmem:[%s1342 + $0x10] sm:%s1335]
              %1361 = vst [vmem:[%s1343 + $0x20] sm:%s1335] %v1360
              %v1362 = vld [vmem:[%s1342 + $0x30] sm:%s1335]
              %1363 = vst [vmem:[%s1343 + $0x24] sm:%s1335] %v1362
              %v1364 = vld [vmem:[%s1342 + $0x14] sm:%s1335]
              %1365 = vst [vmem:[%s1343 + $0x28] sm:%s1335] %v1364
              %v1366 = vld [vmem:[%s1342 + $0x34] sm:%s1335]
              %1367 = vst [vmem:[%s1343 + $0x2c] sm:%s1335] %v1366
              %v1368 = vld [vmem:[%s1342 + $0x18] sm:%s1335]
              %1369 = vst [vmem:[%s1343 + $0x30] sm:%s1335] %v1368
              %v1370 = vld [vmem:[%s1342 + $0x38] sm:%s1335]
              %1371 = vst [vmem:[%s1343 + $0x34] sm:%s1335] %v1370
              %v1372 = vld [vmem:[%s1342 + $0x1c] sm:%s1335]
              %1373 = vst [vmem:[%s1343 + $0x38] sm:%s1335] %v1372
              %v1374 = vld [vmem:[%s1342 + $0x3c] sm:%s1335]
              %1375 = vst [vmem:[%s1343 + $0x3c] sm:%s1335] %v1374
              %v1376 = vld [vmem:[%s1342 + $0x40] sm:%s1335]
              %1377 = vst [vmem:[%s1343 + $0x40] sm:%s1335] %v1376
              %v1378 = vld [vmem:[%s1342 + $0x60] sm:%s1335]
              %1379 = vst [vmem:[%s1343 + $0x44] sm:%s1335] %v1378
              %v1380 = vld [vmem:[%s1342 + $0x44] sm:%s1335]
              %1381 = vst [vmem:[%s1343 + $0x48] sm:%s1335] %v1380
              %v1382 = vld [vmem:[%s1342 + $0x64] sm:%s1335]
              %1383 = vst [vmem:[%s1343 + $0x4c] sm:%s1335] %v1382
              %v1384 = vld [vmem:[%s1342 + $0x48] sm:%s1335]
              %1385 = vst [vmem:[%s1343 + $0x50] sm:%s1335] %v1384
              %v1386 = vld [vmem:[%s1342 + $0x68] sm:%s1335]
              %1387 = vst [vmem:[%s1343 + $0x54] sm:%s1335] %v1386
              %v1388 = vld [vmem:[%s1342 + $0x4c] sm:%s1335]
              %1389 = vst [vmem:[%s1343 + $0x58] sm:%s1335] %v1388
              %v1390 = vld [vmem:[%s1342 + $0x6c] sm:%s1335]
              %1391 = vst [vmem:[%s1343 + $0x5c] sm:%s1335] %v1390
              %v1392 = vld [vmem:[%s1342 + $0x50] sm:%s1335]
              %1393 = vst [vmem:[%s1343 + $0x60] sm:%s1335] %v1392
              %v1394 = vld [vmem:[%s1342 + $0x70] sm:%s1335]
              %1395 = vst [vmem:[%s1343 + $0x64] sm:%s1335] %v1394
              %v1396 = vld [vmem:[%s1342 + $0x54] sm:%s1335]
              %1397 = vst [vmem:[%s1343 + $0x68] sm:%s1335] %v1396
              %v1398 = vld [vmem:[%s1342 + $0x74] sm:%s1335]
              %1399 = vst [vmem:[%s1343 + $0x6c] sm:%s1335] %v1398
              %v1400 = vld [vmem:[%s1342 + $0x58] sm:%s1335]
              %1401 = vst [vmem:[%s1343 + $0x70] sm:%s1335] %v1400
              %v1402 = vld [vmem:[%s1342 + $0x78] sm:%s1335]
              %1403 = vst [vmem:[%s1343 + $0x74] sm:%s1335] %v1402
              %v1404 = vld [vmem:[%s1342 + $0x5c] sm:%s1335]
              %1405 = vst [vmem:[%s1343 + $0x78] sm:%s1335] %v1404
              %v1406 = vld [vmem:[%s1342 + $0x7c] sm:%s1335]
              %1407 = vst [vmem:[%s1343 + $0x7c] sm:%s1335] %v1406
            $region263: #{smallformer_forward.1} parent=250 // loop_footer
              %s1341 = sadd.s32 1, %s1337
            $region264: #{smallformer_forward.1} parent=250 // loop_footer_branch
              %1336 = sbr.rel target = $region260
            $region265: #{smallformer_forward.1} parent=250 // loop_exit
              _
          $region251: #{smallformer_forward.1} parent=235 // pred_fallthru
            _
        $region236: #{smallformer_forward.1} parent=139 // pred_fallthru
          _
        // Predicated region
        $region237: #{smallformer_forward.1} parent=139 // pred_check
          %p1241 = pneg %p1237
        $region238: #{smallformer_forward.1} parent=139 // pred_check_branch
          %1243 = sbr.rel (%p1241) target = $region240
        $region239: #{smallformer_forward.1} parent=139 // pred_region
          %s1244 = sshllo.u32 0, 4
          loop: start=0, step=1, limit=1
          $region241: #{smallformer_forward.1} parent=239 // loop_pre_header
            _
          $region242: #{smallformer_forward.1} parent=239 // loop_header
            %s1246 = sphi 0, %s1250
            %p1247 = scmp.ge.s32.totalorder %s1246, 1
            %s1251 = sphi %s61, %s61
            %s1252 = sphi [#allocation2], [#allocation2]
          $region243: #{smallformer_forward.1} parent=239 // loop_header_branch
            %1249 = sbr.rel (%p1247) target = $region247
          $region244: #{smallformer_forward.1} parent=239 // loop_body
            %v1253 = vld [vmem:[%s1251] sm:%s1244]
            %1254 = vst [vmem:[%s1252] sm:%s1244] %v1253
            %v1255 = vld [vmem:[%s1251 + $0x20] sm:%s1244]
            %1256 = vst [vmem:[%s1252 + $0x4] sm:%s1244] %v1255
            %v1257 = vld [vmem:[%s1251 + $0x4] sm:%s1244]
            %1258 = vst [vmem:[%s1252 + $0x8] sm:%s1244] %v1257
            %v1259 = vld [vmem:[%s1251 + $0x24] sm:%s1244]
            %1260 = vst [vmem:[%s1252 + $0xc] sm:%s1244] %v1259
            %v1261 = vld [vmem:[%s1251 + $0x8] sm:%s1244]
            %1262 = vst [vmem:[%s1252 + $0x10] sm:%s1244] %v1261
            %v1263 = vld [vmem:[%s1251 + $0x28] sm:%s1244]
            %1264 = vst [vmem:[%s1252 + $0x14] sm:%s1244] %v1263
            %v1265 = vld [vmem:[%s1251 + $0xc] sm:%s1244]
            %1266 = vst [vmem:[%s1252 + $0x18] sm:%s1244] %v1265
            %v1267 = vld [vmem:[%s1251 + $0x2c] sm:%s1244]
            %1268 = vst [vmem:[%s1252 + $0x1c] sm:%s1244] %v1267
            %v1269 = vld [vmem:[%s1251 + $0x10] sm:%s1244]
            %1270 = vst [vmem:[%s1252 + $0x20] sm:%s1244] %v1269
            %v1271 = vld [vmem:[%s1251 + $0x30] sm:%s1244]
            %1272 = vst [vmem:[%s1252 + $0x24] sm:%s1244] %v1271
            %v1273 = vld [vmem:[%s1251 + $0x14] sm:%s1244]
            %1274 = vst [vmem:[%s1252 + $0x28] sm:%s1244] %v1273
            %v1275 = vld [vmem:[%s1251 + $0x34] sm:%s1244]
            %1276 = vst [vmem:[%s1252 + $0x2c] sm:%s1244] %v1275
            %v1277 = vld [vmem:[%s1251 + $0x18] sm:%s1244]
            %1278 = vst [vmem:[%s1252 + $0x30] sm:%s1244] %v1277
            %v1279 = vld [vmem:[%s1251 + $0x38] sm:%s1244]
            %1280 = vst [vmem:[%s1252 + $0x34] sm:%s1244] %v1279
            %v1281 = vld [vmem:[%s1251 + $0x1c] sm:%s1244]
            %1282 = vst [vmem:[%s1252 + $0x38] sm:%s1244] %v1281
            %v1283 = vld [vmem:[%s1251 + $0x3c] sm:%s1244]
            %1284 = vst [vmem:[%s1252 + $0x3c] sm:%s1244] %v1283
            %v1285 = vld [vmem:[%s1251 + $0x40] sm:%s1244]
            %1286 = vst [vmem:[%s1252 + $0x40] sm:%s1244] %v1285
            %v1287 = vld [vmem:[%s1251 + $0x60] sm:%s1244]
            %1288 = vst [vmem:[%s1252 + $0x44] sm:%s1244] %v1287
            %v1289 = vld [vmem:[%s1251 + $0x44] sm:%s1244]
            %1290 = vst [vmem:[%s1252 + $0x48] sm:%s1244] %v1289
            %v1291 = vld [vmem:[%s1251 + $0x64] sm:%s1244]
            %1292 = vst [vmem:[%s1252 + $0x4c] sm:%s1244] %v1291
            %v1293 = vld [vmem:[%s1251 + $0x48] sm:%s1244]
            %1294 = vst [vmem:[%s1252 + $0x50] sm:%s1244] %v1293
            %v1295 = vld [vmem:[%s1251 + $0x68] sm:%s1244]
            %1296 = vst [vmem:[%s1252 + $0x54] sm:%s1244] %v1295
            %v1297 = vld [vmem:[%s1251 + $0x4c] sm:%s1244]
            %1298 = vst [vmem:[%s1252 + $0x58] sm:%s1244] %v1297
            %v1299 = vld [vmem:[%s1251 + $0x6c] sm:%s1244]
            %1300 = vst [vmem:[%s1252 + $0x5c] sm:%s1244] %v1299
            %v1301 = vld [vmem:[%s1251 + $0x50] sm:%s1244]
            %1302 = vst [vmem:[%s1252 + $0x60] sm:%s1244] %v1301
            %v1303 = vld [vmem:[%s1251 + $0x70] sm:%s1244]
            %1304 = vst [vmem:[%s1252 + $0x64] sm:%s1244] %v1303
            %v1305 = vld [vmem:[%s1251 + $0x54] sm:%s1244]
            %1306 = vst [vmem:[%s1252 + $0x68] sm:%s1244] %v1305
            %v1307 = vld [vmem:[%s1251 + $0x74] sm:%s1244]
            %1308 = vst [vmem:[%s1252 + $0x6c] sm:%s1244] %v1307
            %v1309 = vld [vmem:[%s1251 + $0x58] sm:%s1244]
            %1310 = vst [vmem:[%s1252 + $0x70] sm:%s1244] %v1309
            %v1311 = vld [vmem:[%s1251 + $0x78] sm:%s1244]
            %1312 = vst [vmem:[%s1252 + $0x74] sm:%s1244] %v1311
            %v1313 = vld [vmem:[%s1251 + $0x5c] sm:%s1244]
            %1314 = vst [vmem:[%s1252 + $0x78] sm:%s1244] %v1313
            %v1315 = vld [vmem:[%s1251 + $0x7c] sm:%s1244]
            %1316 = vst [vmem:[%s1252 + $0x7c] sm:%s1244] %v1315
          $region245: #{smallformer_forward.1} parent=239 // loop_footer
            %s1250 = sadd.s32 1, %s1246
          $region246: #{smallformer_forward.1} parent=239 // loop_footer_branch
            %1245 = sbr.rel target = $region242
          $region247: #{smallformer_forward.1} parent=239 // loop_exit
            _
        $region240: #{smallformer_forward.1} parent=139 // pred_fallthru
          _
        // Predicated region
        $region266: #{smallformer_forward.1} parent=139 // pred_check
          _
        $region267: #{smallformer_forward.1} parent=139 // pred_check_branch
          %1410 = sbr.rel (0) target = $region269
        $region268: #{smallformer_forward.1} parent=139 // pred_region
          %1411 = vsyncadd [#allocation5], 2048
        $region269: #{smallformer_forward.1} parent=139 // pred_fallthru
          _
        %s1412 = scalar_lea.sflag [#allocation5], 1
        %p1414 = scmp.lt.u32.totalorder 2000, 8
        %p1415 = pneg %p1414
        // Predicated region
        $region270: #{smallformer_forward.1} parent=139 // pred_check
          _
        $region271: #{smallformer_forward.1} parent=139 // pred_check_branch
          %1417 = sbr.rel (%p1414) target = $region273
        $region272: #{smallformer_forward.1} parent=139 // pred_region
          %s1432 = sand.u32 2000, 7
          %p1433 = scmp.eq.s32.totalorder %s1432, 0
          // Predicated region
          $region285: #{smallformer_forward.1} parent=272 // pred_check
            %p1434 = pneg %p1433
          $region286: #{smallformer_forward.1} parent=272 // pred_check_branch
            %1436 = sbr.rel (%p1434) target = $region288
          $region287: #{smallformer_forward.1} parent=272 // pred_region
            loop: start=0, step=1, limit=1
            $region289: #{smallformer_forward.1} parent=287 // loop_pre_header
              _
            $region290: #{smallformer_forward.1} parent=287 // loop_header
              %s1438 = sphi 0, %s1442
              %p1439 = scmp.ge.s32.totalorder %s1438, 1
              %s1443 = sphi %s63, %s63
              %s1444 = sphi [#allocation3], [#allocation3]
            $region291: #{smallformer_forward.1} parent=287 // loop_header_branch
              %1441 = sbr.rel (%p1439) target = $region295
            $region292: #{smallformer_forward.1} parent=287 // loop_body
              %v1445 = vld [vmem:[%s1443] sm:$0xff]
              %1446 = vst [vmem:[%s1444] sm:$0xff] %v1445
              %v1447 = vld [vmem:[%s1443 + $0x8] sm:$0xff]
              %1448 = vst [vmem:[%s1444 + $0x8] sm:$0xff] %v1447
              %v1449 = vld [vmem:[%s1443 + $0x10] sm:$0xff]
              %1450 = vst [vmem:[%s1444 + $0x10] sm:$0xff] %v1449
              %v1451 = vld [vmem:[%s1443 + $0x18] sm:$0xff]
              %1452 = vst [vmem:[%s1444 + $0x18] sm:$0xff] %v1451
              %v1453 = vld [vmem:[%s1443 + $0x20] sm:$0xff]
              %1454 = vst [vmem:[%s1444 + $0x20] sm:$0xff] %v1453
              %v1455 = vld [vmem:[%s1443 + $0x28] sm:$0xff]
              %1456 = vst [vmem:[%s1444 + $0x28] sm:$0xff] %v1455
              %v1457 = vld [vmem:[%s1443 + $0x30] sm:$0xff]
              %1458 = vst [vmem:[%s1444 + $0x30] sm:$0xff] %v1457
              %v1459 = vld [vmem:[%s1443 + $0x38] sm:$0xff]
              %1460 = vst [vmem:[%s1444 + $0x38] sm:$0xff] %v1459
              %v1461 = vld [vmem:[%s1443 + $0x40] sm:$0xff]
              %1462 = vst [vmem:[%s1444 + $0x40] sm:$0xff] %v1461
              %v1463 = vld [vmem:[%s1443 + $0x48] sm:$0xff]
              %1464 = vst [vmem:[%s1444 + $0x48] sm:$0xff] %v1463
              %v1465 = vld [vmem:[%s1443 + $0x50] sm:$0xff]
              %1466 = vst [vmem:[%s1444 + $0x50] sm:$0xff] %v1465
              %v1467 = vld [vmem:[%s1443 + $0x58] sm:$0xff]
              %1468 = vst [vmem:[%s1444 + $0x58] sm:$0xff] %v1467
              %v1469 = vld [vmem:[%s1443 + $0x60] sm:$0xff]
              %1470 = vst [vmem:[%s1444 + $0x60] sm:$0xff] %v1469
              %v1471 = vld [vmem:[%s1443 + $0x68] sm:$0xff]
              %1472 = vst [vmem:[%s1444 + $0x68] sm:$0xff] %v1471
              %v1473 = vld [vmem:[%s1443 + $0x70] sm:$0xff]
              %1474 = vst [vmem:[%s1444 + $0x70] sm:$0xff] %v1473
              %v1475 = vld [vmem:[%s1443 + $0x78] sm:$0xff]
              %1476 = vst [vmem:[%s1444 + $0x78] sm:$0xff] %v1475
              %v1477 = vld [vmem:[%s1443 + $0x80] sm:$0xff]
              %1478 = vst [vmem:[%s1444 + $0x80] sm:$0xff] %v1477
              %v1479 = vld [vmem:[%s1443 + $0x88] sm:$0xff]
              %1480 = vst [vmem:[%s1444 + $0x88] sm:$0xff] %v1479
              %v1481 = vld [vmem:[%s1443 + $0x90] sm:$0xff]
              %1482 = vst [vmem:[%s1444 + $0x90] sm:$0xff] %v1481
              %v1483 = vld [vmem:[%s1443 + $0x98] sm:$0xff]
              %1484 = vst [vmem:[%s1444 + $0x98] sm:$0xff] %v1483
              %v1485 = vld [vmem:[%s1443 + $0xa0] sm:$0xff]
              %1486 = vst [vmem:[%s1444 + $0xa0] sm:$0xff] %v1485
              %v1487 = vld [vmem:[%s1443 + $0xa8] sm:$0xff]
              %1488 = vst [vmem:[%s1444 + $0xa8] sm:$0xff] %v1487
              %v1489 = vld [vmem:[%s1443 + $0xb0] sm:$0xff]
              %1490 = vst [vmem:[%s1444 + $0xb0] sm:$0xff] %v1489
              %v1491 = vld [vmem:[%s1443 + $0xb8] sm:$0xff]
              %1492 = vst [vmem:[%s1444 + $0xb8] sm:$0xff] %v1491
              %v1493 = vld [vmem:[%s1443 + $0xc0] sm:$0xff]
              %1494 = vst [vmem:[%s1444 + $0xc0] sm:$0xff] %v1493
              %v1495 = vld [vmem:[%s1443 + $0xc8] sm:$0xff]
              %1496 = vst [vmem:[%s1444 + $0xc8] sm:$0xff] %v1495
              %v1497 = vld [vmem:[%s1443 + $0xd0] sm:$0xff]
              %1498 = vst [vmem:[%s1444 + $0xd0] sm:$0xff] %v1497
              %v1499 = vld [vmem:[%s1443 + $0xd8] sm:$0xff]
              %1500 = vst [vmem:[%s1444 + $0xd8] sm:$0xff] %v1499
              %v1501 = vld [vmem:[%s1443 + $0xe0] sm:$0xff]
              %1502 = vst [vmem:[%s1444 + $0xe0] sm:$0xff] %v1501
              %v1503 = vld [vmem:[%s1443 + $0xe8] sm:$0xff]
              %1504 = vst [vmem:[%s1444 + $0xe8] sm:$0xff] %v1503
              %v1505 = vld [vmem:[%s1443 + $0xf0] sm:$0xff]
              %1506 = vst [vmem:[%s1444 + $0xf0] sm:$0xff] %v1505
              %v1507 = vld [vmem:[%s1443 + $0xf8] sm:$0xff]
              %1508 = vst [vmem:[%s1444 + $0xf8] sm:$0xff] %v1507
              %v1509 = vld [vmem:[%s1443 + $0x100] sm:$0xff]
              %1510 = vst [vmem:[%s1444 + $0x100] sm:$0xff] %v1509
              %v1511 = vld [vmem:[%s1443 + $0x108] sm:$0xff]
              %1512 = vst [vmem:[%s1444 + $0x108] sm:$0xff] %v1511
              %v1513 = vld [vmem:[%s1443 + $0x110] sm:$0xff]
              %1514 = vst [vmem:[%s1444 + $0x110] sm:$0xff] %v1513
              %v1515 = vld [vmem:[%s1443 + $0x118] sm:$0xff]
              %1516 = vst [vmem:[%s1444 + $0x118] sm:$0xff] %v1515
              %v1517 = vld [vmem:[%s1443 + $0x120] sm:$0xff]
              %1518 = vst [vmem:[%s1444 + $0x120] sm:$0xff] %v1517
              %v1519 = vld [vmem:[%s1443 + $0x128] sm:$0xff]
              %1520 = vst [vmem:[%s1444 + $0x128] sm:$0xff] %v1519
              %v1521 = vld [vmem:[%s1443 + $0x130] sm:$0xff]
              %1522 = vst [vmem:[%s1444 + $0x130] sm:$0xff] %v1521
              %v1523 = vld [vmem:[%s1443 + $0x138] sm:$0xff]
              %1524 = vst [vmem:[%s1444 + $0x138] sm:$0xff] %v1523
              %v1525 = vld [vmem:[%s1443 + $0x140] sm:$0xff]
              %1526 = vst [vmem:[%s1444 + $0x140] sm:$0xff] %v1525
              %v1527 = vld [vmem:[%s1443 + $0x148] sm:$0xff]
              %1528 = vst [vmem:[%s1444 + $0x148] sm:$0xff] %v1527
              %v1529 = vld [vmem:[%s1443 + $0x150] sm:$0xff]
              %1530 = vst [vmem:[%s1444 + $0x150] sm:$0xff] %v1529
              %v1531 = vld [vmem:[%s1443 + $0x158] sm:$0xff]
              %1532 = vst [vmem:[%s1444 + $0x158] sm:$0xff] %v1531
              %v1533 = vld [vmem:[%s1443 + $0x160] sm:$0xff]
              %1534 = vst [vmem:[%s1444 + $0x160] sm:$0xff] %v1533
              %v1535 = vld [vmem:[%s1443 + $0x168] sm:$0xff]
              %1536 = vst [vmem:[%s1444 + $0x168] sm:$0xff] %v1535
              %v1537 = vld [vmem:[%s1443 + $0x170] sm:$0xff]
              %1538 = vst [vmem:[%s1444 + $0x170] sm:$0xff] %v1537
              %v1539 = vld [vmem:[%s1443 + $0x178] sm:$0xff]
              %1540 = vst [vmem:[%s1444 + $0x178] sm:$0xff] %v1539
              %v1541 = vld [vmem:[%s1443 + $0x180] sm:$0xff]
              %1542 = vst [vmem:[%s1444 + $0x180] sm:$0xff] %v1541
              %v1543 = vld [vmem:[%s1443 + $0x188] sm:$0xff]
              %1544 = vst [vmem:[%s1444 + $0x188] sm:$0xff] %v1543
              %v1545 = vld [vmem:[%s1443 + $0x190] sm:$0xff]
              %1546 = vst [vmem:[%s1444 + $0x190] sm:$0xff] %v1545
              %v1547 = vld [vmem:[%s1443 + $0x198] sm:$0xff]
              %1548 = vst [vmem:[%s1444 + $0x198] sm:$0xff] %v1547
              %v1549 = vld [vmem:[%s1443 + $0x1a0] sm:$0xff]
              %1550 = vst [vmem:[%s1444 + $0x1a0] sm:$0xff] %v1549
              %v1551 = vld [vmem:[%s1443 + $0x1a8] sm:$0xff]
              %1552 = vst [vmem:[%s1444 + $0x1a8] sm:$0xff] %v1551
              %v1553 = vld [vmem:[%s1443 + $0x1b0] sm:$0xff]
              %1554 = vst [vmem:[%s1444 + $0x1b0] sm:$0xff] %v1553
              %v1555 = vld [vmem:[%s1443 + $0x1b8] sm:$0xff]
              %1556 = vst [vmem:[%s1444 + $0x1b8] sm:$0xff] %v1555
              %v1557 = vld [vmem:[%s1443 + $0x1c0] sm:$0xff]
              %1558 = vst [vmem:[%s1444 + $0x1c0] sm:$0xff] %v1557
              %v1559 = vld [vmem:[%s1443 + $0x1c8] sm:$0xff]
              %1560 = vst [vmem:[%s1444 + $0x1c8] sm:$0xff] %v1559
              %v1561 = vld [vmem:[%s1443 + $0x1d0] sm:$0xff]
              %1562 = vst [vmem:[%s1444 + $0x1d0] sm:$0xff] %v1561
              %v1563 = vld [vmem:[%s1443 + $0x1d8] sm:$0xff]
              %1564 = vst [vmem:[%s1444 + $0x1d8] sm:$0xff] %v1563
              %v1565 = vld [vmem:[%s1443 + $0x1e0] sm:$0xff]
              %1566 = vst [vmem:[%s1444 + $0x1e0] sm:$0xff] %v1565
              %v1567 = vld [vmem:[%s1443 + $0x1e8] sm:$0xff]
              %1568 = vst [vmem:[%s1444 + $0x1e8] sm:$0xff] %v1567
              %v1569 = vld [vmem:[%s1443 + $0x1f0] sm:$0xff]
              %1570 = vst [vmem:[%s1444 + $0x1f0] sm:$0xff] %v1569
              %v1571 = vld [vmem:[%s1443 + $0x1f8] sm:$0xff]
              %1572 = vst [vmem:[%s1444 + $0x1f8] sm:$0xff] %v1571
              %v1573 = vld [vmem:[%s1443 + $0x200] sm:$0xff]
              %1574 = vst [vmem:[%s1444 + $0x200] sm:$0xff] %v1573
              %v1575 = vld [vmem:[%s1443 + $0x208] sm:$0xff]
              %1576 = vst [vmem:[%s1444 + $0x208] sm:$0xff] %v1575
              %v1577 = vld [vmem:[%s1443 + $0x210] sm:$0xff]
              %1578 = vst [vmem:[%s1444 + $0x210] sm:$0xff] %v1577
              %v1579 = vld [vmem:[%s1443 + $0x218] sm:$0xff]
              %1580 = vst [vmem:[%s1444 + $0x218] sm:$0xff] %v1579
              %v1581 = vld [vmem:[%s1443 + $0x220] sm:$0xff]
              %1582 = vst [vmem:[%s1444 + $0x220] sm:$0xff] %v1581
              %v1583 = vld [vmem:[%s1443 + $0x228] sm:$0xff]
              %1584 = vst [vmem:[%s1444 + $0x228] sm:$0xff] %v1583
              %v1585 = vld [vmem:[%s1443 + $0x230] sm:$0xff]
              %1586 = vst [vmem:[%s1444 + $0x230] sm:$0xff] %v1585
              %v1587 = vld [vmem:[%s1443 + $0x238] sm:$0xff]
              %1588 = vst [vmem:[%s1444 + $0x238] sm:$0xff] %v1587
              %v1589 = vld [vmem:[%s1443 + $0x240] sm:$0xff]
              %1590 = vst [vmem:[%s1444 + $0x240] sm:$0xff] %v1589
              %v1591 = vld [vmem:[%s1443 + $0x248] sm:$0xff]
              %1592 = vst [vmem:[%s1444 + $0x248] sm:$0xff] %v1591
              %v1593 = vld [vmem:[%s1443 + $0x250] sm:$0xff]
              %1594 = vst [vmem:[%s1444 + $0x250] sm:$0xff] %v1593
              %v1595 = vld [vmem:[%s1443 + $0x258] sm:$0xff]
              %1596 = vst [vmem:[%s1444 + $0x258] sm:$0xff] %v1595
              %v1597 = vld [vmem:[%s1443 + $0x260] sm:$0xff]
              %1598 = vst [vmem:[%s1444 + $0x260] sm:$0xff] %v1597
              %v1599 = vld [vmem:[%s1443 + $0x268] sm:$0xff]
              %1600 = vst [vmem:[%s1444 + $0x268] sm:$0xff] %v1599
              %v1601 = vld [vmem:[%s1443 + $0x270] sm:$0xff]
              %1602 = vst [vmem:[%s1444 + $0x270] sm:$0xff] %v1601
              %v1603 = vld [vmem:[%s1443 + $0x278] sm:$0xff]
              %1604 = vst [vmem:[%s1444 + $0x278] sm:$0xff] %v1603
              %v1605 = vld [vmem:[%s1443 + $0x280] sm:$0xff]
              %1606 = vst [vmem:[%s1444 + $0x280] sm:$0xff] %v1605
              %v1607 = vld [vmem:[%s1443 + $0x288] sm:$0xff]
              %1608 = vst [vmem:[%s1444 + $0x288] sm:$0xff] %v1607
              %v1609 = vld [vmem:[%s1443 + $0x290] sm:$0xff]
              %1610 = vst [vmem:[%s1444 + $0x290] sm:$0xff] %v1609
              %v1611 = vld [vmem:[%s1443 + $0x298] sm:$0xff]
              %1612 = vst [vmem:[%s1444 + $0x298] sm:$0xff] %v1611
              %v1613 = vld [vmem:[%s1443 + $0x2a0] sm:$0xff]
              %1614 = vst [vmem:[%s1444 + $0x2a0] sm:$0xff] %v1613
              %v1615 = vld [vmem:[%s1443 + $0x2a8] sm:$0xff]
              %1616 = vst [vmem:[%s1444 + $0x2a8] sm:$0xff] %v1615
              %v1617 = vld [vmem:[%s1443 + $0x2b0] sm:$0xff]
              %1618 = vst [vmem:[%s1444 + $0x2b0] sm:$0xff] %v1617
              %v1619 = vld [vmem:[%s1443 + $0x2b8] sm:$0xff]
              %1620 = vst [vmem:[%s1444 + $0x2b8] sm:$0xff] %v1619
              %v1621 = vld [vmem:[%s1443 + $0x2c0] sm:$0xff]
              %1622 = vst [vmem:[%s1444 + $0x2c0] sm:$0xff] %v1621
              %v1623 = vld [vmem:[%s1443 + $0x2c8] sm:$0xff]
              %1624 = vst [vmem:[%s1444 + $0x2c8] sm:$0xff] %v1623
              %v1625 = vld [vmem:[%s1443 + $0x2d0] sm:$0xff]
              %1626 = vst [vmem:[%s1444 + $0x2d0] sm:$0xff] %v1625
              %v1627 = vld [vmem:[%s1443 + $0x2d8] sm:$0xff]
              %1628 = vst [vmem:[%s1444 + $0x2d8] sm:$0xff] %v1627
              %v1629 = vld [vmem:[%s1443 + $0x2e0] sm:$0xff]
              %1630 = vst [vmem:[%s1444 + $0x2e0] sm:$0xff] %v1629
              %v1631 = vld [vmem:[%s1443 + $0x2e8] sm:$0xff]
              %1632 = vst [vmem:[%s1444 + $0x2e8] sm:$0xff] %v1631
              %v1633 = vld [vmem:[%s1443 + $0x2f0] sm:$0xff]
              %1634 = vst [vmem:[%s1444 + $0x2f0] sm:$0xff] %v1633
              %v1635 = vld [vmem:[%s1443 + $0x2f8] sm:$0xff]
              %1636 = vst [vmem:[%s1444 + $0x2f8] sm:$0xff] %v1635
              %v1637 = vld [vmem:[%s1443 + $0x300] sm:$0xff]
              %1638 = vst [vmem:[%s1444 + $0x300] sm:$0xff] %v1637
              %v1639 = vld [vmem:[%s1443 + $0x308] sm:$0xff]
              %1640 = vst [vmem:[%s1444 + $0x308] sm:$0xff] %v1639
              %v1641 = vld [vmem:[%s1443 + $0x310] sm:$0xff]
              %1642 = vst [vmem:[%s1444 + $0x310] sm:$0xff] %v1641
              %v1643 = vld [vmem:[%s1443 + $0x318] sm:$0xff]
              %1644 = vst [vmem:[%s1444 + $0x318] sm:$0xff] %v1643
              %v1645 = vld [vmem:[%s1443 + $0x320] sm:$0xff]
              %1646 = vst [vmem:[%s1444 + $0x320] sm:$0xff] %v1645
              %v1647 = vld [vmem:[%s1443 + $0x328] sm:$0xff]
              %1648 = vst [vmem:[%s1444 + $0x328] sm:$0xff] %v1647
              %v1649 = vld [vmem:[%s1443 + $0x330] sm:$0xff]
              %1650 = vst [vmem:[%s1444 + $0x330] sm:$0xff] %v1649
              %v1651 = vld [vmem:[%s1443 + $0x338] sm:$0xff]
              %1652 = vst [vmem:[%s1444 + $0x338] sm:$0xff] %v1651
              %v1653 = vld [vmem:[%s1443 + $0x340] sm:$0xff]
              %1654 = vst [vmem:[%s1444 + $0x340] sm:$0xff] %v1653
              %v1655 = vld [vmem:[%s1443 + $0x348] sm:$0xff]
              %1656 = vst [vmem:[%s1444 + $0x348] sm:$0xff] %v1655
              %v1657 = vld [vmem:[%s1443 + $0x350] sm:$0xff]
              %1658 = vst [vmem:[%s1444 + $0x350] sm:$0xff] %v1657
              %v1659 = vld [vmem:[%s1443 + $0x358] sm:$0xff]
              %1660 = vst [vmem:[%s1444 + $0x358] sm:$0xff] %v1659
              %v1661 = vld [vmem:[%s1443 + $0x360] sm:$0xff]
              %1662 = vst [vmem:[%s1444 + $0x360] sm:$0xff] %v1661
              %v1663 = vld [vmem:[%s1443 + $0x368] sm:$0xff]
              %1664 = vst [vmem:[%s1444 + $0x368] sm:$0xff] %v1663
              %v1665 = vld [vmem:[%s1443 + $0x370] sm:$0xff]
              %1666 = vst [vmem:[%s1444 + $0x370] sm:$0xff] %v1665
              %v1667 = vld [vmem:[%s1443 + $0x378] sm:$0xff]
              %1668 = vst [vmem:[%s1444 + $0x378] sm:$0xff] %v1667
              %v1669 = vld [vmem:[%s1443 + $0x380] sm:$0xff]
              %1670 = vst [vmem:[%s1444 + $0x380] sm:$0xff] %v1669
              %v1671 = vld [vmem:[%s1443 + $0x388] sm:$0xff]
              %1672 = vst [vmem:[%s1444 + $0x388] sm:$0xff] %v1671
              %v1673 = vld [vmem:[%s1443 + $0x390] sm:$0xff]
              %1674 = vst [vmem:[%s1444 + $0x390] sm:$0xff] %v1673
              %v1675 = vld [vmem:[%s1443 + $0x398] sm:$0xff]
              %1676 = vst [vmem:[%s1444 + $0x398] sm:$0xff] %v1675
              %v1677 = vld [vmem:[%s1443 + $0x3a0] sm:$0xff]
              %1678 = vst [vmem:[%s1444 + $0x3a0] sm:$0xff] %v1677
              %v1679 = vld [vmem:[%s1443 + $0x3a8] sm:$0xff]
              %1680 = vst [vmem:[%s1444 + $0x3a8] sm:$0xff] %v1679
              %v1681 = vld [vmem:[%s1443 + $0x3b0] sm:$0xff]
              %1682 = vst [vmem:[%s1444 + $0x3b0] sm:$0xff] %v1681
              %v1683 = vld [vmem:[%s1443 + $0x3b8] sm:$0xff]
              %1684 = vst [vmem:[%s1444 + $0x3b8] sm:$0xff] %v1683
              %v1685 = vld [vmem:[%s1443 + $0x3c0] sm:$0xff]
              %1686 = vst [vmem:[%s1444 + $0x3c0] sm:$0xff] %v1685
              %v1687 = vld [vmem:[%s1443 + $0x3c8] sm:$0xff]
              %1688 = vst [vmem:[%s1444 + $0x3c8] sm:$0xff] %v1687
              %v1689 = vld [vmem:[%s1443 + $0x3d0] sm:$0xff]
              %1690 = vst [vmem:[%s1444 + $0x3d0] sm:$0xff] %v1689
              %v1691 = vld [vmem:[%s1443 + $0x3d8] sm:$0xff]
              %1692 = vst [vmem:[%s1444 + $0x3d8] sm:$0xff] %v1691
              %v1693 = vld [vmem:[%s1443 + $0x3e0] sm:$0xff]
              %1694 = vst [vmem:[%s1444 + $0x3e0] sm:$0xff] %v1693
              %v1695 = vld [vmem:[%s1443 + $0x3e8] sm:$0xff]
              %1696 = vst [vmem:[%s1444 + $0x3e8] sm:$0xff] %v1695
              %v1697 = vld [vmem:[%s1443 + $0x3f0] sm:$0xff]
              %1698 = vst [vmem:[%s1444 + $0x3f0] sm:$0xff] %v1697
              %v1699 = vld [vmem:[%s1443 + $0x3f8] sm:$0xff]
              %1700 = vst [vmem:[%s1444 + $0x3f8] sm:$0xff] %v1699
              %v1701 = vld [vmem:[%s1443 + $0x400] sm:$0xff]
              %1702 = vst [vmem:[%s1444 + $0x400] sm:$0xff] %v1701
              %v1703 = vld [vmem:[%s1443 + $0x408] sm:$0xff]
              %1704 = vst [vmem:[%s1444 + $0x408] sm:$0xff] %v1703
              %v1705 = vld [vmem:[%s1443 + $0x410] sm:$0xff]
              %1706 = vst [vmem:[%s1444 + $0x410] sm:$0xff] %v1705
              %v1707 = vld [vmem:[%s1443 + $0x418] sm:$0xff]
              %1708 = vst [vmem:[%s1444 + $0x418] sm:$0xff] %v1707
              %v1709 = vld [vmem:[%s1443 + $0x420] sm:$0xff]
              %1710 = vst [vmem:[%s1444 + $0x420] sm:$0xff] %v1709
              %v1711 = vld [vmem:[%s1443 + $0x428] sm:$0xff]
              %1712 = vst [vmem:[%s1444 + $0x428] sm:$0xff] %v1711
              %v1713 = vld [vmem:[%s1443 + $0x430] sm:$0xff]
              %1714 = vst [vmem:[%s1444 + $0x430] sm:$0xff] %v1713
              %v1715 = vld [vmem:[%s1443 + $0x438] sm:$0xff]
              %1716 = vst [vmem:[%s1444 + $0x438] sm:$0xff] %v1715
              %v1717 = vld [vmem:[%s1443 + $0x440] sm:$0xff]
              %1718 = vst [vmem:[%s1444 + $0x440] sm:$0xff] %v1717
              %v1719 = vld [vmem:[%s1443 + $0x448] sm:$0xff]
              %1720 = vst [vmem:[%s1444 + $0x448] sm:$0xff] %v1719
              %v1721 = vld [vmem:[%s1443 + $0x450] sm:$0xff]
              %1722 = vst [vmem:[%s1444 + $0x450] sm:$0xff] %v1721
              %v1723 = vld [vmem:[%s1443 + $0x458] sm:$0xff]
              %1724 = vst [vmem:[%s1444 + $0x458] sm:$0xff] %v1723
              %v1725 = vld [vmem:[%s1443 + $0x460] sm:$0xff]
              %1726 = vst [vmem:[%s1444 + $0x460] sm:$0xff] %v1725
              %v1727 = vld [vmem:[%s1443 + $0x468] sm:$0xff]
              %1728 = vst [vmem:[%s1444 + $0x468] sm:$0xff] %v1727
              %v1729 = vld [vmem:[%s1443 + $0x470] sm:$0xff]
              %1730 = vst [vmem:[%s1444 + $0x470] sm:$0xff] %v1729
              %v1731 = vld [vmem:[%s1443 + $0x478] sm:$0xff]
              %1732 = vst [vmem:[%s1444 + $0x478] sm:$0xff] %v1731
              %v1733 = vld [vmem:[%s1443 + $0x480] sm:$0xff]
              %1734 = vst [vmem:[%s1444 + $0x480] sm:$0xff] %v1733
              %v1735 = vld [vmem:[%s1443 + $0x488] sm:$0xff]
              %1736 = vst [vmem:[%s1444 + $0x488] sm:$0xff] %v1735
              %v1737 = vld [vmem:[%s1443 + $0x490] sm:$0xff]
              %1738 = vst [vmem:[%s1444 + $0x490] sm:$0xff] %v1737
              %v1739 = vld [vmem:[%s1443 + $0x498] sm:$0xff]
              %1740 = vst [vmem:[%s1444 + $0x498] sm:$0xff] %v1739
              %v1741 = vld [vmem:[%s1443 + $0x4a0] sm:$0xff]
              %1742 = vst [vmem:[%s1444 + $0x4a0] sm:$0xff] %v1741
              %v1743 = vld [vmem:[%s1443 + $0x4a8] sm:$0xff]
              %1744 = vst [vmem:[%s1444 + $0x4a8] sm:$0xff] %v1743
              %v1745 = vld [vmem:[%s1443 + $0x4b0] sm:$0xff]
              %1746 = vst [vmem:[%s1444 + $0x4b0] sm:$0xff] %v1745
              %v1747 = vld [vmem:[%s1443 + $0x4b8] sm:$0xff]
              %1748 = vst [vmem:[%s1444 + $0x4b8] sm:$0xff] %v1747
              %v1749 = vld [vmem:[%s1443 + $0x4c0] sm:$0xff]
              %1750 = vst [vmem:[%s1444 + $0x4c0] sm:$0xff] %v1749
              %v1751 = vld [vmem:[%s1443 + $0x4c8] sm:$0xff]
              %1752 = vst [vmem:[%s1444 + $0x4c8] sm:$0xff] %v1751
              %v1753 = vld [vmem:[%s1443 + $0x4d0] sm:$0xff]
              %1754 = vst [vmem:[%s1444 + $0x4d0] sm:$0xff] %v1753
              %v1755 = vld [vmem:[%s1443 + $0x4d8] sm:$0xff]
              %1756 = vst [vmem:[%s1444 + $0x4d8] sm:$0xff] %v1755
              %v1757 = vld [vmem:[%s1443 + $0x4e0] sm:$0xff]
              %1758 = vst [vmem:[%s1444 + $0x4e0] sm:$0xff] %v1757
              %v1759 = vld [vmem:[%s1443 + $0x4e8] sm:$0xff]
              %1760 = vst [vmem:[%s1444 + $0x4e8] sm:$0xff] %v1759
              %v1761 = vld [vmem:[%s1443 + $0x4f0] sm:$0xff]
              %1762 = vst [vmem:[%s1444 + $0x4f0] sm:$0xff] %v1761
              %v1763 = vld [vmem:[%s1443 + $0x4f8] sm:$0xff]
              %1764 = vst [vmem:[%s1444 + $0x4f8] sm:$0xff] %v1763
              %v1765 = vld [vmem:[%s1443 + $0x500] sm:$0xff]
              %1766 = vst [vmem:[%s1444 + $0x500] sm:$0xff] %v1765
              %v1767 = vld [vmem:[%s1443 + $0x508] sm:$0xff]
              %1768 = vst [vmem:[%s1444 + $0x508] sm:$0xff] %v1767
              %v1769 = vld [vmem:[%s1443 + $0x510] sm:$0xff]
              %1770 = vst [vmem:[%s1444 + $0x510] sm:$0xff] %v1769
              %v1771 = vld [vmem:[%s1443 + $0x518] sm:$0xff]
              %1772 = vst [vmem:[%s1444 + $0x518] sm:$0xff] %v1771
              %v1773 = vld [vmem:[%s1443 + $0x520] sm:$0xff]
              %1774 = vst [vmem:[%s1444 + $0x520] sm:$0xff] %v1773
              %v1775 = vld [vmem:[%s1443 + $0x528] sm:$0xff]
              %1776 = vst [vmem:[%s1444 + $0x528] sm:$0xff] %v1775
              %v1777 = vld [vmem:[%s1443 + $0x530] sm:$0xff]
              %1778 = vst [vmem:[%s1444 + $0x530] sm:$0xff] %v1777
              %v1779 = vld [vmem:[%s1443 + $0x538] sm:$0xff]
              %1780 = vst [vmem:[%s1444 + $0x538] sm:$0xff] %v1779
              %v1781 = vld [vmem:[%s1443 + $0x540] sm:$0xff]
              %1782 = vst [vmem:[%s1444 + $0x540] sm:$0xff] %v1781
              %v1783 = vld [vmem:[%s1443 + $0x548] sm:$0xff]
              %1784 = vst [vmem:[%s1444 + $0x548] sm:$0xff] %v1783
              %v1785 = vld [vmem:[%s1443 + $0x550] sm:$0xff]
              %1786 = vst [vmem:[%s1444 + $0x550] sm:$0xff] %v1785
              %v1787 = vld [vmem:[%s1443 + $0x558] sm:$0xff]
              %1788 = vst [vmem:[%s1444 + $0x558] sm:$0xff] %v1787
              %v1789 = vld [vmem:[%s1443 + $0x560] sm:$0xff]
              %1790 = vst [vmem:[%s1444 + $0x560] sm:$0xff] %v1789
              %v1791 = vld [vmem:[%s1443 + $0x568] sm:$0xff]
              %1792 = vst [vmem:[%s1444 + $0x568] sm:$0xff] %v1791
              %v1793 = vld [vmem:[%s1443 + $0x570] sm:$0xff]
              %1794 = vst [vmem:[%s1444 + $0x570] sm:$0xff] %v1793
              %v1795 = vld [vmem:[%s1443 + $0x578] sm:$0xff]
              %1796 = vst [vmem:[%s1444 + $0x578] sm:$0xff] %v1795
              %v1797 = vld [vmem:[%s1443 + $0x580] sm:$0xff]
              %1798 = vst [vmem:[%s1444 + $0x580] sm:$0xff] %v1797
              %v1799 = vld [vmem:[%s1443 + $0x588] sm:$0xff]
              %1800 = vst [vmem:[%s1444 + $0x588] sm:$0xff] %v1799
              %v1801 = vld [vmem:[%s1443 + $0x590] sm:$0xff]
              %1802 = vst [vmem:[%s1444 + $0x590] sm:$0xff] %v1801
              %v1803 = vld [vmem:[%s1443 + $0x598] sm:$0xff]
              %1804 = vst [vmem:[%s1444 + $0x598] sm:$0xff] %v1803
              %v1805 = vld [vmem:[%s1443 + $0x5a0] sm:$0xff]
              %1806 = vst [vmem:[%s1444 + $0x5a0] sm:$0xff] %v1805
              %v1807 = vld [vmem:[%s1443 + $0x5a8] sm:$0xff]
              %1808 = vst [vmem:[%s1444 + $0x5a8] sm:$0xff] %v1807
              %v1809 = vld [vmem:[%s1443 + $0x5b0] sm:$0xff]
              %1810 = vst [vmem:[%s1444 + $0x5b0] sm:$0xff] %v1809
              %v1811 = vld [vmem:[%s1443 + $0x5b8] sm:$0xff]
              %1812 = vst [vmem:[%s1444 + $0x5b8] sm:$0xff] %v1811
              %v1813 = vld [vmem:[%s1443 + $0x5c0] sm:$0xff]
              %1814 = vst [vmem:[%s1444 + $0x5c0] sm:$0xff] %v1813
              %v1815 = vld [vmem:[%s1443 + $0x5c8] sm:$0xff]
              %1816 = vst [vmem:[%s1444 + $0x5c8] sm:$0xff] %v1815
              %v1817 = vld [vmem:[%s1443 + $0x5d0] sm:$0xff]
              %1818 = vst [vmem:[%s1444 + $0x5d0] sm:$0xff] %v1817
              %v1819 = vld [vmem:[%s1443 + $0x5d8] sm:$0xff]
              %1820 = vst [vmem:[%s1444 + $0x5d8] sm:$0xff] %v1819
              %v1821 = vld [vmem:[%s1443 + $0x5e0] sm:$0xff]
              %1822 = vst [vmem:[%s1444 + $0x5e0] sm:$0xff] %v1821
              %v1823 = vld [vmem:[%s1443 + $0x5e8] sm:$0xff]
              %1824 = vst [vmem:[%s1444 + $0x5e8] sm:$0xff] %v1823
              %v1825 = vld [vmem:[%s1443 + $0x5f0] sm:$0xff]
              %1826 = vst [vmem:[%s1444 + $0x5f0] sm:$0xff] %v1825
              %v1827 = vld [vmem:[%s1443 + $0x5f8] sm:$0xff]
              %1828 = vst [vmem:[%s1444 + $0x5f8] sm:$0xff] %v1827
              %v1829 = vld [vmem:[%s1443 + $0x600] sm:$0xff]
              %1830 = vst [vmem:[%s1444 + $0x600] sm:$0xff] %v1829
              %v1831 = vld [vmem:[%s1443 + $0x608] sm:$0xff]
              %1832 = vst [vmem:[%s1444 + $0x608] sm:$0xff] %v1831
              %v1833 = vld [vmem:[%s1443 + $0x610] sm:$0xff]
              %1834 = vst [vmem:[%s1444 + $0x610] sm:$0xff] %v1833
              %v1835 = vld [vmem:[%s1443 + $0x618] sm:$0xff]
              %1836 = vst [vmem:[%s1444 + $0x618] sm:$0xff] %v1835
              %v1837 = vld [vmem:[%s1443 + $0x620] sm:$0xff]
              %1838 = vst [vmem:[%s1444 + $0x620] sm:$0xff] %v1837
              %v1839 = vld [vmem:[%s1443 + $0x628] sm:$0xff]
              %1840 = vst [vmem:[%s1444 + $0x628] sm:$0xff] %v1839
              %v1841 = vld [vmem:[%s1443 + $0x630] sm:$0xff]
              %1842 = vst [vmem:[%s1444 + $0x630] sm:$0xff] %v1841
              %v1843 = vld [vmem:[%s1443 + $0x638] sm:$0xff]
              %1844 = vst [vmem:[%s1444 + $0x638] sm:$0xff] %v1843
              %v1845 = vld [vmem:[%s1443 + $0x640] sm:$0xff]
              %1846 = vst [vmem:[%s1444 + $0x640] sm:$0xff] %v1845
              %v1847 = vld [vmem:[%s1443 + $0x648] sm:$0xff]
              %1848 = vst [vmem:[%s1444 + $0x648] sm:$0xff] %v1847
              %v1849 = vld [vmem:[%s1443 + $0x650] sm:$0xff]
              %1850 = vst [vmem:[%s1444 + $0x650] sm:$0xff] %v1849
              %v1851 = vld [vmem:[%s1443 + $0x658] sm:$0xff]
              %1852 = vst [vmem:[%s1444 + $0x658] sm:$0xff] %v1851
              %v1853 = vld [vmem:[%s1443 + $0x660] sm:$0xff]
              %1854 = vst [vmem:[%s1444 + $0x660] sm:$0xff] %v1853
              %v1855 = vld [vmem:[%s1443 + $0x668] sm:$0xff]
              %1856 = vst [vmem:[%s1444 + $0x668] sm:$0xff] %v1855
              %v1857 = vld [vmem:[%s1443 + $0x670] sm:$0xff]
              %1858 = vst [vmem:[%s1444 + $0x670] sm:$0xff] %v1857
              %v1859 = vld [vmem:[%s1443 + $0x678] sm:$0xff]
              %1860 = vst [vmem:[%s1444 + $0x678] sm:$0xff] %v1859
              %v1861 = vld [vmem:[%s1443 + $0x680] sm:$0xff]
              %1862 = vst [vmem:[%s1444 + $0x680] sm:$0xff] %v1861
              %v1863 = vld [vmem:[%s1443 + $0x688] sm:$0xff]
              %1864 = vst [vmem:[%s1444 + $0x688] sm:$0xff] %v1863
              %v1865 = vld [vmem:[%s1443 + $0x690] sm:$0xff]
              %1866 = vst [vmem:[%s1444 + $0x690] sm:$0xff] %v1865
              %v1867 = vld [vmem:[%s1443 + $0x698] sm:$0xff]
              %1868 = vst [vmem:[%s1444 + $0x698] sm:$0xff] %v1867
              %v1869 = vld [vmem:[%s1443 + $0x6a0] sm:$0xff]
              %1870 = vst [vmem:[%s1444 + $0x6a0] sm:$0xff] %v1869
              %v1871 = vld [vmem:[%s1443 + $0x6a8] sm:$0xff]
              %1872 = vst [vmem:[%s1444 + $0x6a8] sm:$0xff] %v1871
              %v1873 = vld [vmem:[%s1443 + $0x6b0] sm:$0xff]
              %1874 = vst [vmem:[%s1444 + $0x6b0] sm:$0xff] %v1873
              %v1875 = vld [vmem:[%s1443 + $0x6b8] sm:$0xff]
              %1876 = vst [vmem:[%s1444 + $0x6b8] sm:$0xff] %v1875
              %v1877 = vld [vmem:[%s1443 + $0x6c0] sm:$0xff]
              %1878 = vst [vmem:[%s1444 + $0x6c0] sm:$0xff] %v1877
              %v1879 = vld [vmem:[%s1443 + $0x6c8] sm:$0xff]
              %1880 = vst [vmem:[%s1444 + $0x6c8] sm:$0xff] %v1879
              %v1881 = vld [vmem:[%s1443 + $0x6d0] sm:$0xff]
              %1882 = vst [vmem:[%s1444 + $0x6d0] sm:$0xff] %v1881
              %v1883 = vld [vmem:[%s1443 + $0x6d8] sm:$0xff]
              %1884 = vst [vmem:[%s1444 + $0x6d8] sm:$0xff] %v1883
              %v1885 = vld [vmem:[%s1443 + $0x6e0] sm:$0xff]
              %1886 = vst [vmem:[%s1444 + $0x6e0] sm:$0xff] %v1885
              %v1887 = vld [vmem:[%s1443 + $0x6e8] sm:$0xff]
              %1888 = vst [vmem:[%s1444 + $0x6e8] sm:$0xff] %v1887
              %v1889 = vld [vmem:[%s1443 + $0x6f0] sm:$0xff]
              %1890 = vst [vmem:[%s1444 + $0x6f0] sm:$0xff] %v1889
              %v1891 = vld [vmem:[%s1443 + $0x6f8] sm:$0xff]
              %1892 = vst [vmem:[%s1444 + $0x6f8] sm:$0xff] %v1891
              %v1893 = vld [vmem:[%s1443 + $0x700] sm:$0xff]
              %1894 = vst [vmem:[%s1444 + $0x700] sm:$0xff] %v1893
              %v1895 = vld [vmem:[%s1443 + $0x708] sm:$0xff]
              %1896 = vst [vmem:[%s1444 + $0x708] sm:$0xff] %v1895
              %v1897 = vld [vmem:[%s1443 + $0x710] sm:$0xff]
              %1898 = vst [vmem:[%s1444 + $0x710] sm:$0xff] %v1897
              %v1899 = vld [vmem:[%s1443 + $0x718] sm:$0xff]
              %1900 = vst [vmem:[%s1444 + $0x718] sm:$0xff] %v1899
              %v1901 = vld [vmem:[%s1443 + $0x720] sm:$0xff]
              %1902 = vst [vmem:[%s1444 + $0x720] sm:$0xff] %v1901
              %v1903 = vld [vmem:[%s1443 + $0x728] sm:$0xff]
              %1904 = vst [vmem:[%s1444 + $0x728] sm:$0xff] %v1903
              %v1905 = vld [vmem:[%s1443 + $0x730] sm:$0xff]
              %1906 = vst [vmem:[%s1444 + $0x730] sm:$0xff] %v1905
              %v1907 = vld [vmem:[%s1443 + $0x738] sm:$0xff]
              %1908 = vst [vmem:[%s1444 + $0x738] sm:$0xff] %v1907
              %v1909 = vld [vmem:[%s1443 + $0x740] sm:$0xff]
              %1910 = vst [vmem:[%s1444 + $0x740] sm:$0xff] %v1909
              %v1911 = vld [vmem:[%s1443 + $0x748] sm:$0xff]
              %1912 = vst [vmem:[%s1444 + $0x748] sm:$0xff] %v1911
              %v1913 = vld [vmem:[%s1443 + $0x750] sm:$0xff]
              %1914 = vst [vmem:[%s1444 + $0x750] sm:$0xff] %v1913
              %v1915 = vld [vmem:[%s1443 + $0x758] sm:$0xff]
              %1916 = vst [vmem:[%s1444 + $0x758] sm:$0xff] %v1915
              %v1917 = vld [vmem:[%s1443 + $0x760] sm:$0xff]
              %1918 = vst [vmem:[%s1444 + $0x760] sm:$0xff] %v1917
              %v1919 = vld [vmem:[%s1443 + $0x768] sm:$0xff]
              %1920 = vst [vmem:[%s1444 + $0x768] sm:$0xff] %v1919
              %v1921 = vld [vmem:[%s1443 + $0x770] sm:$0xff]
              %1922 = vst [vmem:[%s1444 + $0x770] sm:$0xff] %v1921
              %v1923 = vld [vmem:[%s1443 + $0x778] sm:$0xff]
              %1924 = vst [vmem:[%s1444 + $0x778] sm:$0xff] %v1923
              %v1925 = vld [vmem:[%s1443 + $0x780] sm:$0xff]
              %1926 = vst [vmem:[%s1444 + $0x780] sm:$0xff] %v1925
              %v1927 = vld [vmem:[%s1443 + $0x788] sm:$0xff]
              %1928 = vst [vmem:[%s1444 + $0x788] sm:$0xff] %v1927
              %v1929 = vld [vmem:[%s1443 + $0x790] sm:$0xff]
              %1930 = vst [vmem:[%s1444 + $0x790] sm:$0xff] %v1929
              %v1931 = vld [vmem:[%s1443 + $0x798] sm:$0xff]
              %1932 = vst [vmem:[%s1444 + $0x798] sm:$0xff] %v1931
              %v1933 = vld [vmem:[%s1443 + $0x7a0] sm:$0xff]
              %1934 = vst [vmem:[%s1444 + $0x7a0] sm:$0xff] %v1933
              %v1935 = vld [vmem:[%s1443 + $0x7a8] sm:$0xff]
              %1936 = vst [vmem:[%s1444 + $0x7a8] sm:$0xff] %v1935
              %v1937 = vld [vmem:[%s1443 + $0x7b0] sm:$0xff]
              %1938 = vst [vmem:[%s1444 + $0x7b0] sm:$0xff] %v1937
              %v1939 = vld [vmem:[%s1443 + $0x7b8] sm:$0xff]
              %1940 = vst [vmem:[%s1444 + $0x7b8] sm:$0xff] %v1939
              %v1941 = vld [vmem:[%s1443 + $0x7c0] sm:$0xff]
              %1942 = vst [vmem:[%s1444 + $0x7c0] sm:$0xff] %v1941
              %v1943 = vld [vmem:[%s1443 + $0x7c8] sm:$0xff]
              %1944 = vst [vmem:[%s1444 + $0x7c8] sm:$0xff] %v1943
            $region293: #{smallformer_forward.1} parent=287 // loop_footer
              %s1442 = sadd.s32 1, %s1438
            $region294: #{smallformer_forward.1} parent=287 // loop_footer_branch
              %1437 = sbr.rel target = $region290
            $region295: #{smallformer_forward.1} parent=287 // loop_exit
              _
          $region288: #{smallformer_forward.1} parent=272 // pred_fallthru
            _
          %p1945 = pneg %p1433
          // Predicated region
          $region296: #{smallformer_forward.1} parent=272 // pred_check
            _
          $region297: #{smallformer_forward.1} parent=272 // pred_check_branch
            %1947 = sbr.rel (%p1433) target = $region299
          $region298: #{smallformer_forward.1} parent=272 // pred_region
            %s1948 = sand.u32 2000, 7
          $region299: #{smallformer_forward.1} parent=272 // pred_fallthru
            _
        $region273: #{smallformer_forward.1} parent=139 // pred_fallthru
          _
        // Predicated region
        $region274: #{smallformer_forward.1} parent=139 // pred_check
          %p1418 = pneg %p1414
        $region275: #{smallformer_forward.1} parent=139 // pred_check_branch
          %1420 = sbr.rel (%p1418) target = $region277
        $region276: #{smallformer_forward.1} parent=139 // pred_region
          %s1421 = sshllo.u32 0, 2000
          loop: start=0, step=1, limit=1
          $region278: #{smallformer_forward.1} parent=276 // loop_pre_header
            _
          $region279: #{smallformer_forward.1} parent=276 // loop_header
            %s1423 = sphi 0, %s1427
            %p1424 = scmp.ge.s32.totalorder %s1423, 1
            %s1428 = sphi %s63, %s63
            %s1429 = sphi [#allocation3], [#allocation3]
          $region280: #{smallformer_forward.1} parent=276 // loop_header_branch
            %1426 = sbr.rel (%p1424) target = $region284
          $region281: #{smallformer_forward.1} parent=276 // loop_body
            %v1430 = vld [vmem:[%s1428] sm:%s1421]
            %1431 = vst [vmem:[%s1429] sm:%s1421] %v1430
          $region282: #{smallformer_forward.1} parent=276 // loop_footer
            %s1427 = sadd.s32 1, %s1423
          $region283: #{smallformer_forward.1} parent=276 // loop_footer_branch
            %1422 = sbr.rel target = $region279
          $region284: #{smallformer_forward.1} parent=276 // loop_exit
            _
        $region277: #{smallformer_forward.1} parent=139 // pred_fallthru
          _
        // Predicated region
        $region300: #{smallformer_forward.1} parent=139 // pred_check
          _
        $region301: #{smallformer_forward.1} parent=139 // pred_check_branch
          %1951 = sbr.rel (0) target = $region303
        $region302: #{smallformer_forward.1} parent=139 // pred_region
          %1952 = vsyncadd %s1412, 32000
        $region303: #{smallformer_forward.1} parent=139 // pred_fallthru
          _
        %s1953 = scalar_lea.sflag [#allocation5], 2
        %p1955 = scmp.lt.u32.totalorder 256, 8
        %p1956 = pneg %p1955
        // Predicated region
        $region304: #{smallformer_forward.1} parent=139 // pred_check
          _
        $region305: #{smallformer_forward.1} parent=139 // pred_check_branch
          %1958 = sbr.rel (%p1955) target = $region307
        $region306: #{smallformer_forward.1} parent=139 // pred_region
          %s1973 = sand.u32 256, 7
          %p1974 = scmp.eq.s32.totalorder %s1973, 0
          // Predicated region
          $region319: #{smallformer_forward.1} parent=306 // pred_check
            %p1975 = pneg %p1974
          $region320: #{smallformer_forward.1} parent=306 // pred_check_branch
            %1977 = sbr.rel (%p1975) target = $region322
          $region321: #{smallformer_forward.1} parent=306 // pred_region
            loop: start=0, step=1, limit=1
            $region323: #{smallformer_forward.1} parent=321 // loop_pre_header
              _
            $region324: #{smallformer_forward.1} parent=321 // loop_header
              %s1979 = sphi 0, %s1983
              %p1980 = scmp.ge.s32.totalorder %s1979, 1
              %s1984 = sphi %s65, %s65
              %s1985 = sphi [#allocation4], [#allocation4]
            $region325: #{smallformer_forward.1} parent=321 // loop_header_branch
              %1982 = sbr.rel (%p1980) target = $region329
            $region326: #{smallformer_forward.1} parent=321 // loop_body
              %v1986 = vld [vmem:[%s1984] sm:$0xff]
              %1987 = vst [vmem:[%s1985] sm:$0xff] %v1986
              %v1988 = vld [vmem:[%s1984 + $0x8] sm:$0xff]
              %1989 = vst [vmem:[%s1985 + $0x8] sm:$0xff] %v1988
              %v1990 = vld [vmem:[%s1984 + $0x10] sm:$0xff]
              %1991 = vst [vmem:[%s1985 + $0x10] sm:$0xff] %v1990
              %v1992 = vld [vmem:[%s1984 + $0x18] sm:$0xff]
              %1993 = vst [vmem:[%s1985 + $0x18] sm:$0xff] %v1992
              %v1994 = vld [vmem:[%s1984 + $0x20] sm:$0xff]
              %1995 = vst [vmem:[%s1985 + $0x20] sm:$0xff] %v1994
              %v1996 = vld [vmem:[%s1984 + $0x28] sm:$0xff]
              %1997 = vst [vmem:[%s1985 + $0x28] sm:$0xff] %v1996
              %v1998 = vld [vmem:[%s1984 + $0x30] sm:$0xff]
              %1999 = vst [vmem:[%s1985 + $0x30] sm:$0xff] %v1998
              %v2000 = vld [vmem:[%s1984 + $0x38] sm:$0xff]
              %2001 = vst [vmem:[%s1985 + $0x38] sm:$0xff] %v2000
              %v2002 = vld [vmem:[%s1984 + $0x40] sm:$0xff]
              %2003 = vst [vmem:[%s1985 + $0x40] sm:$0xff] %v2002
              %v2004 = vld [vmem:[%s1984 + $0x48] sm:$0xff]
              %2005 = vst [vmem:[%s1985 + $0x48] sm:$0xff] %v2004
              %v2006 = vld [vmem:[%s1984 + $0x50] sm:$0xff]
              %2007 = vst [vmem:[%s1985 + $0x50] sm:$0xff] %v2006
              %v2008 = vld [vmem:[%s1984 + $0x58] sm:$0xff]
              %2009 = vst [vmem:[%s1985 + $0x58] sm:$0xff] %v2008
              %v2010 = vld [vmem:[%s1984 + $0x60] sm:$0xff]
              %2011 = vst [vmem:[%s1985 + $0x60] sm:$0xff] %v2010
              %v2012 = vld [vmem:[%s1984 + $0x68] sm:$0xff]
              %2013 = vst [vmem:[%s1985 + $0x68] sm:$0xff] %v2012
              %v2014 = vld [vmem:[%s1984 + $0x70] sm:$0xff]
              %2015 = vst [vmem:[%s1985 + $0x70] sm:$0xff] %v2014
              %v2016 = vld [vmem:[%s1984 + $0x78] sm:$0xff]
              %2017 = vst [vmem:[%s1985 + $0x78] sm:$0xff] %v2016
              %v2018 = vld [vmem:[%s1984 + $0x80] sm:$0xff]
              %2019 = vst [vmem:[%s1985 + $0x80] sm:$0xff] %v2018
              %v2020 = vld [vmem:[%s1984 + $0x88] sm:$0xff]
              %2021 = vst [vmem:[%s1985 + $0x88] sm:$0xff] %v2020
              %v2022 = vld [vmem:[%s1984 + $0x90] sm:$0xff]
              %2023 = vst [vmem:[%s1985 + $0x90] sm:$0xff] %v2022
              %v2024 = vld [vmem:[%s1984 + $0x98] sm:$0xff]
              %2025 = vst [vmem:[%s1985 + $0x98] sm:$0xff] %v2024
              %v2026 = vld [vmem:[%s1984 + $0xa0] sm:$0xff]
              %2027 = vst [vmem:[%s1985 + $0xa0] sm:$0xff] %v2026
              %v2028 = vld [vmem:[%s1984 + $0xa8] sm:$0xff]
              %2029 = vst [vmem:[%s1985 + $0xa8] sm:$0xff] %v2028
              %v2030 = vld [vmem:[%s1984 + $0xb0] sm:$0xff]
              %2031 = vst [vmem:[%s1985 + $0xb0] sm:$0xff] %v2030
              %v2032 = vld [vmem:[%s1984 + $0xb8] sm:$0xff]
              %2033 = vst [vmem:[%s1985 + $0xb8] sm:$0xff] %v2032
              %v2034 = vld [vmem:[%s1984 + $0xc0] sm:$0xff]
              %2035 = vst [vmem:[%s1985 + $0xc0] sm:$0xff] %v2034
              %v2036 = vld [vmem:[%s1984 + $0xc8] sm:$0xff]
              %2037 = vst [vmem:[%s1985 + $0xc8] sm:$0xff] %v2036
              %v2038 = vld [vmem:[%s1984 + $0xd0] sm:$0xff]
              %2039 = vst [vmem:[%s1985 + $0xd0] sm:$0xff] %v2038
              %v2040 = vld [vmem:[%s1984 + $0xd8] sm:$0xff]
              %2041 = vst [vmem:[%s1985 + $0xd8] sm:$0xff] %v2040
              %v2042 = vld [vmem:[%s1984 + $0xe0] sm:$0xff]
              %2043 = vst [vmem:[%s1985 + $0xe0] sm:$0xff] %v2042
              %v2044 = vld [vmem:[%s1984 + $0xe8] sm:$0xff]
              %2045 = vst [vmem:[%s1985 + $0xe8] sm:$0xff] %v2044
              %v2046 = vld [vmem:[%s1984 + $0xf0] sm:$0xff]
              %2047 = vst [vmem:[%s1985 + $0xf0] sm:$0xff] %v2046
              %v2048 = vld [vmem:[%s1984 + $0xf8] sm:$0xff]
              %2049 = vst [vmem:[%s1985 + $0xf8] sm:$0xff] %v2048
            $region327: #{smallformer_forward.1} parent=321 // loop_footer
              %s1983 = sadd.s32 1, %s1979
            $region328: #{smallformer_forward.1} parent=321 // loop_footer_branch
              %1978 = sbr.rel target = $region324
            $region329: #{smallformer_forward.1} parent=321 // loop_exit
              _
          $region322: #{smallformer_forward.1} parent=306 // pred_fallthru
            _
          %p2050 = pneg %p1974
          // Predicated region
          $region330: #{smallformer_forward.1} parent=306 // pred_check
            _
          $region331: #{smallformer_forward.1} parent=306 // pred_check_branch
            %2052 = sbr.rel (%p1974) target = $region333
          $region332: #{smallformer_forward.1} parent=306 // pred_region
            %s2053 = sand.u32 256, 7
          $region333: #{smallformer_forward.1} parent=306 // pred_fallthru
            _
        $region307: #{smallformer_forward.1} parent=139 // pred_fallthru
          _
        // Predicated region
        $region308: #{smallformer_forward.1} parent=139 // pred_check
          %p1959 = pneg %p1955
        $region309: #{smallformer_forward.1} parent=139 // pred_check_branch
          %1961 = sbr.rel (%p1959) target = $region311
        $region310: #{smallformer_forward.1} parent=139 // pred_region
          %s1962 = sshllo.u32 0, 256
          loop: start=0, step=1, limit=1
          $region312: #{smallformer_forward.1} parent=310 // loop_pre_header
            _
          $region313: #{smallformer_forward.1} parent=310 // loop_header
            %s1964 = sphi 0, %s1968
            %p1965 = scmp.ge.s32.totalorder %s1964, 1
            %s1969 = sphi %s65, %s65
            %s1970 = sphi [#allocation4], [#allocation4]
          $region314: #{smallformer_forward.1} parent=310 // loop_header_branch
            %1967 = sbr.rel (%p1965) target = $region318
          $region315: #{smallformer_forward.1} parent=310 // loop_body
            %v1971 = vld [vmem:[%s1969] sm:%s1962]
            %1972 = vst [vmem:[%s1970] sm:%s1962] %v1971
          $region316: #{smallformer_forward.1} parent=310 // loop_footer
            %s1968 = sadd.s32 1, %s1964
          $region317: #{smallformer_forward.1} parent=310 // loop_footer_branch
            %1963 = sbr.rel target = $region313
          $region318: #{smallformer_forward.1} parent=310 // loop_exit
            _
        $region311: #{smallformer_forward.1} parent=139 // pred_fallthru
          _
        // Predicated region
        $region334: #{smallformer_forward.1} parent=139 // pred_check
          _
        $region335: #{smallformer_forward.1} parent=139 // pred_check_branch
          %2056 = sbr.rel (0) target = $region337
        $region336: #{smallformer_forward.1} parent=139 // pred_region
          %2057 = vsyncadd %s1953, 4096
        $region337: #{smallformer_forward.1} parent=139 // pred_fallthru
          _
        %v2058 = vld [vmem:[%s1231] sm:$0xff]
        %v2059 = vld [vmem:[%s1231 + $0x8] sm:$0xff]
        %v2060 = vld [vmem:[%s3] sm:$0xf]
        %v2061 = vld [vmem:[%s3 + $0x4] sm:$0xf]
        %v2062 = vld [vmem:[%s3 + $0x8] sm:$0xf]
        %v2063 = vld [vmem:[%s3 + $0xc] sm:$0xf]
        %v2064 = vld [vmem:[%s3 + $0x10] sm:$0xf]
        %v2065 = vld [vmem:[%s3 + $0x14] sm:$0xf]
        %v2066 = vpack.c.bf16 %v2059, %v2058
        %v2067 = vld [vmem:[#allocation7] sm:$0x1]
        %v2069 = vlaneseq
        %v2070 = vshrl.u32 %v2069, 7
        %v2071 = vsub.s32 0, %v2070
        %v2072 = vrot.slane %v2067, %v2071
        %v2080 = vunpack.c.l.b16 %v2060
        %v2081 = vunpack.c.l.b16 %v2061
        %v2082 = vunpack.c.l.b16 %v2062
        %v2083 = vunpack.c.l.b16 %v2063
        %v2084 = vunpack.c.l.b16 %v2064
        %v2085 = vunpack.c.l.b16 %v2065
        %v2086 = vpack.c.b16 %v2081, %v2080
        %v2087 = vpack.c.b16 %v2083, %v2082
        %v2088 = vpack.c.b16 %v2085, %v2084
        %vm2092 = vcmask 392192
        %v2094 = vsel %vm2092, %v2066, 0
        %2096 = vmatprep.subr.bf16.mxu0 0
        %2097 = vmatpush1.bf16.msra.mxu0 %v2086
        %2098 = vmatprep.subr.bf16.mxu0 0
        %2099 = vmatpush1.bf16.msra.mxu0 %v2087
        %2100 = vmatprep.subr.bf16.mxu0 0
        %2101 = vmatpush1.bf16.msra.mxu0 %v2088
        %2102 = vmatprep.subr.bf16.mxu0 0
        %2103 = vmatpush1.bf16.msra.mxu0 0
        %2104 = vmatprep.subr.bf16.mxu0 0
        %2105 = vmatpush1.bf16.msra.mxu0 0
        %2106 = vmatprep.subr.bf16.mxu0 0
        %2107 = vmatpush1.bf16.msra.mxu0 0
        %2108 = vmatprep.subr.bf16.mxu0 0
        %2109 = vmatpush1.bf16.msra.mxu0 0
        %2110 = vmatprep.subr.bf16.mxu0 0
        %2111 = vmatpush1.bf16.msra.mxu0 0
        %2112 = vmatprep.subr.bf16.mxu0 0
        %2113 = vmatpush1.bf16.msra.mxu0 0
        %2114 = vmatprep.subr.bf16.mxu0 0
        %2115 = vmatpush1.bf16.msra.mxu0 0
        %2116 = vmatprep.subr.bf16.mxu0 0
        %2117 = vmatpush1.bf16.msra.mxu0 0
        %2118 = vmatprep.subr.bf16.mxu0 0
        %2119 = vmatpush1.bf16.msra.mxu0 0
        %2120 = vmatprep.subr.bf16.mxu0 0
        %2121 = vmatpush1.bf16.msra.mxu0 0
        %2122 = vmatprep.subr.bf16.mxu0 0
        %2123 = vmatpush1.bf16.msra.mxu0 0
        %2124 = vmatprep.subr.bf16.mxu0 0
        %2125 = vmatpush1.bf16.msra.mxu0 0
        %2126 = vmatprep.subr.bf16.mxu0 0
        %2127 = vmatpush1.bf16.msra.mxu0 0
        %2128 = vmatprep.mubr.bf16.mxu0 0
        %2129 = vmatmul.mubr.bf16.gmra.mrb[0].mxu0 %v2094
        %v2130 = vpop.f32.mrb[0].mxu0
        %v2131 = vadd.f32 %v2072, %v2130
        %v2132 = vpop.f32.mrb[0].mxu0
        %v2133 = vpop.f32.mrb[0].mxu0
        %v2134 = vadd.f32 %v2072, %v2133
        %v2135 = vpop.f32.mrb[0].mxu0
        %2136 = vdwg.mxu0
        %v2137 = vld [vmem:[%s9] sm:$0xff]
        %v2138 = vld [vmem:[%s9 + $0x8] sm:$0xff]
        %v2139 = vadd.f32 %v2131, %v2137
        %v2140 = vadd.f32 %v2134, %v2138
        %v2141 = vld [vmem:[#allocation9] sm:$0x1]
        %vm2144 = vcmask 1040384
        %v2145 = vrot.slane %v2139, 7
        %v2146 = vrot.slane %v2140, 7
        %v2147 = vsel %vm2144, %v2145, %v2146
        %v2151 = vsel %vm2144, %v2141, %v2145
        %vm2152 = vcmask 261120
        %v2153 = vsel %vm2152, %v2151, 0.0
        %2154 = vadd.xlane.f32.xlu0 %v2153
        %v2155 = vpop.xlane.xlu0 %2154
        %v2156 = vsel %vm2152, %v2147, 0.0
        %2157 = vadd.xlane.f32.xlu0 %v2156
        %v2158 = vpop.xlane.xlu0 %2157
        %vm2159 = vcmask 253952
        %v2160 = vsel %vm2159, %v2146, 0.0
        %2161 = vadd.xlane.f32.xlu0 %v2160
        %v2162 = vpop.xlane.xlu0 %2161
        %v2163 = vrcp.pop 32.0
        %v2164 = vmul.f32 %v2155, %v2163
        %v2165 = vmul.f32 %v2158, %v2163
        %v2166 = vmul.f32 %v2162, %v2163
        %v2167 = vsub.f32 %v2151, %v2164
        %v2168 = vsub.f32 %v2147, %v2165
        %v2169 = vsub.f32 %v2146, %v2166
        %v2170 = vmul.f32 %v2167, %v2167
        %v2171 = vmul.f32 %v2168, %v2168
        %v2172 = vmul.f32 %v2169, %v2169
        %v2173 = vsel %vm2152, %v2170, 0.0
        %2174 = vadd.xlane.f32.xlu0 %v2173
        %v2175 = vpop.xlane.xlu0 %2174
        %v2176 = vsel %vm2152, %v2171, 0.0
        %2177 = vadd.xlane.f32.xlu0 %v2176
        %v2178 = vpop.xlane.xlu0 %2177
        %v2179 = vsel %vm2159, %v2172, 0.0
        %2180 = vadd.xlane.f32.xlu0 %v2179
        %v2181 = vpop.xlane.xlu0 %2180
        %v2182 = vmul.f32 %v2175, %v2163
        %v2183 = vmul.f32 %v2178, %v2163
        %v2184 = vmul.f32 %v2181, %v2163
        %v2185 = vadd.f32 %v2182, 1e-06
        %v2186 = vadd.f32 %v2183, 1e-06
        %v2187 = vadd.f32 %v2184, 1e-06
        %v2188 = vrsqrt.pop %v2185
        %v2189 = vrsqrt.pop %v2186
        %v2190 = vrsqrt.pop %v2187
        %v2191 = vmul.f32 %v2167, %v2188
        %v2192 = vmul.f32 %v2168, %v2189
        %v2193 = vmul.f32 %v2169, %v2190
        %v2194 = vld [vmem:[#allocation11] sm:$0xf]
        %v2195 = vld [vmem:[#allocation11 + $0x4] sm:$0xf]
        %v2196 = vld [vmem:[#allocation11 + $0x8] sm:$0xf]
        %v2197 = vld [vmem:[#allocation11 + $0xc] sm:$0xf]
        %v2198 = vpack.c.bf16 %v2192, %v2191
        %v2199 = vpack.c.bf16 %v2193, %v2193
        %v2200 = vld [vmem:[#allocation12] sm:$0x1]
        %v2202 = vlaneseq
        %v2203 = vshrl.u32 %v2202, 7
        %v2204 = vsub.s32 0, %v2203
        %v2205 = vrot.slane %v2200, %v2204
        %v2211 = vunpack.c.l.b16 %v2194
        %v2212 = vunpack.c.l.b16 %v2195
        %v2213 = vunpack.c.l.b16 %v2196
        %v2214 = vunpack.c.l.b16 %v2197
        %v2215 = vpack.c.b16 %v2212, %v2211
        %v2216 = vpack.c.b16 %v2214, %v2213
        %v2220 = vsel %vm2152, %v2198, 0
        %v2223 = vsel %vm2152, %v2199, 0
        %2225 = vmatprep.subr.bf16.mxu0 0
        %2226 = vmatpush1.bf16.msra.mxu0 %v2215
        %2227 = vmatprep.subr.bf16.mxu0 0
        %2228 = vmatpush1.bf16.msra.mxu0 %v2216
        %2229 = vmatprep.subr.bf16.mxu0 0
        %2230 = vmatpush1.bf16.msra.mxu0 0
        %2231 = vmatprep.subr.bf16.mxu0 0
        %2232 = vmatpush1.bf16.msra.mxu0 0
        %2233 = vmatprep.subr.bf16.mxu0 0
        %2234 = vmatpush1.bf16.msra.mxu0 0
        %2235 = vmatprep.subr.bf16.mxu0 0
        %2236 = vmatpush1.bf16.msra.mxu0 0
        %2237 = vmatprep.subr.bf16.mxu0 0
        %2238 = vmatpush1.bf16.msra.mxu0 0
        %2239 = vmatprep.subr.bf16.mxu0 0
        %2240 = vmatpush1.bf16.msra.mxu0 0
        %2241 = vmatprep.subr.bf16.mxu0 0
        %2242 = vmatpush1.bf16.msra.mxu0 0
        %2243 = vmatprep.subr.bf16.mxu0 0
        %2244 = vmatpush1.bf16.msra.mxu0 0
        %2245 = vmatprep.subr.bf16.mxu0 0
        %2246 = vmatpush1.bf16.msra.mxu0 0
        %2247 = vmatprep.subr.bf16.mxu0 0
        %2248 = vmatpush1.bf16.msra.mxu0 0
        %2249 = vmatprep.subr.bf16.mxu0 0
        %2250 = vmatpush1.bf16.msra.mxu0 0
        %2251 = vmatprep.subr.bf16.mxu0 0
        %2252 = vmatpush1.bf16.msra.mxu0 0
        %2253 = vmatprep.subr.bf16.mxu0 0
        %2254 = vmatpush1.bf16.msra.mxu0 0
        %2255 = vmatprep.subr.bf16.mxu0 0
        %2256 = vmatpush1.bf16.msra.mxu0 0
        %2257 = vmatprep.mubr.bf16.mxu0 0
        %2258 = vmatmul.mubr.bf16.gmra.mrb[0].mxu0 %v2220
        %v2259 = vpop.f32.mrb[0].mxu0
        %v2260 = vadd.f32 %v2205, %v2259
        %v2261 = vpop.f32.mrb[0].mxu0
        %v2262 = vpop.f32.mrb[0].mxu0
        %v2263 = vadd.f32 %v2205, %v2262
        %v2264 = vpop.f32.mrb[0].mxu0
        %2265 = vmatprep.mubr.bf16.mxu0 0
        %2266 = vmatmul.mubr.bf16.gmra.mrb[0].mxu0 %v2223
        %v2267 = vpop.f32.mrb[0].mxu0
        %v2268 = vadd.f32 %v2205, %v2267
        %v2269 = vpop.f32.mrb[0].mxu0
        %v2270 = vpop.f32.mrb[0].mxu0
        %v2271 = vpop.f32.mrb[0].mxu0
        %2272 = vdwg.mxu0
        %2276 = vrot.lane.b32.xlu0 %v2260, 96
        %v2277 = vpop.permute.xlu0 %2276
        %2278 = vrot.lane.b32.xlu0 %v2263, 96
        %v2279 = vpop.permute.xlu0 %2278
        %2280 = vrot.lane.b32.xlu0 %v2268, 96
        %v2281 = vpop.permute.xlu0 %2280
        %vm2282 = vcmask 64512
        %v2283 = vsel %vm2282, %v2260, 0
        %v2285 = vsel %vm2282, %v2263, 0
        %v2287 = vsel %vm2282, %v2268, 0
        %v2289 = vsel %vm2282, %v2277, 0
        %v2291 = vsel %vm2282, %v2279, 0
        %v2293 = vsel %vm2282, %v2281, 0
        %2295 = vmatprep.subr.mxu0 0.0
        %2296 = vmatpush1.xpose.msra.mxu0 %v2289
        %2297 = vmatprep.subr.mxu0 0.0
        %2298 = vmatpush1.xpose.msra.mxu0 %v2291
        %2299 = vmatprep.subr.mxu0 0.0
        %2300 = vmatpush1.xpose.msra.mxu0 %v2293
        %2301 = vmatprep.subr.mxu0 0.0
        %2302 = vmatpush1.xpose.msra.mxu0 0.0
        %2303 = vmatprep.subr.mxu0 0.0
        %2304 = vmatpush1.xpose.msra.mxu0 0.0
        %2305 = vmatprep.subr.mxu0 0.0
        %2306 = vmatpush1.xpose.msra.mxu0 0.0
        %2307 = vmatprep.subr.mxu0 0.0
        %2308 = vmatpush1.xpose.msra.mxu0 0.0
        %2309 = vmatprep.subr.mxu0 0.0
        %2310 = vmatpush1.xpose.msra.mxu0 0.0
        %2311 = vmatprep.subr.mxu0 0.0
        %2312 = vmatpush1.xpose.msra.mxu0 0.0
        %2313 = vmatprep.subr.mxu0 0.0
        %2314 = vmatpush1.xpose.msra.mxu0 0.0
        %2315 = vmatprep.subr.mxu0 0.0
        %2316 = vmatpush1.xpose.msra.mxu0 0.0
        %2317 = vmatprep.subr.mxu0 0.0
        %2318 = vmatpush1.xpose.msra.mxu0 0.0
        %2319 = vmatprep.subr.mxu0 0.0
        %2320 = vmatpush1.xpose.msra.mxu0 0.0
        %2321 = vmatprep.subr.mxu0 0.0
        %2322 = vmatpush1.xpose.msra.mxu0 0.0
        %2323 = vmatprep.subr.mxu0 0.0
        %2324 = vmatpush1.xpose.msra.mxu0 0.0
        %2325 = vmatprep.subr.mxu0 0.0
        %2326 = vmatpush1.xpose.msra.mxu0 0.0
        %2327 = vmatprep.subr.mxu0 0.0
        %2328 = vmatpush1.xpose.msra.mxu0 0.0
        %2329 = vmatprep.subr.mxu0 0.0
        %2330 = vmatpush1.xpose.msra.mxu0 0.0
        %2331 = vmatprep.subr.mxu0 0.0
        %2332 = vmatpush1.xpose.msra.mxu0 0.0
        %2333 = vmatprep.subr.mxu0 0.0
        %2334 = vmatpush1.xpose.msra.mxu0 0.0
        %2335 = vmatprep.subr.mxu0 0.0
        %2336 = vmatpush1.xpose.msra.mxu0 0.0
        %2337 = vmatprep.subr.mxu0 0.0
        %2338 = vmatpush1.xpose.msra.mxu0 0.0
        %2339 = vmatprep.subr.mxu0 0.0
        %2340 = vmatpush1.xpose.msra.mxu0 0.0
        %2341 = vmatprep.subr.mxu0 0.0
        %2342 = vmatpush1.xpose.msra.mxu0 0.0
        %2343 = vmatprep.subr.mxu0 0.0
        %2344 = vmatpush1.xpose.msra.mxu0 0.0
        %2345 = vmatprep.subr.mxu0 0.0
        %2346 = vmatpush1.xpose.msra.mxu0 0.0
        %2347 = vmatprep.subr.mxu0 0.0
        %2348 = vmatpush1.xpose.msra.mxu0 0.0
        %2349 = vmatprep.subr.mxu0 0.0
        %2350 = vmatpush1.xpose.msra.mxu0 0.0
        %2351 = vmatprep.subr.mxu0 0.0
        %2352 = vmatpush1.xpose.msra.mxu0 0.0
        %2353 = vmatprep.subr.mxu0 0.0
        %2354 = vmatpush1.xpose.msra.mxu0 0.0
        %2355 = vmatprep.subr.mxu0 0.0
        %2356 = vmatpush1.xpose.msra.mxu0 0.0
        %2357 = vmatprep.subr.mxu0 0.0
        %2358 = vmatpush1.xpose.msra.mxu0 0.0
        %2359 = vmatprep.mubr.f32.mxu0 0.0
        %2360 = vmatmul.mubr.f32.gmra.mrb[0].mxu0 %v2283
        %v2361 = vpop.f32.mrb[0].mxu0
        %v2362 = vadd.f32 0.0, %v2361
        %v2363 = vpop.f32.mrb[0].mxu0
        %2364 = vmatprep.mubr.f32.mxu0 0.0
        %2365 = vmatmul.mubr.f32.gmra.mrb[0].mxu0 %v2285
        %v2366 = vpop.f32.mrb[0].mxu0
        %v2367 = vadd.f32 0.0, %v2366
        %v2368 = vpop.f32.mrb[0].mxu0
        %2369 = vmatprep.mubr.f32.mxu0 0.0
        %2370 = vmatmul.mubr.f32.gmra.mrb[0].mxu0 %v2287
        %v2371 = vpop.f32.mrb[0].mxu0
        %v2372 = vadd.f32 0.0, %v2371
        %v2373 = vpop.f32.mrb[0].mxu0
        %2374 = vdwg.mxu0
        %vm2375 = vcmask 138240
        %v2376 = vsel %vm2375, %v2362, -inf
        %2377 = vmax.xlane.f32.xlu0 %v2376
        %v2378 = vpop.xlane.xlu0 %2377
        %v2379 = vsel %vm2375, %v2367, -inf
        %2380 = vmax.xlane.f32.xlu0 %v2379
        %v2381 = vpop.xlane.xlu0 %2380
        %vm2382 = vcmask 131072
        %v2383 = vsel %vm2382, %v2372, -inf
        %2384 = vmax.xlane.f32.xlu0 %v2383
        %v2385 = vpop.xlane.xlu0 %2384
        %v2386 = vsub.f32 %v2362, %v2378
        %v2387 = vsub.f32 %v2367, %v2381
        %v2388 = vsub.f32 %v2372, %v2385
        %v2389 = vmul.f32 %v2386, 1.442695
        %v2390 = vpow.pop %v2389
        %v2391 = vmul.f32 %v2387, 1.442695
        %v2392 = vpow.pop %v2391
        %v2393 = vmul.f32 %v2388, 1.442695
        %v2394 = vpow.pop %v2393
        %v2395 = vsel %vm2375, %v2390, 0.0
        %2396 = vadd.xlane.f32.xlu0 %v2395
        %v2397 = vpop.xlane.xlu0 %2396
        %v2398 = vsel %vm2375, %v2392, 0.0
        %2399 = vadd.xlane.f32.xlu0 %v2398
        %v2400 = vpop.xlane.xlu0 %2399
        %v2401 = vsel %vm2382, %v2394, 0.0
        %2402 = vadd.xlane.f32.xlu0 %v2401
        %v2403 = vpop.xlane.xlu0 %2402
        %v2404 = vrcp.pop %v2397
        %v2405 = vrcp.pop %v2400
        %v2406 = vrcp.pop %v2403
        %v2407 = vmul.f32 %v2390, %v2404
        %v2408 = vmul.f32 %v2392, %v2405
        %v2409 = vmul.f32 %v2394, %v2406
        %2410 = vrot.lane.b32.xlu0 %v2260, 64
        %v2411 = vpop.permute.xlu0 %2410
        %2412 = vrot.lane.b32.xlu0 %v2263, 64
        %v2413 = vpop.permute.xlu0 %2412
        %2414 = vrot.lane.b32.xlu0 %v2268, 64
        %v2415 = vpop.permute.xlu0 %2414
        %v2419 = vsel %vm2375, %v2407, 0
        %v2422 = vsel %vm2375, %v2408, 0
        %v2425 = vsel %vm2375, %v2409, 0
        %v2427 = vsel %vm2144, %v2415, 0
        %2429 = vmatprep.subr.mxu0 0.0
        %2430 = vmatpush1.msra.mxu0 %v2411
        %2431 = vmatprep.subr.mxu0 0.0
        %2432 = vmatpush1.msra.mxu0 %v2413
        %2433 = vmatprep.subr.mxu0 0.0
        %2434 = vmatpush1.msra.mxu0 %v2427
        %2435 = vmatprep.subr.mxu0 0.0
        %2436 = vmatpush1.msra.mxu0 0.0
        %2437 = vmatprep.subr.mxu0 0.0
        %2438 = vmatpush1.msra.mxu0 0.0
        %2439 = vmatprep.subr.mxu0 0.0
        %2440 = vmatpush1.msra.mxu0 0.0
        %2441 = vmatprep.subr.mxu0 0.0
        %2442 = vmatpush1.msra.mxu0 0.0
        %2443 = vmatprep.subr.mxu0 0.0
        %2444 = vmatpush1.msra.mxu0 0.0
        %2445 = vmatprep.subr.mxu0 0.0
        %2446 = vmatpush1.msra.mxu0 0.0
        %2447 = vmatprep.subr.mxu0 0.0
        %2448 = vmatpush1.msra.mxu0 0.0
        %2449 = vmatprep.subr.mxu0 0.0
        %2450 = vmatpush1.msra.mxu0 0.0
        %2451 = vmatprep.subr.mxu0 0.0
        %2452 = vmatpush1.msra.mxu0 0.0
        %2453 = vmatprep.subr.mxu0 0.0
        %2454 = vmatpush1.msra.mxu0 0.0
        %2455 = vmatprep.subr.mxu0 0.0
        %2456 = vmatpush1.msra.mxu0 0.0
        %2457 = vmatprep.subr.mxu0 0.0
        %2458 = vmatpush1.msra.mxu0 0.0
        %2459 = vmatprep.subr.mxu0 0.0
        %2460 = vmatpush1.msra.mxu0 0.0
        %2461 = vmatprep.subr.mxu0 0.0
        %2462 = vmatpush1.msra.mxu0 0.0
        %2463 = vmatprep.subr.mxu0 0.0
        %2464 = vmatpush1.msra.mxu0 0.0
        %2465 = vmatprep.subr.mxu0 0.0
        %2466 = vmatpush1.msra.mxu0 0.0
        %2467 = vmatprep.subr.mxu0 0.0
        %2468 = vmatpush1.msra.mxu0 0.0
        %2469 = vmatprep.subr.mxu0 0.0
        %2470 = vmatpush1.msra.mxu0 0.0
        %2471 = vmatprep.subr.mxu0 0.0
        %2472 = vmatpush1.msra.mxu0 0.0
        %2473 = vmatprep.subr.mxu0 0.0
        %2474 = vmatpush1.msra.mxu0 0.0
        %2475 = vmatprep.subr.mxu0 0.0
        %2476 = vmatpush1.msra.mxu0 0.0
        %2477 = vmatprep.subr.mxu0 0.0
        %2478 = vmatpush1.msra.mxu0 0.0
        %2479 = vmatprep.subr.mxu0 0.0
        %2480 = vmatpush1.msra.mxu0 0.0
        %2481 = vmatprep.subr.mxu0 0.0
        %2482 = vmatpush1.msra.mxu0 0.0
        %2483 = vmatprep.subr.mxu0 0.0
        %2484 = vmatpush1.msra.mxu0 0.0
        %2485 = vmatprep.subr.mxu0 0.0
        %2486 = vmatpush1.msra.mxu0 0.0
        %2487 = vmatprep.subr.mxu0 0.0
        %2488 = vmatpush1.msra.mxu0 0.0
        %2489 = vmatprep.subr.mxu0 0.0
        %2490 = vmatpush1.msra.mxu0 0.0
        %2491 = vmatprep.subr.mxu0 0.0
        %2492 = vmatpush1.msra.mxu0 0.0
        %2493 = vmatprep.mubr.f32.mxu0 0.0
        %2494 = vmatmul.mubr.f32.gmra.mrb[0].mxu0 %v2419
        %v2495 = vpop.f32.mrb[0].mxu0
        %v2496 = vadd.f32 0.0, %v2495
        %v2497 = vpop.f32.mrb[0].mxu0
        %2498 = vmatprep.mubr.f32.mxu0 0.0
        %2499 = vmatmul.mubr.f32.gmra.mrb[0].mxu0 %v2422
        %v2500 = vpop.f32.mrb[0].mxu0
        %v2501 = vadd.f32 0.0, %v2500
        %v2502 = vpop.f32.mrb[0].mxu0
        %2503 = vmatprep.mubr.f32.mxu0 0.0
        %2504 = vmatmul.mubr.f32.gmra.mrb[0].mxu0 %v2425
        %v2505 = vpop.f32.mrb[0].mxu0
        %v2506 = vadd.f32 0.0, %v2505
        %v2507 = vpop.f32.mrb[0].mxu0
        %2508 = vdwg.mxu0
        %2509 = vrot.lane.b32.xlu0 %v2260, 120
        %v2510 = vpop.permute.xlu0 %2509
        %2511 = vrot.lane.b32.xlu0 %v2263, 120
        %v2512 = vpop.permute.xlu0 %2511
        %2513 = vrot.lane.b32.xlu0 %v2268, 120
        %v2514 = vpop.permute.xlu0 %2513
        %2515 = vrot.lane.b32.xlu0 %v2260, 88
        %v2516 = vpop.permute.xlu0 %2515
        %2517 = vrot.lane.b32.xlu0 %v2263, 88
        %v2518 = vpop.permute.xlu0 %2517
        %2519 = vrot.lane.b32.xlu0 %v2268, 88
        %v2520 = vpop.permute.xlu0 %2519
        %v2521 = vsel %vm2282, %v2510, 0
        %v2523 = vsel %vm2282, %v2512, 0
        %v2525 = vsel %vm2282, %v2514, 0
        %v2527 = vsel %vm2282, %v2516, 0
        %v2529 = vsel %vm2282, %v2518, 0
        %v2531 = vsel %vm2282, %v2520, 0
        %2533 = vmatprep.subr.mxu0 0.0
        %2534 = vmatpush1.xpose.msra.mxu0 %v2527
        %2535 = vmatprep.subr.mxu0 0.0
        %2536 = vmatpush1.xpose.msra.mxu0 %v2529
        %2537 = vmatprep.subr.mxu0 0.0
        %2538 = vmatpush1.xpose.msra.mxu0 %v2531
        %2539 = vmatprep.subr.mxu0 0.0
        %2540 = vmatpush1.xpose.msra.mxu0 0.0
        %2541 = vmatprep.subr.mxu0 0.0
        %2542 = vmatpush1.xpose.msra.mxu0 0.0
        %2543 = vmatprep.subr.mxu0 0.0
        %2544 = vmatpush1.xpose.msra.mxu0 0.0
        %2545 = vmatprep.subr.mxu0 0.0
        %2546 = vmatpush1.xpose.msra.mxu0 0.0
        %2547 = vmatprep.subr.mxu0 0.0
        %2548 = vmatpush1.xpose.msra.mxu0 0.0
        %2549 = vmatprep.subr.mxu0 0.0
        %2550 = vmatpush1.xpose.msra.mxu0 0.0
        %2551 = vmatprep.subr.mxu0 0.0
        %2552 = vmatpush1.xpose.msra.mxu0 0.0
        %2553 = vmatprep.subr.mxu0 0.0
        %2554 = vmatpush1.xpose.msra.mxu0 0.0
        %2555 = vmatprep.subr.mxu0 0.0
        %2556 = vmatpush1.xpose.msra.mxu0 0.0
        %2557 = vmatprep.subr.mxu0 0.0
        %2558 = vmatpush1.xpose.msra.mxu0 0.0
        %2559 = vmatprep.subr.mxu0 0.0
        %2560 = vmatpush1.xpose.msra.mxu0 0.0
        %2561 = vmatprep.subr.mxu0 0.0
        %2562 = vmatpush1.xpose.msra.mxu0 0.0
        %2563 = vmatprep.subr.mxu0 0.0
        %2564 = vmatpush1.xpose.msra.mxu0 0.0
        %2565 = vmatprep.subr.mxu0 0.0
        %2566 = vmatpush1.xpose.msra.mxu0 0.0
        %2567 = vmatprep.subr.mxu0 0.0
        %2568 = vmatpush1.xpose.msra.mxu0 0.0
        %2569 = vmatprep.subr.mxu0 0.0
        %2570 = vmatpush1.xpose.msra.mxu0 0.0
        %2571 = vmatprep.subr.mxu0 0.0
        %2572 = vmatpush1.xpose.msra.mxu0 0.0
        %2573 = vmatprep.subr.mxu0 0.0
        %2574 = vmatpush1.xpose.msra.mxu0 0.0
        %2575 = vmatprep.subr.mxu0 0.0
        %2576 = vmatpush1.xpose.msra.mxu0 0.0
        %2577 = vmatprep.subr.mxu0 0.0
        %2578 = vmatpush1.xpose.msra.mxu0 0.0
        %2579 = vmatprep.subr.mxu0 0.0
        %2580 = vmatpush1.xpose.msra.mxu0 0.0
        %2581 = vmatprep.subr.mxu0 0.0
        %2582 = vmatpush1.xpose.msra.mxu0 0.0
        %2583 = vmatprep.subr.mxu0 0.0
        %2584 = vmatpush1.xpose.msra.mxu0 0.0
        %2585 = vmatprep.subr.mxu0 0.0
        %2586 = vmatpush1.xpose.msra.mxu0 0.0
        %2587 = vmatprep.subr.mxu0 0.0
        %2588 = vmatpush1.xpose.msra.mxu0 0.0
        %2589 = vmatprep.subr.mxu0 0.0
        %2590 = vmatpush1.xpose.msra.mxu0 0.0
        %2591 = vmatprep.subr.mxu0 0.0
        %2592 = vmatpush1.xpose.msra.mxu0 0.0
        %2593 = vmatprep.subr.mxu0 0.0
        %2594 = vmatpush1.xpose.msra.mxu0 0.0
        %2595 = vmatprep.subr.mxu0 0.0
        %2596 = vmatpush1.xpose.msra.mxu0 0.0
        %2597 = vmatprep.mubr.f32.mxu0 0.0
        %2598 = vmatmul.mubr.f32.gmra.mrb[0].mxu0 %v2521
        %v2599 = vpop.f32.mrb[0].mxu0
        %v2600 = vadd.f32 0.0, %v2599
        %v2601 = vpop.f32.mrb[0].mxu0
        %2602 = vmatprep.mubr.f32.mxu0 0.0
        %2603 = vmatmul.mubr.f32.gmra.mrb[0].mxu0 %v2523
        %v2604 = vpop.f32.mrb[0].mxu0
        %v2605 = vadd.f32 0.0, %v2604
        %v2606 = vpop.f32.mrb[0].mxu0
        %2607 = vmatprep.mubr.f32.mxu0 0.0
        %2608 = vmatmul.mubr.f32.gmra.mrb[0].mxu0 %v2525
        %v2609 = vpop.f32.mrb[0].mxu0
        %v2610 = vadd.f32 0.0, %v2609
        %v2611 = vpop.f32.mrb[0].mxu0
        %2612 = vdwg.mxu0
        %v2613 = vsel %vm2375, %v2600, -inf
        %2614 = vmax.xlane.f32.xlu0 %v2613
        %v2615 = vpop.xlane.xlu0 %2614
        %v2616 = vsel %vm2375, %v2605, -inf
        %2617 = vmax.xlane.f32.xlu0 %v2616
        %v2618 = vpop.xlane.xlu0 %2617
        %v2619 = vsel %vm2382, %v2610, -inf
        %2620 = vmax.xlane.f32.xlu0 %v2619
        %v2621 = vpop.xlane.xlu0 %2620
        %v2622 = vsub.f32 %v2600, %v2615
        %v2623 = vsub.f32 %v2605, %v2618
        %v2624 = vsub.f32 %v2610, %v2621
        %v2625 = vmul.f32 %v2622, 1.442695
        %v2626 = vpow.pop %v2625
        %v2627 = vmul.f32 %v2623, 1.442695
        %v2628 = vpow.pop %v2627
        %v2629 = vmul.f32 %v2624, 1.442695
        %v2630 = vpow.pop %v2629
        %v2631 = vsel %vm2375, %v2626, 0.0
        %2632 = vadd.xlane.f32.xlu0 %v2631
        %v2633 = vpop.xlane.xlu0 %2632
        %v2634 = vsel %vm2375, %v2628, 0.0
        %2635 = vadd.xlane.f32.xlu0 %v2634
        %v2636 = vpop.xlane.xlu0 %2635
        %v2637 = vsel %vm2382, %v2630, 0.0
        %2638 = vadd.xlane.f32.xlu0 %v2637
        %v2639 = vpop.xlane.xlu0 %2638
        %v2640 = vrcp.pop %v2633
        %v2641 = vrcp.pop %v2636
        %v2642 = vrcp.pop %v2639
        %v2643 = vmul.f32 %v2626, %v2640
        %v2644 = vmul.f32 %v2628, %v2641
        %v2645 = vmul.f32 %v2630, %v2642
        %2646 = vrot.lane.b32.xlu0 %v2260, 56
        %v2647 = vpop.permute.xlu0 %2646
        %2648 = vrot.lane.b32.xlu0 %v2263, 56
        %v2649 = vpop.permute.xlu0 %2648
        %2650 = vrot.lane.b32.xlu0 %v2268, 56
        %v2651 = vpop.permute.xlu0 %2650
        %v2655 = vsel %vm2375, %v2643, 0
        %v2658 = vsel %vm2375, %v2644, 0
        %v2661 = vsel %vm2375, %v2645, 0
        %v2663 = vsel %vm2144, %v2651, 0
        %2665 = vmatprep.subr.mxu0 0.0
        %2666 = vmatpush1.msra.mxu0 %v2647
        %2667 = vmatprep.subr.mxu0 0.0
        %2668 = vmatpush1.msra.mxu0 %v2649
        %2669 = vmatprep.subr.mxu0 0.0
        %2670 = vmatpush1.msra.mxu0 %v2663
        %2671 = vmatprep.subr.mxu0 0.0
        %2672 = vmatpush1.msra.mxu0 0.0
        %2673 = vmatprep.subr.mxu0 0.0
        %2674 = vmatpush1.msra.mxu0 0.0
        %2675 = vmatprep.subr.mxu0 0.0
        %2676 = vmatpush1.msra.mxu0 0.0
        %2677 = vmatprep.subr.mxu0 0.0
        %2678 = vmatpush1.msra.mxu0 0.0
        %2679 = vmatprep.subr.mxu0 0.0
        %2680 = vmatpush1.msra.mxu0 0.0
        %2681 = vmatprep.subr.mxu0 0.0
        %2682 = vmatpush1.msra.mxu0 0.0
        %2683 = vmatprep.subr.mxu0 0.0
        %2684 = vmatpush1.msra.mxu0 0.0
        %2685 = vmatprep.subr.mxu0 0.0
        %2686 = vmatpush1.msra.mxu0 0.0
        %2687 = vmatprep.subr.mxu0 0.0
        %2688 = vmatpush1.msra.mxu0 0.0
        %2689 = vmatprep.subr.mxu0 0.0
        %2690 = vmatpush1.msra.mxu0 0.0
        %2691 = vmatprep.subr.mxu0 0.0
        %2692 = vmatpush1.msra.mxu0 0.0
        %2693 = vmatprep.subr.mxu0 0.0
        %2694 = vmatpush1.msra.mxu0 0.0
        %2695 = vmatprep.subr.mxu0 0.0
        %2696 = vmatpush1.msra.mxu0 0.0
        %2697 = vmatprep.subr.mxu0 0.0
        %2698 = vmatpush1.msra.mxu0 0.0
        %2699 = vmatprep.subr.mxu0 0.0
        %2700 = vmatpush1.msra.mxu0 0.0
        %2701 = vmatprep.subr.mxu0 0.0
        %2702 = vmatpush1.msra.mxu0 0.0
        %2703 = vmatprep.subr.mxu0 0.0
        %2704 = vmatpush1.msra.mxu0 0.0
        %2705 = vmatprep.subr.mxu0 0.0
        %2706 = vmatpush1.msra.mxu0 0.0
        %2707 = vmatprep.subr.mxu0 0.0
        %2708 = vmatpush1.msra.mxu0 0.0
        %2709 = vmatprep.subr.mxu0 0.0
        %2710 = vmatpush1.msra.mxu0 0.0
        %2711 = vmatprep.subr.mxu0 0.0
        %2712 = vmatpush1.msra.mxu0 0.0
        %2713 = vmatprep.subr.mxu0 0.0
        %2714 = vmatpush1.msra.mxu0 0.0
        %2715 = vmatprep.subr.mxu0 0.0
        %2716 = vmatpush1.msra.mxu0 0.0
        %2717 = vmatprep.subr.mxu0 0.0
        %2718 = vmatpush1.msra.mxu0 0.0
        %2719 = vmatprep.subr.mxu0 0.0
        %2720 = vmatpush1.msra.mxu0 0.0
        %2721 = vmatprep.subr.mxu0 0.0
        %2722 = vmatpush1.msra.mxu0 0.0
        %2723 = vmatprep.subr.mxu0 0.0
        %2724 = vmatpush1.msra.mxu0 0.0
        %2725 = vmatprep.subr.mxu0 0.0
        %2726 = vmatpush1.msra.mxu0 0.0
        %2727 = vmatprep.subr.mxu0 0.0
        %2728 = vmatpush1.msra.mxu0 0.0
        %2729 = vmatprep.mubr.f32.mxu0 0.0
        %2730 = vmatmul.mubr.f32.gmra.mrb[0].mxu0 %v2655
        %v2731 = vpop.f32.mrb[0].mxu0
        %v2732 = vadd.f32 0.0, %v2731
        %v2733 = vpop.f32.mrb[0].mxu0
        %2734 = vmatprep.mubr.f32.mxu0 0.0
        %2735 = vmatmul.mubr.f32.gmra.mrb[0].mxu0 %v2658
        %v2736 = vpop.f32.mrb[0].mxu0
        %v2737 = vadd.f32 0.0, %v2736
        %v2738 = vpop.f32.mrb[0].mxu0
        %2739 = vmatprep.mubr.f32.mxu0 0.0
        %2740 = vmatmul.mubr.f32.gmra.mrb[0].mxu0 %v2661
        %v2741 = vpop.f32.mrb[0].mxu0
        %v2742 = vadd.f32 0.0, %v2741
        %v2743 = vpop.f32.mrb[0].mxu0
        %2744 = vdwg.mxu0
        %2745 = vrot.lane.b32.xlu0 %v2260, 112
        %v2746 = vpop.permute.xlu0 %2745
        %2747 = vrot.lane.b32.xlu0 %v2263, 112
        %v2748 = vpop.permute.xlu0 %2747
        %2749 = vrot.lane.b32.xlu0 %v2268, 112
        %v2750 = vpop.permute.xlu0 %2749
        %2751 = vrot.lane.b32.xlu0 %v2260, 80
        %v2752 = vpop.permute.xlu0 %2751
        %2753 = vrot.lane.b32.xlu0 %v2263, 80
        %v2754 = vpop.permute.xlu0 %2753
        %2755 = vrot.lane.b32.xlu0 %v2268, 80
        %v2756 = vpop.permute.xlu0 %2755
        %v2757 = vsel %vm2282, %v2746, 0
        %v2759 = vsel %vm2282, %v2748, 0
        %v2761 = vsel %vm2282, %v2750, 0
        %v2763 = vsel %vm2282, %v2752, 0
        %v2765 = vsel %vm2282, %v2754, 0
        %v2767 = vsel %vm2282, %v2756, 0
        %2769 = vmatprep.subr.mxu0 0.0
        %2770 = vmatpush1.xpose.msra.mxu0 %v2763
        %2771 = vmatprep.subr.mxu0 0.0
        %2772 = vmatpush1.xpose.msra.mxu0 %v2765
        %2773 = vmatprep.subr.mxu0 0.0
        %2774 = vmatpush1.xpose.msra.mxu0 %v2767
        %2775 = vmatprep.subr.mxu0 0.0
        %2776 = vmatpush1.xpose.msra.mxu0 0.0
        %2777 = vmatprep.subr.mxu0 0.0
        %2778 = vmatpush1.xpose.msra.mxu0 0.0
        %2779 = vmatprep.subr.mxu0 0.0
        %2780 = vmatpush1.xpose.msra.mxu0 0.0
        %2781 = vmatprep.subr.mxu0 0.0
        %2782 = vmatpush1.xpose.msra.mxu0 0.0
        %2783 = vmatprep.subr.mxu0 0.0
        %2784 = vmatpush1.xpose.msra.mxu0 0.0
        %2785 = vmatprep.subr.mxu0 0.0
        %2786 = vmatpush1.xpose.msra.mxu0 0.0
        %2787 = vmatprep.subr.mxu0 0.0
        %2788 = vmatpush1.xpose.msra.mxu0 0.0
        %2789 = vmatprep.subr.mxu0 0.0
        %2790 = vmatpush1.xpose.msra.mxu0 0.0
        %2791 = vmatprep.subr.mxu0 0.0
        %2792 = vmatpush1.xpose.msra.mxu0 0.0
        %2793 = vmatprep.subr.mxu0 0.0
        %2794 = vmatpush1.xpose.msra.mxu0 0.0
        %2795 = vmatprep.subr.mxu0 0.0
        %2796 = vmatpush1.xpose.msra.mxu0 0.0
        %2797 = vmatprep.subr.mxu0 0.0
        %2798 = vmatpush1.xpose.msra.mxu0 0.0
        %2799 = vmatprep.subr.mxu0 0.0
        %2800 = vmatpush1.xpose.msra.mxu0 0.0
        %2801 = vmatprep.subr.mxu0 0.0
        %2802 = vmatpush1.xpose.msra.mxu0 0.0
        %2803 = vmatprep.subr.mxu0 0.0
        %2804 = vmatpush1.xpose.msra.mxu0 0.0
        %2805 = vmatprep.subr.mxu0 0.0
        %2806 = vmatpush1.xpose.msra.mxu0 0.0
        %2807 = vmatprep.subr.mxu0 0.0
        %2808 = vmatpush1.xpose.msra.mxu0 0.0
        %2809 = vmatprep.subr.mxu0 0.0
        %2810 = vmatpush1.xpose.msra.mxu0 0.0
        %2811 = vmatprep.subr.mxu0 0.0
        %2812 = vmatpush1.xpose.msra.mxu0 0.0
        %2813 = vmatprep.subr.mxu0 0.0
        %2814 = vmatpush1.xpose.msra.mxu0 0.0
        %2815 = vmatprep.subr.mxu0 0.0
        %2816 = vmatpush1.xpose.msra.mxu0 0.0
        %2817 = vmatprep.subr.mxu0 0.0
        %2818 = vmatpush1.xpose.msra.mxu0 0.0
        %2819 = vmatprep.subr.mxu0 0.0
        %2820 = vmatpush1.xpose.msra.mxu0 0.0
        %2821 = vmatprep.subr.mxu0 0.0
        %2822 = vmatpush1.xpose.msra.mxu0 0.0
        %2823 = vmatprep.subr.mxu0 0.0
        %2824 = vmatpush1.xpose.msra.mxu0 0.0
        %2825 = vmatprep.subr.mxu0 0.0
        %2826 = vmatpush1.xpose.msra.mxu0 0.0
        %2827 = vmatprep.subr.mxu0 0.0
        %2828 = vmatpush1.xpose.msra.mxu0 0.0
        %2829 = vmatprep.subr.mxu0 0.0
        %2830 = vmatpush1.xpose.msra.mxu0 0.0
        %2831 = vmatprep.subr.mxu0 0.0
        %2832 = vmatpush1.xpose.msra.mxu0 0.0
        %2833 = vmatprep.mubr.f32.mxu0 0.0
        %2834 = vmatmul.mubr.f32.gmra.mrb[0].mxu0 %v2757
        %v2835 = vpop.f32.mrb[0].mxu0
        %v2836 = vadd.f32 0.0, %v2835
        %v2837 = vpop.f32.mrb[0].mxu0
        %2838 = vmatprep.mubr.f32.mxu0 0.0
        %2839 = vmatmul.mubr.f32.gmra.mrb[0].mxu0 %v2759
        %v2840 = vpop.f32.mrb[0].mxu0
        %v2841 = vadd.f32 0.0, %v2840
        %v2842 = vpop.f32.mrb[0].mxu0
        %2843 = vmatprep.mubr.f32.mxu0 0.0
        %2844 = vmatmul.mubr.f32.gmra.mrb[0].mxu0 %v2761
        %v2845 = vpop.f32.mrb[0].mxu0
        %v2846 = vadd.f32 0.0, %v2845
        %v2847 = vpop.f32.mrb[0].mxu0
        %2848 = vdwg.mxu0
        %v2849 = vsel %vm2375, %v2836, -inf
        %2850 = vmax.xlane.f32.xlu0 %v2849
        %v2851 = vpop.xlane.xlu0 %2850
        %v2852 = vsel %vm2375, %v2841, -inf
        %2853 = vmax.xlane.f32.xlu0 %v2852
        %v2854 = vpop.xlane.xlu0 %2853
        %v2855 = vsel %vm2382, %v2846, -inf
        %2856 = vmax.xlane.f32.xlu0 %v2855
        %v2857 = vpop.xlane.xlu0 %2856
        %v2858 = vsub.f32 %v2836, %v2851
        %v2859 = vsub.f32 %v2841, %v2854
        %v2860 = vsub.f32 %v2846, %v2857
        %v2861 = vmul.f32 %v2858, 1.442695
        %v2862 = vpow.pop %v2861
        %v2863 = vmul.f32 %v2859, 1.442695
        %v2864 = vpow.pop %v2863
        %v2865 = vmul.f32 %v2860, 1.442695
        %v2866 = vpow.pop %v2865
        %v2867 = vsel %vm2375, %v2862, 0.0
        %2868 = vadd.xlane.f32.xlu0 %v2867
        %v2869 = vpop.xlane.xlu0 %2868
        %v2870 = vsel %vm2375, %v2864, 0.0
        %2871 = vadd.xlane.f32.xlu0 %v2870
        %v2872 = vpop.xlane.xlu0 %2871
        %v2873 = vsel %vm2382, %v2866, 0.0
        %2874 = vadd.xlane.f32.xlu0 %v2873
        %v2875 = vpop.xlane.xlu0 %2874
        %v2876 = vrcp.pop %v2869
        %v2877 = vrcp.pop %v2872
        %v2878 = vrcp.pop %v2875
        %v2879 = vmul.f32 %v2862, %v2876
        %v2880 = vmul.f32 %v2864, %v2877
        %v2881 = vmul.f32 %v2866, %v2878
        %2882 = vrot.lane.b32.xlu0 %v2260, 48
        %v2883 = vpop.permute.xlu0 %2882
        %2884 = vrot.lane.b32.xlu0 %v2263, 48
        %v2885 = vpop.permute.xlu0 %2884
        %2886 = vrot.lane.b32.xlu0 %v2268, 48
        %v2887 = vpop.permute.xlu0 %2886
        %v2891 = vsel %vm2375, %v2879, 0
        %v2894 = vsel %vm2375, %v2880, 0
        %v2897 = vsel %vm2375, %v2881, 0
        %v2899 = vsel %vm2144, %v2887, 0
        %2901 = vmatprep.subr.mxu0 0.0
        %2902 = vmatpush1.msra.mxu0 %v2883
        %2903 = vmatprep.subr.mxu0 0.0
        %2904 = vmatpush1.msra.mxu0 %v2885
        %2905 = vmatprep.subr.mxu0 0.0
        %2906 = vmatpush1.msra.mxu0 %v2899
        %2907 = vmatprep.subr.mxu0 0.0
        %2908 = vmatpush1.msra.mxu0 0.0
        %2909 = vmatprep.subr.mxu0 0.0
        %2910 = vmatpush1.msra.mxu0 0.0
        %2911 = vmatprep.subr.mxu0 0.0
        %2912 = vmatpush1.msra.mxu0 0.0
        %2913 = vmatprep.subr.mxu0 0.0
        %2914 = vmatpush1.msra.mxu0 0.0
        %2915 = vmatprep.subr.mxu0 0.0
        %2916 = vmatpush1.msra.mxu0 0.0
        %2917 = vmatprep.subr.mxu0 0.0
        %2918 = vmatpush1.msra.mxu0 0.0
        %2919 = vmatprep.subr.mxu0 0.0
        %2920 = vmatpush1.msra.mxu0 0.0
        %2921 = vmatprep.subr.mxu0 0.0
        %2922 = vmatpush1.msra.mxu0 0.0
        %2923 = vmatprep.subr.mxu0 0.0
        %2924 = vmatpush1.msra.mxu0 0.0
        %2925 = vmatprep.subr.mxu0 0.0
        %2926 = vmatpush1.msra.mxu0 0.0
        %2927 = vmatprep.subr.mxu0 0.0
        %2928 = vmatpush1.msra.mxu0 0.0
        %2929 = vmatprep.subr.mxu0 0.0
        %2930 = vmatpush1.msra.mxu0 0.0
        %2931 = vmatprep.subr.mxu0 0.0
        %2932 = vmatpush1.msra.mxu0 0.0
        %2933 = vmatprep.subr.mxu0 0.0
        %2934 = vmatpush1.msra.mxu0 0.0
        %2935 = vmatprep.subr.mxu0 0.0
        %2936 = vmatpush1.msra.mxu0 0.0
        %2937 = vmatprep.subr.mxu0 0.0
        %2938 = vmatpush1.msra.mxu0 0.0
        %2939 = vmatprep.subr.mxu0 0.0
        %2940 = vmatpush1.msra.mxu0 0.0
        %2941 = vmatprep.subr.mxu0 0.0
        %2942 = vmatpush1.msra.mxu0 0.0
        %2943 = vmatprep.subr.mxu0 0.0
        %2944 = vmatpush1.msra.mxu0 0.0
        %2945 = vmatprep.subr.mxu0 0.0
        %2946 = vmatpush1.msra.mxu0 0.0
        %2947 = vmatprep.subr.mxu0 0.0
        %2948 = vmatpush1.msra.mxu0 0.0
        %2949 = vmatprep.subr.mxu0 0.0
        %2950 = vmatpush1.msra.mxu0 0.0
        %2951 = vmatprep.subr.mxu0 0.0
        %2952 = vmatpush1.msra.mxu0 0.0
        %2953 = vmatprep.subr.mxu0 0.0
        %2954 = vmatpush1.msra.mxu0 0.0
        %2955 = vmatprep.subr.mxu0 0.0
        %2956 = vmatpush1.msra.mxu0 0.0
        %2957 = vmatprep.subr.mxu0 0.0
        %2958 = vmatpush1.msra.mxu0 0.0
        %2959 = vmatprep.subr.mxu0 0.0
        %2960 = vmatpush1.msra.mxu0 0.0
        %2961 = vmatprep.subr.mxu0 0.0
        %2962 = vmatpush1.msra.mxu0 0.0
        %2963 = vmatprep.subr.mxu0 0.0
        %2964 = vmatpush1.msra.mxu0 0.0
        %2965 = vmatprep.mubr.f32.mxu0 0.0
        %2966 = vmatmul.mubr.f32.gmra.mrb[0].mxu0 %v2891
        %v2967 = vpop.f32.mrb[0].mxu0
        %v2968 = vadd.f32 0.0, %v2967
        %v2969 = vpop.f32.mrb[0].mxu0
        %2970 = vmatprep.mubr.f32.mxu0 0.0
        %2971 = vmatmul.mubr.f32.gmra.mrb[0].mxu0 %v2894
        %v2972 = vpop.f32.mrb[0].mxu0
        %v2973 = vadd.f32 0.0, %v2972
        %v2974 = vpop.f32.mrb[0].mxu0
        %2975 = vmatprep.mubr.f32.mxu0 0.0
        %2976 = vmatmul.mubr.f32.gmra.mrb[0].mxu0 %v2897
        %v2977 = vpop.f32.mrb[0].mxu0
        %v2978 = vadd.f32 0.0, %v2977
        %v2979 = vpop.f32.mrb[0].mxu0
        %2980 = vdwg.mxu0
        %2981 = vrot.lane.b32.xlu0 %v2260, 104
        %v2982 = vpop.permute.xlu0 %2981
        %2983 = vrot.lane.b32.xlu0 %v2263, 104
        %v2984 = vpop.permute.xlu0 %2983
        %2985 = vrot.lane.b32.xlu0 %v2268, 104
        %v2986 = vpop.permute.xlu0 %2985
        %2987 = vrot.lane.b32.xlu0 %v2260, 72
        %v2988 = vpop.permute.xlu0 %2987
        %2989 = vrot.lane.b32.xlu0 %v2263, 72
        %v2990 = vpop.permute.xlu0 %2989
        %2991 = vrot.lane.b32.xlu0 %v2268, 72
        %v2992 = vpop.permute.xlu0 %2991
        %v2993 = vsel %vm2282, %v2982, 0
        %v2995 = vsel %vm2282, %v2984, 0
        %v2997 = vsel %vm2282, %v2986, 0
        %v2999 = vsel %vm2282, %v2988, 0
        %v3001 = vsel %vm2282, %v2990, 0
        %v3003 = vsel %vm2282, %v2992, 0
        %3005 = vmatprep.subr.mxu0 0.0
        %3006 = vmatpush1.xpose.msra.mxu0 %v2999
        %3007 = vmatprep.subr.mxu0 0.0
        %3008 = vmatpush1.xpose.msra.mxu0 %v3001
        %3009 = vmatprep.subr.mxu0 0.0
        %3010 = vmatpush1.xpose.msra.mxu0 %v3003
        %3011 = vmatprep.subr.mxu0 0.0
        %3012 = vmatpush1.xpose.msra.mxu0 0.0
        %3013 = vmatprep.subr.mxu0 0.0
        %3014 = vmatpush1.xpose.msra.mxu0 0.0
        %3015 = vmatprep.subr.mxu0 0.0
        %3016 = vmatpush1.xpose.msra.mxu0 0.0
        %3017 = vmatprep.subr.mxu0 0.0
        %3018 = vmatpush1.xpose.msra.mxu0 0.0
        %3019 = vmatprep.subr.mxu0 0.0
        %3020 = vmatpush1.xpose.msra.mxu0 0.0
        %3021 = vmatprep.subr.mxu0 0.0
        %3022 = vmatpush1.xpose.msra.mxu0 0.0
        %3023 = vmatprep.subr.mxu0 0.0
        %3024 = vmatpush1.xpose.msra.mxu0 0.0
        %3025 = vmatprep.subr.mxu0 0.0
        %3026 = vmatpush1.xpose.msra.mxu0 0.0
        %3027 = vmatprep.subr.mxu0 0.0
        %3028 = vmatpush1.xpose.msra.mxu0 0.0
        %3029 = vmatprep.subr.mxu0 0.0
        %3030 = vmatpush1.xpose.msra.mxu0 0.0
        %3031 = vmatprep.subr.mxu0 0.0
        %3032 = vmatpush1.xpose.msra.mxu0 0.0
        %3033 = vmatprep.subr.mxu0 0.0
        %3034 = vmatpush1.xpose.msra.mxu0 0.0
        %3035 = vmatprep.subr.mxu0 0.0
        %3036 = vmatpush1.xpose.msra.mxu0 0.0
        %3037 = vmatprep.subr.mxu0 0.0
        %3038 = vmatpush1.xpose.msra.mxu0 0.0
        %3039 = vmatprep.subr.mxu0 0.0
        %3040 = vmatpush1.xpose.msra.mxu0 0.0
        %3041 = vmatprep.subr.mxu0 0.0
        %3042 = vmatpush1.xpose.msra.mxu0 0.0
        %3043 = vmatprep.subr.mxu0 0.0
        %3044 = vmatpush1.xpose.msra.mxu0 0.0
        %3045 = vmatprep.subr.mxu0 0.0
        %3046 = vmatpush1.xpose.msra.mxu0 0.0
        %3047 = vmatprep.subr.mxu0 0.0
        %3048 = vmatpush1.xpose.msra.mxu0 0.0
        %3049 = vmatprep.subr.mxu0 0.0
        %3050 = vmatpush1.xpose.msra.mxu0 0.0
        %3051 = vmatprep.subr.mxu0 0.0
        %3052 = vmatpush1.xpose.msra.mxu0 0.0
        %3053 = vmatprep.subr.mxu0 0.0
        %3054 = vmatpush1.xpose.msra.mxu0 0.0
        %3055 = vmatprep.subr.mxu0 0.0
        %3056 = vmatpush1.xpose.msra.mxu0 0.0
        %3057 = vmatprep.subr.mxu0 0.0
        %3058 = vmatpush1.xpose.msra.mxu0 0.0
        %3059 = vmatprep.subr.mxu0 0.0
        %3060 = vmatpush1.xpose.msra.mxu0 0.0
        %3061 = vmatprep.subr.mxu0 0.0
        %3062 = vmatpush1.xpose.msra.mxu0 0.0
        %3063 = vmatprep.subr.mxu0 0.0
        %3064 = vmatpush1.xpose.msra.mxu0 0.0
        %3065 = vmatprep.subr.mxu0 0.0
        %3066 = vmatpush1.xpose.msra.mxu0 0.0
        %3067 = vmatprep.subr.mxu0 0.0
        %3068 = vmatpush1.xpose.msra.mxu0 0.0
        %3069 = vmatprep.mubr.f32.mxu0 0.0
        %3070 = vmatmul.mubr.f32.gmra.mrb[0].mxu0 %v2993
        %v3071 = vpop.f32.mrb[0].mxu0
        %v3072 = vadd.f32 0.0, %v3071
        %v3073 = vpop.f32.mrb[0].mxu0
        %3074 = vmatprep.mubr.f32.mxu0 0.0
        %3075 = vmatmul.mubr.f32.gmra.mrb[0].mxu0 %v2995
        %v3076 = vpop.f32.mrb[0].mxu0
        %v3077 = vadd.f32 0.0, %v3076
        %v3078 = vpop.f32.mrb[0].mxu0
        %3079 = vmatprep.mubr.f32.mxu0 0.0
        %3080 = vmatmul.mubr.f32.gmra.mrb[0].mxu0 %v2997
        %v3081 = vpop.f32.mrb[0].mxu0
        %v3082 = vadd.f32 0.0, %v3081
        %v3083 = vpop.f32.mrb[0].mxu0
        %3084 = vdwg.mxu0
        %v3085 = vsel %vm2375, %v3072, -inf
        %3086 = vmax.xlane.f32.xlu0 %v3085
        %v3087 = vpop.xlane.xlu0 %3086
        %v3088 = vsel %vm2375, %v3077, -inf
        %3089 = vmax.xlane.f32.xlu0 %v3088
        %v3090 = vpop.xlane.xlu0 %3089
        %v3091 = vsel %vm2382, %v3082, -inf
        %3092 = vmax.xlane.f32.xlu0 %v3091
        %v3093 = vpop.xlane.xlu0 %3092
        %v3094 = vsub.f32 %v3072, %v3087
        %v3095 = vsub.f32 %v3077, %v3090
        %v3096 = vsub.f32 %v3082, %v3093
        %v3097 = vmul.f32 %v3094, 1.442695
        %v3098 = vpow.pop %v3097
        %v3099 = vmul.f32 %v3095, 1.442695
        %v3100 = vpow.pop %v3099
        %v3101 = vmul.f32 %v3096, 1.442695
        %v3102 = vpow.pop %v3101
        %v3103 = vsel %vm2375, %v3098, 0.0
        %3104 = vadd.xlane.f32.xlu0 %v3103
        %v3105 = vpop.xlane.xlu0 %3104
        %v3106 = vsel %vm2375, %v3100, 0.0
        %3107 = vadd.xlane.f32.xlu0 %v3106
        %v3108 = vpop.xlane.xlu0 %3107
        %v3109 = vsel %vm2382, %v3102, 0.0
        %3110 = vadd.xlane.f32.xlu0 %v3109
        %v3111 = vpop.xlane.xlu0 %3110
        %v3112 = vrcp.pop %v3105
        %v3113 = vrcp.pop %v3108
        %v3114 = vrcp.pop %v3111
        %v3115 = vmul.f32 %v3098, %v3112
        %v3116 = vmul.f32 %v3100, %v3113
        %v3117 = vmul.f32 %v3102, %v3114
        %3118 = vrot.lane.b32.xlu0 %v2260, 40
        %v3119 = vpop.permute.xlu0 %3118
        %3120 = vrot.lane.b32.xlu0 %v2263, 40
        %v3121 = vpop.permute.xlu0 %3120
        %3122 = vrot.lane.b32.xlu0 %v2268, 40
        %v3123 = vpop.permute.xlu0 %3122
        %v3127 = vsel %vm2375, %v3115, 0
        %v3130 = vsel %vm2375, %v3116, 0
        %v3133 = vsel %vm2375, %v3117, 0
        %v3135 = vsel %vm2144, %v3123, 0
        %3137 = vmatprep.subr.mxu0 0.0
        %3138 = vmatpush1.msra.mxu0 %v3119
        %3139 = vmatprep.subr.mxu0 0.0
        %3140 = vmatpush1.msra.mxu0 %v3121
        %3141 = vmatprep.subr.mxu0 0.0
        %3142 = vmatpush1.msra.mxu0 %v3135
        %3143 = vmatprep.subr.mxu0 0.0
        %3144 = vmatpush1.msra.mxu0 0.0
        %3145 = vmatprep.subr.mxu0 0.0
        %3146 = vmatpush1.msra.mxu0 0.0
        %3147 = vmatprep.subr.mxu0 0.0
        %3148 = vmatpush1.msra.mxu0 0.0
        %3149 = vmatprep.subr.mxu0 0.0
        %3150 = vmatpush1.msra.mxu0 0.0
        %3151 = vmatprep.subr.mxu0 0.0
        %3152 = vmatpush1.msra.mxu0 0.0
        %3153 = vmatprep.subr.mxu0 0.0
        %3154 = vmatpush1.msra.mxu0 0.0
        %3155 = vmatprep.subr.mxu0 0.0
        %3156 = vmatpush1.msra.mxu0 0.0
        %3157 = vmatprep.subr.mxu0 0.0
        %3158 = vmatpush1.msra.mxu0 0.0
        %3159 = vmatprep.subr.mxu0 0.0
        %3160 = vmatpush1.msra.mxu0 0.0
        %3161 = vmatprep.subr.mxu0 0.0
        %3162 = vmatpush1.msra.mxu0 0.0
        %3163 = vmatprep.subr.mxu0 0.0
        %3164 = vmatpush1.msra.mxu0 0.0
        %3165 = vmatprep.subr.mxu0 0.0
        %3166 = vmatpush1.msra.mxu0 0.0
        %3167 = vmatprep.subr.mxu0 0.0
        %3168 = vmatpush1.msra.mxu0 0.0
        %3169 = vmatprep.subr.mxu0 0.0
        %3170 = vmatpush1.msra.mxu0 0.0
        %3171 = vmatprep.subr.mxu0 0.0
        %3172 = vmatpush1.msra.mxu0 0.0
        %3173 = vmatprep.subr.mxu0 0.0
        %3174 = vmatpush1.msra.mxu0 0.0
        %3175 = vmatprep.subr.mxu0 0.0
        %3176 = vmatpush1.msra.mxu0 0.0
        %3177 = vmatprep.subr.mxu0 0.0
        %3178 = vmatpush1.msra.mxu0 0.0
        %3179 = vmatprep.subr.mxu0 0.0
        %3180 = vmatpush1.msra.mxu0 0.0
        %3181 = vmatprep.subr.mxu0 0.0
        %3182 = vmatpush1.msra.mxu0 0.0
        %3183 = vmatprep.subr.mxu0 0.0
        %3184 = vmatpush1.msra.mxu0 0.0
        %3185 = vmatprep.subr.mxu0 0.0
        %3186 = vmatpush1.msra.mxu0 0.0
        %3187 = vmatprep.subr.mxu0 0.0
        %3188 = vmatpush1.msra.mxu0 0.0
        %3189 = vmatprep.subr.mxu0 0.0
        %3190 = vmatpush1.msra.mxu0 0.0
        %3191 = vmatprep.subr.mxu0 0.0
        %3192 = vmatpush1.msra.mxu0 0.0
        %3193 = vmatprep.subr.mxu0 0.0
        %3194 = vmatpush1.msra.mxu0 0.0
        %3195 = vmatprep.subr.mxu0 0.0
        %3196 = vmatpush1.msra.mxu0 0.0
        %3197 = vmatprep.subr.mxu0 0.0
        %3198 = vmatpush1.msra.mxu0 0.0
        %3199 = vmatprep.subr.mxu0 0.0
        %3200 = vmatpush1.msra.mxu0 0.0
        %3201 = vmatprep.mubr.f32.mxu0 0.0
        %3202 = vmatmul.mubr.f32.gmra.mrb[0].mxu0 %v3127
        %v3203 = vpop.f32.mrb[0].mxu0
        %v3204 = vadd.f32 0.0, %v3203
        %v3205 = vpop.f32.mrb[0].mxu0
        %3206 = vmatprep.mubr.f32.mxu0 0.0
        %3207 = vmatmul.mubr.f32.gmra.mrb[0].mxu0 %v3130
        %v3208 = vpop.f32.mrb[0].mxu0
        %v3209 = vadd.f32 0.0, %v3208
        %v3210 = vpop.f32.mrb[0].mxu0
        %3211 = vmatprep.mubr.f32.mxu0 0.0
        %3212 = vmatmul.mubr.f32.gmra.mrb[0].mxu0 %v3133
        %v3213 = vpop.f32.mrb[0].mxu0
        %v3214 = vadd.f32 0.0, %v3213
        %v3215 = vpop.f32.mrb[0].mxu0
        %3216 = vdwg.mxu0
        %3220 = vrot.lane.b32.xlu0 %v2732, 8
        %v3221 = vpop.permute.xlu0 %3220
        %3222 = vrot.lane.b32.xlu0 %v2737, 8
        %v3223 = vpop.permute.xlu0 %3222
        %3224 = vrot.lane.b32.xlu0 %v2742, 8
        %v3225 = vpop.permute.xlu0 %3224
        %3232 = vrot.lane.b32.xlu0 %v2968, 16
        %v3233 = vpop.permute.xlu0 %3232
        %3234 = vrot.lane.b32.xlu0 %v2973, 16
        %v3235 = vpop.permute.xlu0 %3234
        %3236 = vrot.lane.b32.xlu0 %v2978, 16
        %v3237 = vpop.permute.xlu0 %3236
        %3244 = vrot.lane.b32.xlu0 %v3204, 24
        %v3245 = vpop.permute.xlu0 %3244
        %3246 = vrot.lane.b32.xlu0 %v3209, 24
        %v3247 = vpop.permute.xlu0 %3246
        %3248 = vrot.lane.b32.xlu0 %v3214, 24
        %v3249 = vpop.permute.xlu0 %3248
        %v3253 = vsel %vm2282, %v2496, %v3221
        %v3254 = vsel %vm2282, %v2501, %v3223
        %v3255 = vsel %vm2282, %v2506, %v3225
        %vm3256 = vcmask 130048
        %v3257 = vsel %vm3256, %v3253, %v3233
        %v3258 = vsel %vm3256, %v3254, %v3235
        %v3259 = vsel %vm3256, %v3255, %v3237
        %vm3260 = vcmask 195584
        %v3261 = vsel %vm3260, %v3257, %v3245
        %v3262 = vsel %vm3260, %v3258, %v3247
        %v3263 = vsel %vm3260, %v3259, %v3249
        %v3264 = vld [vmem:[#allocation14] sm:$0xff]
        %v3265 = vld [vmem:[#allocation14 + $0x8] sm:$0xff]
        %v3266 = vld [vmem:[#allocation14 + $0x10] sm:$0xff]
        %v3267 = vld [vmem:[#allocation14 + $0x18] sm:$0xff]
        %v3269 = vsel %vm2152, %v3261, 0
        %v3272 = vsel %vm2152, %v3262, 0
        %v3275 = vsel %vm2152, %v3263, 0
        %3277 = vmatprep.subr.mxu0 0.0
        %3278 = vmatpush1.msra.mxu0 %v3264
        %3279 = vmatprep.subr.mxu0 0.0
        %3280 = vmatpush1.msra.mxu0 %v3265
        %3281 = vmatprep.subr.mxu0 0.0
        %3282 = vmatpush1.msra.mxu0 %v3266
        %3283 = vmatprep.subr.mxu0 0.0
        %3284 = vmatpush1.msra.mxu0 %v3267
        %3285 = vmatprep.subr.mxu0 0.0
        %3286 = vmatpush1.msra.mxu0 0.0
        %3287 = vmatprep.subr.mxu0 0.0
        %3288 = vmatpush1.msra.mxu0 0.0
        %3289 = vmatprep.subr.mxu0 0.0
        %3290 = vmatpush1.msra.mxu0 0.0
        %3291 = vmatprep.subr.mxu0 0.0
        %3292 = vmatpush1.msra.mxu0 0.0
        %3293 = vmatprep.subr.mxu0 0.0
        %3294 = vmatpush1.msra.mxu0 0.0
        %3295 = vmatprep.subr.mxu0 0.0
        %3296 = vmatpush1.msra.mxu0 0.0
        %3297 = vmatprep.subr.mxu0 0.0
        %3298 = vmatpush1.msra.mxu0 0.0
        %3299 = vmatprep.subr.mxu0 0.0
        %3300 = vmatpush1.msra.mxu0 0.0
        %3301 = vmatprep.subr.mxu0 0.0
        %3302 = vmatpush1.msra.mxu0 0.0
        %3303 = vmatprep.subr.mxu0 0.0
        %3304 = vmatpush1.msra.mxu0 0.0
        %3305 = vmatprep.subr.mxu0 0.0
        %3306 = vmatpush1.msra.mxu0 0.0
        %3307 = vmatprep.subr.mxu0 0.0
        %3308 = vmatpush1.msra.mxu0 0.0
        %3309 = vmatprep.subr.mxu0 0.0
        %3310 = vmatpush1.msra.mxu0 0.0
        %3311 = vmatprep.subr.mxu0 0.0
        %3312 = vmatpush1.msra.mxu0 0.0
        %3313 = vmatprep.subr.mxu0 0.0
        %3314 = vmatpush1.msra.mxu0 0.0
        %3315 = vmatprep.subr.mxu0 0.0
        %3316 = vmatpush1.msra.mxu0 0.0
        %3317 = vmatprep.subr.mxu0 0.0
        %3318 = vmatpush1.msra.mxu0 0.0
        %3319 = vmatprep.subr.mxu0 0.0
        %3320 = vmatpush1.msra.mxu0 0.0
        %3321 = vmatprep.subr.mxu0 0.0
        %3322 = vmatpush1.msra.mxu0 0.0
        %3323 = vmatprep.subr.mxu0 0.0
        %3324 = vmatpush1.msra.mxu0 0.0
        %3325 = vmatprep.subr.mxu0 0.0
        %3326 = vmatpush1.msra.mxu0 0.0
        %3327 = vmatprep.subr.mxu0 0.0
        %3328 = vmatpush1.msra.mxu0 0.0
        %3329 = vmatprep.subr.mxu0 0.0
        %3330 = vmatpush1.msra.mxu0 0.0
        %3331 = vmatprep.subr.mxu0 0.0
        %3332 = vmatpush1.msra.mxu0 0.0
        %3333 = vmatprep.subr.mxu0 0.0
        %3334 = vmatpush1.msra.mxu0 0.0
        %3335 = vmatprep.subr.mxu0 0.0
        %3336 = vmatpush1.msra.mxu0 0.0
        %3337 = vmatprep.subr.mxu0 0.0
        %3338 = vmatpush1.msra.mxu0 0.0
        %3339 = vmatprep.subr.mxu0 0.0
        %3340 = vmatpush1.msra.mxu0 0.0
        %3341 = vmatprep.mubr.f32.mxu0 0.0
        %3342 = vmatmul.mubr.f32.gmra.mrb[0].mxu0 %v3269
        %v3343 = vpop.f32.mrb[0].mxu0
        %v3344 = vadd.f32 0.0, %v3343
        %v3345 = vpop.f32.mrb[0].mxu0
        %3346 = vmatprep.mubr.f32.mxu0 0.0
        %3347 = vmatmul.mubr.f32.gmra.mrb[0].mxu0 %v3272
        %v3348 = vpop.f32.mrb[0].mxu0
        %v3349 = vadd.f32 0.0, %v3348
        %v3350 = vpop.f32.mrb[0].mxu0
        %3351 = vmatprep.mubr.f32.mxu0 0.0
        %3352 = vmatmul.mubr.f32.gmra.mrb[0].mxu0 %v3275
        %v3353 = vpop.f32.mrb[0].mxu0
        %v3354 = vadd.f32 0.0, %v3353
        %v3355 = vpop.f32.mrb[0].mxu0
        %3356 = vdwg.mxu0
        %v3357 = vadd.f32 %v2151, %v3344
        %v3358 = vadd.f32 %v2147, %v3349
        %v3359 = vadd.f32 %v2146, %v3354
        %v3360 = vld [vmem:[#allocation15] sm:$0x1]
        %v3362 = vlaneseq
        %v3363 = vshrl.u32 %v3362, 7
        %v3364 = vsub.s32 0, %v3363
        %v3365 = vrot.slane %v3360, %v3364
        %v3367 = vadd.f32 %v3357, %v3365
        %v3368 = vadd.f32 %v3358, %v3365
        %v3369 = vadd.f32 %v3359, %v3365
        %v3370 = vsel %vm2152, %v3367, 0.0
        %3371 = vadd.xlane.f32.xlu0 %v3370
        %v3372 = vpop.xlane.xlu0 %3371
        %v3373 = vsel %vm2152, %v3368, 0.0
        %3374 = vadd.xlane.f32.xlu0 %v3373
        %v3375 = vpop.xlane.xlu0 %3374
        %v3376 = vsel %vm2159, %v3369, 0.0
        %3377 = vadd.xlane.f32.xlu0 %v3376
        %v3378 = vpop.xlane.xlu0 %3377
        %v3379 = vmul.f32 %v3372, %v2163
        %v3380 = vmul.f32 %v3375, %v2163
        %v3381 = vmul.f32 %v3378, %v2163
        %v3382 = vsub.f32 %v3367, %v3379
        %v3383 = vsub.f32 %v3368, %v3380
        %v3384 = vsub.f32 %v3369, %v3381
        %v3385 = vmul.f32 %v3382, %v3382
        %v3386 = vmul.f32 %v3383, %v3383
        %v3387 = vmul.f32 %v3384, %v3384
        %v3388 = vsel %vm2152, %v3385, 0.0
        %3389 = vadd.xlane.f32.xlu0 %v3388
        %v3390 = vpop.xlane.xlu0 %3389
        %v3391 = vsel %vm2152, %v3386, 0.0
        %3392 = vadd.xlane.f32.xlu0 %v3391
        %v3393 = vpop.xlane.xlu0 %3392
        %v3394 = vsel %vm2159, %v3387, 0.0
        %3395 = vadd.xlane.f32.xlu0 %v3394
        %v3396 = vpop.xlane.xlu0 %3395
        %v3397 = vmul.f32 %v3390, %v2163
        %v3398 = vmul.f32 %v3393, %v2163
        %v3399 = vmul.f32 %v3396, %v2163
        %v3400 = vadd.f32 %v3397, 1e-06
        %v3401 = vadd.f32 %v3398, 1e-06
        %v3402 = vadd.f32 %v3399, 1e-06
        %v3403 = vrsqrt.pop %v3400
        %v3404 = vrsqrt.pop %v3401
        %v3405 = vrsqrt.pop %v3402
        %v3406 = vmul.f32 %v3382, %v3403
        %v3407 = vmul.f32 %v3383, %v3404
        %v3408 = vmul.f32 %v3384, %v3405
        %v3409 = vld [vmem:[#allocation17] sm:$0xf]
        %v3410 = vld [vmem:[#allocation17 + $0x4] sm:$0xf]
        %v3411 = vld [vmem:[#allocation17 + $0x8] sm:$0xf]
        %v3412 = vld [vmem:[#allocation17 + $0xc] sm:$0xf]
        %v3413 = vpack.c.bf16 %v3407, %v3406
        %v3414 = vpack.c.bf16 %v3408, %v3408
        %v3415 = vld [vmem:[#allocation18] sm:$0x1]
        %v3417 = vlaneseq
        %v3418 = vshrl.u32 %v3417, 7
        %v3419 = vsub.s32 0, %v3418
        %v3420 = vrot.slane %v3415, %v3419
        %v3426 = vunpack.c.l.b16 %v3409
        %v3427 = vunpack.c.l.b16 %v3410
        %v3428 = vunpack.c.l.b16 %v3411
        %v3429 = vunpack.c.l.b16 %v3412
        %v3430 = vpack.c.b16 %v3427, %v3426
        %v3431 = vpack.c.b16 %v3429, %v3428
        %v3435 = vsel %vm2152, %v3413, 0
        %v3438 = vsel %vm2152, %v3414, 0
        %3440 = vmatprep.subr.bf16.mxu0 0
        %3441 = vmatpush1.bf16.msra.mxu0 %v3430
        %3442 = vmatprep.subr.bf16.mxu0 0
        %3443 = vmatpush1.bf16.msra.mxu0 %v3431
        %3444 = vmatprep.subr.bf16.mxu0 0
        %3445 = vmatpush1.bf16.msra.mxu0 0
        %3446 = vmatprep.subr.bf16.mxu0 0
        %3447 = vmatpush1.bf16.msra.mxu0 0
        %3448 = vmatprep.subr.bf16.mxu0 0
        %3449 = vmatpush1.bf16.msra.mxu0 0
        %3450 = vmatprep.subr.bf16.mxu0 0
        %3451 = vmatpush1.bf16.msra.mxu0 0
        %3452 = vmatprep.subr.bf16.mxu0 0
        %3453 = vmatpush1.bf16.msra.mxu0 0
        %3454 = vmatprep.subr.bf16.mxu0 0
        %3455 = vmatpush1.bf16.msra.mxu0 0
        %3456 = vmatprep.subr.bf16.mxu0 0
        %3457 = vmatpush1.bf16.msra.mxu0 0
        %3458 = vmatprep.subr.bf16.mxu0 0
        %3459 = vmatpush1.bf16.msra.mxu0 0
        %3460 = vmatprep.subr.bf16.mxu0 0
        %3461 = vmatpush1.bf16.msra.mxu0 0
        %3462 = vmatprep.subr.bf16.mxu0 0
        %3463 = vmatpush1.bf16.msra.mxu0 0
        %3464 = vmatprep.subr.bf16.mxu0 0
        %3465 = vmatpush1.bf16.msra.mxu0 0
        %3466 = vmatprep.subr.bf16.mxu0 0
        %3467 = vmatpush1.bf16.msra.mxu0 0
        %3468 = vmatprep.subr.bf16.mxu0 0
        %3469 = vmatpush1.bf16.msra.mxu0 0
        %3470 = vmatprep.subr.bf16.mxu0 0
        %3471 = vmatpush1.bf16.msra.mxu0 0
        %3472 = vmatprep.mubr.bf16.mxu0 0
        %3473 = vmatmul.mubr.bf16.gmra.mrb[0].mxu0 %v3435
        %v3474 = vpop.f32.mrb[0].mxu0
        %v3475 = vadd.f32 %v3420, %v3474
        %v3476 = vpop.f32.mrb[0].mxu0
        %v3477 = vpop.f32.mrb[0].mxu0
        %v3478 = vadd.f32 %v3420, %v3477
        %v3479 = vpop.f32.mrb[0].mxu0
        %3480 = vmatprep.mubr.bf16.mxu0 0
        %3481 = vmatmul.mubr.bf16.gmra.mrb[0].mxu0 %v3438
        %v3482 = vpop.f32.mrb[0].mxu0
        %v3483 = vadd.f32 %v3420, %v3482
        %v3484 = vpop.f32.mrb[0].mxu0
        %v3485 = vpop.f32.mrb[0].mxu0
        %v3486 = vpop.f32.mrb[0].mxu0
        %3487 = vdwg.mxu0
        %v3488 = vmul.f32 %v3475, 0.5
        %v3489 = vmul.f32 %v3478, 0.5
        %v3490 = vmul.f32 %v3483, 0.5
        %v3491 = vmul.f32 %v3475, 0.70710677
        %v3492 = vmul.f32 %v3478, 0.70710677
        %v3493 = vmul.f32 %v3483, 0.70710677
        %v3494 = verf.f32.pop %v3491
        %v3495 = verf.f32.pop %v3492
        %v3496 = verf.f32.pop %v3493
        %v3497 = vadd.f32 %v3494, 1.0
        %v3498 = vadd.f32 %v3495, 1.0
        %v3499 = vadd.f32 %v3496, 1.0
        %v3500 = vmul.f32 %v3488, %v3497
        %v3501 = vmul.f32 %v3489, %v3498
        %v3502 = vmul.f32 %v3490, %v3499
        %v3503 = vld [vmem:[%s23] sm:$0xf]
        %v3504 = vld [vmem:[%s23 + $0x4] sm:$0xf]
        %v3505 = vld [vmem:[%s23 + $0x8] sm:$0xf]
        %v3506 = vld [vmem:[%s23 + $0xc] sm:$0xf]
        %v3507 = vld [vmem:[%s23 + $0x10] sm:$0xf]
        %v3508 = vld [vmem:[%s23 + $0x14] sm:$0xf]
        %v3509 = vld [vmem:[%s23 + $0x18] sm:$0xf]
        %v3510 = vld [vmem:[%s23 + $0x1c] sm:$0xf]
        %v3511 = vld [vmem:[%s23 + $0x20] sm:$0xf]
        %v3512 = vld [vmem:[%s23 + $0x24] sm:$0xf]
        %v3513 = vld [vmem:[%s23 + $0x28] sm:$0xf]
        %v3514 = vld [vmem:[%s23 + $0x2c] sm:$0xf]
        %v3515 = vld [vmem:[%s23 + $0x30] sm:$0xf]
        %v3516 = vld [vmem:[%s23 + $0x34] sm:$0xf]
        %v3517 = vld [vmem:[%s23 + $0x38] sm:$0xf]
        %v3518 = vld [vmem:[%s23 + $0x3c] sm:$0xf]
        %v3519 = vpack.c.bf16 %v3501, %v3500
        %v3520 = vpack.c.bf16 %v3502, %v3502
        %v3537 = vunpack.c.l.b16 %v3503
        %v3538 = vunpack.c.l.b16 %v3504
        %v3539 = vunpack.c.l.b16 %v3505
        %v3540 = vunpack.c.l.b16 %v3506
        %v3541 = vunpack.c.l.b16 %v3507
        %v3542 = vunpack.c.l.b16 %v3508
        %v3543 = vunpack.c.l.b16 %v3509
        %v3544 = vunpack.c.l.b16 %v3510
        %v3545 = vunpack.c.l.b16 %v3511
        %v3546 = vunpack.c.l.b16 %v3512
        %v3547 = vunpack.c.l.b16 %v3513
        %v3548 = vunpack.c.l.b16 %v3514
        %v3549 = vunpack.c.l.b16 %v3515
        %v3550 = vunpack.c.l.b16 %v3516
        %v3551 = vunpack.c.l.b16 %v3517
        %v3552 = vunpack.c.l.b16 %v3518
        %v3553 = vpack.c.b16 %v3538, %v3537
        %v3554 = vpack.c.b16 %v3540, %v3539
        %v3555 = vpack.c.b16 %v3542, %v3541
        %v3556 = vpack.c.b16 %v3544, %v3543
        %v3557 = vpack.c.b16 %v3546, %v3545
        %v3558 = vpack.c.b16 %v3548, %v3547
        %v3559 = vpack.c.b16 %v3550, %v3549
        %v3560 = vpack.c.b16 %v3552, %v3551
        %3569 = vmatprep.subr.bf16.mxu0 0
        %3570 = vmatpush1.bf16.msra.mxu0 %v3553
        %3571 = vmatprep.subr.bf16.mxu0 0
        %3572 = vmatpush1.bf16.msra.mxu0 %v3554
        %3573 = vmatprep.subr.bf16.mxu0 0
        %3574 = vmatpush1.bf16.msra.mxu0 %v3555
        %3575 = vmatprep.subr.bf16.mxu0 0
        %3576 = vmatpush1.bf16.msra.mxu0 %v3556
        %3577 = vmatprep.subr.bf16.mxu0 0
        %3578 = vmatpush1.bf16.msra.mxu0 %v3557
        %3579 = vmatprep.subr.bf16.mxu0 0
        %3580 = vmatpush1.bf16.msra.mxu0 %v3558
        %3581 = vmatprep.subr.bf16.mxu0 0
        %3582 = vmatpush1.bf16.msra.mxu0 %v3559
        %3583 = vmatprep.subr.bf16.mxu0 0
        %3584 = vmatpush1.bf16.msra.mxu0 %v3560
        %3585 = vmatprep.subr.bf16.mxu0 0
        %3586 = vmatpush1.bf16.msra.mxu0 0
        %3587 = vmatprep.subr.bf16.mxu0 0
        %3588 = vmatpush1.bf16.msra.mxu0 0
        %3589 = vmatprep.subr.bf16.mxu0 0
        %3590 = vmatpush1.bf16.msra.mxu0 0
        %3591 = vmatprep.subr.bf16.mxu0 0
        %3592 = vmatpush1.bf16.msra.mxu0 0
        %3593 = vmatprep.subr.bf16.mxu0 0
        %3594 = vmatpush1.bf16.msra.mxu0 0
        %3595 = vmatprep.subr.bf16.mxu0 0
        %3596 = vmatpush1.bf16.msra.mxu0 0
        %3597 = vmatprep.subr.bf16.mxu0 0
        %3598 = vmatpush1.bf16.msra.mxu0 0
        %3599 = vmatprep.subr.bf16.mxu0 0
        %3600 = vmatpush1.bf16.msra.mxu0 0
        %3601 = vmatprep.mubr.bf16.mxu0 0
        %3602 = vmatmul.mubr.bf16.gmra.mrb[0].mxu0 %v3519
        %v3603 = vpop.f32.mrb[0].mxu0
        %v3604 = vadd.f32 0.0, %v3603
        %v3605 = vpop.f32.mrb[0].mxu0
        %v3606 = vpop.f32.mrb[0].mxu0
        %v3607 = vadd.f32 0.0, %v3606
        %v3608 = vpop.f32.mrb[0].mxu0
        %3609 = vmatprep.mubr.bf16.mxu0 0
        %3610 = vmatmul.mubr.bf16.gmra.mrb[0].mxu0 %v3520
        %v3611 = vpop.f32.mrb[0].mxu0
        %v3612 = vadd.f32 0.0, %v3611
        %v3613 = vpop.f32.mrb[0].mxu0
        %v3614 = vpop.f32.mrb[0].mxu0
        %v3615 = vpop.f32.mrb[0].mxu0
        %3616 = vdwg.mxu0
        %v3617 = vadd.f32 %v3367, %v3604
        %v3618 = vadd.f32 %v3368, %v3607
        %v3619 = vadd.f32 %v3369, %v3612
        %v3620 = vld [vmem:[#allocation20] sm:$0x1]
        %v3622 = vlaneseq
        %v3623 = vshrl.u32 %v3622, 7
        %v3624 = vsub.s32 0, %v3623
        %v3625 = vrot.slane %v3620, %v3624
        %v3627 = vadd.f32 %v3617, %v3625
        %v3628 = vadd.f32 %v3618, %v3625
        %v3629 = vadd.f32 %v3619, %v3625
        %v3630 = vsel %vm2152, %v3627, 0.0
        %3631 = vadd.xlane.f32.xlu0 %v3630
        %v3632 = vpop.xlane.xlu0 %3631
        %v3633 = vsel %vm2152, %v3628, 0.0
        %3634 = vadd.xlane.f32.xlu0 %v3633
        %v3635 = vpop.xlane.xlu0 %3634
        %v3636 = vsel %vm2159, %v3629, 0.0
        %3637 = vadd.xlane.f32.xlu0 %v3636
        %v3638 = vpop.xlane.xlu0 %3637
        %v3639 = vmul.f32 %v3632, %v2163
        %v3640 = vmul.f32 %v3635, %v2163
        %v3641 = vmul.f32 %v3638, %v2163
        %v3642 = vsub.f32 %v3627, %v3639
        %v3643 = vsub.f32 %v3628, %v3640
        %v3644 = vsub.f32 %v3629, %v3641
        %v3645 = vmul.f32 %v3642, %v3642
        %v3646 = vmul.f32 %v3643, %v3643
        %v3647 = vmul.f32 %v3644, %v3644
        %v3648 = vsel %vm2152, %v3645, 0.0
        %3649 = vadd.xlane.f32.xlu0 %v3648
        %v3650 = vpop.xlane.xlu0 %3649
        %v3651 = vsel %vm2152, %v3646, 0.0
        %3652 = vadd.xlane.f32.xlu0 %v3651
        %v3653 = vpop.xlane.xlu0 %3652
        %v3654 = vsel %vm2159, %v3647, 0.0
        %3655 = vadd.xlane.f32.xlu0 %v3654
        %v3656 = vpop.xlane.xlu0 %3655
        %v3657 = vmul.f32 %v3650, %v2163
        %v3658 = vmul.f32 %v3653, %v2163
        %v3659 = vmul.f32 %v3656, %v2163
        %v3660 = vadd.f32 %v3657, 1e-06
        %v3661 = vadd.f32 %v3658, 1e-06
        %v3662 = vadd.f32 %v3659, 1e-06
        %v3663 = vrsqrt.pop %v3660
        %v3664 = vrsqrt.pop %v3661
        %v3665 = vrsqrt.pop %v3662
        %v3666 = vmul.f32 %v3642, %v3663
        %v3667 = vmul.f32 %v3643, %v3664
        %v3668 = vmul.f32 %v3644, %v3665
        %v3669 = vld [vmem:[#allocation21] sm:$0xf]
        %v3670 = vld [vmem:[#allocation21 + $0x4] sm:$0xf]
        %v3671 = vld [vmem:[#allocation21 + $0x8] sm:$0xf]
        %v3672 = vld [vmem:[#allocation21 + $0xc] sm:$0xf]
        %v3673 = vpack.c.bf16 %v3667, %v3666
        %v3674 = vpack.c.bf16 %v3668, %v3668
        %v3675 = vld [vmem:[#allocation23] sm:$0x1]
        %v3677 = vlaneseq
        %v3678 = vshrl.u32 %v3677, 7
        %v3679 = vsub.s32 0, %v3678
        %v3680 = vrot.slane %v3675, %v3679
        %v3686 = vunpack.c.l.b16 %v3669
        %v3687 = vunpack.c.l.b16 %v3670
        %v3688 = vunpack.c.l.b16 %v3671
        %v3689 = vunpack.c.l.b16 %v3672
        %v3690 = vpack.c.b16 %v3687, %v3686
        %v3691 = vpack.c.b16 %v3689, %v3688
        %v3695 = vsel %vm2152, %v3673, 0
        %v3698 = vsel %vm2152, %v3674, 0
        %3700 = vmatprep.subr.bf16.mxu0 0
        %3701 = vmatpush1.bf16.msra.mxu0 %v3690
        %3702 = vmatprep.subr.bf16.mxu0 0
        %3703 = vmatpush1.bf16.msra.mxu0 %v3691
        %3704 = vmatprep.subr.bf16.mxu0 0
        %3705 = vmatpush1.bf16.msra.mxu0 0
        %3706 = vmatprep.subr.bf16.mxu0 0
        %3707 = vmatpush1.bf16.msra.mxu0 0
        %3708 = vmatprep.subr.bf16.mxu0 0
        %3709 = vmatpush1.bf16.msra.mxu0 0
        %3710 = vmatprep.subr.bf16.mxu0 0
        %3711 = vmatpush1.bf16.msra.mxu0 0
        %3712 = vmatprep.subr.bf16.mxu0 0
        %3713 = vmatpush1.bf16.msra.mxu0 0
        %3714 = vmatprep.subr.bf16.mxu0 0
        %3715 = vmatpush1.bf16.msra.mxu0 0
        %3716 = vmatprep.subr.bf16.mxu0 0
        %3717 = vmatpush1.bf16.msra.mxu0 0
        %3718 = vmatprep.subr.bf16.mxu0 0
        %3719 = vmatpush1.bf16.msra.mxu0 0
        %3720 = vmatprep.subr.bf16.mxu0 0
        %3721 = vmatpush1.bf16.msra.mxu0 0
        %3722 = vmatprep.subr.bf16.mxu0 0
        %3723 = vmatpush1.bf16.msra.mxu0 0
        %3724 = vmatprep.subr.bf16.mxu0 0
        %3725 = vmatpush1.bf16.msra.mxu0 0
        %3726 = vmatprep.subr.bf16.mxu0 0
        %3727 = vmatpush1.bf16.msra.mxu0 0
        %3728 = vmatprep.subr.bf16.mxu0 0
        %3729 = vmatpush1.bf16.msra.mxu0 0
        %3730 = vmatprep.subr.bf16.mxu0 0
        %3731 = vmatpush1.bf16.msra.mxu0 0
        %3732 = vmatprep.mubr.bf16.mxu0 0
        %3733 = vmatmul.mubr.bf16.gmra.mrb[0].mxu0 %v3695
        %v3734 = vpop.f32.mrb[0].mxu0
        %v3735 = vadd.f32 %v3680, %v3734
        %v3736 = vpop.f32.mrb[0].mxu0
        %v3737 = vpop.f32.mrb[0].mxu0
        %v3738 = vadd.f32 %v3680, %v3737
        %v3739 = vpop.f32.mrb[0].mxu0
        %3740 = vmatprep.mubr.bf16.mxu0 0
        %3741 = vmatmul.mubr.bf16.gmra.mrb[0].mxu0 %v3698
        %v3742 = vpop.f32.mrb[0].mxu0
        %v3743 = vadd.f32 %v3680, %v3742
        %v3744 = vpop.f32.mrb[0].mxu0
        %v3745 = vpop.f32.mrb[0].mxu0
        %v3746 = vpop.f32.mrb[0].mxu0
        %3747 = vdwg.mxu0
        %3751 = vrot.lane.b32.xlu0 %v3735, 96
        %v3752 = vpop.permute.xlu0 %3751
        %3753 = vrot.lane.b32.xlu0 %v3738, 96
        %v3754 = vpop.permute.xlu0 %3753
        %3755 = vrot.lane.b32.xlu0 %v3743, 96
        %v3756 = vpop.permute.xlu0 %3755
        %v3757 = vsel %vm2282, %v3735, 0
        %v3759 = vsel %vm2282, %v3738, 0
        %v3761 = vsel %vm2282, %v3743, 0
        %v3763 = vsel %vm2282, %v3752, 0
        %v3765 = vsel %vm2282, %v3754, 0
        %v3767 = vsel %vm2282, %v3756, 0
        %3769 = vmatprep.subr.mxu0 0.0
        %3770 = vmatpush1.xpose.msra.mxu0 %v3763
        %3771 = vmatprep.subr.mxu0 0.0
        %3772 = vmatpush1.xpose.msra.mxu0 %v3765
        %3773 = vmatprep.subr.mxu0 0.0
        %3774 = vmatpush1.xpose.msra.mxu0 %v3767
        %3775 = vmatprep.subr.mxu0 0.0
        %3776 = vmatpush1.xpose.msra.mxu0 0.0
        %3777 = vmatprep.subr.mxu0 0.0
        %3778 = vmatpush1.xpose.msra.mxu0 0.0
        %3779 = vmatprep.subr.mxu0 0.0
        %3780 = vmatpush1.xpose.msra.mxu0 0.0
        %3781 = vmatprep.subr.mxu0 0.0
        %3782 = vmatpush1.xpose.msra.mxu0 0.0
        %3783 = vmatprep.subr.mxu0 0.0
        %3784 = vmatpush1.xpose.msra.mxu0 0.0
        %3785 = vmatprep.subr.mxu0 0.0
        %3786 = vmatpush1.xpose.msra.mxu0 0.0
        %3787 = vmatprep.subr.mxu0 0.0
        %3788 = vmatpush1.xpose.msra.mxu0 0.0
        %3789 = vmatprep.subr.mxu0 0.0
        %3790 = vmatpush1.xpose.msra.mxu0 0.0
        %3791 = vmatprep.subr.mxu0 0.0
        %3792 = vmatpush1.xpose.msra.mxu0 0.0
        %3793 = vmatprep.subr.mxu0 0.0
        %3794 = vmatpush1.xpose.msra.mxu0 0.0
        %3795 = vmatprep.subr.mxu0 0.0
        %3796 = vmatpush1.xpose.msra.mxu0 0.0
        %3797 = vmatprep.subr.mxu0 0.0
        %3798 = vmatpush1.xpose.msra.mxu0 0.0
        %3799 = vmatprep.subr.mxu0 0.0
        %3800 = vmatpush1.xpose.msra.mxu0 0.0
        %3801 = vmatprep.subr.mxu0 0.0
        %3802 = vmatpush1.xpose.msra.mxu0 0.0
        %3803 = vmatprep.subr.mxu0 0.0
        %3804 = vmatpush1.xpose.msra.mxu0 0.0
        %3805 = vmatprep.subr.mxu0 0.0
        %3806 = vmatpush1.xpose.msra.mxu0 0.0
        %3807 = vmatprep.subr.mxu0 0.0
        %3808 = vmatpush1.xpose.msra.mxu0 0.0
        %3809 = vmatprep.subr.mxu0 0.0
        %3810 = vmatpush1.xpose.msra.mxu0 0.0
        %3811 = vmatprep.subr.mxu0 0.0
        %3812 = vmatpush1.xpose.msra.mxu0 0.0
        %3813 = vmatprep.subr.mxu0 0.0
        %3814 = vmatpush1.xpose.msra.mxu0 0.0
        %3815 = vmatprep.subr.mxu0 0.0
        %3816 = vmatpush1.xpose.msra.mxu0 0.0
        %3817 = vmatprep.subr.mxu0 0.0
        %3818 = vmatpush1.xpose.msra.mxu0 0.0
        %3819 = vmatprep.subr.mxu0 0.0
        %3820 = vmatpush1.xpose.msra.mxu0 0.0
        %3821 = vmatprep.subr.mxu0 0.0
        %3822 = vmatpush1.xpose.msra.mxu0 0.0
        %3823 = vmatprep.subr.mxu0 0.0
        %3824 = vmatpush1.xpose.msra.mxu0 0.0
        %3825 = vmatprep.subr.mxu0 0.0
        %3826 = vmatpush1.xpose.msra.mxu0 0.0
        %3827 = vmatprep.subr.mxu0 0.0
        %3828 = vmatpush1.xpose.msra.mxu0 0.0
        %3829 = vmatprep.subr.mxu0 0.0
        %3830 = vmatpush1.xpose.msra.mxu0 0.0
        %3831 = vmatprep.subr.mxu0 0.0
        %3832 = vmatpush1.xpose.msra.mxu0 0.0
        %3833 = vmatprep.mubr.f32.mxu0 0.0
        %3834 = vmatmul.mubr.f32.gmra.mrb[0].mxu0 %v3757
        %v3835 = vpop.f32.mrb[0].mxu0
        %v3836 = vadd.f32 0.0, %v3835
        %v3837 = vpop.f32.mrb[0].mxu0
        %3838 = vmatprep.mubr.f32.mxu0 0.0
        %3839 = vmatmul.mubr.f32.gmra.mrb[0].mxu0 %v3759
        %v3840 = vpop.f32.mrb[0].mxu0
        %v3841 = vadd.f32 0.0, %v3840
        %v3842 = vpop.f32.mrb[0].mxu0
        %3843 = vmatprep.mubr.f32.mxu0 0.0
        %3844 = vmatmul.mubr.f32.gmra.mrb[0].mxu0 %v3761
        %v3845 = vpop.f32.mrb[0].mxu0
        %v3846 = vadd.f32 0.0, %v3845
        %v3847 = vpop.f32.mrb[0].mxu0
        %3848 = vdwg.mxu0
        %v3849 = vsel %vm2375, %v3836, -inf
        %3850 = vmax.xlane.f32.xlu0 %v3849
        %v3851 = vpop.xlane.xlu0 %3850
        %v3852 = vsel %vm2375, %v3841, -inf
        %3853 = vmax.xlane.f32.xlu0 %v3852
        %v3854 = vpop.xlane.xlu0 %3853
        %v3855 = vsel %vm2382, %v3846, -inf
        %3856 = vmax.xlane.f32.xlu0 %v3855
        %v3857 = vpop.xlane.xlu0 %3856
        %v3858 = vsub.f32 %v3836, %v3851
        %v3859 = vsub.f32 %v3841, %v3854
        %v3860 = vsub.f32 %v3846, %v3857
        %v3861 = vmul.f32 %v3858, 1.442695
        %v3862 = vpow.pop %v3861
        %v3863 = vmul.f32 %v3859, 1.442695
        %v3864 = vpow.pop %v3863
        %v3865 = vmul.f32 %v3860, 1.442695
        %v3866 = vpow.pop %v3865
        %v3867 = vsel %vm2375, %v3862, 0.0
        %3868 = vadd.xlane.f32.xlu0 %v3867
        %v3869 = vpop.xlane.xlu0 %3868
        %v3870 = vsel %vm2375, %v3864, 0.0
        %3871 = vadd.xlane.f32.xlu0 %v3870
        %v3872 = vpop.xlane.xlu0 %3871
        %v3873 = vsel %vm2382, %v3866, 0.0
        %3874 = vadd.xlane.f32.xlu0 %v3873
        %v3875 = vpop.xlane.xlu0 %3874
        %v3876 = vrcp.pop %v3869
        %v3877 = vrcp.pop %v3872
        %v3878 = vrcp.pop %v3875
        %v3879 = vmul.f32 %v3862, %v3876
        %v3880 = vmul.f32 %v3864, %v3877
        %v3881 = vmul.f32 %v3866, %v3878
        %3882 = vrot.lane.b32.xlu0 %v3735, 64
        %v3883 = vpop.permute.xlu0 %3882
        %3884 = vrot.lane.b32.xlu0 %v3738, 64
        %v3885 = vpop.permute.xlu0 %3884
        %3886 = vrot.lane.b32.xlu0 %v3743, 64
        %v3887 = vpop.permute.xlu0 %3886
        %v3891 = vsel %vm2375, %v3879, 0
        %v3894 = vsel %vm2375, %v3880, 0
        %v3897 = vsel %vm2375, %v3881, 0
        %v3899 = vsel %vm2144, %v3887, 0
        %3901 = vmatprep.subr.mxu0 0.0
        %3902 = vmatpush1.msra.mxu0 %v3883
        %3903 = vmatprep.subr.mxu0 0.0
        %3904 = vmatpush1.msra.mxu0 %v3885
        %3905 = vmatprep.subr.mxu0 0.0
        %3906 = vmatpush1.msra.mxu0 %v3899
        %3907 = vmatprep.subr.mxu0 0.0
        %3908 = vmatpush1.msra.mxu0 0.0
        %3909 = vmatprep.subr.mxu0 0.0
        %3910 = vmatpush1.msra.mxu0 0.0
        %3911 = vmatprep.subr.mxu0 0.0
        %3912 = vmatpush1.msra.mxu0 0.0
        %3913 = vmatprep.subr.mxu0 0.0
        %3914 = vmatpush1.msra.mxu0 0.0
        %3915 = vmatprep.subr.mxu0 0.0
        %3916 = vmatpush1.msra.mxu0 0.0
        %3917 = vmatprep.subr.mxu0 0.0
        %3918 = vmatpush1.msra.mxu0 0.0
        %3919 = vmatprep.subr.mxu0 0.0
        %3920 = vmatpush1.msra.mxu0 0.0
        %3921 = vmatprep.subr.mxu0 0.0
        %3922 = vmatpush1.msra.mxu0 0.0
        %3923 = vmatprep.subr.mxu0 0.0
        %3924 = vmatpush1.msra.mxu0 0.0
        %3925 = vmatprep.subr.mxu0 0.0
        %3926 = vmatpush1.msra.mxu0 0.0
        %3927 = vmatprep.subr.mxu0 0.0
        %3928 = vmatpush1.msra.mxu0 0.0
        %3929 = vmatprep.subr.mxu0 0.0
        %3930 = vmatpush1.msra.mxu0 0.0
        %3931 = vmatprep.subr.mxu0 0.0
        %3932 = vmatpush1.msra.mxu0 0.0
        %3933 = vmatprep.subr.mxu0 0.0
        %3934 = vmatpush1.msra.mxu0 0.0
        %3935 = vmatprep.subr.mxu0 0.0
        %3936 = vmatpush1.msra.mxu0 0.0
        %3937 = vmatprep.subr.mxu0 0.0
        %3938 = vmatpush1.msra.mxu0 0.0
        %3939 = vmatprep.subr.mxu0 0.0
        %3940 = vmatpush1.msra.mxu0 0.0
        %3941 = vmatprep.subr.mxu0 0.0
        %3942 = vmatpush1.msra.mxu0 0.0
        %3943 = vmatprep.subr.mxu0 0.0
        %3944 = vmatpush1.msra.mxu0 0.0
        %3945 = vmatprep.subr.mxu0 0.0
        %3946 = vmatpush1.msra.mxu0 0.0
        %3947 = vmatprep.subr.mxu0 0.0
        %3948 = vmatpush1.msra.mxu0 0.0
        %3949 = vmatprep.subr.mxu0 0.0
        %3950 = vmatpush1.msra.mxu0 0.0
        %3951 = vmatprep.subr.mxu0 0.0
        %3952 = vmatpush1.msra.mxu0 0.0
        %3953 = vmatprep.subr.mxu0 0.0
        %3954 = vmatpush1.msra.mxu0 0.0
        %3955 = vmatprep.subr.mxu0 0.0
        %3956 = vmatpush1.msra.mxu0 0.0
        %3957 = vmatprep.subr.mxu0 0.0
        %3958 = vmatpush1.msra.mxu0 0.0
        %3959 = vmatprep.subr.mxu0 0.0
        %3960 = vmatpush1.msra.mxu0 0.0
        %3961 = vmatprep.subr.mxu0 0.0
        %3962 = vmatpush1.msra.mxu0 0.0
        %3963 = vmatprep.subr.mxu0 0.0
        %3964 = vmatpush1.msra.mxu0 0.0
        %3965 = vmatprep.mubr.f32.mxu0 0.0
        %3966 = vmatmul.mubr.f32.gmra.mrb[0].mxu0 %v3891
        %v3967 = vpop.f32.mrb[0].mxu0
        %v3968 = vadd.f32 0.0, %v3967
        %v3969 = vpop.f32.mrb[0].mxu0
        %3970 = vmatprep.mubr.f32.mxu0 0.0
        %3971 = vmatmul.mubr.f32.gmra.mrb[0].mxu0 %v3894
        %v3972 = vpop.f32.mrb[0].mxu0
        %v3973 = vadd.f32 0.0, %v3972
        %v3974 = vpop.f32.mrb[0].mxu0
        %3975 = vmatprep.mubr.f32.mxu0 0.0
        %3976 = vmatmul.mubr.f32.gmra.mrb[0].mxu0 %v3897
        %v3977 = vpop.f32.mrb[0].mxu0
        %v3978 = vadd.f32 0.0, %v3977
        %v3979 = vpop.f32.mrb[0].mxu0
        %3980 = vdwg.mxu0
        %3981 = vrot.lane.b32.xlu0 %v3735, 120
        %v3982 = vpop.permute.xlu0 %3981
        %3983 = vrot.lane.b32.xlu0 %v3738, 120
        %v3984 = vpop.permute.xlu0 %3983
        %3985 = vrot.lane.b32.xlu0 %v3743, 120
        %v3986 = vpop.permute.xlu0 %3985
        %3987 = vrot.lane.b32.xlu0 %v3735, 88
        %v3988 = vpop.permute.xlu0 %3987
        %3989 = vrot.lane.b32.xlu0 %v3738, 88
        %v3990 = vpop.permute.xlu0 %3989
        %3991 = vrot.lane.b32.xlu0 %v3743, 88
        %v3992 = vpop.permute.xlu0 %3991
        %v3993 = vsel %vm2282, %v3982, 0
        %v3995 = vsel %vm2282, %v3984, 0
        %v3997 = vsel %vm2282, %v3986, 0
        %v3999 = vsel %vm2282, %v3988, 0
        %v4001 = vsel %vm2282, %v3990, 0
        %v4003 = vsel %vm2282, %v3992, 0
        %4005 = vmatprep.subr.mxu0 0.0
        %4006 = vmatpush1.xpose.msra.mxu0 %v3999
        %4007 = vmatprep.subr.mxu0 0.0
        %4008 = vmatpush1.xpose.msra.mxu0 %v4001
        %4009 = vmatprep.subr.mxu0 0.0
        %4010 = vmatpush1.xpose.msra.mxu0 %v4003
        %4011 = vmatprep.subr.mxu0 0.0
        %4012 = vmatpush1.xpose.msra.mxu0 0.0
        %4013 = vmatprep.subr.mxu0 0.0
        %4014 = vmatpush1.xpose.msra.mxu0 0.0
        %4015 = vmatprep.subr.mxu0 0.0
        %4016 = vmatpush1.xpose.msra.mxu0 0.0
        %4017 = vmatprep.subr.mxu0 0.0
        %4018 = vmatpush1.xpose.msra.mxu0 0.0
        %4019 = vmatprep.subr.mxu0 0.0
        %4020 = vmatpush1.xpose.msra.mxu0 0.0
        %4021 = vmatprep.subr.mxu0 0.0
        %4022 = vmatpush1.xpose.msra.mxu0 0.0
        %4023 = vmatprep.subr.mxu0 0.0
        %4024 = vmatpush1.xpose.msra.mxu0 0.0
        %4025 = vmatprep.subr.mxu0 0.0
        %4026 = vmatpush1.xpose.msra.mxu0 0.0
        %4027 = vmatprep.subr.mxu0 0.0
        %4028 = vmatpush1.xpose.msra.mxu0 0.0
        %4029 = vmatprep.subr.mxu0 0.0
        %4030 = vmatpush1.xpose.msra.mxu0 0.0
        %4031 = vmatprep.subr.mxu0 0.0
        %4032 = vmatpush1.xpose.msra.mxu0 0.0
        %4033 = vmatprep.subr.mxu0 0.0
        %4034 = vmatpush1.xpose.msra.mxu0 0.0
        %4035 = vmatprep.subr.mxu0 0.0
        %4036 = vmatpush1.xpose.msra.mxu0 0.0
        %4037 = vmatprep.subr.mxu0 0.0
        %4038 = vmatpush1.xpose.msra.mxu0 0.0
        %4039 = vmatprep.subr.mxu0 0.0
        %4040 = vmatpush1.xpose.msra.mxu0 0.0
        %4041 = vmatprep.subr.mxu0 0.0
        %4042 = vmatpush1.xpose.msra.mxu0 0.0
        %4043 = vmatprep.subr.mxu0 0.0
        %4044 = vmatpush1.xpose.msra.mxu0 0.0
        %4045 = vmatprep.subr.mxu0 0.0
        %4046 = vmatpush1.xpose.msra.mxu0 0.0
        %4047 = vmatprep.subr.mxu0 0.0
        %4048 = vmatpush1.xpose.msra.mxu0 0.0
        %4049 = vmatprep.subr.mxu0 0.0
        %4050 = vmatpush1.xpose.msra.mxu0 0.0
        %4051 = vmatprep.subr.mxu0 0.0
        %4052 = vmatpush1.xpose.msra.mxu0 0.0
        %4053 = vmatprep.subr.mxu0 0.0
        %4054 = vmatpush1.xpose.msra.mxu0 0.0
        %4055 = vmatprep.subr.mxu0 0.0
        %4056 = vmatpush1.xpose.msra.mxu0 0.0
        %4057 = vmatprep.subr.mxu0 0.0
        %4058 = vmatpush1.xpose.msra.mxu0 0.0
        %4059 = vmatprep.subr.mxu0 0.0
        %4060 = vmatpush1.xpose.msra.mxu0 0.0
        %4061 = vmatprep.subr.mxu0 0.0
        %4062 = vmatpush1.xpose.msra.mxu0 0.0
        %4063 = vmatprep.subr.mxu0 0.0
        %4064 = vmatpush1.xpose.msra.mxu0 0.0
        %4065 = vmatprep.subr.mxu0 0.0
        %4066 = vmatpush1.xpose.msra.mxu0 0.0
        %4067 = vmatprep.subr.mxu0 0.0
        %4068 = vmatpush1.xpose.msra.mxu0 0.0
        %4069 = vmatprep.mubr.f32.mxu0 0.0
        %4070 = vmatmul.mubr.f32.gmra.mrb[0].mxu0 %v3993
        %v4071 = vpop.f32.mrb[0].mxu0
        %v4072 = vadd.f32 0.0, %v4071
        %v4073 = vpop.f32.mrb[0].mxu0
        %4074 = vmatprep.mubr.f32.mxu0 0.0
        %4075 = vmatmul.mubr.f32.gmra.mrb[0].mxu0 %v3995
        %v4076 = vpop.f32.mrb[0].mxu0
        %v4077 = vadd.f32 0.0, %v4076
        %v4078 = vpop.f32.mrb[0].mxu0
        %4079 = vmatprep.mubr.f32.mxu0 0.0
        %4080 = vmatmul.mubr.f32.gmra.mrb[0].mxu0 %v3997
        %v4081 = vpop.f32.mrb[0].mxu0
        %v4082 = vadd.f32 0.0, %v4081
        %v4083 = vpop.f32.mrb[0].mxu0
        %4084 = vdwg.mxu0
        %v4085 = vsel %vm2375, %v4072, -inf
        %4086 = vmax.xlane.f32.xlu0 %v4085
        %v4087 = vpop.xlane.xlu0 %4086
        %v4088 = vsel %vm2375, %v4077, -inf
        %4089 = vmax.xlane.f32.xlu0 %v4088
        %v4090 = vpop.xlane.xlu0 %4089
        %v4091 = vsel %vm2382, %v4082, -inf
        %4092 = vmax.xlane.f32.xlu0 %v4091
        %v4093 = vpop.xlane.xlu0 %4092
        %v4094 = vsub.f32 %v4072, %v4087
        %v4095 = vsub.f32 %v4077, %v4090
        %v4096 = vsub.f32 %v4082, %v4093
        %v4097 = vmul.f32 %v4094, 1.442695
        %v4098 = vpow.pop %v4097
        %v4099 = vmul.f32 %v4095, 1.442695
        %v4100 = vpow.pop %v4099
        %v4101 = vmul.f32 %v4096, 1.442695
        %v4102 = vpow.pop %v4101
        %v4103 = vsel %vm2375, %v4098, 0.0
        %4104 = vadd.xlane.f32.xlu0 %v4103
        %v4105 = vpop.xlane.xlu0 %4104
        %v4106 = vsel %vm2375, %v4100, 0.0
        %4107 = vadd.xlane.f32.xlu0 %v4106
        %v4108 = vpop.xlane.xlu0 %4107
        %v4109 = vsel %vm2382, %v4102, 0.0
        %4110 = vadd.xlane.f32.xlu0 %v4109
        %v4111 = vpop.xlane.xlu0 %4110
        %v4112 = vrcp.pop %v4105
        %v4113 = vrcp.pop %v4108
        %v4114 = vrcp.pop %v4111
        %v4115 = vmul.f32 %v4098, %v4112
        %v4116 = vmul.f32 %v4100, %v4113
        %v4117 = vmul.f32 %v4102, %v4114
        %4118 = vrot.lane.b32.xlu0 %v3735, 56
        %v4119 = vpop.permute.xlu0 %4118
        %4120 = vrot.lane.b32.xlu0 %v3738, 56
        %v4121 = vpop.permute.xlu0 %4120
        %4122 = vrot.lane.b32.xlu0 %v3743, 56
        %v4123 = vpop.permute.xlu0 %4122
        %v4127 = vsel %vm2375, %v4115, 0
        %v4130 = vsel %vm2375, %v4116, 0
        %v4133 = vsel %vm2375, %v4117, 0
        %v4135 = vsel %vm2144, %v4123, 0
        %4137 = vmatprep.subr.mxu0 0.0
        %4138 = vmatpush1.msra.mxu0 %v4119
        %4139 = vmatprep.subr.mxu0 0.0
        %4140 = vmatpush1.msra.mxu0 %v4121
        %4141 = vmatprep.subr.mxu0 0.0
        %4142 = vmatpush1.msra.mxu0 %v4135
        %4143 = vmatprep.subr.mxu0 0.0
        %4144 = vmatpush1.msra.mxu0 0.0
        %4145 = vmatprep.subr.mxu0 0.0
        %4146 = vmatpush1.msra.mxu0 0.0
        %4147 = vmatprep.subr.mxu0 0.0
        %4148 = vmatpush1.msra.mxu0 0.0
        %4149 = vmatprep.subr.mxu0 0.0
        %4150 = vmatpush1.msra.mxu0 0.0
        %4151 = vmatprep.subr.mxu0 0.0
        %4152 = vmatpush1.msra.mxu0 0.0
        %4153 = vmatprep.subr.mxu0 0.0
        %4154 = vmatpush1.msra.mxu0 0.0
        %4155 = vmatprep.subr.mxu0 0.0
        %4156 = vmatpush1.msra.mxu0 0.0
        %4157 = vmatprep.subr.mxu0 0.0
        %4158 = vmatpush1.msra.mxu0 0.0
        %4159 = vmatprep.subr.mxu0 0.0
        %4160 = vmatpush1.msra.mxu0 0.0
        %4161 = vmatprep.subr.mxu0 0.0
        %4162 = vmatpush1.msra.mxu0 0.0
        %4163 = vmatprep.subr.mxu0 0.0
        %4164 = vmatpush1.msra.mxu0 0.0
        %4165 = vmatprep.subr.mxu0 0.0
        %4166 = vmatpush1.msra.mxu0 0.0
        %4167 = vmatprep.subr.mxu0 0.0
        %4168 = vmatpush1.msra.mxu0 0.0
        %4169 = vmatprep.subr.mxu0 0.0
        %4170 = vmatpush1.msra.mxu0 0.0
        %4171 = vmatprep.subr.mxu0 0.0
        %4172 = vmatpush1.msra.mxu0 0.0
        %4173 = vmatprep.subr.mxu0 0.0
        %4174 = vmatpush1.msra.mxu0 0.0
        %4175 = vmatprep.subr.mxu0 0.0
        %4176 = vmatpush1.msra.mxu0 0.0
        %4177 = vmatprep.subr.mxu0 0.0
        %4178 = vmatpush1.msra.mxu0 0.0
        %4179 = vmatprep.subr.mxu0 0.0
        %4180 = vmatpush1.msra.mxu0 0.0
        %4181 = vmatprep.subr.mxu0 0.0
        %4182 = vmatpush1.msra.mxu0 0.0
        %4183 = vmatprep.subr.mxu0 0.0
        %4184 = vmatpush1.msra.mxu0 0.0
        %4185 = vmatprep.subr.mxu0 0.0
        %4186 = vmatpush1.msra.mxu0 0.0
        %4187 = vmatprep.subr.mxu0 0.0
        %4188 = vmatpush1.msra.mxu0 0.0
        %4189 = vmatprep.subr.mxu0 0.0
        %4190 = vmatpush1.msra.mxu0 0.0
        %4191 = vmatprep.subr.mxu0 0.0
        %4192 = vmatpush1.msra.mxu0 0.0
        %4193 = vmatprep.subr.mxu0 0.0
        %4194 = vmatpush1.msra.mxu0 0.0
        %4195 = vmatprep.subr.mxu0 0.0
        %4196 = vmatpush1.msra.mxu0 0.0
        %4197 = vmatprep.subr.mxu0 0.0
        %4198 = vmatpush1.msra.mxu0 0.0
        %4199 = vmatprep.subr.mxu0 0.0
        %4200 = vmatpush1.msra.mxu0 0.0
        %4201 = vmatprep.mubr.f32.mxu0 0.0
        %4202 = vmatmul.mubr.f32.gmra.mrb[0].mxu0 %v4127
        %v4203 = vpop.f32.mrb[0].mxu0
        %v4204 = vadd.f32 0.0, %v4203
        %v4205 = vpop.f32.mrb[0].mxu0
        %4206 = vmatprep.mubr.f32.mxu0 0.0
        %4207 = vmatmul.mubr.f32.gmra.mrb[0].mxu0 %v4130
        %v4208 = vpop.f32.mrb[0].mxu0
        %v4209 = vadd.f32 0.0, %v4208
        %v4210 = vpop.f32.mrb[0].mxu0
        %4211 = vmatprep.mubr.f32.mxu0 0.0
        %4212 = vmatmul.mubr.f32.gmra.mrb[0].mxu0 %v4133
        %v4213 = vpop.f32.mrb[0].mxu0
        %v4214 = vadd.f32 0.0, %v4213
        %v4215 = vpop.f32.mrb[0].mxu0
        %4216 = vdwg.mxu0
        %4217 = vrot.lane.b32.xlu0 %v3735, 112
        %v4218 = vpop.permute.xlu0 %4217
        %4219 = vrot.lane.b32.xlu0 %v3738, 112
        %v4220 = vpop.permute.xlu0 %4219
        %4221 = vrot.lane.b32.xlu0 %v3743, 112
        %v4222 = vpop.permute.xlu0 %4221
        %4223 = vrot.lane.b32.xlu0 %v3735, 80
        %v4224 = vpop.permute.xlu0 %4223
        %4225 = vrot.lane.b32.xlu0 %v3738, 80
        %v4226 = vpop.permute.xlu0 %4225
        %4227 = vrot.lane.b32.xlu0 %v3743, 80
        %v4228 = vpop.permute.xlu0 %4227
        %v4229 = vsel %vm2282, %v4218, 0
        %v4231 = vsel %vm2282, %v4220, 0
        %v4233 = vsel %vm2282, %v4222, 0
        %v4235 = vsel %vm2282, %v4224, 0
        %v4237 = vsel %vm2282, %v4226, 0
        %v4239 = vsel %vm2282, %v4228, 0
        %4241 = vmatprep.subr.mxu0 0.0
        %4242 = vmatpush1.xpose.msra.mxu0 %v4235
        %4243 = vmatprep.subr.mxu0 0.0
        %4244 = vmatpush1.xpose.msra.mxu0 %v4237
        %4245 = vmatprep.subr.mxu0 0.0
        %4246 = vmatpush1.xpose.msra.mxu0 %v4239
        %4247 = vmatprep.subr.mxu0 0.0
        %4248 = vmatpush1.xpose.msra.mxu0 0.0
        %4249 = vmatprep.subr.mxu0 0.0
        %4250 = vmatpush1.xpose.msra.mxu0 0.0
        %4251 = vmatprep.subr.mxu0 0.0
        %4252 = vmatpush1.xpose.msra.mxu0 0.0
        %4253 = vmatprep.subr.mxu0 0.0
        %4254 = vmatpush1.xpose.msra.mxu0 0.0
        %4255 = vmatprep.subr.mxu0 0.0
        %4256 = vmatpush1.xpose.msra.mxu0 0.0
        %4257 = vmatprep.subr.mxu0 0.0
        %4258 = vmatpush1.xpose.msra.mxu0 0.0
        %4259 = vmatprep.subr.mxu0 0.0
        %4260 = vmatpush1.xpose.msra.mxu0 0.0
        %4261 = vmatprep.subr.mxu0 0.0
        %4262 = vmatpush1.xpose.msra.mxu0 0.0
        %4263 = vmatprep.subr.mxu0 0.0
        %4264 = vmatpush1.xpose.msra.mxu0 0.0
        %4265 = vmatprep.subr.mxu0 0.0
        %4266 = vmatpush1.xpose.msra.mxu0 0.0
        %4267 = vmatprep.subr.mxu0 0.0
        %4268 = vmatpush1.xpose.msra.mxu0 0.0
        %4269 = vmatprep.subr.mxu0 0.0
        %4270 = vmatpush1.xpose.msra.mxu0 0.0
        %4271 = vmatprep.subr.mxu0 0.0
        %4272 = vmatpush1.xpose.msra.mxu0 0.0
        %4273 = vmatprep.subr.mxu0 0.0
        %4274 = vmatpush1.xpose.msra.mxu0 0.0
        %4275 = vmatprep.subr.mxu0 0.0
        %4276 = vmatpush1.xpose.msra.mxu0 0.0
        %4277 = vmatprep.subr.mxu0 0.0
        %4278 = vmatpush1.xpose.msra.mxu0 0.0
        %4279 = vmatprep.subr.mxu0 0.0
        %4280 = vmatpush1.xpose.msra.mxu0 0.0
        %4281 = vmatprep.subr.mxu0 0.0
        %4282 = vmatpush1.xpose.msra.mxu0 0.0
        %4283 = vmatprep.subr.mxu0 0.0
        %4284 = vmatpush1.xpose.msra.mxu0 0.0
        %4285 = vmatprep.subr.mxu0 0.0
        %4286 = vmatpush1.xpose.msra.mxu0 0.0
        %4287 = vmatprep.subr.mxu0 0.0
        %4288 = vmatpush1.xpose.msra.mxu0 0.0
        %4289 = vmatprep.subr.mxu0 0.0
        %4290 = vmatpush1.xpose.msra.mxu0 0.0
        %4291 = vmatprep.subr.mxu0 0.0
        %4292 = vmatpush1.xpose.msra.mxu0 0.0
        %4293 = vmatprep.subr.mxu0 0.0
        %4294 = vmatpush1.xpose.msra.mxu0 0.0
        %4295 = vmatprep.subr.mxu0 0.0
        %4296 = vmatpush1.xpose.msra.mxu0 0.0
        %4297 = vmatprep.subr.mxu0 0.0
        %4298 = vmatpush1.xpose.msra.mxu0 0.0
        %4299 = vmatprep.subr.mxu0 0.0
        %4300 = vmatpush1.xpose.msra.mxu0 0.0
        %4301 = vmatprep.subr.mxu0 0.0
        %4302 = vmatpush1.xpose.msra.mxu0 0.0
        %4303 = vmatprep.subr.mxu0 0.0
        %4304 = vmatpush1.xpose.msra.mxu0 0.0
        %4305 = vmatprep.mubr.f32.mxu0 0.0
        %4306 = vmatmul.mubr.f32.gmra.mrb[0].mxu0 %v4229
        %v4307 = vpop.f32.mrb[0].mxu0
        %v4308 = vadd.f32 0.0, %v4307
        %v4309 = vpop.f32.mrb[0].mxu0
        %4310 = vmatprep.mubr.f32.mxu0 0.0
        %4311 = vmatmul.mubr.f32.gmra.mrb[0].mxu0 %v4231
        %v4312 = vpop.f32.mrb[0].mxu0
        %v4313 = vadd.f32 0.0, %v4312
        %v4314 = vpop.f32.mrb[0].mxu0
        %4315 = vmatprep.mubr.f32.mxu0 0.0
        %4316 = vmatmul.mubr.f32.gmra.mrb[0].mxu0 %v4233
        %v4317 = vpop.f32.mrb[0].mxu0
        %v4318 = vadd.f32 0.0, %v4317
        %v4319 = vpop.f32.mrb[0].mxu0
        %4320 = vdwg.mxu0
        %v4321 = vsel %vm2375, %v4308, -inf
        %4322 = vmax.xlane.f32.xlu0 %v4321
        %v4323 = vpop.xlane.xlu0 %4322
        %v4324 = vsel %vm2375, %v4313, -inf
        %4325 = vmax.xlane.f32.xlu0 %v4324
        %v4326 = vpop.xlane.xlu0 %4325
        %v4327 = vsel %vm2382, %v4318, -inf
        %4328 = vmax.xlane.f32.xlu0 %v4327
        %v4329 = vpop.xlane.xlu0 %4328
        %v4330 = vsub.f32 %v4308, %v4323
        %v4331 = vsub.f32 %v4313, %v4326
        %v4332 = vsub.f32 %v4318, %v4329
        %v4333 = vmul.f32 %v4330, 1.442695
        %v4334 = vpow.pop %v4333
        %v4335 = vmul.f32 %v4331, 1.442695
        %v4336 = vpow.pop %v4335
        %v4337 = vmul.f32 %v4332, 1.442695
        %v4338 = vpow.pop %v4337
        %v4339 = vsel %vm2375, %v4334, 0.0
        %4340 = vadd.xlane.f32.xlu0 %v4339
        %v4341 = vpop.xlane.xlu0 %4340
        %v4342 = vsel %vm2375, %v4336, 0.0
        %4343 = vadd.xlane.f32.xlu0 %v4342
        %v4344 = vpop.xlane.xlu0 %4343
        %v4345 = vsel %vm2382, %v4338, 0.0
        %4346 = vadd.xlane.f32.xlu0 %v4345
        %v4347 = vpop.xlane.xlu0 %4346
        %v4348 = vrcp.pop %v4341
        %v4349 = vrcp.pop %v4344
        %v4350 = vrcp.pop %v4347
        %v4351 = vmul.f32 %v4334, %v4348
        %v4352 = vmul.f32 %v4336, %v4349
        %v4353 = vmul.f32 %v4338, %v4350
        %4354 = vrot.lane.b32.xlu0 %v3735, 48
        %v4355 = vpop.permute.xlu0 %4354
        %4356 = vrot.lane.b32.xlu0 %v3738, 48
        %v4357 = vpop.permute.xlu0 %4356
        %4358 = vrot.lane.b32.xlu0 %v3743, 48
        %v4359 = vpop.permute.xlu0 %4358
        %v4363 = vsel %vm2375, %v4351, 0
        %v4366 = vsel %vm2375, %v4352, 0
        %v4369 = vsel %vm2375, %v4353, 0
        %v4371 = vsel %vm2144, %v4359, 0
        %4373 = vmatprep.subr.mxu0 0.0
        %4374 = vmatpush1.msra.mxu0 %v4355
        %4375 = vmatprep.subr.mxu0 0.0
        %4376 = vmatpush1.msra.mxu0 %v4357
        %4377 = vmatprep.subr.mxu0 0.0
        %4378 = vmatpush1.msra.mxu0 %v4371
        %4379 = vmatprep.subr.mxu0 0.0
        %4380 = vmatpush1.msra.mxu0 0.0
        %4381 = vmatprep.subr.mxu0 0.0
        %4382 = vmatpush1.msra.mxu0 0.0
        %4383 = vmatprep.subr.mxu0 0.0
        %4384 = vmatpush1.msra.mxu0 0.0
        %4385 = vmatprep.subr.mxu0 0.0
        %4386 = vmatpush1.msra.mxu0 0.0
        %4387 = vmatprep.subr.mxu0 0.0
        %4388 = vmatpush1.msra.mxu0 0.0
        %4389 = vmatprep.subr.mxu0 0.0
        %4390 = vmatpush1.msra.mxu0 0.0
        %4391 = vmatprep.subr.mxu0 0.0
        %4392 = vmatpush1.msra.mxu0 0.0
        %4393 = vmatprep.subr.mxu0 0.0
        %4394 = vmatpush1.msra.mxu0 0.0
        %4395 = vmatprep.subr.mxu0 0.0
        %4396 = vmatpush1.msra.mxu0 0.0
        %4397 = vmatprep.subr.mxu0 0.0
        %4398 = vmatpush1.msra.mxu0 0.0
        %4399 = vmatprep.subr.mxu0 0.0
        %4400 = vmatpush1.msra.mxu0 0.0
        %4401 = vmatprep.subr.mxu0 0.0
        %4402 = vmatpush1.msra.mxu0 0.0
        %4403 = vmatprep.subr.mxu0 0.0
        %4404 = vmatpush1.msra.mxu0 0.0
        %4405 = vmatprep.subr.mxu0 0.0
        %4406 = vmatpush1.msra.mxu0 0.0
        %4407 = vmatprep.subr.mxu0 0.0
        %4408 = vmatpush1.msra.mxu0 0.0
        %4409 = vmatprep.subr.mxu0 0.0
        %4410 = vmatpush1.msra.mxu0 0.0
        %4411 = vmatprep.subr.mxu0 0.0
        %4412 = vmatpush1.msra.mxu0 0.0
        %4413 = vmatprep.subr.mxu0 0.0
        %4414 = vmatpush1.msra.mxu0 0.0
        %4415 = vmatprep.subr.mxu0 0.0
        %4416 = vmatpush1.msra.mxu0 0.0
        %4417 = vmatprep.subr.mxu0 0.0
        %4418 = vmatpush1.msra.mxu0 0.0
        %4419 = vmatprep.subr.mxu0 0.0
        %4420 = vmatpush1.msra.mxu0 0.0
        %4421 = vmatprep.subr.mxu0 0.0
        %4422 = vmatpush1.msra.mxu0 0.0
        %4423 = vmatprep.subr.mxu0 0.0
        %4424 = vmatpush1.msra.mxu0 0.0
        %4425 = vmatprep.subr.mxu0 0.0
        %4426 = vmatpush1.msra.mxu0 0.0
        %4427 = vmatprep.subr.mxu0 0.0
        %4428 = vmatpush1.msra.mxu0 0.0
        %4429 = vmatprep.subr.mxu0 0.0
        %4430 = vmatpush1.msra.mxu0 0.0
        %4431 = vmatprep.subr.mxu0 0.0
        %4432 = vmatpush1.msra.mxu0 0.0
        %4433 = vmatprep.subr.mxu0 0.0
        %4434 = vmatpush1.msra.mxu0 0.0
        %4435 = vmatprep.subr.mxu0 0.0
        %4436 = vmatpush1.msra.mxu0 0.0
        %4437 = vmatprep.mubr.f32.mxu0 0.0
        %4438 = vmatmul.mubr.f32.gmra.mrb[0].mxu0 %v4363
        %v4439 = vpop.f32.mrb[0].mxu0
        %v4440 = vadd.f32 0.0, %v4439
        %v4441 = vpop.f32.mrb[0].mxu0
        %4442 = vmatprep.mubr.f32.mxu0 0.0
        %4443 = vmatmul.mubr.f32.gmra.mrb[0].mxu0 %v4366
        %v4444 = vpop.f32.mrb[0].mxu0
        %v4445 = vadd.f32 0.0, %v4444
        %v4446 = vpop.f32.mrb[0].mxu0
        %4447 = vmatprep.mubr.f32.mxu0 0.0
        %4448 = vmatmul.mubr.f32.gmra.mrb[0].mxu0 %v4369
        %v4449 = vpop.f32.mrb[0].mxu0
        %v4450 = vadd.f32 0.0, %v4449
        %v4451 = vpop.f32.mrb[0].mxu0
        %4452 = vdwg.mxu0
        %4453 = vrot.lane.b32.xlu0 %v3735, 104
        %v4454 = vpop.permute.xlu0 %4453
        %4455 = vrot.lane.b32.xlu0 %v3738, 104
        %v4456 = vpop.permute.xlu0 %4455
        %4457 = vrot.lane.b32.xlu0 %v3743, 104
        %v4458 = vpop.permute.xlu0 %4457
        %4459 = vrot.lane.b32.xlu0 %v3735, 72
        %v4460 = vpop.permute.xlu0 %4459
        %4461 = vrot.lane.b32.xlu0 %v3738, 72
        %v4462 = vpop.permute.xlu0 %4461
        %4463 = vrot.lane.b32.xlu0 %v3743, 72
        %v4464 = vpop.permute.xlu0 %4463
        %v4465 = vsel %vm2282, %v4454, 0
        %v4467 = vsel %vm2282, %v4456, 0
        %v4469 = vsel %vm2282, %v4458, 0
        %v4471 = vsel %vm2282, %v4460, 0
        %v4473 = vsel %vm2282, %v4462, 0
        %v4475 = vsel %vm2282, %v4464, 0
        %4477 = vmatprep.subr.mxu0 0.0
        %4478 = vmatpush1.xpose.msra.mxu0 %v4471
        %4479 = vmatprep.subr.mxu0 0.0
        %4480 = vmatpush1.xpose.msra.mxu0 %v4473
        %4481 = vmatprep.subr.mxu0 0.0
        %4482 = vmatpush1.xpose.msra.mxu0 %v4475
        %4483 = vmatprep.subr.mxu0 0.0
        %4484 = vmatpush1.xpose.msra.mxu0 0.0
        %4485 = vmatprep.subr.mxu0 0.0
        %4486 = vmatpush1.xpose.msra.mxu0 0.0
        %4487 = vmatprep.subr.mxu0 0.0
        %4488 = vmatpush1.xpose.msra.mxu0 0.0
        %4489 = vmatprep.subr.mxu0 0.0
        %4490 = vmatpush1.xpose.msra.mxu0 0.0
        %4491 = vmatprep.subr.mxu0 0.0
        %4492 = vmatpush1.xpose.msra.mxu0 0.0
        %4493 = vmatprep.subr.mxu0 0.0
        %4494 = vmatpush1.xpose.msra.mxu0 0.0
        %4495 = vmatprep.subr.mxu0 0.0
        %4496 = vmatpush1.xpose.msra.mxu0 0.0
        %4497 = vmatprep.subr.mxu0 0.0
        %4498 = vmatpush1.xpose.msra.mxu0 0.0
        %4499 = vmatprep.subr.mxu0 0.0
        %4500 = vmatpush1.xpose.msra.mxu0 0.0
        %4501 = vmatprep.subr.mxu0 0.0
        %4502 = vmatpush1.xpose.msra.mxu0 0.0
        %4503 = vmatprep.subr.mxu0 0.0
        %4504 = vmatpush1.xpose.msra.mxu0 0.0
        %4505 = vmatprep.subr.mxu0 0.0
        %4506 = vmatpush1.xpose.msra.mxu0 0.0
        %4507 = vmatprep.subr.mxu0 0.0
        %4508 = vmatpush1.xpose.msra.mxu0 0.0
        %4509 = vmatprep.subr.mxu0 0.0
        %4510 = vmatpush1.xpose.msra.mxu0 0.0
        %4511 = vmatprep.subr.mxu0 0.0
        %4512 = vmatpush1.xpose.msra.mxu0 0.0
        %4513 = vmatprep.subr.mxu0 0.0
        %4514 = vmatpush1.xpose.msra.mxu0 0.0
        %4515 = vmatprep.subr.mxu0 0.0
        %4516 = vmatpush1.xpose.msra.mxu0 0.0
        %4517 = vmatprep.subr.mxu0 0.0
        %4518 = vmatpush1.xpose.msra.mxu0 0.0
        %4519 = vmatprep.subr.mxu0 0.0
        %4520 = vmatpush1.xpose.msra.mxu0 0.0
        %4521 = vmatprep.subr.mxu0 0.0
        %4522 = vmatpush1.xpose.msra.mxu0 0.0
        %4523 = vmatprep.subr.mxu0 0.0
        %4524 = vmatpush1.xpose.msra.mxu0 0.0
        %4525 = vmatprep.subr.mxu0 0.0
        %4526 = vmatpush1.xpose.msra.mxu0 0.0
        %4527 = vmatprep.subr.mxu0 0.0
        %4528 = vmatpush1.xpose.msra.mxu0 0.0
        %4529 = vmatprep.subr.mxu0 0.0
        %4530 = vmatpush1.xpose.msra.mxu0 0.0
        %4531 = vmatprep.subr.mxu0 0.0
        %4532 = vmatpush1.xpose.msra.mxu0 0.0
        %4533 = vmatprep.subr.mxu0 0.0
        %4534 = vmatpush1.xpose.msra.mxu0 0.0
        %4535 = vmatprep.subr.mxu0 0.0
        %4536 = vmatpush1.xpose.msra.mxu0 0.0
        %4537 = vmatprep.subr.mxu0 0.0
        %4538 = vmatpush1.xpose.msra.mxu0 0.0
        %4539 = vmatprep.subr.mxu0 0.0
        %4540 = vmatpush1.xpose.msra.mxu0 0.0
        %4541 = vmatprep.mubr.f32.mxu0 0.0
        %4542 = vmatmul.mubr.f32.gmra.mrb[0].mxu0 %v4465
        %v4543 = vpop.f32.mrb[0].mxu0
        %v4544 = vadd.f32 0.0, %v4543
        %v4545 = vpop.f32.mrb[0].mxu0
        %4546 = vmatprep.mubr.f32.mxu0 0.0
        %4547 = vmatmul.mubr.f32.gmra.mrb[0].mxu0 %v4467
        %v4548 = vpop.f32.mrb[0].mxu0
        %v4549 = vadd.f32 0.0, %v4548
        %v4550 = vpop.f32.mrb[0].mxu0
        %4551 = vmatprep.mubr.f32.mxu0 0.0
        %4552 = vmatmul.mubr.f32.gmra.mrb[0].mxu0 %v4469
        %v4553 = vpop.f32.mrb[0].mxu0
        %v4554 = vadd.f32 0.0, %v4553
        %v4555 = vpop.f32.mrb[0].mxu0
        %4556 = vdwg.mxu0
        %v4557 = vsel %vm2375, %v4544, -inf
        %4558 = vmax.xlane.f32.xlu0 %v4557
        %v4559 = vpop.xlane.xlu0 %4558
        %v4560 = vsel %vm2375, %v4549, -inf
        %4561 = vmax.xlane.f32.xlu0 %v4560
        %v4562 = vpop.xlane.xlu0 %4561
        %v4563 = vsel %vm2382, %v4554, -inf
        %4564 = vmax.xlane.f32.xlu0 %v4563
        %v4565 = vpop.xlane.xlu0 %4564
        %v4566 = vsub.f32 %v4544, %v4559
        %v4567 = vsub.f32 %v4549, %v4562
        %v4568 = vsub.f32 %v4554, %v4565
        %v4569 = vmul.f32 %v4566, 1.442695
        %v4570 = vpow.pop %v4569
        %v4571 = vmul.f32 %v4567, 1.442695
        %v4572 = vpow.pop %v4571
        %v4573 = vmul.f32 %v4568, 1.442695
        %v4574 = vpow.pop %v4573
        %v4575 = vsel %vm2375, %v4570, 0.0
        %4576 = vadd.xlane.f32.xlu0 %v4575
        %v4577 = vpop.xlane.xlu0 %4576
        %v4578 = vsel %vm2375, %v4572, 0.0
        %4579 = vadd.xlane.f32.xlu0 %v4578
        %v4580 = vpop.xlane.xlu0 %4579
        %v4581 = vsel %vm2382, %v4574, 0.0
        %4582 = vadd.xlane.f32.xlu0 %v4581
        %v4583 = vpop.xlane.xlu0 %4582
        %v4584 = vrcp.pop %v4577
        %v4585 = vrcp.pop %v4580
        %v4586 = vrcp.pop %v4583
        %v4587 = vmul.f32 %v4570, %v4584
        %v4588 = vmul.f32 %v4572, %v4585
        %v4589 = vmul.f32 %v4574, %v4586
        %4590 = vrot.lane.b32.xlu0 %v3735, 40
        %v4591 = vpop.permute.xlu0 %4590
        %4592 = vrot.lane.b32.xlu0 %v3738, 40
        %v4593 = vpop.permute.xlu0 %4592
        %4594 = vrot.lane.b32.xlu0 %v3743, 40
        %v4595 = vpop.permute.xlu0 %4594
        %v4599 = vsel %vm2375, %v4587, 0
        %v4602 = vsel %vm2375, %v4588, 0
        %v4605 = vsel %vm2375, %v4589, 0
        %v4607 = vsel %vm2144, %v4595, 0
        %4609 = vmatprep.subr.mxu0 0.0
        %4610 = vmatpush1.msra.mxu0 %v4591
        %4611 = vmatprep.subr.mxu0 0.0
        %4612 = vmatpush1.msra.mxu0 %v4593
        %4613 = vmatprep.subr.mxu0 0.0
        %4614 = vmatpush1.msra.mxu0 %v4607
        %4615 = vmatprep.subr.mxu0 0.0
        %4616 = vmatpush1.msra.mxu0 0.0
        %4617 = vmatprep.subr.mxu0 0.0
        %4618 = vmatpush1.msra.mxu0 0.0
        %4619 = vmatprep.subr.mxu0 0.0
        %4620 = vmatpush1.msra.mxu0 0.0
        %4621 = vmatprep.subr.mxu0 0.0
        %4622 = vmatpush1.msra.mxu0 0.0
        %4623 = vmatprep.subr.mxu0 0.0
        %4624 = vmatpush1.msra.mxu0 0.0
        %4625 = vmatprep.subr.mxu0 0.0
        %4626 = vmatpush1.msra.mxu0 0.0
        %4627 = vmatprep.subr.mxu0 0.0
        %4628 = vmatpush1.msra.mxu0 0.0
        %4629 = vmatprep.subr.mxu0 0.0
        %4630 = vmatpush1.msra.mxu0 0.0
        %4631 = vmatprep.subr.mxu0 0.0
        %4632 = vmatpush1.msra.mxu0 0.0
        %4633 = vmatprep.subr.mxu0 0.0
        %4634 = vmatpush1.msra.mxu0 0.0
        %4635 = vmatprep.subr.mxu0 0.0
        %4636 = vmatpush1.msra.mxu0 0.0
        %4637 = vmatprep.subr.mxu0 0.0
        %4638 = vmatpush1.msra.mxu0 0.0
        %4639 = vmatprep.subr.mxu0 0.0
        %4640 = vmatpush1.msra.mxu0 0.0
        %4641 = vmatprep.subr.mxu0 0.0
        %4642 = vmatpush1.msra.mxu0 0.0
        %4643 = vmatprep.subr.mxu0 0.0
        %4644 = vmatpush1.msra.mxu0 0.0
        %4645 = vmatprep.subr.mxu0 0.0
        %4646 = vmatpush1.msra.mxu0 0.0
        %4647 = vmatprep.subr.mxu0 0.0
        %4648 = vmatpush1.msra.mxu0 0.0
        %4649 = vmatprep.subr.mxu0 0.0
        %4650 = vmatpush1.msra.mxu0 0.0
        %4651 = vmatprep.subr.mxu0 0.0
        %4652 = vmatpush1.msra.mxu0 0.0
        %4653 = vmatprep.subr.mxu0 0.0
        %4654 = vmatpush1.msra.mxu0 0.0
        %4655 = vmatprep.subr.mxu0 0.0
        %4656 = vmatpush1.msra.mxu0 0.0
        %4657 = vmatprep.subr.mxu0 0.0
        %4658 = vmatpush1.msra.mxu0 0.0
        %4659 = vmatprep.subr.mxu0 0.0
        %4660 = vmatpush1.msra.mxu0 0.0
        %4661 = vmatprep.subr.mxu0 0.0
        %4662 = vmatpush1.msra.mxu0 0.0
        %4663 = vmatprep.subr.mxu0 0.0
        %4664 = vmatpush1.msra.mxu0 0.0
        %4665 = vmatprep.subr.mxu0 0.0
        %4666 = vmatpush1.msra.mxu0 0.0
        %4667 = vmatprep.subr.mxu0 0.0
        %4668 = vmatpush1.msra.mxu0 0.0
        %4669 = vmatprep.subr.mxu0 0.0
        %4670 = vmatpush1.msra.mxu0 0.0
        %4671 = vmatprep.subr.mxu0 0.0
        %4672 = vmatpush1.msra.mxu0 0.0
        %4673 = vmatprep.mubr.f32.mxu0 0.0
        %4674 = vmatmul.mubr.f32.gmra.mrb[0].mxu0 %v4599
        %v4675 = vpop.f32.mrb[0].mxu0
        %v4676 = vadd.f32 0.0, %v4675
        %v4677 = vpop.f32.mrb[0].mxu0
        %4678 = vmatprep.mubr.f32.mxu0 0.0
        %4679 = vmatmul.mubr.f32.gmra.mrb[0].mxu0 %v4602
        %v4680 = vpop.f32.mrb[0].mxu0
        %v4681 = vadd.f32 0.0, %v4680
        %v4682 = vpop.f32.mrb[0].mxu0
        %4683 = vmatprep.mubr.f32.mxu0 0.0
        %4684 = vmatmul.mubr.f32.gmra.mrb[0].mxu0 %v4605
        %v4685 = vpop.f32.mrb[0].mxu0
        %v4686 = vadd.f32 0.0, %v4685
        %v4687 = vpop.f32.mrb[0].mxu0
        %4688 = vdwg.mxu0
        %4692 = vrot.lane.b32.xlu0 %v4204, 8
        %v4693 = vpop.permute.xlu0 %4692
        %4694 = vrot.lane.b32.xlu0 %v4209, 8
        %v4695 = vpop.permute.xlu0 %4694
        %4696 = vrot.lane.b32.xlu0 %v4214, 8
        %v4697 = vpop.permute.xlu0 %4696
        %4704 = vrot.lane.b32.xlu0 %v4440, 16
        %v4705 = vpop.permute.xlu0 %4704
        %4706 = vrot.lane.b32.xlu0 %v4445, 16
        %v4707 = vpop.permute.xlu0 %4706
        %4708 = vrot.lane.b32.xlu0 %v4450, 16
        %v4709 = vpop.permute.xlu0 %4708
        %4716 = vrot.lane.b32.xlu0 %v4676, 24
        %v4717 = vpop.permute.xlu0 %4716
        %4718 = vrot.lane.b32.xlu0 %v4681, 24
        %v4719 = vpop.permute.xlu0 %4718
        %4720 = vrot.lane.b32.xlu0 %v4686, 24
        %v4721 = vpop.permute.xlu0 %4720
        %v4725 = vsel %vm2282, %v3968, %v4693
        %v4726 = vsel %vm2282, %v3973, %v4695
        %v4727 = vsel %vm2282, %v3978, %v4697
        %v4728 = vsel %vm3256, %v4725, %v4705
        %v4729 = vsel %vm3256, %v4726, %v4707
        %v4730 = vsel %vm3256, %v4727, %v4709
        %v4731 = vsel %vm3260, %v4728, %v4717
        %v4732 = vsel %vm3260, %v4729, %v4719
        %v4733 = vsel %vm3260, %v4730, %v4721
        %v4734 = vld [vmem:[#allocation24] sm:$0xff]
        %v4735 = vld [vmem:[#allocation24 + $0x8] sm:$0xff]
        %v4736 = vld [vmem:[#allocation24 + $0x10] sm:$0xff]
        %v4737 = vld [vmem:[#allocation24 + $0x18] sm:$0xff]
        %v4739 = vsel %vm2152, %v4731, 0
        %v4742 = vsel %vm2152, %v4732, 0
        %v4745 = vsel %vm2152, %v4733, 0
        %4747 = vmatprep.subr.mxu0 0.0
        %4748 = vmatpush1.msra.mxu0 %v4734
        %4749 = vmatprep.subr.mxu0 0.0
        %4750 = vmatpush1.msra.mxu0 %v4735
        %4751 = vmatprep.subr.mxu0 0.0
        %4752 = vmatpush1.msra.mxu0 %v4736
        %4753 = vmatprep.subr.mxu0 0.0
        %4754 = vmatpush1.msra.mxu0 %v4737
        %4755 = vmatprep.subr.mxu0 0.0
        %4756 = vmatpush1.msra.mxu0 0.0
        %4757 = vmatprep.subr.mxu0 0.0
        %4758 = vmatpush1.msra.mxu0 0.0
        %4759 = vmatprep.subr.mxu0 0.0
        %4760 = vmatpush1.msra.mxu0 0.0
        %4761 = vmatprep.subr.mxu0 0.0
        %4762 = vmatpush1.msra.mxu0 0.0
        %4763 = vmatprep.subr.mxu0 0.0
        %4764 = vmatpush1.msra.mxu0 0.0
        %4765 = vmatprep.subr.mxu0 0.0
        %4766 = vmatpush1.msra.mxu0 0.0
        %4767 = vmatprep.subr.mxu0 0.0
        %4768 = vmatpush1.msra.mxu0 0.0
        %4769 = vmatprep.subr.mxu0 0.0
        %4770 = vmatpush1.msra.mxu0 0.0
        %4771 = vmatprep.subr.mxu0 0.0
        %4772 = vmatpush1.msra.mxu0 0.0
        %4773 = vmatprep.subr.mxu0 0.0
        %4774 = vmatpush1.msra.mxu0 0.0
        %4775 = vmatprep.subr.mxu0 0.0
        %4776 = vmatpush1.msra.mxu0 0.0
        %4777 = vmatprep.subr.mxu0 0.0
        %4778 = vmatpush1.msra.mxu0 0.0
        %4779 = vmatprep.subr.mxu0 0.0
        %4780 = vmatpush1.msra.mxu0 0.0
        %4781 = vmatprep.subr.mxu0 0.0
        %4782 = vmatpush1.msra.mxu0 0.0
        %4783 = vmatprep.subr.mxu0 0.0
        %4784 = vmatpush1.msra.mxu0 0.0
        %4785 = vmatprep.subr.mxu0 0.0
        %4786 = vmatpush1.msra.mxu0 0.0
        %4787 = vmatprep.subr.mxu0 0.0
        %4788 = vmatpush1.msra.mxu0 0.0
        %4789 = vmatprep.subr.mxu0 0.0
        %4790 = vmatpush1.msra.mxu0 0.0
        %4791 = vmatprep.subr.mxu0 0.0
        %4792 = vmatpush1.msra.mxu0 0.0
        %4793 = vmatprep.subr.mxu0 0.0
        %4794 = vmatpush1.msra.mxu0 0.0
        %4795 = vmatprep.subr.mxu0 0.0
        %4796 = vmatpush1.msra.mxu0 0.0
        %4797 = vmatprep.subr.mxu0 0.0
        %4798 = vmatpush1.msra.mxu0 0.0
        %4799 = vmatprep.subr.mxu0 0.0
        %4800 = vmatpush1.msra.mxu0 0.0
        %4801 = vmatprep.subr.mxu0 0.0
        %4802 = vmatpush1.msra.mxu0 0.0
        %4803 = vmatprep.subr.mxu0 0.0
        %4804 = vmatpush1.msra.mxu0 0.0
        %4805 = vmatprep.subr.mxu0 0.0
        %4806 = vmatpush1.msra.mxu0 0.0
        %4807 = vmatprep.subr.mxu0 0.0
        %4808 = vmatpush1.msra.mxu0 0.0
        %4809 = vmatprep.subr.mxu0 0.0
        %4810 = vmatpush1.msra.mxu0 0.0
        %4811 = vmatprep.mubr.f32.mxu0 0.0
        %4812 = vmatmul.mubr.f32.gmra.mrb[0].mxu0 %v4739
        %v4813 = vpop.f32.mrb[0].mxu0
        %v4814 = vadd.f32 0.0, %v4813
        %v4815 = vpop.f32.mrb[0].mxu0
        %4816 = vmatprep.mubr.f32.mxu0 0.0
        %4817 = vmatmul.mubr.f32.gmra.mrb[0].mxu0 %v4742
        %v4818 = vpop.f32.mrb[0].mxu0
        %v4819 = vadd.f32 0.0, %v4818
        %v4820 = vpop.f32.mrb[0].mxu0
        %4821 = vmatprep.mubr.f32.mxu0 0.0
        %4822 = vmatmul.mubr.f32.gmra.mrb[0].mxu0 %v4745
        %v4823 = vpop.f32.mrb[0].mxu0
        %v4824 = vadd.f32 0.0, %v4823
        %v4825 = vpop.f32.mrb[0].mxu0
        %4826 = vdwg.mxu0
        %v4827 = vadd.f32 %v3627, %v4814
        %v4828 = vadd.f32 %v3628, %v4819
        %v4829 = vadd.f32 %v3629, %v4824
        %v4830 = vld [vmem:[#allocation26] sm:$0x1]
        %v4832 = vlaneseq
        %v4833 = vshrl.u32 %v4832, 7
        %v4834 = vsub.s32 0, %v4833
        %v4835 = vrot.slane %v4830, %v4834
        %v4837 = vadd.f32 %v4827, %v4835
        %v4838 = vadd.f32 %v4828, %v4835
        %v4839 = vadd.f32 %v4829, %v4835
        %v4840 = vsel %vm2152, %v4837, 0.0
        %4841 = vadd.xlane.f32.xlu0 %v4840
        %v4842 = vpop.xlane.xlu0 %4841
        %v4843 = vsel %vm2152, %v4838, 0.0
        %4844 = vadd.xlane.f32.xlu0 %v4843
        %v4845 = vpop.xlane.xlu0 %4844
        %v4846 = vsel %vm2159, %v4839, 0.0
        %4847 = vadd.xlane.f32.xlu0 %v4846
        %v4848 = vpop.xlane.xlu0 %4847
        %v4849 = vmul.f32 %v4842, %v2163
        %v4850 = vmul.f32 %v4845, %v2163
        %v4851 = vmul.f32 %v4848, %v2163
        %v4852 = vsub.f32 %v4837, %v4849
        %v4853 = vsub.f32 %v4838, %v4850
        %v4854 = vsub.f32 %v4839, %v4851
        %v4855 = vmul.f32 %v4852, %v4852
        %v4856 = vmul.f32 %v4853, %v4853
        %v4857 = vmul.f32 %v4854, %v4854
        %v4858 = vsel %vm2152, %v4855, 0.0
        %4859 = vadd.xlane.f32.xlu0 %v4858
        %v4860 = vpop.xlane.xlu0 %4859
        %v4861 = vsel %vm2152, %v4856, 0.0
        %4862 = vadd.xlane.f32.xlu0 %v4861
        %v4863 = vpop.xlane.xlu0 %4862
        %v4864 = vsel %vm2159, %v4857, 0.0
        %4865 = vadd.xlane.f32.xlu0 %v4864
        %v4866 = vpop.xlane.xlu0 %4865
        %v4867 = vmul.f32 %v4860, %v2163
        %v4868 = vmul.f32 %v4863, %v2163
        %v4869 = vmul.f32 %v4866, %v2163
        %v4870 = vadd.f32 %v4867, 1e-06
        %v4871 = vadd.f32 %v4868, 1e-06
        %v4872 = vadd.f32 %v4869, 1e-06
        %v4873 = vrsqrt.pop %v4870
        %v4874 = vrsqrt.pop %v4871
        %v4875 = vrsqrt.pop %v4872
        %v4876 = vmul.f32 %v4852, %v4873
        %v4877 = vmul.f32 %v4853, %v4874
        %v4878 = vmul.f32 %v4854, %v4875
        %v4879 = vld [vmem:[#allocation27] sm:$0xf]
        %v4880 = vld [vmem:[#allocation27 + $0x4] sm:$0xf]
        %v4881 = vld [vmem:[#allocation27 + $0x8] sm:$0xf]
        %v4882 = vld [vmem:[#allocation27 + $0xc] sm:$0xf]
        %v4883 = vpack.c.bf16 %v4877, %v4876
        %v4884 = vpack.c.bf16 %v4878, %v4878
        %v4885 = vld [vmem:[#allocation29] sm:$0x1]
        %v4887 = vlaneseq
        %v4888 = vshrl.u32 %v4887, 7
        %v4889 = vsub.s32 0, %v4888
        %v4890 = vrot.slane %v4885, %v4889
        %v4896 = vunpack.c.l.b16 %v4879
        %v4897 = vunpack.c.l.b16 %v4880
        %v4898 = vunpack.c.l.b16 %v4881
        %v4899 = vunpack.c.l.b16 %v4882
        %v4900 = vpack.c.b16 %v4897, %v4896
        %v4901 = vpack.c.b16 %v4899, %v4898
        %v4905 = vsel %vm2152, %v4883, 0
        %v4908 = vsel %vm2152, %v4884, 0
        %4910 = vmatprep.subr.bf16.mxu0 0
        %4911 = vmatpush1.bf16.msra.mxu0 %v4900
        %4912 = vmatprep.subr.bf16.mxu0 0
        %4913 = vmatpush1.bf16.msra.mxu0 %v4901
        %4914 = vmatprep.subr.bf16.mxu0 0
        %4915 = vmatpush1.bf16.msra.mxu0 0
        %4916 = vmatprep.subr.bf16.mxu0 0
        %4917 = vmatpush1.bf16.msra.mxu0 0
        %4918 = vmatprep.subr.bf16.mxu0 0
        %4919 = vmatpush1.bf16.msra.mxu0 0
        %4920 = vmatprep.subr.bf16.mxu0 0
        %4921 = vmatpush1.bf16.msra.mxu0 0
        %4922 = vmatprep.subr.bf16.mxu0 0
        %4923 = vmatpush1.bf16.msra.mxu0 0
        %4924 = vmatprep.subr.bf16.mxu0 0
        %4925 = vmatpush1.bf16.msra.mxu0 0
        %4926 = vmatprep.subr.bf16.mxu0 0
        %4927 = vmatpush1.bf16.msra.mxu0 0
        %4928 = vmatprep.subr.bf16.mxu0 0
        %4929 = vmatpush1.bf16.msra.mxu0 0
        %4930 = vmatprep.subr.bf16.mxu0 0
        %4931 = vmatpush1.bf16.msra.mxu0 0
        %4932 = vmatprep.subr.bf16.mxu0 0
        %4933 = vmatpush1.bf16.msra.mxu0 0
        %4934 = vmatprep.subr.bf16.mxu0 0
        %4935 = vmatpush1.bf16.msra.mxu0 0
        %4936 = vmatprep.subr.bf16.mxu0 0
        %4937 = vmatpush1.bf16.msra.mxu0 0
        %4938 = vmatprep.subr.bf16.mxu0 0
        %4939 = vmatpush1.bf16.msra.mxu0 0
        %4940 = vmatprep.subr.bf16.mxu0 0
        %4941 = vmatpush1.bf16.msra.mxu0 0
        %4942 = vmatprep.mubr.bf16.mxu0 0
        %4943 = vmatmul.mubr.bf16.gmra.mrb[0].mxu0 %v4905
        %v4944 = vpop.f32.mrb[0].mxu0
        %v4945 = vadd.f32 %v4890, %v4944
        %v4946 = vpop.f32.mrb[0].mxu0
        %v4947 = vpop.f32.mrb[0].mxu0
        %v4948 = vadd.f32 %v4890, %v4947
        %v4949 = vpop.f32.mrb[0].mxu0
        %4950 = vmatprep.mubr.bf16.mxu0 0
        %4951 = vmatmul.mubr.bf16.gmra.mrb[0].mxu0 %v4908
        %v4952 = vpop.f32.mrb[0].mxu0
        %v4953 = vadd.f32 %v4890, %v4952
        %v4954 = vpop.f32.mrb[0].mxu0
        %v4955 = vpop.f32.mrb[0].mxu0
        %v4956 = vpop.f32.mrb[0].mxu0
        %4957 = vdwg.mxu0
        %v4958 = vmul.f32 %v4945, 0.5
        %v4959 = vmul.f32 %v4948, 0.5
        %v4960 = vmul.f32 %v4953, 0.5
        %v4961 = vmul.f32 %v4945, 0.70710677
        %v4962 = vmul.f32 %v4948, 0.70710677
        %v4963 = vmul.f32 %v4953, 0.70710677
        %v4964 = verf.f32.pop %v4961
        %v4965 = verf.f32.pop %v4962
        %v4966 = verf.f32.pop %v4963
        %v4967 = vadd.f32 %v4964, 1.0
        %v4968 = vadd.f32 %v4965, 1.0
        %v4969 = vadd.f32 %v4966, 1.0
        %v4970 = vmul.f32 %v4958, %v4967
        %v4971 = vmul.f32 %v4959, %v4968
        %v4972 = vmul.f32 %v4960, %v4969
        %v4973 = vld [vmem:[%s39] sm:$0xf]
        %v4974 = vld [vmem:[%s39 + $0x4] sm:$0xf]
        %v4975 = vld [vmem:[%s39 + $0x8] sm:$0xf]
        %v4976 = vld [vmem:[%s39 + $0xc] sm:$0xf]
        %v4977 = vld [vmem:[%s39 + $0x10] sm:$0xf]
        %v4978 = vld [vmem:[%s39 + $0x14] sm:$0xf]
        %v4979 = vld [vmem:[%s39 + $0x18] sm:$0xf]
        %v4980 = vld [vmem:[%s39 + $0x1c] sm:$0xf]
        %v4981 = vld [vmem:[%s39 + $0x20] sm:$0xf]
        %v4982 = vld [vmem:[%s39 + $0x24] sm:$0xf]
        %v4983 = vld [vmem:[%s39 + $0x28] sm:$0xf]
        %v4984 = vld [vmem:[%s39 + $0x2c] sm:$0xf]
        %v4985 = vld [vmem:[%s39 + $0x30] sm:$0xf]
        %v4986 = vld [vmem:[%s39 + $0x34] sm:$0xf]
        %v4987 = vld [vmem:[%s39 + $0x38] sm:$0xf]
        %v4988 = vld [vmem:[%s39 + $0x3c] sm:$0xf]
        %v4989 = vpack.c.bf16 %v4971, %v4970
        %v4990 = vpack.c.bf16 %v4972, %v4972
        %v5007 = vunpack.c.l.b16 %v4973
        %v5008 = vunpack.c.l.b16 %v4974
        %v5009 = vunpack.c.l.b16 %v4975
        %v5010 = vunpack.c.l.b16 %v4976
        %v5011 = vunpack.c.l.b16 %v4977
        %v5012 = vunpack.c.l.b16 %v4978
        %v5013 = vunpack.c.l.b16 %v4979
        %v5014 = vunpack.c.l.b16 %v4980
        %v5015 = vunpack.c.l.b16 %v4981
        %v5016 = vunpack.c.l.b16 %v4982
        %v5017 = vunpack.c.l.b16 %v4983
        %v5018 = vunpack.c.l.b16 %v4984
        %v5019 = vunpack.c.l.b16 %v4985
        %v5020 = vunpack.c.l.b16 %v4986
        %v5021 = vunpack.c.l.b16 %v4987
        %v5022 = vunpack.c.l.b16 %v4988
        %v5023 = vpack.c.b16 %v5008, %v5007
        %v5024 = vpack.c.b16 %v5010, %v5009
        %v5025 = vpack.c.b16 %v5012, %v5011
        %v5026 = vpack.c.b16 %v5014, %v5013
        %v5027 = vpack.c.b16 %v5016, %v5015
        %v5028 = vpack.c.b16 %v5018, %v5017
        %v5029 = vpack.c.b16 %v5020, %v5019
        %v5030 = vpack.c.b16 %v5022, %v5021
        %5039 = vmatprep.subr.bf16.mxu0 0
        %5040 = vmatpush1.bf16.msra.mxu0 %v5023
        %5041 = vmatprep.subr.bf16.mxu0 0
        %5042 = vmatpush1.bf16.msra.mxu0 %v5024
        %5043 = vmatprep.subr.bf16.mxu0 0
        %5044 = vmatpush1.bf16.msra.mxu0 %v5025
        %5045 = vmatprep.subr.bf16.mxu0 0
        %5046 = vmatpush1.bf16.msra.mxu0 %v5026
        %5047 = vmatprep.subr.bf16.mxu0 0
        %5048 = vmatpush1.bf16.msra.mxu0 %v5027
        %5049 = vmatprep.subr.bf16.mxu0 0
        %5050 = vmatpush1.bf16.msra.mxu0 %v5028
        %5051 = vmatprep.subr.bf16.mxu0 0
        %5052 = vmatpush1.bf16.msra.mxu0 %v5029
        %5053 = vmatprep.subr.bf16.mxu0 0
        %5054 = vmatpush1.bf16.msra.mxu0 %v5030
        %5055 = vmatprep.subr.bf16.mxu0 0
        %5056 = vmatpush1.bf16.msra.mxu0 0
        %5057 = vmatprep.subr.bf16.mxu0 0
        %5058 = vmatpush1.bf16.msra.mxu0 0
        %5059 = vmatprep.subr.bf16.mxu0 0
        %5060 = vmatpush1.bf16.msra.mxu0 0
        %5061 = vmatprep.subr.bf16.mxu0 0
        %5062 = vmatpush1.bf16.msra.mxu0 0
        %5063 = vmatprep.subr.bf16.mxu0 0
        %5064 = vmatpush1.bf16.msra.mxu0 0
        %5065 = vmatprep.subr.bf16.mxu0 0
        %5066 = vmatpush1.bf16.msra.mxu0 0
        %5067 = vmatprep.subr.bf16.mxu0 0
        %5068 = vmatpush1.bf16.msra.mxu0 0
        %5069 = vmatprep.subr.bf16.mxu0 0
        %5070 = vmatpush1.bf16.msra.mxu0 0
        %5071 = vmatprep.mubr.bf16.mxu0 0
        %5072 = vmatmul.mubr.bf16.gmra.mrb[0].mxu0 %v4989
        %v5073 = vpop.f32.mrb[0].mxu0
        %v5074 = vadd.f32 0.0, %v5073
        %v5075 = vpop.f32.mrb[0].mxu0
        %v5076 = vpop.f32.mrb[0].mxu0
        %v5077 = vpop.f32.mrb[0].mxu0
        %5078 = vmatprep.mubr.bf16.mxu0 0
        %5079 = vmatmul.mubr.bf16.gmra.mrb[0].mxu0 %v4990
        %v5080 = vpop.f32.mrb[0].mxu0
        %v5081 = vpop.f32.mrb[0].mxu0
        %v5082 = vpop.f32.mrb[0].mxu0
        %v5083 = vpop.f32.mrb[0].mxu0
        %5084 = vdwg.mxu0
        %v5085 = vadd.f32 %v4837, %v5074
        %v5086 = vld [vmem:[#allocation30] sm:$0x1]
        %v5088 = vlaneseq
        %v5089 = vshrl.u32 %v5088, 7
        %v5090 = vsub.s32 0, %v5089
        %v5091 = vrot.slane %v5086, %v5090
        %v5093 = vadd.f32 %v5085, %v5091
        %v5094 = vsel %vm2159, %v5093, 0.0
        %5095 = vadd.xlane.f32.xlu0 %v5094
        %v5096 = vpop.xlane.xlu0 %5095
        %v5097 = vmul.f32 %v5096, %v2163
        %v5098 = vsub.f32 %v5093, %v5097
        %v5099 = vmul.f32 %v5098, %v5098
        %v5100 = vsel %vm2159, %v5099, 0.0
        %5101 = vadd.xlane.f32.xlu0 %v5100
        %v5102 = vpop.xlane.xlu0 %5101
        %v5103 = vmul.f32 %v5102, %v2163
        %v5104 = vadd.f32 %v5103, 1e-06
        %v5105 = vrsqrt.pop %v5104
        %v5106 = vmul.f32 %v5098, %v5105
        %s5107 = smul.u32 4, 4
        %s5108 = smul.u32 %s5107, 8
        %s5109 = sshll.u32 %s5108, 4
        %5110 = dma.done [#allocation5], %s5109
        %s5111 = smul.u32 4, 125
        %s5112 = smul.u32 %s5111, 4
        %s5113 = sshll.u32 %s5112, 4
        %5114 = dma.done %s1412, %s5113
        %s5115 = smul.u32 4, 64
        %s5116 = smul.u32 %s5115, 1
        %s5117 = sshll.u32 %s5116, 4
        %5118 = dma.done %s1953, %s5117
        %v5119 = vld [vmem:[#allocation2] sm:$0xff]
        %v5120 = vld [vmem:[#allocation2 + $0x8] sm:$0xff]
        %v5121 = vld [vmem:[#allocation2 + $0x10] sm:$0xff]
        %v5122 = vld [vmem:[#allocation2 + $0x18] sm:$0xff]
        %v5123 = vld [vmem:[#allocation2 + $0x20] sm:$0xff]
        %v5124 = vld [vmem:[#allocation2 + $0x28] sm:$0xff]
        %v5125 = vld [vmem:[#allocation2 + $0x30] sm:$0xff]
        %v5126 = vld [vmem:[#allocation2 + $0x38] sm:$0xff]
        %v5127 = vld [vmem:[#allocation2 + $0x40] sm:$0xff]
        %v5128 = vld [vmem:[#allocation2 + $0x48] sm:$0xff]
        %v5129 = vld [vmem:[#allocation2 + $0x50] sm:$0xff]
        %v5130 = vld [vmem:[#allocation2 + $0x58] sm:$0xff]
        %v5131 = vld [vmem:[#allocation2 + $0x60] sm:$0xff]
        %v5132 = vld [vmem:[#allocation2 + $0x68] sm:$0xff]
        %v5133 = vld [vmem:[#allocation2 + $0x70] sm:$0xff]
        %v5134 = vld [vmem:[#allocation2 + $0x78] sm:$0xff]
        %v5135 = vpack.c.bf16 %v5106, %v5106
        %v5136 = vld [vmem:[#allocation32] sm:$0xff]
        %v5138 = vlaneseq
        %v5139 = vshrl.u32 %v5138, 7
        %v5140 = vsub.s32 0, %v5139
        %v5141 = vrot.slane %v5136, %v5140
        %v5142 = vlaneseq
        %v5143 = vshrl.u32 %v5142, 7
        %v5144 = vsub.s32 1, %v5143
        %v5145 = vrot.slane %v5136, %v5144
        %v5146 = vlaneseq
        %v5147 = vshrl.u32 %v5146, 7
        %v5148 = vsub.s32 2, %v5147
        %v5149 = vrot.slane %v5136, %v5148
        %v5150 = vlaneseq
        %v5151 = vshrl.u32 %v5150, 7
        %v5152 = vsub.s32 3, %v5151
        %v5153 = vrot.slane %v5136, %v5152
        %v5154 = vlaneseq
        %v5155 = vshrl.u32 %v5154, 7
        %v5156 = vsub.s32 4, %v5155
        %v5157 = vrot.slane %v5136, %v5156
        %v5158 = vlaneseq
        %v5159 = vshrl.u32 %v5158, 7
        %v5160 = vsub.s32 5, %v5159
        %v5161 = vrot.slane %v5136, %v5160
        %v5162 = vlaneseq
        %v5163 = vshrl.u32 %v5162, 7
        %v5164 = vsub.s32 6, %v5163
        %v5165 = vrot.slane %v5136, %v5164
        %v5166 = vlaneseq
        %v5167 = vshrl.u32 %v5166, 7
        %v5168 = vsub.s32 7, %v5167
        %v5169 = vrot.slane %v5136, %v5168
        %v5179 = vsel %vm2152, %v5135, 0
        %5181 = vmatprep.subr.bf16.mxu0 %v5120
        %5182 = vmatpush1.bf16.msra.mxu0 %v5119
        %5183 = vmatprep.subr.bf16.mxu0 %v5128
        %5184 = vmatpush1.bf16.msra.mxu0 %v5127
        %5185 = vmatprep.subr.bf16.mxu0 0
        %5186 = vmatpush1.bf16.msra.mxu0 0
        %5187 = vmatprep.subr.bf16.mxu0 0
        %5188 = vmatpush1.bf16.msra.mxu0 0
        %5189 = vmatprep.subr.bf16.mxu0 0
        %5190 = vmatpush1.bf16.msra.mxu0 0
        %5191 = vmatprep.subr.bf16.mxu0 0
        %5192 = vmatpush1.bf16.msra.mxu0 0
        %5193 = vmatprep.subr.bf16.mxu0 0
        %5194 = vmatpush1.bf16.msra.mxu0 0
        %5195 = vmatprep.subr.bf16.mxu0 0
        %5196 = vmatpush1.bf16.msra.mxu0 0
        %5197 = vmatprep.subr.bf16.mxu0 0
        %5198 = vmatpush1.bf16.msra.mxu0 0
        %5199 = vmatprep.subr.bf16.mxu0 0
        %5200 = vmatpush1.bf16.msra.mxu0 0
        %5201 = vmatprep.subr.bf16.mxu0 0
        %5202 = vmatpush1.bf16.msra.mxu0 0
        %5203 = vmatprep.subr.bf16.mxu0 0
        %5204 = vmatpush1.bf16.msra.mxu0 0
        %5205 = vmatprep.subr.bf16.mxu0 0
        %5206 = vmatpush1.bf16.msra.mxu0 0
        %5207 = vmatprep.subr.bf16.mxu0 0
        %5208 = vmatpush1.bf16.msra.mxu0 0
        %5209 = vmatprep.subr.bf16.mxu0 0
        %5210 = vmatpush1.bf16.msra.mxu0 0
        %5211 = vmatprep.subr.bf16.mxu0 0
        %5212 = vmatpush1.bf16.msra.mxu0 0
        %5213 = vmatprep.mubr.bf16.mxu0 0
        %5214 = vmatmul.mubr.bf16.gmra.mrb[0].mxu0 %v5179
        %v5215 = vpop.f32.mrb[0].mxu0
        %v5216 = vadd.f32 %v5141, %v5215
        %v5217 = vpop.f32.mrb[0].mxu0
        %v5218 = vadd.f32 %v5145, %v5217
        %v5219 = vpop.f32.mrb[0].mxu0
        %v5220 = vpop.f32.mrb[0].mxu0
        %5221 = vdwg.mxu0
        %5222 = vmatprep.subr.bf16.mxu0 %v5122
        %5223 = vmatpush1.bf16.msra.mxu0 %v5121
        %5224 = vmatprep.subr.bf16.mxu0 %v5130
        %5225 = vmatpush1.bf16.msra.mxu0 %v5129
        %5226 = vmatprep.subr.bf16.mxu0 0
        %5227 = vmatpush1.bf16.msra.mxu0 0
        %5228 = vmatprep.subr.bf16.mxu0 0
        %5229 = vmatpush1.bf16.msra.mxu0 0
        %5230 = vmatprep.subr.bf16.mxu0 0
        %5231 = vmatpush1.bf16.msra.mxu0 0
        %5232 = vmatprep.subr.bf16.mxu0 0
        %5233 = vmatpush1.bf16.msra.mxu0 0
        %5234 = vmatprep.subr.bf16.mxu0 0
        %5235 = vmatpush1.bf16.msra.mxu0 0
        %5236 = vmatprep.subr.bf16.mxu0 0
        %5237 = vmatpush1.bf16.msra.mxu0 0
        %5238 = vmatprep.subr.bf16.mxu0 0
        %5239 = vmatpush1.bf16.msra.mxu0 0
        %5240 = vmatprep.subr.bf16.mxu0 0
        %5241 = vmatpush1.bf16.msra.mxu0 0
        %5242 = vmatprep.subr.bf16.mxu0 0
        %5243 = vmatpush1.bf16.msra.mxu0 0
        %5244 = vmatprep.subr.bf16.mxu0 0
        %5245 = vmatpush1.bf16.msra.mxu0 0
        %5246 = vmatprep.subr.bf16.mxu0 0
        %5247 = vmatpush1.bf16.msra.mxu0 0
        %5248 = vmatprep.subr.bf16.mxu0 0
        %5249 = vmatpush1.bf16.msra.mxu0 0
        %5250 = vmatprep.subr.bf16.mxu0 0
        %5251 = vmatpush1.bf16.msra.mxu0 0
        %5252 = vmatprep.subr.bf16.mxu0 0
        %5253 = vmatpush1.bf16.msra.mxu0 0
        %5254 = vmatprep.mubr.bf16.mxu0 0
        %5255 = vmatmul.mubr.bf16.gmra.mrb[0].mxu0 %v5179
        %v5256 = vpop.f32.mrb[0].mxu0
        %v5257 = vadd.f32 %v5149, %v5256
        %v5258 = vpop.f32.mrb[0].mxu0
        %v5259 = vadd.f32 %v5153, %v5258
        %v5260 = vpop.f32.mrb[0].mxu0
        %v5261 = vpop.f32.mrb[0].mxu0
        %5262 = vdwg.mxu0
        %5263 = vmatprep.subr.bf16.mxu0 %v5124
        %5264 = vmatpush1.bf16.msra.mxu0 %v5123
        %5265 = vmatprep.subr.bf16.mxu0 %v5132
        %5266 = vmatpush1.bf16.msra.mxu0 %v5131
        %5267 = vmatprep.subr.bf16.mxu0 0
        %5268 = vmatpush1.bf16.msra.mxu0 0
        %5269 = vmatprep.subr.bf16.mxu0 0
        %5270 = vmatpush1.bf16.msra.mxu0 0
        %5271 = vmatprep.subr.bf16.mxu0 0
        %5272 = vmatpush1.bf16.msra.mxu0 0
        %5273 = vmatprep.subr.bf16.mxu0 0
        %5274 = vmatpush1.bf16.msra.mxu0 0
        %5275 = vmatprep.subr.bf16.mxu0 0
        %5276 = vmatpush1.bf16.msra.mxu0 0
        %5277 = vmatprep.subr.bf16.mxu0 0
        %5278 = vmatpush1.bf16.msra.mxu0 0
        %5279 = vmatprep.subr.bf16.mxu0 0
        %5280 = vmatpush1.bf16.msra.mxu0 0
        %5281 = vmatprep.subr.bf16.mxu0 0
        %5282 = vmatpush1.bf16.msra.mxu0 0
        %5283 = vmatprep.subr.bf16.mxu0 0
        %5284 = vmatpush1.bf16.msra.mxu0 0
        %5285 = vmatprep.subr.bf16.mxu0 0
        %5286 = vmatpush1.bf16.msra.mxu0 0
        %5287 = vmatprep.subr.bf16.mxu0 0
        %5288 = vmatpush1.bf16.msra.mxu0 0
        %5289 = vmatprep.subr.bf16.mxu0 0
        %5290 = vmatpush1.bf16.msra.mxu0 0
        %5291 = vmatprep.subr.bf16.mxu0 0
        %5292 = vmatpush1.bf16.msra.mxu0 0
        %5293 = vmatprep.subr.bf16.mxu0 0
        %5294 = vmatpush1.bf16.msra.mxu0 0
        %5295 = vmatprep.mubr.bf16.mxu0 0
        %5296 = vmatmul.mubr.bf16.gmra.mrb[0].mxu0 %v5179
        %v5297 = vpop.f32.mrb[0].mxu0
        %v5298 = vadd.f32 %v5157, %v5297
        %v5299 = vpop.f32.mrb[0].mxu0
        %v5300 = vadd.f32 %v5161, %v5299
        %v5301 = vpop.f32.mrb[0].mxu0
        %v5302 = vpop.f32.mrb[0].mxu0
        %5303 = vdwg.mxu0
        %5304 = vmatprep.subr.bf16.mxu0 %v5126
        %5305 = vmatpush1.bf16.msra.mxu0 %v5125
        %5306 = vmatprep.subr.bf16.mxu0 %v5134
        %5307 = vmatpush1.bf16.msra.mxu0 %v5133
        %5308 = vmatprep.subr.bf16.mxu0 0
        %5309 = vmatpush1.bf16.msra.mxu0 0
        %5310 = vmatprep.subr.bf16.mxu0 0
        %5311 = vmatpush1.bf16.msra.mxu0 0
        %5312 = vmatprep.subr.bf16.mxu0 0
        %5313 = vmatpush1.bf16.msra.mxu0 0
        %5314 = vmatprep.subr.bf16.mxu0 0
        %5315 = vmatpush1.bf16.msra.mxu0 0
        %5316 = vmatprep.subr.bf16.mxu0 0
        %5317 = vmatpush1.bf16.msra.mxu0 0
        %5318 = vmatprep.subr.bf16.mxu0 0
        %5319 = vmatpush1.bf16.msra.mxu0 0
        %5320 = vmatprep.subr.bf16.mxu0 0
        %5321 = vmatpush1.bf16.msra.mxu0 0
        %5322 = vmatprep.subr.bf16.mxu0 0
        %5323 = vmatpush1.bf16.msra.mxu0 0
        %5324 = vmatprep.subr.bf16.mxu0 0
        %5325 = vmatpush1.bf16.msra.mxu0 0
        %5326 = vmatprep.subr.bf16.mxu0 0
        %5327 = vmatpush1.bf16.msra.mxu0 0
        %5328 = vmatprep.subr.bf16.mxu0 0
        %5329 = vmatpush1.bf16.msra.mxu0 0
        %5330 = vmatprep.subr.bf16.mxu0 0
        %5331 = vmatpush1.bf16.msra.mxu0 0
        %5332 = vmatprep.subr.bf16.mxu0 0
        %5333 = vmatpush1.bf16.msra.mxu0 0
        %5334 = vmatprep.subr.bf16.mxu0 0
        %5335 = vmatpush1.bf16.msra.mxu0 0
        %5336 = vmatprep.mubr.bf16.mxu0 0
        %5337 = vmatmul.mubr.bf16.gmra.mrb[0].mxu0 %v5179
        %v5338 = vpop.f32.mrb[0].mxu0
        %v5339 = vadd.f32 %v5165, %v5338
        %v5340 = vpop.f32.mrb[0].mxu0
        %v5341 = vadd.f32 %v5169, %v5340
        %v5342 = vpop.f32.mrb[0].mxu0
        %v5343 = vpop.f32.mrb[0].mxu0
        %5344 = vdwg.mxu0
        %v5345 = vld [vmem:[#allocation3] sm:$0xff]
        %v5346 = vld [vmem:[#allocation3 + $0x8] sm:$0xff]
        %v5347 = vld [vmem:[#allocation3 + $0x10] sm:$0xff]
        %v5348 = vld [vmem:[#allocation3 + $0x18] sm:$0xff]
        %v5349 = vld [vmem:[#allocation3 + $0x20] sm:$0xff]
        %v5350 = vld [vmem:[#allocation3 + $0x28] sm:$0xff]
        %v5351 = vld [vmem:[#allocation3 + $0x30] sm:$0xff]
        %v5352 = vld [vmem:[#allocation3 + $0x38] sm:$0xff]
        %v5353 = vld [vmem:[#allocation3 + $0x40] sm:$0xff]
        %v5354 = vld [vmem:[#allocation3 + $0x48] sm:$0xff]
        %v5355 = vld [vmem:[#allocation3 + $0x50] sm:$0xff]
        %v5356 = vld [vmem:[#allocation3 + $0x58] sm:$0xff]
        %v5357 = vld [vmem:[#allocation3 + $0x60] sm:$0xff]
        %v5358 = vld [vmem:[#allocation3 + $0x68] sm:$0xff]
        %v5359 = vld [vmem:[#allocation3 + $0x70] sm:$0xff]
        %v5360 = vld [vmem:[#allocation3 + $0x78] sm:$0xff]
        %v5361 = vld [vmem:[#allocation3 + $0x80] sm:$0xff]
        %v5362 = vld [vmem:[#allocation3 + $0x88] sm:$0xff]
        %v5363 = vld [vmem:[#allocation3 + $0x90] sm:$0xff]
        %v5364 = vld [vmem:[#allocation3 + $0x98] sm:$0xff]
        %v5365 = vld [vmem:[#allocation3 + $0xa0] sm:$0xff]
        %v5366 = vld [vmem:[#allocation3 + $0xa8] sm:$0xff]
        %v5367 = vld [vmem:[#allocation3 + $0xb0] sm:$0xff]
        %v5368 = vld [vmem:[#allocation3 + $0xb8] sm:$0xff]
        %v5369 = vld [vmem:[#allocation3 + $0xc0] sm:$0xff]
        %v5370 = vld [vmem:[#allocation3 + $0xc8] sm:$0xff]
        %v5371 = vld [vmem:[#allocation3 + $0xd0] sm:$0xff]
        %v5372 = vld [vmem:[#allocation3 + $0xd8] sm:$0xff]
        %v5373 = vld [vmem:[#allocation3 + $0xe0] sm:$0xff]
        %v5374 = vld [vmem:[#allocation3 + $0xe8] sm:$0xff]
        %v5375 = vld [vmem:[#allocation3 + $0xf0] sm:$0xff]
        %v5376 = vld [vmem:[#allocation3 + $0xf8] sm:$0xff]
        %v5377 = vld [vmem:[#allocation3 + $0x100] sm:$0xff]
        %v5378 = vld [vmem:[#allocation3 + $0x108] sm:$0xff]
        %v5379 = vld [vmem:[#allocation3 + $0x110] sm:$0xff]
        %v5380 = vld [vmem:[#allocation3 + $0x118] sm:$0xff]
        %v5381 = vld [vmem:[#allocation3 + $0x120] sm:$0xff]
        %v5382 = vld [vmem:[#allocation3 + $0x128] sm:$0xff]
        %v5383 = vld [vmem:[#allocation3 + $0x130] sm:$0xff]
        %v5384 = vld [vmem:[#allocation3 + $0x138] sm:$0xff]
        %v5385 = vld [vmem:[#allocation3 + $0x140] sm:$0xff]
        %v5386 = vld [vmem:[#allocation3 + $0x148] sm:$0xff]
        %v5387 = vld [vmem:[#allocation3 + $0x150] sm:$0xff]
        %v5388 = vld [vmem:[#allocation3 + $0x158] sm:$0xff]
        %v5389 = vld [vmem:[#allocation3 + $0x160] sm:$0xff]
        %v5390 = vld [vmem:[#allocation3 + $0x168] sm:$0xff]
        %v5391 = vld [vmem:[#allocation3 + $0x170] sm:$0xff]
        %v5392 = vld [vmem:[#allocation3 + $0x178] sm:$0xff]
        %v5393 = vld [vmem:[#allocation3 + $0x180] sm:$0xff]
        %v5394 = vld [vmem:[#allocation3 + $0x188] sm:$0xff]
        %v5395 = vld [vmem:[#allocation3 + $0x190] sm:$0xff]
        %v5396 = vld [vmem:[#allocation3 + $0x198] sm:$0xff]
        %v5397 = vld [vmem:[#allocation3 + $0x1a0] sm:$0xff]
        %v5398 = vld [vmem:[#allocation3 + $0x1a8] sm:$0xff]
        %v5399 = vld [vmem:[#allocation3 + $0x1b0] sm:$0xff]
        %v5400 = vld [vmem:[#allocation3 + $0x1b8] sm:$0xff]
        %v5401 = vld [vmem:[#allocation3 + $0x1c0] sm:$0xff]
        %v5402 = vld [vmem:[#allocation3 + $0x1c8] sm:$0xff]
        %v5403 = vld [vmem:[#allocation3 + $0x1d0] sm:$0xff]
        %v5404 = vld [vmem:[#allocation3 + $0x1d8] sm:$0xff]
        %v5405 = vld [vmem:[#allocation3 + $0x1e0] sm:$0xff]
        %v5406 = vld [vmem:[#allocation3 + $0x1e8] sm:$0xff]
        %v5407 = vld [vmem:[#allocation3 + $0x1f0] sm:$0xff]
        %v5408 = vld [vmem:[#allocation3 + $0x1f8] sm:$0xff]
        %v5409 = vld [vmem:[#allocation3 + $0x200] sm:$0xff]
        %v5410 = vld [vmem:[#allocation3 + $0x208] sm:$0xff]
        %v5411 = vld [vmem:[#allocation3 + $0x210] sm:$0xff]
        %v5412 = vld [vmem:[#allocation3 + $0x218] sm:$0xff]
        %v5413 = vld [vmem:[#allocation3 + $0x220] sm:$0xff]
        %v5414 = vld [vmem:[#allocation3 + $0x228] sm:$0xff]
        %v5415 = vld [vmem:[#allocation3 + $0x230] sm:$0xff]
        %v5416 = vld [vmem:[#allocation3 + $0x238] sm:$0xff]
        %v5417 = vld [vmem:[#allocation3 + $0x240] sm:$0xff]
        %v5418 = vld [vmem:[#allocation3 + $0x248] sm:$0xff]
        %v5419 = vld [vmem:[#allocation3 + $0x250] sm:$0xff]
        %v5420 = vld [vmem:[#allocation3 + $0x258] sm:$0xff]
        %v5421 = vld [vmem:[#allocation3 + $0x260] sm:$0xff]
        %v5422 = vld [vmem:[#allocation3 + $0x268] sm:$0xff]
        %v5423 = vld [vmem:[#allocation3 + $0x270] sm:$0xff]
        %v5424 = vld [vmem:[#allocation3 + $0x278] sm:$0xff]
        %v5425 = vld [vmem:[#allocation3 + $0x280] sm:$0xff]
        %v5426 = vld [vmem:[#allocation3 + $0x288] sm:$0xff]
        %v5427 = vld [vmem:[#allocation3 + $0x290] sm:$0xff]
        %v5428 = vld [vmem:[#allocation3 + $0x298] sm:$0xff]
        %v5429 = vld [vmem:[#allocation3 + $0x2a0] sm:$0xff]
        %v5430 = vld [vmem:[#allocation3 + $0x2a8] sm:$0xff]
        %v5431 = vld [vmem:[#allocation3 + $0x2b0] sm:$0xff]
        %v5432 = vld [vmem:[#allocation3 + $0x2b8] sm:$0xff]
        %v5433 = vld [vmem:[#allocation3 + $0x2c0] sm:$0xff]
        %v5434 = vld [vmem:[#allocation3 + $0x2c8] sm:$0xff]
        %v5435 = vld [vmem:[#allocation3 + $0x2d0] sm:$0xff]
        %v5436 = vld [vmem:[#allocation3 + $0x2d8] sm:$0xff]
        %v5437 = vld [vmem:[#allocation3 + $0x2e0] sm:$0xff]
        %v5438 = vld [vmem:[#allocation3 + $0x2e8] sm:$0xff]
        %v5439 = vld [vmem:[#allocation3 + $0x2f0] sm:$0xff]
        %v5440 = vld [vmem:[#allocation3 + $0x2f8] sm:$0xff]
        %v5441 = vld [vmem:[#allocation3 + $0x300] sm:$0xff]
        %v5442 = vld [vmem:[#allocation3 + $0x308] sm:$0xff]
        %v5443 = vld [vmem:[#allocation3 + $0x310] sm:$0xff]
        %v5444 = vld [vmem:[#allocation3 + $0x318] sm:$0xff]
        %v5445 = vld [vmem:[#allocation3 + $0x320] sm:$0xff]
        %v5446 = vld [vmem:[#allocation3 + $0x328] sm:$0xff]
        %v5447 = vld [vmem:[#allocation3 + $0x330] sm:$0xff]
        %v5448 = vld [vmem:[#allocation3 + $0x338] sm:$0xff]
        %v5449 = vld [vmem:[#allocation3 + $0x340] sm:$0xff]
        %v5450 = vld [vmem:[#allocation3 + $0x348] sm:$0xff]
        %v5451 = vld [vmem:[#allocation3 + $0x350] sm:$0xff]
        %v5452 = vld [vmem:[#allocation3 + $0x358] sm:$0xff]
        %v5453 = vld [vmem:[#allocation3 + $0x360] sm:$0xff]
        %v5454 = vld [vmem:[#allocation3 + $0x368] sm:$0xff]
        %v5455 = vld [vmem:[#allocation3 + $0x370] sm:$0xff]
        %v5456 = vld [vmem:[#allocation3 + $0x378] sm:$0xff]
        %v5457 = vld [vmem:[#allocation3 + $0x380] sm:$0xff]
        %v5458 = vld [vmem:[#allocation3 + $0x388] sm:$0xff]
        %v5459 = vld [vmem:[#allocation3 + $0x390] sm:$0xff]
        %v5460 = vld [vmem:[#allocation3 + $0x398] sm:$0xff]
        %v5461 = vld [vmem:[#allocation3 + $0x3a0] sm:$0xff]
        %v5462 = vld [vmem:[#allocation3 + $0x3a8] sm:$0xff]
        %v5463 = vld [vmem:[#allocation3 + $0x3b0] sm:$0xff]
        %v5464 = vld [vmem:[#allocation3 + $0x3b8] sm:$0xff]
        %v5465 = vld [vmem:[#allocation3 + $0x3c0] sm:$0xff]
        %v5466 = vld [vmem:[#allocation3 + $0x3c8] sm:$0xff]
        %v5467 = vld [vmem:[#allocation3 + $0x3d0] sm:$0xff]
        %v5468 = vld [vmem:[#allocation3 + $0x3d8] sm:$0xff]
        %v5469 = vld [vmem:[#allocation3 + $0x3e0] sm:$0xff]
        %v5470 = vld [vmem:[#allocation3 + $0x3e8] sm:$0xff]
        %v5471 = vld [vmem:[#allocation3 + $0x3f0] sm:$0xff]
        %v5472 = vld [vmem:[#allocation3 + $0x3f8] sm:$0xff]
        %v5473 = vld [vmem:[#allocation3 + $0x400] sm:$0xff]
        %v5474 = vld [vmem:[#allocation3 + $0x408] sm:$0xff]
        %v5475 = vld [vmem:[#allocation3 + $0x410] sm:$0xff]
        %v5476 = vld [vmem:[#allocation3 + $0x418] sm:$0xff]
        %v5477 = vld [vmem:[#allocation3 + $0x420] sm:$0xff]
        %v5478 = vld [vmem:[#allocation3 + $0x428] sm:$0xff]
        %v5479 = vld [vmem:[#allocation3 + $0x430] sm:$0xff]
        %v5480 = vld [vmem:[#allocation3 + $0x438] sm:$0xff]
        %v5481 = vld [vmem:[#allocation3 + $0x440] sm:$0xff]
        %v5482 = vld [vmem:[#allocation3 + $0x448] sm:$0xff]
        %v5483 = vld [vmem:[#allocation3 + $0x450] sm:$0xff]
        %v5484 = vld [vmem:[#allocation3 + $0x458] sm:$0xff]
        %v5485 = vld [vmem:[#allocation3 + $0x460] sm:$0xff]
        %v5486 = vld [vmem:[#allocation3 + $0x468] sm:$0xff]
        %v5487 = vld [vmem:[#allocation3 + $0x470] sm:$0xff]
        %v5488 = vld [vmem:[#allocation3 + $0x478] sm:$0xff]
        %v5489 = vld [vmem:[#allocation3 + $0x480] sm:$0xff]
        %v5490 = vld [vmem:[#allocation3 + $0x488] sm:$0xff]
        %v5491 = vld [vmem:[#allocation3 + $0x490] sm:$0xff]
        %v5492 = vld [vmem:[#allocation3 + $0x498] sm:$0xff]
        %v5493 = vld [vmem:[#allocation3 + $0x4a0] sm:$0xff]
        %v5494 = vld [vmem:[#allocation3 + $0x4a8] sm:$0xff]
        %v5495 = vld [vmem:[#allocation3 + $0x4b0] sm:$0xff]
        %v5496 = vld [vmem:[#allocation3 + $0x4b8] sm:$0xff]
        %v5497 = vld [vmem:[#allocation3 + $0x4c0] sm:$0xff]
        %v5498 = vld [vmem:[#allocation3 + $0x4c8] sm:$0xff]
        %v5499 = vld [vmem:[#allocation3 + $0x4d0] sm:$0xff]
        %v5500 = vld [vmem:[#allocation3 + $0x4d8] sm:$0xff]
        %v5501 = vld [vmem:[#allocation3 + $0x4e0] sm:$0xff]
        %v5502 = vld [vmem:[#allocation3 + $0x4e8] sm:$0xff]
        %v5503 = vld [vmem:[#allocation3 + $0x4f0] sm:$0xff]
        %v5504 = vld [vmem:[#allocation3 + $0x4f8] sm:$0xff]
        %v5505 = vld [vmem:[#allocation3 + $0x500] sm:$0xff]
        %v5506 = vld [vmem:[#allocation3 + $0x508] sm:$0xff]
        %v5507 = vld [vmem:[#allocation3 + $0x510] sm:$0xff]
        %v5508 = vld [vmem:[#allocation3 + $0x518] sm:$0xff]
        %v5509 = vld [vmem:[#allocation3 + $0x520] sm:$0xff]
        %v5510 = vld [vmem:[#allocation3 + $0x528] sm:$0xff]
        %v5511 = vld [vmem:[#allocation3 + $0x530] sm:$0xff]
        %v5512 = vld [vmem:[#allocation3 + $0x538] sm:$0xff]
        %v5513 = vld [vmem:[#allocation3 + $0x540] sm:$0xff]
        %v5514 = vld [vmem:[#allocation3 + $0x548] sm:$0xff]
        %v5515 = vld [vmem:[#allocation3 + $0x550] sm:$0xff]
        %v5516 = vld [vmem:[#allocation3 + $0x558] sm:$0xff]
        %v5517 = vld [vmem:[#allocation3 + $0x560] sm:$0xff]
        %v5518 = vld [vmem:[#allocation3 + $0x568] sm:$0xff]
        %v5519 = vld [vmem:[#allocation3 + $0x570] sm:$0xff]
        %v5520 = vld [vmem:[#allocation3 + $0x578] sm:$0xff]
        %v5521 = vld [vmem:[#allocation3 + $0x580] sm:$0xff]
        %v5522 = vld [vmem:[#allocation3 + $0x588] sm:$0xff]
        %v5523 = vld [vmem:[#allocation3 + $0x590] sm:$0xff]
        %v5524 = vld [vmem:[#allocation3 + $0x598] sm:$0xff]
        %v5525 = vld [vmem:[#allocation3 + $0x5a0] sm:$0xff]
        %v5526 = vld [vmem:[#allocation3 + $0x5a8] sm:$0xff]
        %v5527 = vld [vmem:[#allocation3 + $0x5b0] sm:$0xff]
        %v5528 = vld [vmem:[#allocation3 + $0x5b8] sm:$0xff]
        %v5529 = vld [vmem:[#allocation3 + $0x5c0] sm:$0xff]
        %v5530 = vld [vmem:[#allocation3 + $0x5c8] sm:$0xff]
        %v5531 = vld [vmem:[#allocation3 + $0x5d0] sm:$0xff]
        %v5532 = vld [vmem:[#allocation3 + $0x5d8] sm:$0xff]
        %v5533 = vld [vmem:[#allocation3 + $0x5e0] sm:$0xff]
        %v5534 = vld [vmem:[#allocation3 + $0x5e8] sm:$0xff]
        %v5535 = vld [vmem:[#allocation3 + $0x5f0] sm:$0xff]
        %v5536 = vld [vmem:[#allocation3 + $0x5f8] sm:$0xff]
        %v5537 = vld [vmem:[#allocation3 + $0x600] sm:$0xff]
        %v5538 = vld [vmem:[#allocation3 + $0x608] sm:$0xff]
        %v5539 = vld [vmem:[#allocation3 + $0x610] sm:$0xff]
        %v5540 = vld [vmem:[#allocation3 + $0x618] sm:$0xff]
        %v5541 = vld [vmem:[#allocation3 + $0x620] sm:$0xff]
        %v5542 = vld [vmem:[#allocation3 + $0x628] sm:$0xff]
        %v5543 = vld [vmem:[#allocation3 + $0x630] sm:$0xff]
        %v5544 = vld [vmem:[#allocation3 + $0x638] sm:$0xff]
        %v5545 = vld [vmem:[#allocation3 + $0x640] sm:$0xff]
        %v5546 = vld [vmem:[#allocation3 + $0x648] sm:$0xff]
        %v5547 = vld [vmem:[#allocation3 + $0x650] sm:$0xff]
        %v5548 = vld [vmem:[#allocation3 + $0x658] sm:$0xff]
        %v5549 = vld [vmem:[#allocation3 + $0x660] sm:$0xff]
        %v5550 = vld [vmem:[#allocation3 + $0x668] sm:$0xff]
        %v5551 = vld [vmem:[#allocation3 + $0x670] sm:$0xff]
        %v5552 = vld [vmem:[#allocation3 + $0x678] sm:$0xff]
        %v5553 = vld [vmem:[#allocation3 + $0x680] sm:$0xff]
        %v5554 = vld [vmem:[#allocation3 + $0x688] sm:$0xff]
        %v5555 = vld [vmem:[#allocation3 + $0x690] sm:$0xff]
        %v5556 = vld [vmem:[#allocation3 + $0x698] sm:$0xff]
        %v5557 = vld [vmem:[#allocation3 + $0x6a0] sm:$0xff]
        %v5558 = vld [vmem:[#allocation3 + $0x6a8] sm:$0xff]
        %v5559 = vld [vmem:[#allocation3 + $0x6b0] sm:$0xff]
        %v5560 = vld [vmem:[#allocation3 + $0x6b8] sm:$0xff]
        %v5561 = vld [vmem:[#allocation3 + $0x6c0] sm:$0xff]
        %v5562 = vld [vmem:[#allocation3 + $0x6c8] sm:$0xff]
        %v5563 = vld [vmem:[#allocation3 + $0x6d0] sm:$0xff]
        %v5564 = vld [vmem:[#allocation3 + $0x6d8] sm:$0xff]
        %v5565 = vld [vmem:[#allocation3 + $0x6e0] sm:$0xff]
        %v5566 = vld [vmem:[#allocation3 + $0x6e8] sm:$0xff]
        %v5567 = vld [vmem:[#allocation3 + $0x6f0] sm:$0xff]
        %v5568 = vld [vmem:[#allocation3 + $0x6f8] sm:$0xff]
        %v5569 = vld [vmem:[#allocation3 + $0x700] sm:$0xff]
        %v5570 = vld [vmem:[#allocation3 + $0x708] sm:$0xff]
        %v5571 = vld [vmem:[#allocation3 + $0x710] sm:$0xff]
        %v5572 = vld [vmem:[#allocation3 + $0x718] sm:$0xff]
        %v5573 = vld [vmem:[#allocation3 + $0x720] sm:$0xff]
        %v5574 = vld [vmem:[#allocation3 + $0x728] sm:$0xff]
        %v5575 = vld [vmem:[#allocation3 + $0x730] sm:$0xff]
        %v5576 = vld [vmem:[#allocation3 + $0x738] sm:$0xff]
        %v5577 = vld [vmem:[#allocation3 + $0x740] sm:$0xff]
        %v5578 = vld [vmem:[#allocation3 + $0x748] sm:$0xff]
        %v5579 = vld [vmem:[#allocation3 + $0x750] sm:$0xff]
        %v5580 = vld [vmem:[#allocation3 + $0x758] sm:$0xff]
        %v5581 = vld [vmem:[#allocation3 + $0x760] sm:$0xff]
        %v5582 = vld [vmem:[#allocation3 + $0x768] sm:$0xff]
        %v5583 = vld [vmem:[#allocation3 + $0x770] sm:$0xff]
        %v5584 = vld [vmem:[#allocation3 + $0x778] sm:$0xff]
        %v5585 = vld [vmem:[#allocation3 + $0x780] sm:$0xff]
        %v5586 = vld [vmem:[#allocation3 + $0x788] sm:$0xff]
        %v5587 = vld [vmem:[#allocation3 + $0x790] sm:$0xff]
        %v5588 = vld [vmem:[#allocation3 + $0x798] sm:$0xff]
        %v5589 = vld [vmem:[#allocation3 + $0x7a0] sm:$0xff]
        %v5590 = vld [vmem:[#allocation3 + $0x7a8] sm:$0xff]
        %v5591 = vld [vmem:[#allocation3 + $0x7b0] sm:$0xff]
        %v5592 = vld [vmem:[#allocation3 + $0x7b8] sm:$0xff]
        %v5593 = vld [vmem:[#allocation3 + $0x7c0] sm:$0xff]
        %v5594 = vld [vmem:[#allocation3 + $0x7c8] sm:$0xff]
        %v5595 = vpack.c.bf16 %v5216, %v5216
        %v5596 = vpack.c.bf16 %v5218, %v5218
        %v5597 = vpack.c.bf16 %v5257, %v5257
        %v5598 = vpack.c.bf16 %v5259, %v5259
        %v5599 = vpack.c.bf16 %v5298, %v5298
        %v5600 = vpack.c.bf16 %v5300, %v5300
        %v5601 = vpack.c.bf16 %v5339, %v5339
        %v5602 = vpack.c.bf16 %v5341, %v5341
        %v5603 = vld [vmem:[%s45] sm:$0xf]
        %v5854 = vunpack.c.l.b16 %v5345
        %v5855 = vunpack.c.h.b16 %v5345
        %v5856 = vunpack.c.l.b16 %v5346
        %v5857 = vunpack.c.h.b16 %v5346
        %v5858 = vunpack.c.l.b16 %v5347
        %v5859 = vunpack.c.h.b16 %v5347
        %v5860 = vunpack.c.l.b16 %v5348
        %v5861 = vunpack.c.h.b16 %v5348
        %v5862 = vunpack.c.l.b16 %v5349
        %v5863 = vunpack.c.h.b16 %v5349
        %v5864 = vunpack.c.l.b16 %v5350
        %v5865 = vunpack.c.h.b16 %v5350
        %v5866 = vunpack.c.l.b16 %v5351
        %v5867 = vunpack.c.h.b16 %v5351
        %v5868 = vunpack.c.l.b16 %v5352
        %v5869 = vunpack.c.h.b16 %v5352
        %v5870 = vunpack.c.l.b16 %v5353
        %v5871 = vunpack.c.h.b16 %v5353
        %v5872 = vunpack.c.l.b16 %v5354
        %v5873 = vunpack.c.h.b16 %v5354
        %v5874 = vunpack.c.l.b16 %v5355
        %v5875 = vunpack.c.h.b16 %v5355
        %v5876 = vunpack.c.l.b16 %v5356
        %v5877 = vunpack.c.h.b16 %v5356
        %v5878 = vunpack.c.l.b16 %v5357
        %v5879 = vunpack.c.h.b16 %v5357
        %v5880 = vunpack.c.l.b16 %v5358
        %v5881 = vunpack.c.h.b16 %v5358
        %v5882 = vunpack.c.l.b16 %v5359
        %v5883 = vunpack.c.h.b16 %v5359
        %v5884 = vunpack.c.l.b16 %v5360
        %v5885 = vunpack.c.h.b16 %v5360
        %v5886 = vunpack.c.l.b16 %v5361
        %v5887 = vunpack.c.h.b16 %v5361
        %v5888 = vunpack.c.l.b16 %v5362
        %v5889 = vunpack.c.h.b16 %v5362
        %v5890 = vunpack.c.l.b16 %v5363
        %v5891 = vunpack.c.h.b16 %v5363
        %v5892 = vunpack.c.l.b16 %v5364
        %v5893 = vunpack.c.h.b16 %v5364
        %v5894 = vunpack.c.l.b16 %v5365
        %v5895 = vunpack.c.h.b16 %v5365
        %v5896 = vunpack.c.l.b16 %v5366
        %v5897 = vunpack.c.h.b16 %v5366
        %v5898 = vunpack.c.l.b16 %v5367
        %v5899 = vunpack.c.h.b16 %v5367
        %v5900 = vunpack.c.l.b16 %v5368
        %v5901 = vunpack.c.h.b16 %v5368
        %v5902 = vunpack.c.l.b16 %v5369
        %v5903 = vunpack.c.h.b16 %v5369
        %v5904 = vunpack.c.l.b16 %v5370
        %v5905 = vunpack.c.h.b16 %v5370
        %v5906 = vunpack.c.l.b16 %v5371
        %v5907 = vunpack.c.h.b16 %v5371
        %v5908 = vunpack.c.l.b16 %v5372
        %v5909 = vunpack.c.h.b16 %v5372
        %v5910 = vunpack.c.l.b16 %v5373
        %v5911 = vunpack.c.h.b16 %v5373
        %v5912 = vunpack.c.l.b16 %v5374
        %v5913 = vunpack.c.h.b16 %v5374
        %v5914 = vunpack.c.l.b16 %v5375
        %v5915 = vunpack.c.h.b16 %v5375
        %v5916 = vunpack.c.l.b16 %v5376
        %v5917 = vunpack.c.h.b16 %v5376
        %v5918 = vunpack.c.l.b16 %v5377
        %v5919 = vunpack.c.h.b16 %v5377
        %v5920 = vunpack.c.l.b16 %v5378
        %v5921 = vunpack.c.h.b16 %v5378
        %v5922 = vunpack.c.l.b16 %v5379
        %v5923 = vunpack.c.h.b16 %v5379
        %v5924 = vunpack.c.l.b16 %v5380
        %v5925 = vunpack.c.h.b16 %v5380
        %v5926 = vunpack.c.l.b16 %v5381
        %v5927 = vunpack.c.h.b16 %v5381
        %v5928 = vunpack.c.l.b16 %v5382
        %v5929 = vunpack.c.h.b16 %v5382
        %v5930 = vunpack.c.l.b16 %v5383
        %v5931 = vunpack.c.h.b16 %v5383
        %v5932 = vunpack.c.l.b16 %v5384
        %v5933 = vunpack.c.h.b16 %v5384
        %v5934 = vunpack.c.l.b16 %v5385
        %v5935 = vunpack.c.h.b16 %v5385
        %v5936 = vunpack.c.l.b16 %v5386
        %v5937 = vunpack.c.h.b16 %v5386
        %v5938 = vunpack.c.l.b16 %v5387
        %v5939 = vunpack.c.h.b16 %v5387
        %v5940 = vunpack.c.l.b16 %v5388
        %v5941 = vunpack.c.h.b16 %v5388
        %v5942 = vunpack.c.l.b16 %v5389
        %v5943 = vunpack.c.h.b16 %v5389
        %v5944 = vunpack.c.l.b16 %v5390
        %v5945 = vunpack.c.h.b16 %v5390
        %v5946 = vunpack.c.l.b16 %v5391
        %v5947 = vunpack.c.h.b16 %v5391
        %v5948 = vunpack.c.l.b16 %v5392
        %v5949 = vunpack.c.h.b16 %v5392
        %v5950 = vunpack.c.l.b16 %v5393
        %v5951 = vunpack.c.h.b16 %v5393
        %v5952 = vunpack.c.l.b16 %v5394
        %v5953 = vunpack.c.h.b16 %v5394
        %v5954 = vunpack.c.l.b16 %v5395
        %v5955 = vunpack.c.h.b16 %v5395
        %v5956 = vunpack.c.l.b16 %v5396
        %v5957 = vunpack.c.h.b16 %v5396
        %v5958 = vunpack.c.l.b16 %v5397
        %v5959 = vunpack.c.h.b16 %v5397
        %v5960 = vunpack.c.l.b16 %v5398
        %v5961 = vunpack.c.h.b16 %v5398
        %v5962 = vunpack.c.l.b16 %v5399
        %v5963 = vunpack.c.h.b16 %v5399
        %v5964 = vunpack.c.l.b16 %v5400
        %v5965 = vunpack.c.h.b16 %v5400
        %v5966 = vunpack.c.l.b16 %v5401
        %v5967 = vunpack.c.h.b16 %v5401
        %v5968 = vunpack.c.l.b16 %v5402
        %v5969 = vunpack.c.h.b16 %v5402
        %v5970 = vunpack.c.l.b16 %v5403
        %v5971 = vunpack.c.h.b16 %v5403
        %v5972 = vunpack.c.l.b16 %v5404
        %v5973 = vunpack.c.h.b16 %v5404
        %v5974 = vunpack.c.l.b16 %v5405
        %v5975 = vunpack.c.h.b16 %v5405
        %v5976 = vunpack.c.l.b16 %v5406
        %v5977 = vunpack.c.h.b16 %v5406
        %v5978 = vunpack.c.l.b16 %v5407
        %v5979 = vunpack.c.h.b16 %v5407
        %v5980 = vunpack.c.l.b16 %v5408
        %v5981 = vunpack.c.h.b16 %v5408
        %v5982 = vunpack.c.l.b16 %v5409
        %v5983 = vunpack.c.h.b16 %v5409
        %v5984 = vunpack.c.l.b16 %v5410
        %v5985 = vunpack.c.h.b16 %v5410
        %v5986 = vunpack.c.l.b16 %v5411
        %v5987 = vunpack.c.h.b16 %v5411
        %v5988 = vunpack.c.l.b16 %v5412
        %v5989 = vunpack.c.h.b16 %v5412
        %v5990 = vunpack.c.l.b16 %v5413
        %v5991 = vunpack.c.h.b16 %v5413
        %v5992 = vunpack.c.l.b16 %v5414
        %v5993 = vunpack.c.h.b16 %v5414
        %v5994 = vunpack.c.l.b16 %v5415
        %v5995 = vunpack.c.h.b16 %v5415
        %v5996 = vunpack.c.l.b16 %v5416
        %v5997 = vunpack.c.h.b16 %v5416
        %v5998 = vunpack.c.l.b16 %v5417
        %v5999 = vunpack.c.h.b16 %v5417
        %v6000 = vunpack.c.l.b16 %v5418
        %v6001 = vunpack.c.h.b16 %v5418
        %v6002 = vunpack.c.l.b16 %v5419
        %v6003 = vunpack.c.h.b16 %v5419
        %v6004 = vunpack.c.l.b16 %v5420
        %v6005 = vunpack.c.h.b16 %v5420
        %v6006 = vunpack.c.l.b16 %v5421
        %v6007 = vunpack.c.h.b16 %v5421
        %v6008 = vunpack.c.l.b16 %v5422
        %v6009 = vunpack.c.h.b16 %v5422
        %v6010 = vunpack.c.l.b16 %v5423
        %v6011 = vunpack.c.h.b16 %v5423
        %v6012 = vunpack.c.l.b16 %v5424
        %v6013 = vunpack.c.h.b16 %v5424
        %v6014 = vunpack.c.l.b16 %v5425
        %v6015 = vunpack.c.h.b16 %v5425
        %v6016 = vunpack.c.l.b16 %v5426
        %v6017 = vunpack.c.h.b16 %v5426
        %v6018 = vunpack.c.l.b16 %v5427
        %v6019 = vunpack.c.h.b16 %v5427
        %v6020 = vunpack.c.l.b16 %v5428
        %v6021 = vunpack.c.h.b16 %v5428
        %v6022 = vunpack.c.l.b16 %v5429
        %v6023 = vunpack.c.h.b16 %v5429
        %v6024 = vunpack.c.l.b16 %v5430
        %v6025 = vunpack.c.h.b16 %v5430
        %v6026 = vunpack.c.l.b16 %v5431
        %v6027 = vunpack.c.h.b16 %v5431
        %v6028 = vunpack.c.l.b16 %v5432
        %v6029 = vunpack.c.h.b16 %v5432
        %v6030 = vunpack.c.l.b16 %v5433
        %v6031 = vunpack.c.h.b16 %v5433
        %v6032 = vunpack.c.l.b16 %v5434
        %v6033 = vunpack.c.h.b16 %v5434
        %v6034 = vunpack.c.l.b16 %v5435
        %v6035 = vunpack.c.h.b16 %v5435
        %v6036 = vunpack.c.l.b16 %v5436
        %v6037 = vunpack.c.h.b16 %v5436
        %v6038 = vunpack.c.l.b16 %v5437
        %v6039 = vunpack.c.h.b16 %v5437
        %v6040 = vunpack.c.l.b16 %v5438
        %v6041 = vunpack.c.h.b16 %v5438
        %v6042 = vunpack.c.l.b16 %v5439
        %v6043 = vunpack.c.h.b16 %v5439
        %v6044 = vunpack.c.l.b16 %v5440
        %v6045 = vunpack.c.h.b16 %v5440
        %v6046 = vunpack.c.l.b16 %v5441
        %v6047 = vunpack.c.h.b16 %v5441
        %v6048 = vunpack.c.l.b16 %v5442
        %v6049 = vunpack.c.h.b16 %v5442
        %v6050 = vunpack.c.l.b16 %v5443
        %v6051 = vunpack.c.h.b16 %v5443
        %v6052 = vunpack.c.l.b16 %v5444
        %v6053 = vunpack.c.h.b16 %v5444
        %v6054 = vunpack.c.l.b16 %v5445
        %v6055 = vunpack.c.h.b16 %v5445
        %v6056 = vunpack.c.l.b16 %v5446
        %v6057 = vunpack.c.h.b16 %v5446
        %v6058 = vunpack.c.l.b16 %v5447
        %v6059 = vunpack.c.h.b16 %v5447
        %v6060 = vunpack.c.l.b16 %v5448
        %v6061 = vunpack.c.h.b16 %v5448
        %v6062 = vunpack.c.l.b16 %v5449
        %v6063 = vunpack.c.h.b16 %v5449
        %v6064 = vunpack.c.l.b16 %v5450
        %v6065 = vunpack.c.h.b16 %v5450
        %v6066 = vunpack.c.l.b16 %v5451
        %v6067 = vunpack.c.h.b16 %v5451
        %v6068 = vunpack.c.l.b16 %v5452
        %v6069 = vunpack.c.h.b16 %v5452
        %v6070 = vunpack.c.l.b16 %v5453
        %v6071 = vunpack.c.h.b16 %v5453
        %v6072 = vunpack.c.l.b16 %v5454
        %v6073 = vunpack.c.h.b16 %v5454
        %v6074 = vunpack.c.l.b16 %v5455
        %v6075 = vunpack.c.h.b16 %v5455
        %v6076 = vunpack.c.l.b16 %v5456
        %v6077 = vunpack.c.h.b16 %v5456
        %v6078 = vunpack.c.l.b16 %v5457
        %v6079 = vunpack.c.h.b16 %v5457
        %v6080 = vunpack.c.l.b16 %v5458
        %v6081 = vunpack.c.h.b16 %v5458
        %v6082 = vunpack.c.l.b16 %v5459
        %v6083 = vunpack.c.h.b16 %v5459
        %v6084 = vunpack.c.l.b16 %v5460
        %v6085 = vunpack.c.h.b16 %v5460
        %v6086 = vunpack.c.l.b16 %v5461
        %v6087 = vunpack.c.h.b16 %v5461
        %v6088 = vunpack.c.l.b16 %v5462
        %v6089 = vunpack.c.h.b16 %v5462
        %v6090 = vunpack.c.l.b16 %v5463
        %v6091 = vunpack.c.h.b16 %v5463
        %v6092 = vunpack.c.l.b16 %v5464
        %v6093 = vunpack.c.h.b16 %v5464
        %v6094 = vunpack.c.l.b16 %v5465
        %v6095 = vunpack.c.h.b16 %v5465
        %v6096 = vunpack.c.l.b16 %v5466
        %v6097 = vunpack.c.h.b16 %v5466
        %v6098 = vunpack.c.l.b16 %v5467
        %v6099 = vunpack.c.h.b16 %v5467
        %v6100 = vunpack.c.l.b16 %v5468
        %v6101 = vunpack.c.h.b16 %v5468
        %v6102 = vunpack.c.l.b16 %v5469
        %v6103 = vunpack.c.h.b16 %v5469
        %v6104 = vunpack.c.l.b16 %v5470
        %v6105 = vunpack.c.h.b16 %v5470
        %v6106 = vunpack.c.l.b16 %v5471
        %v6107 = vunpack.c.h.b16 %v5471
        %v6108 = vunpack.c.l.b16 %v5472
        %v6109 = vunpack.c.h.b16 %v5472
        %v6110 = vunpack.c.l.b16 %v5473
        %v6111 = vunpack.c.h.b16 %v5473
        %v6112 = vunpack.c.l.b16 %v5474
        %v6113 = vunpack.c.h.b16 %v5474
        %v6114 = vunpack.c.l.b16 %v5475
        %v6115 = vunpack.c.h.b16 %v5475
        %v6116 = vunpack.c.l.b16 %v5476
        %v6117 = vunpack.c.h.b16 %v5476
        %v6118 = vunpack.c.l.b16 %v5477
        %v6119 = vunpack.c.h.b16 %v5477
        %v6120 = vunpack.c.l.b16 %v5478
        %v6121 = vunpack.c.h.b16 %v5478
        %v6122 = vunpack.c.l.b16 %v5479
        %v6123 = vunpack.c.h.b16 %v5479
        %v6124 = vunpack.c.l.b16 %v5480
        %v6125 = vunpack.c.h.b16 %v5480
        %v6126 = vunpack.c.l.b16 %v5481
        %v6127 = vunpack.c.h.b16 %v5481
        %v6128 = vunpack.c.l.b16 %v5482
        %v6129 = vunpack.c.h.b16 %v5482
        %v6130 = vunpack.c.l.b16 %v5483
        %v6131 = vunpack.c.h.b16 %v5483
        %v6132 = vunpack.c.l.b16 %v5484
        %v6133 = vunpack.c.h.b16 %v5484
        %v6134 = vunpack.c.l.b16 %v5485
        %v6135 = vunpack.c.h.b16 %v5485
        %v6136 = vunpack.c.l.b16 %v5486
        %v6137 = vunpack.c.h.b16 %v5486
        %v6138 = vunpack.c.l.b16 %v5487
        %v6139 = vunpack.c.h.b16 %v5487
        %v6140 = vunpack.c.l.b16 %v5488
        %v6141 = vunpack.c.h.b16 %v5488
        %v6142 = vunpack.c.l.b16 %v5489
        %v6143 = vunpack.c.h.b16 %v5489
        %v6144 = vunpack.c.l.b16 %v5490
        %v6145 = vunpack.c.h.b16 %v5490
        %v6146 = vunpack.c.l.b16 %v5491
        %v6147 = vunpack.c.h.b16 %v5491
        %v6148 = vunpack.c.l.b16 %v5492
        %v6149 = vunpack.c.h.b16 %v5492
        %v6150 = vunpack.c.l.b16 %v5493
        %v6151 = vunpack.c.h.b16 %v5493
        %v6152 = vunpack.c.l.b16 %v5494
        %v6153 = vunpack.c.h.b16 %v5494
        %v6154 = vunpack.c.l.b16 %v5495
        %v6155 = vunpack.c.h.b16 %v5495
        %v6156 = vunpack.c.l.b16 %v5496
        %v6157 = vunpack.c.h.b16 %v5496
        %v6158 = vunpack.c.l.b16 %v5497
        %v6159 = vunpack.c.h.b16 %v5497
        %v6160 = vunpack.c.l.b16 %v5498
        %v6161 = vunpack.c.h.b16 %v5498
        %v6162 = vunpack.c.l.b16 %v5499
        %v6163 = vunpack.c.h.b16 %v5499
        %v6164 = vunpack.c.l.b16 %v5500
        %v6165 = vunpack.c.h.b16 %v5500
        %v6166 = vunpack.c.l.b16 %v5501
        %v6167 = vunpack.c.h.b16 %v5501
        %v6168 = vunpack.c.l.b16 %v5502
        %v6169 = vunpack.c.h.b16 %v5502
        %v6170 = vunpack.c.l.b16 %v5503
        %v6171 = vunpack.c.h.b16 %v5503
        %v6172 = vunpack.c.l.b16 %v5504
        %v6173 = vunpack.c.h.b16 %v5504
        %v6174 = vunpack.c.l.b16 %v5505
        %v6175 = vunpack.c.h.b16 %v5505
        %v6176 = vunpack.c.l.b16 %v5506
        %v6177 = vunpack.c.h.b16 %v5506
        %v6178 = vunpack.c.l.b16 %v5507
        %v6179 = vunpack.c.h.b16 %v5507
        %v6180 = vunpack.c.l.b16 %v5508
        %v6181 = vunpack.c.h.b16 %v5508
        %v6182 = vunpack.c.l.b16 %v5509
        %v6183 = vunpack.c.h.b16 %v5509
        %v6184 = vunpack.c.l.b16 %v5510
        %v6185 = vunpack.c.h.b16 %v5510
        %v6186 = vunpack.c.l.b16 %v5511
        %v6187 = vunpack.c.h.b16 %v5511
        %v6188 = vunpack.c.l.b16 %v5512
        %v6189 = vunpack.c.h.b16 %v5512
        %v6190 = vunpack.c.l.b16 %v5513
        %v6191 = vunpack.c.h.b16 %v5513
        %v6192 = vunpack.c.l.b16 %v5514
        %v6193 = vunpack.c.h.b16 %v5514
        %v6194 = vunpack.c.l.b16 %v5515
        %v6195 = vunpack.c.h.b16 %v5515
        %v6196 = vunpack.c.l.b16 %v5516
        %v6197 = vunpack.c.h.b16 %v5516
        %v6198 = vunpack.c.l.b16 %v5517
        %v6199 = vunpack.c.h.b16 %v5517
        %v6200 = vunpack.c.l.b16 %v5518
        %v6201 = vunpack.c.h.b16 %v5518
        %v6202 = vunpack.c.l.b16 %v5519
        %v6203 = vunpack.c.h.b16 %v5519
        %v6204 = vunpack.c.l.b16 %v5520
        %v6205 = vunpack.c.h.b16 %v5520
        %v6206 = vunpack.c.l.b16 %v5521
        %v6207 = vunpack.c.h.b16 %v5521
        %v6208 = vunpack.c.l.b16 %v5522
        %v6209 = vunpack.c.h.b16 %v5522
        %v6210 = vunpack.c.l.b16 %v5523
        %v6211 = vunpack.c.h.b16 %v5523
        %v6212 = vunpack.c.l.b16 %v5524
        %v6213 = vunpack.c.h.b16 %v5524
        %v6214 = vunpack.c.l.b16 %v5525
        %v6215 = vunpack.c.h.b16 %v5525
        %v6216 = vunpack.c.l.b16 %v5526
        %v6217 = vunpack.c.h.b16 %v5526
        %v6218 = vunpack.c.l.b16 %v5527
        %v6219 = vunpack.c.h.b16 %v5527
        %v6220 = vunpack.c.l.b16 %v5528
        %v6221 = vunpack.c.h.b16 %v5528
        %v6222 = vunpack.c.l.b16 %v5529
        %v6223 = vunpack.c.h.b16 %v5529
        %v6224 = vunpack.c.l.b16 %v5530
        %v6225 = vunpack.c.h.b16 %v5530
        %v6226 = vunpack.c.l.b16 %v5531
        %v6227 = vunpack.c.h.b16 %v5531
        %v6228 = vunpack.c.l.b16 %v5532
        %v6229 = vunpack.c.h.b16 %v5532
        %v6230 = vunpack.c.l.b16 %v5533
        %v6231 = vunpack.c.h.b16 %v5533
        %v6232 = vunpack.c.l.b16 %v5534
        %v6233 = vunpack.c.h.b16 %v5534
        %v6234 = vunpack.c.l.b16 %v5535
        %v6235 = vunpack.c.h.b16 %v5535
        %v6236 = vunpack.c.l.b16 %v5536
        %v6237 = vunpack.c.h.b16 %v5536
        %v6238 = vunpack.c.l.b16 %v5537
        %v6239 = vunpack.c.h.b16 %v5537
        %v6240 = vunpack.c.l.b16 %v5538
        %v6241 = vunpack.c.h.b16 %v5538
        %v6242 = vunpack.c.l.b16 %v5539
        %v6243 = vunpack.c.h.b16 %v5539
        %v6244 = vunpack.c.l.b16 %v5540
        %v6245 = vunpack.c.h.b16 %v5540
        %v6246 = vunpack.c.l.b16 %v5541
        %v6247 = vunpack.c.h.b16 %v5541
        %v6248 = vunpack.c.l.b16 %v5542
        %v6249 = vunpack.c.h.b16 %v5542
        %v6250 = vunpack.c.l.b16 %v5543
        %v6251 = vunpack.c.h.b16 %v5543
        %v6252 = vunpack.c.l.b16 %v5544
        %v6253 = vunpack.c.h.b16 %v5544
        %v6254 = vunpack.c.l.b16 %v5545
        %v6255 = vunpack.c.h.b16 %v5545
        %v6256 = vunpack.c.l.b16 %v5546
        %v6257 = vunpack.c.h.b16 %v5546
        %v6258 = vunpack.c.l.b16 %v5547
        %v6259 = vunpack.c.h.b16 %v5547
        %v6260 = vunpack.c.l.b16 %v5548
        %v6261 = vunpack.c.h.b16 %v5548
        %v6262 = vunpack.c.l.b16 %v5549
        %v6263 = vunpack.c.h.b16 %v5549
        %v6264 = vunpack.c.l.b16 %v5550
        %v6265 = vunpack.c.h.b16 %v5550
        %v6266 = vunpack.c.l.b16 %v5551
        %v6267 = vunpack.c.h.b16 %v5551
        %v6268 = vunpack.c.l.b16 %v5552
        %v6269 = vunpack.c.h.b16 %v5552
        %v6270 = vunpack.c.l.b16 %v5553
        %v6271 = vunpack.c.h.b16 %v5553
        %v6272 = vunpack.c.l.b16 %v5554
        %v6273 = vunpack.c.h.b16 %v5554
        %v6274 = vunpack.c.l.b16 %v5555
        %v6275 = vunpack.c.h.b16 %v5555
        %v6276 = vunpack.c.l.b16 %v5556
        %v6277 = vunpack.c.h.b16 %v5556
        %v6278 = vunpack.c.l.b16 %v5557
        %v6279 = vunpack.c.h.b16 %v5557
        %v6280 = vunpack.c.l.b16 %v5558
        %v6281 = vunpack.c.h.b16 %v5558
        %v6282 = vunpack.c.l.b16 %v5559
        %v6283 = vunpack.c.h.b16 %v5559
        %v6284 = vunpack.c.l.b16 %v5560
        %v6285 = vunpack.c.h.b16 %v5560
        %v6286 = vunpack.c.l.b16 %v5561
        %v6287 = vunpack.c.h.b16 %v5561
        %v6288 = vunpack.c.l.b16 %v5562
        %v6289 = vunpack.c.h.b16 %v5562
        %v6290 = vunpack.c.l.b16 %v5563
        %v6291 = vunpack.c.h.b16 %v5563
        %v6292 = vunpack.c.l.b16 %v5564
        %v6293 = vunpack.c.h.b16 %v5564
        %v6294 = vunpack.c.l.b16 %v5565
        %v6295 = vunpack.c.h.b16 %v5565
        %v6296 = vunpack.c.l.b16 %v5566
        %v6297 = vunpack.c.h.b16 %v5566
        %v6298 = vunpack.c.l.b16 %v5567
        %v6299 = vunpack.c.h.b16 %v5567
        %v6300 = vunpack.c.l.b16 %v5568
        %v6301 = vunpack.c.h.b16 %v5568
        %v6302 = vunpack.c.l.b16 %v5569
        %v6303 = vunpack.c.h.b16 %v5569
        %v6304 = vunpack.c.l.b16 %v5570
        %v6305 = vunpack.c.h.b16 %v5570
        %v6306 = vunpack.c.l.b16 %v5571
        %v6307 = vunpack.c.h.b16 %v5571
        %v6308 = vunpack.c.l.b16 %v5572
        %v6309 = vunpack.c.h.b16 %v5572
        %v6310 = vunpack.c.l.b16 %v5573
        %v6311 = vunpack.c.h.b16 %v5573
        %v6312 = vunpack.c.l.b16 %v5574
        %v6313 = vunpack.c.h.b16 %v5574
        %v6314 = vunpack.c.l.b16 %v5575
        %v6315 = vunpack.c.h.b16 %v5575
        %v6316 = vunpack.c.l.b16 %v5576
        %v6317 = vunpack.c.h.b16 %v5576
        %v6318 = vunpack.c.l.b16 %v5577
        %v6319 = vunpack.c.h.b16 %v5577
        %v6320 = vunpack.c.l.b16 %v5578
        %v6321 = vunpack.c.h.b16 %v5578
        %v6322 = vunpack.c.l.b16 %v5579
        %v6323 = vunpack.c.h.b16 %v5579
        %v6324 = vunpack.c.l.b16 %v5580
        %v6325 = vunpack.c.h.b16 %v5580
        %v6326 = vunpack.c.l.b16 %v5581
        %v6327 = vunpack.c.h.b16 %v5581
        %v6328 = vunpack.c.l.b16 %v5582
        %v6329 = vunpack.c.h.b16 %v5582
        %v6330 = vunpack.c.l.b16 %v5583
        %v6331 = vunpack.c.h.b16 %v5583
        %v6332 = vunpack.c.l.b16 %v5584
        %v6333 = vunpack.c.h.b16 %v5584
        %v6334 = vunpack.c.l.b16 %v5585
        %v6335 = vunpack.c.h.b16 %v5585
        %v6336 = vunpack.c.l.b16 %v5586
        %v6337 = vunpack.c.h.b16 %v5586
        %v6338 = vunpack.c.l.b16 %v5587
        %v6339 = vunpack.c.h.b16 %v5587
        %v6340 = vunpack.c.l.b16 %v5588
        %v6341 = vunpack.c.h.b16 %v5588
        %v6342 = vunpack.c.l.b16 %v5589
        %v6343 = vunpack.c.h.b16 %v5589
        %v6344 = vunpack.c.l.b16 %v5590
        %v6345 = vunpack.c.h.b16 %v5590
        %v6346 = vunpack.c.l.b16 %v5591
        %v6347 = vunpack.c.h.b16 %v5591
        %v6348 = vunpack.c.l.b16 %v5592
        %v6349 = vunpack.c.h.b16 %v5592
        %v6350 = vunpack.c.l.b16 %v5593
        %v6351 = vunpack.c.h.b16 %v5593
        %v6352 = vunpack.c.l.b16 %v5594
        %v6353 = vunpack.c.h.b16 %v5594
        %v6354 = vpack.c.b16 %v5858, %v5854
        %v6355 = vpack.c.b16 %v5859, %v5855
        %v6356 = vpack.c.b16 %v5860, %v5856
        %v6357 = vpack.c.b16 %v5861, %v5857
        %v6358 = vpack.c.b16 %v5866, %v5862
        %v6359 = vpack.c.b16 %v5867, %v5863
        %v6360 = vpack.c.b16 %v5868, %v5864
        %v6361 = vpack.c.b16 %v5869, %v5865
        %v6362 = vpack.c.b16 %v5874, %v5870
        %v6363 = vpack.c.b16 %v5875, %v5871
        %v6364 = vpack.c.b16 %v5876, %v5872
        %v6365 = vpack.c.b16 %v5877, %v5873
        %v6366 = vpack.c.b16 %v5882, %v5878
        %v6367 = vpack.c.b16 %v5883, %v5879
        %v6368 = vpack.c.b16 %v5884, %v5880
        %v6369 = vpack.c.b16 %v5885, %v5881
        %v6370 = vpack.c.b16 %v5890, %v5886
        %v6371 = vpack.c.b16 %v5891, %v5887
        %v6372 = vpack.c.b16 %v5892, %v5888
        %v6373 = vpack.c.b16 %v5893, %v5889
        %v6374 = vpack.c.b16 %v5898, %v5894
        %v6375 = vpack.c.b16 %v5899, %v5895
        %v6376 = vpack.c.b16 %v5900, %v5896
        %v6377 = vpack.c.b16 %v5901, %v5897
        %v6378 = vpack.c.b16 %v5906, %v5902
        %v6379 = vpack.c.b16 %v5907, %v5903
        %v6380 = vpack.c.b16 %v5908, %v5904
        %v6381 = vpack.c.b16 %v5909, %v5905
        %v6382 = vpack.c.b16 %v5914, %v5910
        %v6383 = vpack.c.b16 %v5915, %v5911
        %v6384 = vpack.c.b16 %v5916, %v5912
        %v6385 = vpack.c.b16 %v5917, %v5913
        %v6386 = vpack.c.b16 %v5922, %v5918
        %v6387 = vpack.c.b16 %v5923, %v5919
        %v6388 = vpack.c.b16 %v5924, %v5920
        %v6389 = vpack.c.b16 %v5925, %v5921
        %v6390 = vpack.c.b16 %v5930, %v5926
        %v6391 = vpack.c.b16 %v5931, %v5927
        %v6392 = vpack.c.b16 %v5932, %v5928
        %v6393 = vpack.c.b16 %v5933, %v5929
        %v6394 = vpack.c.b16 %v5938, %v5934
        %v6395 = vpack.c.b16 %v5939, %v5935
        %v6396 = vpack.c.b16 %v5940, %v5936
        %v6397 = vpack.c.b16 %v5941, %v5937
        %v6398 = vpack.c.b16 %v5946, %v5942
        %v6399 = vpack.c.b16 %v5947, %v5943
        %v6400 = vpack.c.b16 %v5948, %v5944
        %v6401 = vpack.c.b16 %v5949, %v5945
        %v6402 = vpack.c.b16 %v5954, %v5950
        %v6403 = vpack.c.b16 %v5955, %v5951
        %v6404 = vpack.c.b16 %v5956, %v5952
        %v6405 = vpack.c.b16 %v5957, %v5953
        %v6406 = vpack.c.b16 %v5962, %v5958
        %v6407 = vpack.c.b16 %v5963, %v5959
        %v6408 = vpack.c.b16 %v5964, %v5960
        %v6409 = vpack.c.b16 %v5965, %v5961
        %v6410 = vpack.c.b16 %v5970, %v5966
        %v6411 = vpack.c.b16 %v5971, %v5967
        %v6412 = vpack.c.b16 %v5972, %v5968
        %v6413 = vpack.c.b16 %v5973, %v5969
        %v6414 = vpack.c.b16 %v5978, %v5974
        %v6415 = vpack.c.b16 %v5979, %v5975
        %v6416 = vpack.c.b16 %v5980, %v5976
        %v6417 = vpack.c.b16 %v5981, %v5977
        %v6418 = vpack.c.b16 %v5986, %v5982
        %v6419 = vpack.c.b16 %v5987, %v5983
        %v6420 = vpack.c.b16 %v5988, %v5984
        %v6421 = vpack.c.b16 %v5989, %v5985
        %v6422 = vpack.c.b16 %v5994, %v5990
        %v6423 = vpack.c.b16 %v5995, %v5991
        %v6424 = vpack.c.b16 %v5996, %v5992
        %v6425 = vpack.c.b16 %v5997, %v5993
        %v6426 = vpack.c.b16 %v6002, %v5998
        %v6427 = vpack.c.b16 %v6003, %v5999
        %v6428 = vpack.c.b16 %v6004, %v6000
        %v6429 = vpack.c.b16 %v6005, %v6001
        %v6430 = vpack.c.b16 %v6010, %v6006
        %v6431 = vpack.c.b16 %v6011, %v6007
        %v6432 = vpack.c.b16 %v6012, %v6008
        %v6433 = vpack.c.b16 %v6013, %v6009
        %v6434 = vpack.c.b16 %v6018, %v6014
        %v6435 = vpack.c.b16 %v6019, %v6015
        %v6436 = vpack.c.b16 %v6020, %v6016
        %v6437 = vpack.c.b16 %v6021, %v6017
        %v6438 = vpack.c.b16 %v6026, %v6022
        %v6439 = vpack.c.b16 %v6027, %v6023
        %v6440 = vpack.c.b16 %v6028, %v6024
        %v6441 = vpack.c.b16 %v6029, %v6025
        %v6442 = vpack.c.b16 %v6034, %v6030
        %v6443 = vpack.c.b16 %v6035, %v6031
        %v6444 = vpack.c.b16 %v6036, %v6032
        %v6445 = vpack.c.b16 %v6037, %v6033
        %v6446 = vpack.c.b16 %v6042, %v6038
        %v6447 = vpack.c.b16 %v6043, %v6039
        %v6448 = vpack.c.b16 %v6044, %v6040
        %v6449 = vpack.c.b16 %v6045, %v6041
        %v6450 = vpack.c.b16 %v6050, %v6046
        %v6451 = vpack.c.b16 %v6051, %v6047
        %v6452 = vpack.c.b16 %v6052, %v6048
        %v6453 = vpack.c.b16 %v6053, %v6049
        %v6454 = vpack.c.b16 %v6058, %v6054
        %v6455 = vpack.c.b16 %v6059, %v6055
        %v6456 = vpack.c.b16 %v6060, %v6056
        %v6457 = vpack.c.b16 %v6061, %v6057
        %v6458 = vpack.c.b16 %v6066, %v6062
        %v6459 = vpack.c.b16 %v6067, %v6063
        %v6460 = vpack.c.b16 %v6068, %v6064
        %v6461 = vpack.c.b16 %v6069, %v6065
        %v6462 = vpack.c.b16 %v6074, %v6070
        %v6463 = vpack.c.b16 %v6075, %v6071
        %v6464 = vpack.c.b16 %v6076, %v6072
        %v6465 = vpack.c.b16 %v6077, %v6073
        %v6466 = vpack.c.b16 %v6082, %v6078
        %v6467 = vpack.c.b16 %v6083, %v6079
        %v6468 = vpack.c.b16 %v6084, %v6080
        %v6469 = vpack.c.b16 %v6085, %v6081
        %v6470 = vpack.c.b16 %v6090, %v6086
        %v6471 = vpack.c.b16 %v6091, %v6087
        %v6472 = vpack.c.b16 %v6092, %v6088
        %v6473 = vpack.c.b16 %v6093, %v6089
        %v6474 = vpack.c.b16 %v6098, %v6094
        %v6475 = vpack.c.b16 %v6099, %v6095
        %v6476 = vpack.c.b16 %v6100, %v6096
        %v6477 = vpack.c.b16 %v6101, %v6097
        %v6478 = vpack.c.b16 %v6106, %v6102
        %v6479 = vpack.c.b16 %v6107, %v6103
        %v6480 = vpack.c.b16 %v6108, %v6104
        %v6481 = vpack.c.b16 %v6109, %v6105
        %v6482 = vpack.c.b16 %v6114, %v6110
        %v6483 = vpack.c.b16 %v6115, %v6111
        %v6484 = vpack.c.b16 %v6116, %v6112
        %v6485 = vpack.c.b16 %v6117, %v6113
        %v6486 = vpack.c.b16 %v6122, %v6118
        %v6487 = vpack.c.b16 %v6123, %v6119
        %v6488 = vpack.c.b16 %v6124, %v6120
        %v6489 = vpack.c.b16 %v6125, %v6121
        %v6490 = vpack.c.b16 %v6130, %v6126
        %v6491 = vpack.c.b16 %v6131, %v6127
        %v6492 = vpack.c.b16 %v6132, %v6128
        %v6493 = vpack.c.b16 %v6133, %v6129
        %v6494 = vpack.c.b16 %v6138, %v6134
        %v6495 = vpack.c.b16 %v6139, %v6135
        %v6496 = vpack.c.b16 %v6140, %v6136
        %v6497 = vpack.c.b16 %v6141, %v6137
        %v6498 = vpack.c.b16 %v6146, %v6142
        %v6499 = vpack.c.b16 %v6147, %v6143
        %v6500 = vpack.c.b16 %v6148, %v6144
        %v6501 = vpack.c.b16 %v6149, %v6145
        %v6502 = vpack.c.b16 %v6154, %v6150
        %v6503 = vpack.c.b16 %v6155, %v6151
        %v6504 = vpack.c.b16 %v6156, %v6152
        %v6505 = vpack.c.b16 %v6157, %v6153
        %v6506 = vpack.c.b16 %v6162, %v6158
        %v6507 = vpack.c.b16 %v6163, %v6159
        %v6508 = vpack.c.b16 %v6164, %v6160
        %v6509 = vpack.c.b16 %v6165, %v6161
        %v6510 = vpack.c.b16 %v6170, %v6166
        %v6511 = vpack.c.b16 %v6171, %v6167
        %v6512 = vpack.c.b16 %v6172, %v6168
        %v6513 = vpack.c.b16 %v6173, %v6169
        %v6514 = vpack.c.b16 %v6178, %v6174
        %v6515 = vpack.c.b16 %v6179, %v6175
        %v6516 = vpack.c.b16 %v6180, %v6176
        %v6517 = vpack.c.b16 %v6181, %v6177
        %v6518 = vpack.c.b16 %v6186, %v6182
        %v6519 = vpack.c.b16 %v6187, %v6183
        %v6520 = vpack.c.b16 %v6188, %v6184
        %v6521 = vpack.c.b16 %v6189, %v6185
        %v6522 = vpack.c.b16 %v6194, %v6190
        %v6523 = vpack.c.b16 %v6195, %v6191
        %v6524 = vpack.c.b16 %v6196, %v6192
        %v6525 = vpack.c.b16 %v6197, %v6193
        %v6526 = vpack.c.b16 %v6202, %v6198
        %v6527 = vpack.c.b16 %v6203, %v6199
        %v6528 = vpack.c.b16 %v6204, %v6200
        %v6529 = vpack.c.b16 %v6205, %v6201
        %v6530 = vpack.c.b16 %v6210, %v6206
        %v6531 = vpack.c.b16 %v6211, %v6207
        %v6532 = vpack.c.b16 %v6212, %v6208
        %v6533 = vpack.c.b16 %v6213, %v6209
        %v6534 = vpack.c.b16 %v6218, %v6214
        %v6535 = vpack.c.b16 %v6219, %v6215
        %v6536 = vpack.c.b16 %v6220, %v6216
        %v6537 = vpack.c.b16 %v6221, %v6217
        %v6538 = vpack.c.b16 %v6226, %v6222
        %v6539 = vpack.c.b16 %v6227, %v6223
        %v6540 = vpack.c.b16 %v6228, %v6224
        %v6541 = vpack.c.b16 %v6229, %v6225
        %v6542 = vpack.c.b16 %v6234, %v6230
        %v6543 = vpack.c.b16 %v6235, %v6231
        %v6544 = vpack.c.b16 %v6236, %v6232
        %v6545 = vpack.c.b16 %v6237, %v6233
        %v6546 = vpack.c.b16 %v6242, %v6238
        %v6547 = vpack.c.b16 %v6243, %v6239
        %v6548 = vpack.c.b16 %v6244, %v6240
        %v6549 = vpack.c.b16 %v6245, %v6241
        %v6550 = vpack.c.b16 %v6250, %v6246
        %v6551 = vpack.c.b16 %v6251, %v6247
        %v6552 = vpack.c.b16 %v6252, %v6248
        %v6553 = vpack.c.b16 %v6253, %v6249
        %v6554 = vpack.c.b16 %v6258, %v6254
        %v6555 = vpack.c.b16 %v6259, %v6255
        %v6556 = vpack.c.b16 %v6260, %v6256
        %v6557 = vpack.c.b16 %v6261, %v6257
        %v6558 = vpack.c.b16 %v6266, %v6262
        %v6559 = vpack.c.b16 %v6267, %v6263
        %v6560 = vpack.c.b16 %v6268, %v6264
        %v6561 = vpack.c.b16 %v6269, %v6265
        %v6562 = vpack.c.b16 %v6274, %v6270
        %v6563 = vpack.c.b16 %v6275, %v6271
        %v6564 = vpack.c.b16 %v6276, %v6272
        %v6565 = vpack.c.b16 %v6277, %v6273
        %v6566 = vpack.c.b16 %v6282, %v6278
        %v6567 = vpack.c.b16 %v6283, %v6279
        %v6568 = vpack.c.b16 %v6284, %v6280
        %v6569 = vpack.c.b16 %v6285, %v6281
        %v6570 = vpack.c.b16 %v6290, %v6286
        %v6571 = vpack.c.b16 %v6291, %v6287
        %v6572 = vpack.c.b16 %v6292, %v6288
        %v6573 = vpack.c.b16 %v6293, %v6289
        %v6574 = vpack.c.b16 %v6298, %v6294
        %v6575 = vpack.c.b16 %v6299, %v6295
        %v6576 = vpack.c.b16 %v6300, %v6296
        %v6577 = vpack.c.b16 %v6301, %v6297
        %v6578 = vpack.c.b16 %v6306, %v6302
        %v6579 = vpack.c.b16 %v6307, %v6303
        %v6580 = vpack.c.b16 %v6308, %v6304
        %v6581 = vpack.c.b16 %v6309, %v6305
        %v6582 = vpack.c.b16 %v6314, %v6310
        %v6583 = vpack.c.b16 %v6315, %v6311
        %v6584 = vpack.c.b16 %v6316, %v6312
        %v6585 = vpack.c.b16 %v6317, %v6313
        %v6586 = vpack.c.b16 %v6322, %v6318
        %v6587 = vpack.c.b16 %v6323, %v6319
        %v6588 = vpack.c.b16 %v6324, %v6320
        %v6589 = vpack.c.b16 %v6325, %v6321
        %v6590 = vpack.c.b16 %v6330, %v6326
        %v6591 = vpack.c.b16 %v6331, %v6327
        %v6592 = vpack.c.b16 %v6332, %v6328
        %v6593 = vpack.c.b16 %v6333, %v6329
        %v6594 = vpack.c.b16 %v6338, %v6334
        %v6595 = vpack.c.b16 %v6339, %v6335
        %v6596 = vpack.c.b16 %v6340, %v6336
        %v6597 = vpack.c.b16 %v6341, %v6337
        %v6598 = vpack.c.b16 %v6346, %v6342
        %v6599 = vpack.c.b16 %v6347, %v6343
        %v6600 = vpack.c.b16 %v6348, %v6344
        %v6601 = vpack.c.b16 %v6349, %v6345
        %v6602 = vpack.c.b16 %v6350, %v6350
        %v6603 = vpack.c.b16 %v6351, %v6351
        %v6604 = vpack.c.b16 %v6352, %v6352
        %v6605 = vpack.c.b16 %v6353, %v6353
        %v6855 = vlaneseq
        %v6856 = vshrl.u32 %v6855, 7
        %v6857 = vsub.s32 0, %v6856
        %v6858 = vrot.slane %v5603, %v6857
        %v6859 = vlaneseq
        %v6860 = vshrl.u32 %v6859, 7
        %v6861 = vsub.s32 1, %v6860
        %v6862 = vrot.slane %v5603, %v6861
        %v6863 = vlaneseq
        %v6864 = vshrl.u32 %v6863, 7
        %v6865 = vsub.s32 2, %v6864
        %v6866 = vrot.slane %v5603, %v6865
        %v6867 = vlaneseq
        %v6868 = vshrl.u32 %v6867, 7
        %v6869 = vsub.s32 3, %v6868
        %v6870 = vrot.slane %v5603, %v6869
        %vm6875 = vcmask 850944
        %v6877 = vsel %vm6875, %v5602, 0
        %vm6879 = vcmask 1043456
        %v6881 = vsel %vm6879, %v6602, 0
        %v6884 = vsel %vm6879, %v6603, 0
        %v6887 = vsel %vm6879, %v6604, 0
        %v6890 = vsel %vm6879, %v6605, 0
        %6892 = vmatprep.subr.bf16.mxu0 %v6355
        %6893 = vmatpush1.bf16.msra.mxu0 %v6354
        %6894 = vmatprep.subr.bf16.mxu0 %v6359
        %6895 = vmatpush1.bf16.msra.mxu0 %v6358
        %6896 = vmatprep.subr.bf16.mxu0 %v6363
        %6897 = vmatpush1.bf16.msra.mxu0 %v6362
        %6898 = vmatprep.subr.bf16.mxu0 %v6367
        %6899 = vmatpush1.bf16.msra.mxu0 %v6366
        %6900 = vmatprep.subr.bf16.mxu0 %v6371
        %6901 = vmatpush1.bf16.msra.mxu0 %v6370
        %6902 = vmatprep.subr.bf16.mxu0 %v6375
        %6903 = vmatpush1.bf16.msra.mxu0 %v6374
        %6904 = vmatprep.subr.bf16.mxu0 %v6379
        %6905 = vmatpush1.bf16.msra.mxu0 %v6378
        %6906 = vmatprep.subr.bf16.mxu0 %v6383
        %6907 = vmatpush1.bf16.msra.mxu0 %v6382
        %6908 = vmatprep.subr.bf16.mxu0 %v6387
        %6909 = vmatpush1.bf16.msra.mxu0 %v6386
        %6910 = vmatprep.subr.bf16.mxu0 %v6391
        %6911 = vmatpush1.bf16.msra.mxu0 %v6390
        %6912 = vmatprep.subr.bf16.mxu0 %v6395
        %6913 = vmatpush1.bf16.msra.mxu0 %v6394
        %6914 = vmatprep.subr.bf16.mxu0 %v6399
        %6915 = vmatpush1.bf16.msra.mxu0 %v6398
        %6916 = vmatprep.subr.bf16.mxu0 %v6403
        %6917 = vmatpush1.bf16.msra.mxu0 %v6402
        %6918 = vmatprep.subr.bf16.mxu0 %v6407
        %6919 = vmatpush1.bf16.msra.mxu0 %v6406
        %6920 = vmatprep.subr.bf16.mxu0 %v6411
        %6921 = vmatpush1.bf16.msra.mxu0 %v6410
        %6922 = vmatprep.subr.bf16.mxu0 %v6415
        %6923 = vmatpush1.bf16.msra.mxu0 %v6414
        %6924 = vmatprep.mubr.bf16.mxu0 %v5596
        %6925 = vmatmul.mubr.bf16.gmra.mrb[0].mxu0 %v5595
        %v6926 = vpop.f32.mrb[0].mxu0
        %v6927 = vadd.f32 %v6858, %v6926
        %v6928 = vpop.f32.mrb[0].mxu0
        %v6929 = vadd.f32 %v6862, %v6928
        %v6930 = vpop.f32.mrb[0].mxu0
        %v6931 = vpop.f32.mrb[0].mxu0
        %6932 = vdwg.mxu0
        %6933 = vmatprep.subr.bf16.mxu0 %v6419
        %6934 = vmatpush1.bf16.msra.mxu0 %v6418
        %6935 = vmatprep.subr.bf16.mxu0 %v6423
        %6936 = vmatpush1.bf16.msra.mxu0 %v6422
        %6937 = vmatprep.subr.bf16.mxu0 %v6427
        %6938 = vmatpush1.bf16.msra.mxu0 %v6426
        %6939 = vmatprep.subr.bf16.mxu0 %v6431
        %6940 = vmatpush1.bf16.msra.mxu0 %v6430
        %6941 = vmatprep.subr.bf16.mxu0 %v6435
        %6942 = vmatpush1.bf16.msra.mxu0 %v6434
        %6943 = vmatprep.subr.bf16.mxu0 %v6439
        %6944 = vmatpush1.bf16.msra.mxu0 %v6438
        %6945 = vmatprep.subr.bf16.mxu0 %v6443
        %6946 = vmatpush1.bf16.msra.mxu0 %v6442
        %6947 = vmatprep.subr.bf16.mxu0 %v6447
        %6948 = vmatpush1.bf16.msra.mxu0 %v6446
        %6949 = vmatprep.subr.bf16.mxu0 %v6451
        %6950 = vmatpush1.bf16.msra.mxu0 %v6450
        %6951 = vmatprep.subr.bf16.mxu0 %v6455
        %6952 = vmatpush1.bf16.msra.mxu0 %v6454
        %6953 = vmatprep.subr.bf16.mxu0 %v6459
        %6954 = vmatpush1.bf16.msra.mxu0 %v6458
        %6955 = vmatprep.subr.bf16.mxu0 %v6463
        %6956 = vmatpush1.bf16.msra.mxu0 %v6462
        %6957 = vmatprep.subr.bf16.mxu0 %v6467
        %6958 = vmatpush1.bf16.msra.mxu0 %v6466
        %6959 = vmatprep.subr.bf16.mxu0 %v6471
        %6960 = vmatpush1.bf16.msra.mxu0 %v6470
        %6961 = vmatprep.subr.bf16.mxu0 %v6475
        %6962 = vmatpush1.bf16.msra.mxu0 %v6474
        %6963 = vmatprep.subr.bf16.mxu0 %v6479
        %6964 = vmatpush1.bf16.msra.mxu0 %v6478
        %6965 = vmatprep.mubr.bf16.mxu0 %v5598
        %6966 = vmatmul.mubr.bf16.gmra.mrb[0].mxu0 %v5597
        %v6967 = vpop.f32.mrb[0].mxu0
        %v6968 = vadd.f32 %v6927, %v6967
        %v6969 = vpop.f32.mrb[0].mxu0
        %v6970 = vadd.f32 %v6929, %v6969
        %v6971 = vpop.f32.mrb[0].mxu0
        %v6972 = vpop.f32.mrb[0].mxu0
        %6973 = vdwg.mxu0
        %6974 = vmatprep.subr.bf16.mxu0 %v6483
        %6975 = vmatpush1.bf16.msra.mxu0 %v6482
        %6976 = vmatprep.subr.bf16.mxu0 %v6487
        %6977 = vmatpush1.bf16.msra.mxu0 %v6486
        %6978 = vmatprep.subr.bf16.mxu0 %v6491
        %6979 = vmatpush1.bf16.msra.mxu0 %v6490
        %6980 = vmatprep.subr.bf16.mxu0 %v6495
        %6981 = vmatpush1.bf16.msra.mxu0 %v6494
        %6982 = vmatprep.subr.bf16.mxu0 %v6499
        %6983 = vmatpush1.bf16.msra.mxu0 %v6498
        %6984 = vmatprep.subr.bf16.mxu0 %v6503
        %6985 = vmatpush1.bf16.msra.mxu0 %v6502
        %6986 = vmatprep.subr.bf16.mxu0 %v6507
        %6987 = vmatpush1.bf16.msra.mxu0 %v6506
        %6988 = vmatprep.subr.bf16.mxu0 %v6511
        %6989 = vmatpush1.bf16.msra.mxu0 %v6510
        %6990 = vmatprep.subr.bf16.mxu0 %v6515
        %6991 = vmatpush1.bf16.msra.mxu0 %v6514
        %6992 = vmatprep.subr.bf16.mxu0 %v6519
        %6993 = vmatpush1.bf16.msra.mxu0 %v6518
        %6994 = vmatprep.subr.bf16.mxu0 %v6523
        %6995 = vmatpush1.bf16.msra.mxu0 %v6522
        %6996 = vmatprep.subr.bf16.mxu0 %v6527
        %6997 = vmatpush1.bf16.msra.mxu0 %v6526
        %6998 = vmatprep.subr.bf16.mxu0 %v6531
        %6999 = vmatpush1.bf16.msra.mxu0 %v6530
        %7000 = vmatprep.subr.bf16.mxu0 %v6535
        %7001 = vmatpush1.bf16.msra.mxu0 %v6534
        %7002 = vmatprep.subr.bf16.mxu0 %v6539
        %7003 = vmatpush1.bf16.msra.mxu0 %v6538
        %7004 = vmatprep.subr.bf16.mxu0 %v6543
        %7005 = vmatpush1.bf16.msra.mxu0 %v6542
        %7006 = vmatprep.mubr.bf16.mxu0 %v5600
        %7007 = vmatmul.mubr.bf16.gmra.mrb[0].mxu0 %v5599
        %v7008 = vpop.f32.mrb[0].mxu0
        %v7009 = vadd.f32 %v6968, %v7008
        %v7010 = vpop.f32.mrb[0].mxu0
        %v7011 = vadd.f32 %v6970, %v7010
        %v7012 = vpop.f32.mrb[0].mxu0
        %v7013 = vpop.f32.mrb[0].mxu0
        %7014 = vdwg.mxu0
        %7015 = vmatprep.subr.bf16.mxu0 %v6547
        %7016 = vmatpush1.bf16.msra.mxu0 %v6546
        %7017 = vmatprep.subr.bf16.mxu0 %v6551
        %7018 = vmatpush1.bf16.msra.mxu0 %v6550
        %7019 = vmatprep.subr.bf16.mxu0 %v6555
        %7020 = vmatpush1.bf16.msra.mxu0 %v6554
        %7021 = vmatprep.subr.bf16.mxu0 %v6559
        %7022 = vmatpush1.bf16.msra.mxu0 %v6558
        %7023 = vmatprep.subr.bf16.mxu0 %v6563
        %7024 = vmatpush1.bf16.msra.mxu0 %v6562
        %7025 = vmatprep.subr.bf16.mxu0 %v6567
        %7026 = vmatpush1.bf16.msra.mxu0 %v6566
        %7027 = vmatprep.subr.bf16.mxu0 %v6571
        %7028 = vmatpush1.bf16.msra.mxu0 %v6570
        %7029 = vmatprep.subr.bf16.mxu0 %v6575
        %7030 = vmatpush1.bf16.msra.mxu0 %v6574
        %7031 = vmatprep.subr.bf16.mxu0 %v6579
        %7032 = vmatpush1.bf16.msra.mxu0 %v6578
        %7033 = vmatprep.subr.bf16.mxu0 %v6583
        %7034 = vmatpush1.bf16.msra.mxu0 %v6582
        %7035 = vmatprep.subr.bf16.mxu0 %v6587
        %7036 = vmatpush1.bf16.msra.mxu0 %v6586
        %7037 = vmatprep.subr.bf16.mxu0 %v6591
        %7038 = vmatpush1.bf16.msra.mxu0 %v6590
        %7039 = vmatprep.subr.bf16.mxu0 %v6595
        %7040 = vmatpush1.bf16.msra.mxu0 %v6594
        %7041 = vmatprep.subr.bf16.mxu0 %v6599
        %7042 = vmatpush1.bf16.msra.mxu0 %v6598
        %7043 = vmatprep.subr.bf16.mxu0 %v6884
        %7044 = vmatpush1.bf16.msra.mxu0 %v6881
        %7045 = vmatprep.subr.bf16.mxu0 0
        %7046 = vmatpush1.bf16.msra.mxu0 0
        %7047 = vmatprep.mubr.bf16.mxu0 %v6877
        %7048 = vmatmul.mubr.bf16.gmra.mrb[0].mxu0 %v5601
        %v7049 = vpop.f32.mrb[0].mxu0
        %v7050 = vadd.f32 %v7009, %v7049
        %v7051 = vpop.f32.mrb[0].mxu0
        %v7052 = vadd.f32 %v7011, %v7051
        %v7053 = vpop.f32.mrb[0].mxu0
        %v7054 = vpop.f32.mrb[0].mxu0
        %7055 = vdwg.mxu0
        %7056 = vmatprep.subr.bf16.mxu0 %v6357
        %7057 = vmatpush1.bf16.msra.mxu0 %v6356
        %7058 = vmatprep.subr.bf16.mxu0 %v6361
        %7059 = vmatpush1.bf16.msra.mxu0 %v6360
        %7060 = vmatprep.subr.bf16.mxu0 %v6365
        %7061 = vmatpush1.bf16.msra.mxu0 %v6364
        %7062 = vmatprep.subr.bf16.mxu0 %v6369
        %7063 = vmatpush1.bf16.msra.mxu0 %v6368
        %7064 = vmatprep.subr.bf16.mxu0 %v6373
        %7065 = vmatpush1.bf16.msra.mxu0 %v6372
        %7066 = vmatprep.subr.bf16.mxu0 %v6377
        %7067 = vmatpush1.bf16.msra.mxu0 %v6376
        %7068 = vmatprep.subr.bf16.mxu0 %v6381
        %7069 = vmatpush1.bf16.msra.mxu0 %v6380
        %7070 = vmatprep.subr.bf16.mxu0 %v6385
        %7071 = vmatpush1.bf16.msra.mxu0 %v6384
        %7072 = vmatprep.subr.bf16.mxu0 %v6389
        %7073 = vmatpush1.bf16.msra.mxu0 %v6388
        %7074 = vmatprep.subr.bf16.mxu0 %v6393
        %7075 = vmatpush1.bf16.msra.mxu0 %v6392
        %7076 = vmatprep.subr.bf16.mxu0 %v6397
        %7077 = vmatpush1.bf16.msra.mxu0 %v6396
        %7078 = vmatprep.subr.bf16.mxu0 %v6401
        %7079 = vmatpush1.bf16.msra.mxu0 %v6400
        %7080 = vmatprep.subr.bf16.mxu0 %v6405
        %7081 = vmatpush1.bf16.msra.mxu0 %v6404
        %7082 = vmatprep.subr.bf16.mxu0 %v6409
        %7083 = vmatpush1.bf16.msra.mxu0 %v6408
        %7084 = vmatprep.subr.bf16.mxu0 %v6413
        %7085 = vmatpush1.bf16.msra.mxu0 %v6412
        %7086 = vmatprep.subr.bf16.mxu0 %v6417
        %7087 = vmatpush1.bf16.msra.mxu0 %v6416
        %7088 = vmatprep.mubr.bf16.mxu0 %v5596
        %7089 = vmatmul.mubr.bf16.gmra.mrb[0].mxu0 %v5595
        %v7090 = vpop.f32.mrb[0].mxu0
        %v7091 = vadd.f32 %v6866, %v7090
        %v7092 = vpop.f32.mrb[0].mxu0
        %v7093 = vadd.f32 %v6870, %v7092
        %v7094 = vpop.f32.mrb[0].mxu0
        %v7095 = vpop.f32.mrb[0].mxu0
        %7096 = vdwg.mxu0
        %7097 = vmatprep.subr.bf16.mxu0 %v6421
        %7098 = vmatpush1.bf16.msra.mxu0 %v6420
        %7099 = vmatprep.subr.bf16.mxu0 %v6425
        %7100 = vmatpush1.bf16.msra.mxu0 %v6424
        %7101 = vmatprep.subr.bf16.mxu0 %v6429
        %7102 = vmatpush1.bf16.msra.mxu0 %v6428
        %7103 = vmatprep.subr.bf16.mxu0 %v6433
        %7104 = vmatpush1.bf16.msra.mxu0 %v6432
        %7105 = vmatprep.subr.bf16.mxu0 %v6437
        %7106 = vmatpush1.bf16.msra.mxu0 %v6436
        %7107 = vmatprep.subr.bf16.mxu0 %v6441
        %7108 = vmatpush1.bf16.msra.mxu0 %v6440
        %7109 = vmatprep.subr.bf16.mxu0 %v6445
        %7110 = vmatpush1.bf16.msra.mxu0 %v6444
        %7111 = vmatprep.subr.bf16.mxu0 %v6449
        %7112 = vmatpush1.bf16.msra.mxu0 %v6448
        %7113 = vmatprep.subr.bf16.mxu0 %v6453
        %7114 = vmatpush1.bf16.msra.mxu0 %v6452
        %7115 = vmatprep.subr.bf16.mxu0 %v6457
        %7116 = vmatpush1.bf16.msra.mxu0 %v6456
        %7117 = vmatprep.subr.bf16.mxu0 %v6461
        %7118 = vmatpush1.bf16.msra.mxu0 %v6460
        %7119 = vmatprep.subr.bf16.mxu0 %v6465
        %7120 = vmatpush1.bf16.msra.mxu0 %v6464
        %7121 = vmatprep.subr.bf16.mxu0 %v6469
        %7122 = vmatpush1.bf16.msra.mxu0 %v6468
        %7123 = vmatprep.subr.bf16.mxu0 %v6473
        %7124 = vmatpush1.bf16.msra.mxu0 %v6472
        %7125 = vmatprep.subr.bf16.mxu0 %v6477
        %7126 = vmatpush1.bf16.msra.mxu0 %v6476
        %7127 = vmatprep.subr.bf16.mxu0 %v6481
        %7128 = vmatpush1.bf16.msra.mxu0 %v6480
        %7129 = vmatprep.mubr.bf16.mxu0 %v5598
        %7130 = vmatmul.mubr.bf16.gmra.mrb[0].mxu0 %v5597
        %v7131 = vpop.f32.mrb[0].mxu0
        %v7132 = vadd.f32 %v7091, %v7131
        %v7133 = vpop.f32.mrb[0].mxu0
        %v7134 = vadd.f32 %v7093, %v7133
        %v7135 = vpop.f32.mrb[0].mxu0
        %v7136 = vpop.f32.mrb[0].mxu0
        %7137 = vdwg.mxu0
        %7138 = vmatprep.subr.bf16.mxu0 %v6485
        %7139 = vmatpush1.bf16.msra.mxu0 %v6484
        %7140 = vmatprep.subr.bf16.mxu0 %v6489
        %7141 = vmatpush1.bf16.msra.mxu0 %v6488
        %7142 = vmatprep.subr.bf16.mxu0 %v6493
        %7143 = vmatpush1.bf16.msra.mxu0 %v6492
        %7144 = vmatprep.subr.bf16.mxu0 %v6497
        %7145 = vmatpush1.bf16.msra.mxu0 %v6496
        %7146 = vmatprep.subr.bf16.mxu0 %v6501
        %7147 = vmatpush1.bf16.msra.mxu0 %v6500
        %7148 = vmatprep.subr.bf16.mxu0 %v6505
        %7149 = vmatpush1.bf16.msra.mxu0 %v6504
        %7150 = vmatprep.subr.bf16.mxu0 %v6509
        %7151 = vmatpush1.bf16.msra.mxu0 %v6508
        %7152 = vmatprep.subr.bf16.mxu0 %v6513
        %7153 = vmatpush1.bf16.msra.mxu0 %v6512
        %7154 = vmatprep.subr.bf16.mxu0 %v6517
        %7155 = vmatpush1.bf16.msra.mxu0 %v6516
        %7156 = vmatprep.subr.bf16.mxu0 %v6521
        %7157 = vmatpush1.bf16.msra.mxu0 %v6520
        %7158 = vmatprep.subr.bf16.mxu0 %v6525
        %7159 = vmatpush1.bf16.msra.mxu0 %v6524
        %7160 = vmatprep.subr.bf16.mxu0 %v6529
        %7161 = vmatpush1.bf16.msra.mxu0 %v6528
        %7162 = vmatprep.subr.bf16.mxu0 %v6533
        %7163 = vmatpush1.bf16.msra.mxu0 %v6532
        %7164 = vmatprep.subr.bf16.mxu0 %v6537
        %7165 = vmatpush1.bf16.msra.mxu0 %v6536
        %7166 = vmatprep.subr.bf16.mxu0 %v6541
        %7167 = vmatpush1.bf16.msra.mxu0 %v6540
        %7168 = vmatprep.subr.bf16.mxu0 %v6545
        %7169 = vmatpush1.bf16.msra.mxu0 %v6544
        %7170 = vmatprep.mubr.bf16.mxu0 %v5600
        %7171 = vmatmul.mubr.bf16.gmra.mrb[0].mxu0 %v5599
        %v7172 = vpop.f32.mrb[0].mxu0
        %v7173 = vadd.f32 %v7132, %v7172
        %v7174 = vpop.f32.mrb[0].mxu0
        %v7175 = vadd.f32 %v7134, %v7174
        %v7176 = vpop.f32.mrb[0].mxu0
        %v7177 = vpop.f32.mrb[0].mxu0
        %7178 = vdwg.mxu0
        %7179 = vmatprep.subr.bf16.mxu0 %v6549
        %7180 = vmatpush1.bf16.msra.mxu0 %v6548
        %7181 = vmatprep.subr.bf16.mxu0 %v6553
        %7182 = vmatpush1.bf16.msra.mxu0 %v6552
        %7183 = vmatprep.subr.bf16.mxu0 %v6557
        %7184 = vmatpush1.bf16.msra.mxu0 %v6556
        %7185 = vmatprep.subr.bf16.mxu0 %v6561
        %7186 = vmatpush1.bf16.msra.mxu0 %v6560
        %7187 = vmatprep.subr.bf16.mxu0 %v6565
        %7188 = vmatpush1.bf16.msra.mxu0 %v6564
        %7189 = vmatprep.subr.bf16.mxu0 %v6569
        %7190 = vmatpush1.bf16.msra.mxu0 %v6568
        %7191 = vmatprep.subr.bf16.mxu0 %v6573
        %7192 = vmatpush1.bf16.msra.mxu0 %v6572
        %7193 = vmatprep.subr.bf16.mxu0 %v6577
        %7194 = vmatpush1.bf16.msra.mxu0 %v6576
        %7195 = vmatprep.subr.bf16.mxu0 %v6581
        %7196 = vmatpush1.bf16.msra.mxu0 %v6580
        %7197 = vmatprep.subr.bf16.mxu0 %v6585
        %7198 = vmatpush1.bf16.msra.mxu0 %v6584
        %7199 = vmatprep.subr.bf16.mxu0 %v6589
        %7200 = vmatpush1.bf16.msra.mxu0 %v6588
        %7201 = vmatprep.subr.bf16.mxu0 %v6593
        %7202 = vmatpush1.bf16.msra.mxu0 %v6592
        %7203 = vmatprep.subr.bf16.mxu0 %v6597
        %7204 = vmatpush1.bf16.msra.mxu0 %v6596
        %7205 = vmatprep.subr.bf16.mxu0 %v6601
        %7206 = vmatpush1.bf16.msra.mxu0 %v6600
        %7207 = vmatprep.subr.bf16.mxu0 %v6890
        %7208 = vmatpush1.bf16.msra.mxu0 %v6887
        %7209 = vmatprep.subr.bf16.mxu0 0
        %7210 = vmatpush1.bf16.msra.mxu0 0
        %7211 = vmatprep.mubr.bf16.mxu0 %v6877
        %7212 = vmatmul.mubr.bf16.gmra.mrb[0].mxu0 %v5601
        %v7213 = vpop.f32.mrb[0].mxu0
        %v7214 = vadd.f32 %v7173, %v7213
        %v7215 = vpop.f32.mrb[0].mxu0
        %v7216 = vadd.f32 %v7175, %v7215
        %v7217 = vpop.f32.mrb[0].mxu0
        %v7218 = vpop.f32.mrb[0].mxu0
        %7219 = vdwg.mxu0
        %v7220 = vxor.u32 %v7050, 2147483648
        %v7221 = vxor.u32 %v7052, 2147483648
        %v7222 = vxor.u32 %v7214, 2147483648
        %v7223 = vxor.u32 %v7216, 2147483648
        %v7224 = vmul.f32 %v7220, 1.442695
        %v7225 = vpow.pop %v7224
        %v7226 = vmul.f32 %v7221, 1.442695
        %v7227 = vpow.pop %v7226
        %v7228 = vmul.f32 %v7222, 1.442695
        %v7229 = vpow.pop %v7228
        %v7230 = vmul.f32 %v7223, 1.442695
        %v7231 = vpow.pop %v7230
        %v7232 = vadd.f32 %v7225, 1.0
        %v7233 = vadd.f32 %v7227, 1.0
        %v7234 = vadd.f32 %v7229, 1.0
        %v7235 = vadd.f32 %v7231, 1.0
        %v7236 = vrcp.pop %v7232
        %v7237 = vmul.f32 1.0, %v7236
        %v7238 = vrcp.pop %v7233
        %v7239 = vmul.f32 1.0, %v7238
        %v7240 = vrcp.pop %v7234
        %v7241 = vmul.f32 1.0, %v7240
        %v7242 = vrcp.pop %v7235
        %v7243 = vmul.f32 1.0, %v7242
        %v7244 = vmul.f32 %v7050, %v7237
        %v7245 = vmul.f32 %v7052, %v7239
        %v7246 = vmul.f32 %v7214, %v7241
        %v7247 = vmul.f32 %v7216, %v7243
        %v7248 = vld [vmem:[#allocation33] sm:$0xf]
        %v7250 = vlaneseq
        %v7251 = vshrl.u32 %v7250, 7
        %v7252 = vsub.s32 0, %v7251
        %v7253 = vrot.slane %v7248, %v7252
        %v7254 = vlaneseq
        %v7255 = vshrl.u32 %v7254, 7
        %v7256 = vsub.s32 1, %v7255
        %v7257 = vrot.slane %v7248, %v7256
        %v7258 = vlaneseq
        %v7259 = vshrl.u32 %v7258, 7
        %v7260 = vsub.s32 2, %v7259
        %v7261 = vrot.slane %v7248, %v7260
        %v7262 = vlaneseq
        %v7263 = vshrl.u32 %v7262, 7
        %v7264 = vsub.s32 3, %v7263
        %v7265 = vrot.slane %v7248, %v7264
        %v7270 = vmul.f32 %v7244, %v7253
        %v7271 = vmul.f32 %v7245, %v7257
        %v7272 = vmul.f32 %v7246, %v7261
        %v7273 = vmul.f32 %v7247, %v7265
        %v7274 = vld [vmem:[#allocation35] sm:$0xf]
        %v7276 = vlaneseq
        %v7277 = vshrl.u32 %v7276, 7
        %v7278 = vsub.s32 0, %v7277
        %v7279 = vrot.slane %v7274, %v7278
        %v7280 = vlaneseq
        %v7281 = vshrl.u32 %v7280, 7
        %v7282 = vsub.s32 1, %v7281
        %v7283 = vrot.slane %v7274, %v7282
        %v7284 = vlaneseq
        %v7285 = vshrl.u32 %v7284, 7
        %v7286 = vsub.s32 2, %v7285
        %v7287 = vrot.slane %v7274, %v7286
        %v7288 = vlaneseq
        %v7289 = vshrl.u32 %v7288, 7
        %v7290 = vsub.s32 3, %v7289
        %v7291 = vrot.slane %v7274, %v7290
        %v7296 = vadd.f32 %v7270, %v7279
        %v7297 = vadd.f32 %v7271, %v7283
        %v7298 = vadd.f32 %v7272, %v7287
        %v7299 = vadd.f32 %v7273, %v7291
        %v7300 = vld [vmem:[#allocation4] sm:$0xff]
        %v7301 = vld [vmem:[#allocation4 + $0x8] sm:$0xff]
        %v7302 = vld [vmem:[#allocation4 + $0x10] sm:$0xff]
        %v7303 = vld [vmem:[#allocation4 + $0x18] sm:$0xff]
        %v7304 = vld [vmem:[#allocation4 + $0x20] sm:$0xff]
        %v7305 = vld [vmem:[#allocation4 + $0x28] sm:$0xff]
        %v7306 = vld [vmem:[#allocation4 + $0x30] sm:$0xff]
        %v7307 = vld [vmem:[#allocation4 + $0x38] sm:$0xff]
        %v7308 = vld [vmem:[#allocation4 + $0x40] sm:$0xff]
        %v7309 = vld [vmem:[#allocation4 + $0x48] sm:$0xff]
        %v7310 = vld [vmem:[#allocation4 + $0x50] sm:$0xff]
        %v7311 = vld [vmem:[#allocation4 + $0x58] sm:$0xff]
        %v7312 = vld [vmem:[#allocation4 + $0x60] sm:$0xff]
        %v7313 = vld [vmem:[#allocation4 + $0x68] sm:$0xff]
        %v7314 = vld [vmem:[#allocation4 + $0x70] sm:$0xff]
        %v7315 = vld [vmem:[#allocation4 + $0x78] sm:$0xff]
        %v7316 = vld [vmem:[#allocation4 + $0x80] sm:$0xff]
        %v7317 = vld [vmem:[#allocation4 + $0x88] sm:$0xff]
        %v7318 = vld [vmem:[#allocation4 + $0x90] sm:$0xff]
        %v7319 = vld [vmem:[#allocation4 + $0x98] sm:$0xff]
        %v7320 = vld [vmem:[#allocation4 + $0xa0] sm:$0xff]
        %v7321 = vld [vmem:[#allocation4 + $0xa8] sm:$0xff]
        %v7322 = vld [vmem:[#allocation4 + $0xb0] sm:$0xff]
        %v7323 = vld [vmem:[#allocation4 + $0xb8] sm:$0xff]
        %v7324 = vld [vmem:[#allocation4 + $0xc0] sm:$0xff]
        %v7325 = vld [vmem:[#allocation4 + $0xc8] sm:$0xff]
        %v7326 = vld [vmem:[#allocation4 + $0xd0] sm:$0xff]
        %v7327 = vld [vmem:[#allocation4 + $0xd8] sm:$0xff]
        %v7328 = vld [vmem:[#allocation4 + $0xe0] sm:$0xff]
        %v7329 = vld [vmem:[#allocation4 + $0xe8] sm:$0xff]
        %v7330 = vld [vmem:[#allocation4 + $0xf0] sm:$0xff]
        %v7331 = vld [vmem:[#allocation4 + $0xf8] sm:$0xff]
        %v7332 = vpack.c.bf16 %v7296, %v7296
        %v7333 = vpack.c.bf16 %v7297, %v7297
        %v7334 = vpack.c.bf16 %v7298, %v7298
        %v7335 = vpack.c.bf16 %v7299, %v7299
        %v7336 = vld [vmem:[#allocation36] sm:$0x1]
        %7337 = vmatprep.subr.bf16.mxu0 0
        %7338 = vmatpush1.bf16.msra.mxu0 %v7300
        %7339 = vmatprep.subr.bf16.mxu0 0
        %7340 = vmatpush1.bf16.msra.mxu0 %v7301
        %7341 = vmatprep.subr.bf16.mxu0 0
        %7342 = vmatpush1.bf16.msra.mxu0 %v7302
        %7343 = vmatprep.subr.bf16.mxu0 0
        %7344 = vmatpush1.bf16.msra.mxu0 %v7303
        %7345 = vmatprep.subr.bf16.mxu0 0
        %7346 = vmatpush1.bf16.msra.mxu0 %v7304
        %7347 = vmatprep.subr.bf16.mxu0 0
        %7348 = vmatpush1.bf16.msra.mxu0 %v7305
        %7349 = vmatprep.subr.bf16.mxu0 0
        %7350 = vmatpush1.bf16.msra.mxu0 %v7306
        %7351 = vmatprep.subr.bf16.mxu0 0
        %7352 = vmatpush1.bf16.msra.mxu0 %v7307
        %7353 = vmatprep.subr.bf16.mxu0 0
        %7354 = vmatpush1.bf16.msra.mxu0 %v7308
        %7355 = vmatprep.subr.bf16.mxu0 0
        %7356 = vmatpush1.bf16.msra.mxu0 %v7309
        %7357 = vmatprep.subr.bf16.mxu0 0
        %7358 = vmatpush1.bf16.msra.mxu0 %v7310
        %7359 = vmatprep.subr.bf16.mxu0 0
        %7360 = vmatpush1.bf16.msra.mxu0 %v7311
        %7361 = vmatprep.subr.bf16.mxu0 0
        %7362 = vmatpush1.bf16.msra.mxu0 %v7312
        %7363 = vmatprep.subr.bf16.mxu0 0
        %7364 = vmatpush1.bf16.msra.mxu0 %v7313
        %7365 = vmatprep.subr.bf16.mxu0 0
        %7366 = vmatpush1.bf16.msra.mxu0 %v7314
        %7367 = vmatprep.subr.bf16.mxu0 0
        %7368 = vmatpush1.bf16.msra.mxu0 %v7315
        %7369 = vmatprep.mubr.bf16.mxu0 %v7333
        %7370 = vmatmul.mubr.bf16.gmra.mrb[0].mxu0 %v7332
        %v7371 = vpop.f32.mrb[0].mxu0
        %v7372 = vadd.f32 %v7336, %v7371
        %v7373 = vpop.f32.mrb[0].mxu0
        %v7374 = vpop.f32.mrb[0].mxu0
        %v7375 = vpop.f32.mrb[0].mxu0
        %7376 = vdwg.mxu0
        %7377 = vmatprep.subr.bf16.mxu0 0
        %7378 = vmatpush1.bf16.msra.mxu0 %v7316
        %7379 = vmatprep.subr.bf16.mxu0 0
        %7380 = vmatpush1.bf16.msra.mxu0 %v7317
        %7381 = vmatprep.subr.bf16.mxu0 0
        %7382 = vmatpush1.bf16.msra.mxu0 %v7318
        %7383 = vmatprep.subr.bf16.mxu0 0
        %7384 = vmatpush1.bf16.msra.mxu0 %v7319
        %7385 = vmatprep.subr.bf16.mxu0 0
        %7386 = vmatpush1.bf16.msra.mxu0 %v7320
        %7387 = vmatprep.subr.bf16.mxu0 0
        %7388 = vmatpush1.bf16.msra.mxu0 %v7321
        %7389 = vmatprep.subr.bf16.mxu0 0
        %7390 = vmatpush1.bf16.msra.mxu0 %v7322
        %7391 = vmatprep.subr.bf16.mxu0 0
        %7392 = vmatpush1.bf16.msra.mxu0 %v7323
        %7393 = vmatprep.subr.bf16.mxu0 0
        %7394 = vmatpush1.bf16.msra.mxu0 %v7324
        %7395 = vmatprep.subr.bf16.mxu0 0
        %7396 = vmatpush1.bf16.msra.mxu0 %v7325
        %7397 = vmatprep.subr.bf16.mxu0 0
        %7398 = vmatpush1.bf16.msra.mxu0 %v7326
        %7399 = vmatprep.subr.bf16.mxu0 0
        %7400 = vmatpush1.bf16.msra.mxu0 %v7327
        %7401 = vmatprep.subr.bf16.mxu0 0
        %7402 = vmatpush1.bf16.msra.mxu0 %v7328
        %7403 = vmatprep.subr.bf16.mxu0 0
        %7404 = vmatpush1.bf16.msra.mxu0 %v7329
        %7405 = vmatprep.subr.bf16.mxu0 0
        %7406 = vmatpush1.bf16.msra.mxu0 %v7330
        %7407 = vmatprep.subr.bf16.mxu0 0
        %7408 = vmatpush1.bf16.msra.mxu0 %v7331
        %7409 = vmatprep.mubr.bf16.mxu0 %v7335
        %7410 = vmatmul.mubr.bf16.gmra.mrb[0].mxu0 %v7334
        %v7411 = vpop.f32.mrb[0].mxu0
        %v7412 = vadd.f32 %v7372, %v7411
        %v7413 = vpop.f32.mrb[0].mxu0
        %v7414 = vpop.f32.mrb[0].mxu0
        %v7415 = vpop.f32.mrb[0].mxu0
        %7416 = vdwg.mxu0
        %v7417 = vxor.u32 %v7412, 2147483648
        %v7418 = vmul.f32 %v7417, 1.442695
        %v7419 = vpow.pop %v7418
        %v7420 = vadd.f32 %v7419, 1.0
        %v7421 = vrcp.pop %v7420
        %v7422 = vmul.f32 1.0, %v7421
        %v7423 = vmul.f32 %v7412, %v7422
        %v7424 = vld [vmem:[#allocation38] sm:$0x1]
        %v7425 = vmul.f32 %v7423, %v7424
        %v7426 = vld [vmem:[#allocation39] sm:$0x1]
        %v7427 = vadd.f32 %v7425, %v7426
        %v7428 = vld [vmem:[#allocation41] sm:$0x1]
        %v7429 = vmul.f32 %v7427, %v7428
        %vm7430 = vcmask 679936
        %v7431 = vsel %vm7430, %v7429, 0.0
        %7432 = vadd.xlane.f32.xlu0 %v7431
        %v7433 = vpop.xlane.xlu0 %7432
        %v7434 = vld [vmem:[#allocation6] sm:$0x1]
        %v7435 = vadd.f32 %v7433, %v7434
        %v7436 = vxor.u32 %v7435, 2147483648
        %v7437 = vmul.f32 %v7436, 1.442695
        %v7438 = vpow.pop %v7437
        %v7439 = vadd.f32 %v7438, 1.0
        %v7440 = vrcp.pop %v7439
        %v7441 = vmul.f32 1.0, %v7440
        %vm7442 = vcmask 0
        %7443 = vst.msk [vmem:[%s1234] sm:$0x1] %vm7442, %v7441
        %p7444 = scmp.lt.s32.totalorder %s92, 1
        %s7445 = scalar_select %p7444, %s92, 1
        %s7446 = scalar_lea.vmem %s67, %s7445
        // Predicated region
        $region338: #{smallformer_forward.1} parent=139 // pred_check
          %p7447 = pneg %p745
        $region339: #{smallformer_forward.1} parent=139 // pred_check_branch
          %7449 = sbr.rel (%p7447) target = $region341
        $region340: #{smallformer_forward.1} parent=139 // pred_region
          _
        $region341: #{smallformer_forward.1} parent=139 // pred_fallthru
          _
      $region140: #{smallformer_forward.1} parent=5 // pred_fallthru
        _
      %p7450 = scmp.le.s32.totalorder 2, %s87
      // Predicated region
      $region342: #{smallformer_forward.1} parent=5 // pred_check
        %p7451 = pneg %p7450
      $region343: #{smallformer_forward.1} parent=5 // pred_check_branch
        %7453 = sbr.rel (%p7451) target = $region345
      $region344: #{smallformer_forward.1} parent=5 // pred_region
        %s7454 = ssub.s32 %s87, 2
        // Predicated region
        $region346: #{smallformer_forward.1} parent=344 // pred_check
          %p7455 = pneg %p751
        $region347: #{smallformer_forward.1} parent=344 // pred_check_branch
          %7457 = sbr.rel (%p7455) target = $region349
        $region348: #{smallformer_forward.1} parent=344 // pred_region
          %p7458 = scmp.lt.s32.totalorder %s93, 1
          %s7459 = scalar_select %p7458, %s93, 1
          %s7460 = scalar_lea.vmem %s67, %s7459
        $region349: #{smallformer_forward.1} parent=344 // pred_fallthru
          _
      $region345: #{smallformer_forward.1} parent=5 // pred_fallthru
        _
    $region6: #{smallformer_forward.1} parent=1 // loop_footer
      %s91 = sadd.s32 1, %s87
    $region7: #{smallformer_forward.1} parent=1 // loop_footer_branch
      %86 = sbr.rel target = $region3
    $region8: #{smallformer_forward.1} parent=1 // loop_exit
      _
    %7461 = vsyncpa [#allocation8], 1
    %s7462 = scalar_lea.sflag [#allocation8], 1
    %7463 = vsyncpa %s7462, 1
    %7464 = vsyncpa [#allocation10], 1
    %7465 = vsyncpa [#allocation13], 1
    %7466 = vsyncpa [#allocation16], 1
    %7467 = vsyncpa [#allocation19], 1
    %7468 = vsyncpa [#allocation22], 1
    %7469 = vsyncpa [#allocation25], 1
    %7470 = vsyncpa [#allocation28], 1
    %7471 = vsyncpa [#allocation31], 1
    %7472 = vsyncpa [#allocation34], 1
    %7473 = vsyncpa [#allocation37], 1
    %7474 = vsyncpa [#allocation40], 1
  %7475 = vsyncmov [#allocation5]
  %s7476 = vpop.sfrf %7475
  %p7477 = scmp.eq.s32.totalorder %s7476, 0
  %p7478 = pneg %p7477
  %7480 = shalt.err (%p7478)
  %s7481 = scalar_lea.sflag [#allocation5], 1
  %7482 = vsyncmov %s7481
  %s7483 = vpop.sfrf %7482
  %p7484 = scmp.eq.s32.totalorder %s7483, 0
  %p7485 = pneg %p7484
  %7487 = shalt.err (%p7485)
  %s7488 = scalar_lea.sflag [#allocation5], 2
  %7489 = vsyncmov %s7488
  %s7490 = vpop.sfrf %7489
  %p7491 = scmp.eq.s32.totalorder %s7490, 0
  %p7492 = pneg %p7491
  %7494 = shalt.err (%p7492)

</llo_original>
